<compile_context>
chip_gen: v5e
topology: v5e:2x2
jax: 0.10.0
libtpu: 0.0.40
codegen_flags: <defaults>
</compile_context>

<pallas_src>
from functools import partial

import jax
import jax.numpy as jnp
import numpy as np
from jax.experimental import pallas as pl
from jax.experimental.pallas import tpu as pltpu

ENC_PLAN_DIMS = 4   # stand-in for utils.ENC_PLAN_DIMS
BN_EPS = 1e-5


# ----------------------------- in-kernel helpers -----------------------------

def _conv3x3(x_bhwc, w, bias):
    """Circular 3x3 conv over a tile of boards as MXU matmul(s).

    x_bhwc: [Bt, H, W, C]  (bf16)        w: [9*C, Cout] (bf16)     bias: [1, Cout] f32
    Returns [Bt*H*W, Cout] f32.

    Tap order k = 3*di + dj uses circular shift (1-di, 1-dj) along (H, W); this
    matches conv weights reshaped [9, C, Cout] -> [9*C, Cout].  Rolls reused:
    2 H-rolls + 6 W-rolls.  When 9*C is a multiple of 128 (width=256 config)
    the 9 taps are concatenated into one lane-aligned [M, 9*C] im2col matmul;
    otherwise (width=32, stem) a 9-tap accumulation avoids the lane-misaligned
    concat/relayout.
    """
    Bt, H, W, C = x_bhwc.shape
    Cout = w.shape[-1]
    M = Bt * H * W

    rows = (jnp.roll(x_bhwc, 1, axis=1), x_bhwc, jnp.roll(x_bhwc, -1, axis=1))   # di = 0,1,2
    taps = []
    for r in rows:
        taps += [jnp.roll(r, 1, axis=2), r, jnp.roll(r, -1, axis=2)]             # dj = 0,1,2

    if (9 * C) % 128 == 0:
        cols = jnp.concatenate(taps, axis=-1).reshape(M, 9 * C)
        y = jnp.dot(cols, w, preferred_element_type=jnp.float32)
    else:
        y = jnp.zeros((M, Cout), jnp.float32)
        for k, tap in enumerate(taps):
            y = y + jnp.dot(tap.reshape(M, C), w[k * C:(k + 1) * C, :],
                            preferred_element_type=jnp.float32)
    return y + bias.reshape(1, Cout).astype(jnp.float32)


def _bn_train(y, gamma, beta, n_boards):
    """BatchNorm2d training-mode forward (N=1 per board): per-channel stats over H*W.

    y: [n_boards*H*W, C] f32.  One-pass variance E[x^2]-E[x]^2, clamped >= 0
    before rsqrt (review correctness concern)."""
    M, C = y.shape
    yb = y.reshape(n_boards, M // n_boards, C)
    m = jnp.mean(yb, axis=1, keepdims=True)
    v = jnp.maximum(jnp.mean(yb * yb, axis=1, keepdims=True) - m * m, 0.0)
    out = (yb - m) * jax.lax.rsqrt(v + BN_EPS) * gamma.reshape(1, 1, C) + beta.reshape(1, 1, C)
    return out.reshape(M, C)


# --------------------------------- kernel ------------------------------------

def _fused_kernel(board_ref, ws_ref, sv_ref, w1_ref, w2_ref, bv_ref,
                  out_ref, h_ref):
    Bt, H, W, width = h_ref.shape
    k_step = pl.program_id(1)

    # Stem (folded plan-encoder + conv + BN + ReLU): first block step only.
    # The activation then lives (bf16) in the VMEM scratch h_ref for all blocks
    # of this batch tile.
    @pl.when(k_step == 0)
    def _stem():
        sv = sv_ref[...]                                      # [8, width] f32: bias/gamma/beta
        y = _conv3x3(board_ref[...], ws_ref[...], sv[0:1, :])
        y = jnp.maximum(_bn_train(y, sv[1:2, :], sv[2:3, :], Bt), 0.0)
        h_ref[...] = y.reshape(Bt, H, W, width).astype(jnp.bfloat16)

    # U residual blocks per grid step (weights streamed via BlockSpec,
    # auto double-buffered); static unroll amortizes per-step overhead.
    U = w1_ref.shape[0]
    bv = bv_ref[...]                                          # [U, 8, width] f32
    h_last = None
    for u in range(U):
        x = h_ref[...]                                        # bf16 [Bt, H, W, width]
        t = _conv3x3(x, w1_ref[u], bv[u, 0:1, :])
        t = jnp.maximum(_bn_train(t, bv[u, 1:2, :], bv[u, 2:3, :], Bt), 0.0)
        t = _conv3x3(t.reshape(Bt, H, W, width).astype(jnp.bfloat16),
                     w2_ref[u], bv[u, 3:4, :])
        t = _bn_train(t, bv[u, 4:5, :], bv[u, 5:6, :], Bt)
        # Residual add in f32; resident copy kept bf16.
        h_last = jnp.maximum(x.reshape(Bt * H * W, width).astype(jnp.float32) + t, 0.0)
        h_ref[...] = h_last.reshape(Bt, H, W, width).astype(jnp.bfloat16)

    # Single write into the output VMEM buffer (and single HBM writeback) per
    # batch tile, on the last block step.
    @pl.when(k_step == pl.num_programs(1) - 1)
    def _store():
        out_ref[...] = h_last.reshape(Bt, H, W, width)


# ------------------------------ pallas wrapper --------------------------------

def prepare_params(params):
    """One-time prep: fold the linear plan encoder into the stem conv, flatten
    conv weights for the in-kernel matmuls, cast MXU operands to bf16, stack
    per-block weights, and pack the small per-block vectors into one array."""
    width = params['stem_w_np'].shape[-1]
    wenc = params['stem_w_enc']                                    # [9, latent, width]
    enc_folded = jnp.einsum('rl,klw->krw', params['wpe'], wenc)    # [9, raw, width]
    stem_w = jnp.concatenate([params['stem_w_np'], enc_folded], axis=1)   # [9, 12+raw, width]
    stem_b = params['stem_b'].reshape(1, width) + params['bpe'] @ jnp.sum(wenc, axis=0)

    def pack8(rows):
        rows = [jnp.asarray(r, jnp.float32).reshape(width) for r in rows]
        rows += [jnp.zeros((width,), jnp.float32)] * (8 - len(rows))
        return jnp.stack(rows)                                      # [8, width]

    blocks = params['blocks']
    stackw = lambda k: jnp.stack(
        [b[k].reshape(9 * width, width) for b in blocks]).astype(jnp.bfloat16)

    return dict(
        stem_w=stem_w.reshape(-1, width).astype(jnp.bfloat16),     # [9*(12+raw), width]
        stem_v=pack8([stem_b, params['stem_gamma'], params['stem_beta']]),
        w1=stackw('w1'),                                           # [NB, 9*width, width]
        w2=stackw('w2'),
        bv=jnp.stack([pack8([b['b1'], b['g1'], b['bt1'], b['b2'], b['g2'], b['bt2']])
                      for b in blocks]),                           # [NB, 8, width]
    )


def _vmem_budget(Bt, H, W, width, c_in, U):
    """Explicit scoped-VMEM budget (v5e default is only 16 MiB). Capped at
    48 MiB to stay well under v7x's 64 MiB per-TC physical VMEM."""
    bf, f4 = 2, 4
    M = Bt * H * W
    wts = 2 * 2 * U * 9 * width * width * bf          # w1 + w2, double-buffered
    vecs = 2 * U * 8 * width * f4                     # packed block vectors
    stem = 2 * (9 * c_in * width * bf + 8 * width * f4)
    brd = 2 * M * c_in * bf
    outb = 2 * M * width * f4
    act = M * width * bf                              # resident activation scratch
    tmps = 2 * M * 9 * width * bf + 8 * M * width * f4
    budget = wts + vecs + stem + brd + outb + act + tmps
    return int(min(max(int(1.5 * budget) + (8 << 20), 32 << 20), 48 << 20))


@partial(jax.jit, static_argnames=("batch_tile",))
def board_representation_forward_batched(nonplans, plans, prep, batch_tile=None):
    """nonplans: [B, 12, H, W]; plans: [B, H, W, raw].  Returns [B, width, H, W].

    Each board gets its own BN statistics, so this is exactly B independent
    forwards of the PyTorch module, batched for MXU fill / weight-stream reuse.
    """
    B, _, H, W = nonplans.shape
    raw = plans.shape[-1]
    c_in = 12 + raw
    width = prep['w1'].shape[-1]
    nb = prep['w1'].shape[0]
    assert nb >= 1

    if batch_tile is None:
        batch_tile = B                       # max MXU fill / weight reuse by default
    assert B % batch_tile == 0
    Bt = batch_tile
    n_tiles = B // Bt

    # Unroll a few blocks per grid step at small width (step overhead dominates
    # there); keep U=1 at width>=128 where per-step weights are already large.
    U = next(u for u in (4, 2, 1) if nb % u == 0) if width <= 64 else 1
    n_steps = nb // U

    # Channels-last boards with raw plan channels appended (encoder folded into
    # the stem weights), bf16 for the MXU.
    board = jnp.concatenate(
        [jnp.transpose(nonplans, (0, 2, 3, 1)).astype(jnp.float32),
         plans.astype(jnp.float32)], axis=-1).astype(jnp.bfloat16)   # [B, H, W, c_in]

    out = pl.pallas_call(
        _fused_kernel,
        grid=(n_tiles, n_steps),
        out_shape=jax.ShapeDtypeStruct((B, H, W, width), jnp.float32),
        in_specs=[
            pl.BlockSpec((Bt, H, W, c_in), lambda b, k: (b, 0, 0, 0)),       # boards
            pl.BlockSpec(prep['stem_w'].shape, lambda b, k: (0, 0)),         # folded stem W
            pl.BlockSpec((8, width), lambda b, k: (0, 0)),                   # stem b/g/beta
            pl.BlockSpec((U, 9 * width, width), lambda b, k: (k, 0, 0)),     # conv1 weights
            pl.BlockSpec((U, 9 * width, width), lambda b, k: (k, 0, 0)),     # conv2 weights
            pl.BlockSpec((U, 8, width), lambda b, k: (k, 0, 0)),             # packed vectors
        ],
        out_specs=pl.BlockSpec((Bt, H, W, width), lambda b, k: (b, 0, 0, 0)),
        scratch_shapes=[pltpu.VMEM((Bt, H, W, width), jnp.bfloat16)],        # resident act
        compiler_params=pltpu.CompilerParams(
            dimension_semantics=("parallel", "arbitrary"),
            vmem_limit_bytes=_vmem_budget(Bt, H, W, width, c_in, U)),
    )(board, prep['stem_w'], prep['stem_v'], prep['w1'], prep['w2'], prep['bv'])

    # Back to PyTorch NCHW per board.
    return jnp.transpose(out, (0, 3, 1, 2))


def board_representation_forward(nonplans, plans, prep):
    """Single-board API matching the PyTorch module: returns [1, width, H, W]."""
    return board_representation_forward_batched(nonplans[None], plans[None], prep)


# ------------------------------ parameter init --------------------------------

def init_params(key, width, num_res_blocks, c_np=12, latent=ENC_PLAN_DIMS):
    keys = jax.random.split(key, 4 + num_res_blocks)

    def conv_init(k, cin, cout):
        std = (2.0 / (9 * cin)) ** 0.5
        return std * jax.random.normal(k, (9, cin, cout), jnp.float32)

    p = {
        'wpe': 0.5 * jax.random.normal(keys[0], (latent, latent), jnp.float32),
        'bpe': 0.1 * jax.random.normal(keys[1], (1, latent), jnp.float32),
        'stem_w_np': conv_init(keys[2], c_np, width),
        'stem_w_enc': conv_init(keys[3], latent, width),
        'stem_b': jnp.zeros((1, 1, width), jnp.float32),
        'stem_gamma': jnp.ones((1, 1, width), jnp.float32),
        'stem_beta': jnp.zeros((1, 1, width), jnp.float32),
    }
    blocks = []
    for i in range(num_res_blocks):
        k1, k2 = jax.random.split(keys[4 + i])
        blocks.append(dict(
            w1=conv_init(k1, width, width), b1=jnp.zeros((1, 1, width), jnp.float32),
            g1=jnp.ones((1, 1, width), jnp.float32), bt1=jnp.zeros((1, 1, width), jnp.float32),
            w2=conv_init(k2, width, width), b2=jnp.zeros((1, 1, width), jnp.float32),
            g2=jnp.ones((1, 1, width), jnp.float32), bt2=jnp.zeros((1, 1, width), jnp.float32),
        ))
    p['blocks'] = blocks
    return p


# ---------------------------- pure-JAX f32 reference ---------------------------

def _ref_conv3x3_circular(x_chw, w_9io, bias):
    cin, cout = w_9io.shape[1], w_9io.shape[2]
    w = w_9io.reshape(3, 3, cin, cout).transpose(3, 2, 0, 1)       # OIHW
    xp = jnp.pad(x_chw[None], ((0, 0), (0, 0), (1, 1), (1, 1)), mode='wrap')
    out = jax.lax.conv_general_dilated(
        xp, w, window_strides=(1, 1), padding='VALID',
        dimension_numbers=('NCHW', 'OIHW', 'NCHW'))[0]
    return out + bias.reshape(-1, 1, 1)


def _ref_bn(x_chw, gamma, beta):
    m = jnp.mean(x_chw, axis=(1, 2), keepdims=True)
    v = jnp.mean((x_chw - m) ** 2, axis=(1, 2), keepdims=True)
    return ((x_chw - m) * jax.lax.rsqrt(v + BN_EPS)
            * gamma.reshape(-1, 1, 1) + beta.reshape(-1, 1, 1))


def reference_forward(nonplans, plans, params):
    H, W, raw = plans.shape
    enc = plans.reshape(H * W, raw) @ params['wpe'] + params['bpe']
    enc = enc.reshape(H, W, -1).transpose(2, 0, 1)          # [latent, H, W]
    x = jnp.concatenate([nonplans, enc], axis=0)            # [12+latent, H, W]
    stem_w = jnp.concatenate([params['stem_w_np'], params['stem_w_enc']], axis=1)
    h = jnp.maximum(
        _ref_bn(_ref_conv3x3_circular(x, stem_w, params['stem_b']),
                params['stem_gamma'], params['stem_beta']), 0.0)
    for blk in params['blocks']:
        t = jnp.maximum(
            _ref_bn(_ref_conv3x3_circular(h, blk['w1'], blk['b1']), blk['g1'], blk['bt1']), 0.0)
        t = _ref_bn(_ref_conv3x3_circular(t, blk['w2'], blk['b2']), blk['g2'], blk['bt2'])
        h = jnp.maximum(h + t, 0.0)
    return h[None]


# ----------------------------------- main --------------------------------------

if __name__ == "__main__":
    H = W = 8
    width = 32
    num_res_blocks = 2
    B = 2

    key = jax.random.PRNGKey(0)
    k_np, k_pl, k_par = jax.random.split(key, 3)
    nonplans = jax.random.normal(k_np, (B, 12, H, W), jnp.float32)
    plans = jax.random.normal(k_pl, (B, H, W, ENC_PLAN_DIMS), jnp.float32)
    params = init_params(k_par, width, num_res_blocks)
    prep = prepare_params(params)

    # Batched path: all boards stacked along the matmul M dim (one batch tile).
    out = board_representation_forward_batched(nonplans, plans, prep)
    out = jax.block_until_ready(out)
    assert out.shape == (B, width, H, W), out.shape

    # Split-tile path: one board per tile -> exercises the "parallel" batch grid
    # axis (v7x two-TensorCore sharding).
    out_split = board_representation_forward_batched(nonplans, plans, prep, batch_tile=1)
    out_split = jax.block_until_ready(out_split)
    assert out_split.shape == (B, width, H, W), out_split.shape

    # Single-board API matching the PyTorch module's [1, width, H, W] return.
    out1 = board_representation_forward(nonplans[0], plans[0], prep)
    out1 = jax.block_until_ready(out1)
    assert out1.shape == (1, width, H, W), out1.shape

    # f32 reference (PyTorch semantics), per board.  Kernel uses bf16 MXU
    # operands + a bf16 resident activation with f32 accumulation/BN, so the
    # tolerance is loosened (structural bugs would show O(1) errors since
    # activations are BN-normalized each block).
    refs = jnp.concatenate(
        [reference_forward(nonplans[b], plans[b], params) for b in range(B)], axis=0)
    np.testing.assert_allclose(np.asarray(out), np.asarray(refs), rtol=6e-2, atol=6e-2)
    np.testing.assert_allclose(np.asarray(out_split), np.asarray(refs), rtol=6e-2, atol=6e-2)
    np.testing.assert_allclose(np.asarray(out1), np.asarray(refs[:1]), rtol=6e-2, atol=6e-2)

    print("KERNEL_OK")
</pallas_src>

<mosaic_0001>
module attributes {stable_mosaic.version = 11 : i64} {
  func.func @_fused_kernel(%arg0: i32, %arg1: i32, %arg2: memref<2x8x8x16xbf16, #tpu.memory_space<vmem>>, %arg3: memref<144x32xbf16, #tpu.memory_space<vmem>>, %arg4: memref<8x32xf32, #tpu.memory_space<vmem>>, %arg5: memref<2x288x32xbf16, #tpu.memory_space<vmem>>, %arg6: memref<2x288x32xbf16, #tpu.memory_space<vmem>>, %arg7: memref<2x8x32xf32, #tpu.memory_space<vmem>>, %arg8: memref<2x8x8x32xf32, #tpu.memory_space<vmem>>, %arg9: memref<2x8x8x32xbf16, #tpu.memory_space<vmem>>) attributes {dimension_semantics = [#tpu.dimension_semantics<parallel>, #tpu.dimension_semantics<arbitrary>], iteration_bounds = array<i64: 1, 1>, scalar_prefetch = 0 : i64, scratch_operands = 1 : i64, tpu.core_type = #tpu.core_type<tc>, window_params = [{transform_indices = @transform_0, window_bounds = array<i64: 2, 8, 8, 16>}, {pipeline_mode = #tpu.pipeline_mode<synchronous>, transform_indices = @transform_1, window_bounds = array<i64: 144, 32>}, {pipeline_mode = #tpu.pipeline_mode<synchronous>, transform_indices = @transform_2, window_bounds = array<i64: 8, 32>}, {transform_indices = @transform_3, window_bounds = array<i64: 2, 288, 32>}, {transform_indices = @transform_4, window_bounds = array<i64: 2, 288, 32>}, {transform_indices = @transform_5, window_bounds = array<i64: 2, 8, 32>}, {transform_indices = @transform_6, window_bounds = array<i64: 2, 8, 8, 32>}]} {
    %c0_i32 = arith.constant 0 : i32
    %0 = arith.cmpi eq, %arg1, %c0_i32 : i32
    %1 = arith.extui %0 : i1 to i32
    %c0_i32_0 = arith.constant 0 : i32
    %2 = arith.cmpi ne, %1, %c0_i32_0 : i32
    scf.if %2 {
      %c0_99 = arith.constant 0 : index
      %c0_100 = arith.constant 0 : index
      %429 = vector.load %arg4[%c0_99, %c0_100] : memref<8x32xf32, #tpu.memory_space<vmem>>, vector<8x32xf32>
      %c0_101 = arith.constant 0 : index
      %c0_102 = arith.constant 0 : index
      %c0_103 = arith.constant 0 : index
      %c0_104 = arith.constant 0 : index
      %430 = vector.load %arg2[%c0_101, %c0_102, %c0_103, %c0_104] : memref<2x8x8x16xbf16, #tpu.memory_space<vmem>>, vector<2x8x8x16xbf16>
      %c0_105 = arith.constant 0 : index
      %c0_106 = arith.constant 0 : index
      %431 = vector.load %arg3[%c0_105, %c0_106] : memref<144x32xbf16, #tpu.memory_space<vmem>>, vector<144x32xbf16>
      %432 = vector.extract_strided_slice %429 {offsets = [0, 0], sizes = [1, 32], strides = [1, 1]} : vector<8x32xf32> to vector<1x32xf32>
      %433 = vector.extract_strided_slice %430 {offsets = [0, 7, 0, 0], sizes = [2, 1, 8, 16], strides = [1, 1, 1, 1]} : vector<2x8x8x16xbf16> to vector<2x1x8x16xbf16>
      %434 = vector.extract_strided_slice %430 {offsets = [0, 0, 0, 0], sizes = [2, 7, 8, 16], strides = [1, 1, 1, 1]} : vector<2x8x8x16xbf16> to vector<2x7x8x16xbf16>
      %435 = tpu.concatenate %433, %434 in 1 : vector<2x1x8x16xbf16>, vector<2x7x8x16xbf16> -> vector<2x8x8x16xbf16>
      %436 = vector.extract_strided_slice %430 {offsets = [0, 1, 0, 0], sizes = [2, 7, 8, 16], strides = [1, 1, 1, 1]} : vector<2x8x8x16xbf16> to vector<2x7x8x16xbf16>
      %437 = vector.extract_strided_slice %430 {offsets = [0, 0, 0, 0], sizes = [2, 1, 8, 16], strides = [1, 1, 1, 1]} : vector<2x8x8x16xbf16> to vector<2x1x8x16xbf16>
      %438 = tpu.concatenate %436, %437 in 1 : vector<2x7x8x16xbf16>, vector<2x1x8x16xbf16> -> vector<2x8x8x16xbf16>
      %439 = vector.extract_strided_slice %435 {offsets = [0, 0, 7, 0], sizes = [2, 8, 1, 16], strides = [1, 1, 1, 1]} : vector<2x8x8x16xbf16> to vector<2x8x1x16xbf16>
      %440 = vector.extract_strided_slice %435 {offsets = [0, 0, 0, 0], sizes = [2, 8, 7, 16], strides = [1, 1, 1, 1]} : vector<2x8x8x16xbf16> to vector<2x8x7x16xbf16>
      %441 = tpu.concatenate %439, %440 in 2 : vector<2x8x1x16xbf16>, vector<2x8x7x16xbf16> -> vector<2x8x8x16xbf16>
      %442 = vector.extract_strided_slice %435 {offsets = [0, 0, 1, 0], sizes = [2, 8, 7, 16], strides = [1, 1, 1, 1]} : vector<2x8x8x16xbf16> to vector<2x8x7x16xbf16>
      %443 = vector.extract_strided_slice %435 {offsets = [0, 0, 0, 0], sizes = [2, 8, 1, 16], strides = [1, 1, 1, 1]} : vector<2x8x8x16xbf16> to vector<2x8x1x16xbf16>
      %444 = tpu.concatenate %442, %443 in 2 : vector<2x8x7x16xbf16>, vector<2x8x1x16xbf16> -> vector<2x8x8x16xbf16>
      %445 = vector.extract_strided_slice %430 {offsets = [0, 0, 7, 0], sizes = [2, 8, 1, 16], strides = [1, 1, 1, 1]} : vector<2x8x8x16xbf16> to vector<2x8x1x16xbf16>
      %446 = vector.extract_strided_slice %430 {offsets = [0, 0, 0, 0], sizes = [2, 8, 7, 16], strides = [1, 1, 1, 1]} : vector<2x8x8x16xbf16> to vector<2x8x7x16xbf16>
      %447 = tpu.concatenate %445, %446 in 2 : vector<2x8x1x16xbf16>, vector<2x8x7x16xbf16> -> vector<2x8x8x16xbf16>
      %448 = vector.extract_strided_slice %430 {offsets = [0, 0, 1, 0], sizes = [2, 8, 7, 16], strides = [1, 1, 1, 1]} : vector<2x8x8x16xbf16> to vector<2x8x7x16xbf16>
      %449 = vector.extract_strided_slice %430 {offsets = [0, 0, 0, 0], sizes = [2, 8, 1, 16], strides = [1, 1, 1, 1]} : vector<2x8x8x16xbf16> to vector<2x8x1x16xbf16>
      %450 = tpu.concatenate %448, %449 in 2 : vector<2x8x7x16xbf16>, vector<2x8x1x16xbf16> -> vector<2x8x8x16xbf16>
      %451 = vector.extract_strided_slice %438 {offsets = [0, 0, 7, 0], sizes = [2, 8, 1, 16], strides = [1, 1, 1, 1]} : vector<2x8x8x16xbf16> to vector<2x8x1x16xbf16>
      %452 = vector.extract_strided_slice %438 {offsets = [0, 0, 0, 0], sizes = [2, 8, 7, 16], strides = [1, 1, 1, 1]} : vector<2x8x8x16xbf16> to vector<2x8x7x16xbf16>
      %453 = tpu.concatenate %451, %452 in 2 : vector<2x8x1x16xbf16>, vector<2x8x7x16xbf16> -> vector<2x8x8x16xbf16>
      %454 = vector.extract_strided_slice %438 {offsets = [0, 0, 1, 0], sizes = [2, 8, 7, 16], strides = [1, 1, 1, 1]} : vector<2x8x8x16xbf16> to vector<2x8x7x16xbf16>
      %455 = vector.extract_strided_slice %438 {offsets = [0, 0, 0, 0], sizes = [2, 8, 1, 16], strides = [1, 1, 1, 1]} : vector<2x8x8x16xbf16> to vector<2x8x1x16xbf16>
      %456 = tpu.concatenate %454, %455 in 2 : vector<2x8x7x16xbf16>, vector<2x8x1x16xbf16> -> vector<2x8x8x16xbf16>
      %cst_107 = arith.constant 0.000000e+00 : f32
      %457 = vector.broadcast %cst_107 : f32 to vector<128x32xf32>
      %458 = vector.shape_cast %441 : vector<2x8x8x16xbf16> to vector<128x16xbf16>
      %459 = vector.extract_strided_slice %431 {offsets = [0, 0], sizes = [16, 32], strides = [1, 1]} : vector<144x32xbf16> to vector<16x32xbf16>
      %cst_108 = arith.constant dense<0.000000e+00> : vector<128x32xf32>
      %460 = tpu.matmul %458, %459, %cst_108 {dimension_numbers = #tpu.dot_dimension_numbers<[1], [0], [0], [1], [0, 0, 1, 1], [], []>} : vector<128x16xbf16>, vector<16x32xbf16>, vector<128x32xf32> -> vector<128x32xf32>
      %461 = arith.addf %457, %460 : vector<128x32xf32>
      %462 = vector.shape_cast %435 : vector<2x8x8x16xbf16> to vector<128x16xbf16>
      %463 = vector.extract_strided_slice %431 {offsets = [16, 0], sizes = [16, 32], strides = [1, 1]} : vector<144x32xbf16> to vector<16x32xbf16>
      %cst_109 = arith.constant dense<0.000000e+00> : vector<128x32xf32>
      %464 = tpu.matmul %462, %463, %cst_109 {dimension_numbers = #tpu.dot_dimension_numbers<[1], [0], [0], [1], [0, 0, 1, 1], [], []>} : vector<128x16xbf16>, vector<16x32xbf16>, vector<128x32xf32> -> vector<128x32xf32>
      %465 = arith.addf %461, %464 : vector<128x32xf32>
      %466 = vector.shape_cast %444 : vector<2x8x8x16xbf16> to vector<128x16xbf16>
      %467 = vector.extract_strided_slice %431 {offsets = [32, 0], sizes = [16, 32], strides = [1, 1]} : vector<144x32xbf16> to vector<16x32xbf16>
      %cst_110 = arith.constant dense<0.000000e+00> : vector<128x32xf32>
      %468 = tpu.matmul %466, %467, %cst_110 {dimension_numbers = #tpu.dot_dimension_numbers<[1], [0], [0], [1], [0, 0, 1, 1], [], []>} : vector<128x16xbf16>, vector<16x32xbf16>, vector<128x32xf32> -> vector<128x32xf32>
      %469 = arith.addf %465, %468 : vector<128x32xf32>
      %470 = vector.shape_cast %447 : vector<2x8x8x16xbf16> to vector<128x16xbf16>
      %471 = vector.extract_strided_slice %431 {offsets = [48, 0], sizes = [16, 32], strides = [1, 1]} : vector<144x32xbf16> to vector<16x32xbf16>
      %cst_111 = arith.constant dense<0.000000e+00> : vector<128x32xf32>
      %472 = tpu.matmul %470, %471, %cst_111 {dimension_numbers = #tpu.dot_dimension_numbers<[1], [0], [0], [1], [0, 0, 1, 1], [], []>} : vector<128x16xbf16>, vector<16x32xbf16>, vector<128x32xf32> -> vector<128x32xf32>
      %473 = arith.addf %469, %472 : vector<128x32xf32>
      %474 = vector.shape_cast %430 : vector<2x8x8x16xbf16> to vector<128x16xbf16>
      %475 = vector.extract_strided_slice %431 {offsets = [64, 0], sizes = [16, 32], strides = [1, 1]} : vector<144x32xbf16> to vector<16x32xbf16>
      %cst_112 = arith.constant dense<0.000000e+00> : vector<128x32xf32>
      %476 = tpu.matmul %474, %475, %cst_112 {dimension_numbers = #tpu.dot_dimension_numbers<[1], [0], [0], [1], [0, 0, 1, 1], [], []>} : vector<128x16xbf16>, vector<16x32xbf16>, vector<128x32xf32> -> vector<128x32xf32>
      %477 = arith.addf %473, %476 : vector<128x32xf32>
      %478 = vector.shape_cast %450 : vector<2x8x8x16xbf16> to vector<128x16xbf16>
      %479 = vector.extract_strided_slice %431 {offsets = [80, 0], sizes = [16, 32], strides = [1, 1]} : vector<144x32xbf16> to vector<16x32xbf16>
      %cst_113 = arith.constant dense<0.000000e+00> : vector<128x32xf32>
      %480 = tpu.matmul %478, %479, %cst_113 {dimension_numbers = #tpu.dot_dimension_numbers<[1], [0], [0], [1], [0, 0, 1, 1], [], []>} : vector<128x16xbf16>, vector<16x32xbf16>, vector<128x32xf32> -> vector<128x32xf32>
      %481 = arith.addf %477, %480 : vector<128x32xf32>
      %482 = vector.shape_cast %453 : vector<2x8x8x16xbf16> to vector<128x16xbf16>
      %483 = vector.extract_strided_slice %431 {offsets = [96, 0], sizes = [16, 32], strides = [1, 1]} : vector<144x32xbf16> to vector<16x32xbf16>
      %cst_114 = arith.constant dense<0.000000e+00> : vector<128x32xf32>
      %484 = tpu.matmul %482, %483, %cst_114 {dimension_numbers = #tpu.dot_dimension_numbers<[1], [0], [0], [1], [0, 0, 1, 1], [], []>} : vector<128x16xbf16>, vector<16x32xbf16>, vector<128x32xf32> -> vector<128x32xf32>
      %485 = arith.addf %481, %484 : vector<128x32xf32>
      %486 = vector.shape_cast %438 : vector<2x8x8x16xbf16> to vector<128x16xbf16>
      %487 = vector.extract_strided_slice %431 {offsets = [112, 0], sizes = [16, 32], strides = [1, 1]} : vector<144x32xbf16> to vector<16x32xbf16>
      %cst_115 = arith.constant dense<0.000000e+00> : vector<128x32xf32>
      %488 = tpu.matmul %486, %487, %cst_115 {dimension_numbers = #tpu.dot_dimension_numbers<[1], [0], [0], [1], [0, 0, 1, 1], [], []>} : vector<128x16xbf16>, vector<16x32xbf16>, vector<128x32xf32> -> vector<128x32xf32>
      %489 = arith.addf %485, %488 : vector<128x32xf32>
      %490 = vector.shape_cast %456 : vector<2x8x8x16xbf16> to vector<128x16xbf16>
      %491 = vector.extract_strided_slice %431 {offsets = [128, 0], sizes = [16, 32], strides = [1, 1]} : vector<144x32xbf16> to vector<16x32xbf16>
      %cst_116 = arith.constant dense<0.000000e+00> : vector<128x32xf32>
      %492 = tpu.matmul %490, %491, %cst_116 {dimension_numbers = #tpu.dot_dimension_numbers<[1], [0], [0], [1], [0, 0, 1, 1], [], []>} : vector<128x16xbf16>, vector<16x32xbf16>, vector<128x32xf32> -> vector<128x32xf32>
      %493 = arith.addf %489, %492 : vector<128x32xf32>
      %494 = vector.broadcast %432 : vector<1x32xf32> to vector<128x32xf32>
      %495 = arith.addf %493, %494 : vector<128x32xf32>
      %496 = vector.extract_strided_slice %429 {offsets = [1, 0], sizes = [1, 32], strides = [1, 1]} : vector<8x32xf32> to vector<1x32xf32>
      %497 = vector.extract_strided_slice %429 {offsets = [2, 0], sizes = [1, 32], strides = [1, 1]} : vector<8x32xf32> to vector<1x32xf32>
      %498 = vector.shape_cast %495 : vector<128x32xf32> to vector<2x64x32xf32>
      %cst_117 = arith.constant dense<0.000000e+00> : vector<2x32xf32>
      %499 = vector.multi_reduction <add>, %498, %cst_117 [1] : vector<2x64x32xf32> to vector<2x32xf32>
      %500 = vector.shape_cast %499 : vector<2x32xf32> to vector<2x1x32xf32>
      %cst_118 = arith.constant 6.400000e+01 : f32
      %501 = vector.broadcast %cst_118 : f32 to vector<2x1x32xf32>
      %502 = arith.divf %500, %501 : vector<2x1x32xf32>
      %503 = arith.mulf %498, %498 : vector<2x64x32xf32>
      %cst_119 = arith.constant dense<0.000000e+00> : vector<2x32xf32>
      %504 = vector.multi_reduction <add>, %503, %cst_119 [1] : vector<2x64x32xf32> to vector<2x32xf32>
      %505 = vector.shape_cast %504 : vector<2x32xf32> to vector<2x1x32xf32>
      %cst_120 = arith.constant 6.400000e+01 : f32
      %506 = vector.broadcast %cst_120 : f32 to vector<2x1x32xf32>
      %507 = arith.divf %505, %506 : vector<2x1x32xf32>
      %508 = arith.mulf %502, %502 : vector<2x1x32xf32>
      %509 = arith.subf %507, %508 : vector<2x1x32xf32>
      %cst_121 = arith.constant 0.000000e+00 : f32
      %510 = vector.broadcast %cst_121 : f32 to vector<2x1x32xf32>
      %511 = arith.maximumf %509, %510 : vector<2x1x32xf32>
      %512 = vector.broadcast %502 : vector<2x1x32xf32> to vector<2x64x32xf32>
      %513 = arith.subf %498, %512 : vector<2x64x32xf32>
      %cst_122 = arith.constant 9.99999974E-6 : f32
      %514 = vector.broadcast %cst_122 : f32 to vector<2x1x32xf32>
      %515 = arith.addf %511, %514 : vector<2x1x32xf32>
      %516 = math.rsqrt %515 : vector<2x1x32xf32>
      %517 = vector.broadcast %516 : vector<2x1x32xf32> to vector<2x64x32xf32>
      %518 = arith.mulf %513, %517 : vector<2x64x32xf32>
      %519 = vector.shape_cast %496 : vector<1x32xf32> to vector<1x1x32xf32>
      %520 = vector.broadcast %519 : vector<1x1x32xf32> to vector<2x64x32xf32>
      %521 = arith.mulf %518, %520 : vector<2x64x32xf32>
      %522 = vector.shape_cast %497 : vector<1x32xf32> to vector<1x1x32xf32>
      %523 = vector.broadcast %522 : vector<1x1x32xf32> to vector<2x64x32xf32>
      %524 = arith.addf %521, %523 : vector<2x64x32xf32>
      %525 = vector.shape_cast %524 : vector<2x64x32xf32> to vector<128x32xf32>
      %cst_123 = arith.constant 0.000000e+00 : f32
      %526 = vector.broadcast %cst_123 : f32 to vector<128x32xf32>
      %527 = arith.maximumf %525, %526 : vector<128x32xf32>
      %528 = vector.shape_cast %527 : vector<128x32xf32> to vector<2x8x8x32xf32>
      %529 = arith.truncf %528 : vector<2x8x8x32xf32> to vector<2x8x8x32xbf16>
      %c0_124 = arith.constant 0 : index
      %c0_125 = arith.constant 0 : index
      %c0_126 = arith.constant 0 : index
      %c0_127 = arith.constant 0 : index
      %530 = vector.load %arg9[%c0_124, %c0_125, %c0_126, %c0_127] : memref<2x8x8x32xbf16, #tpu.memory_space<vmem>>, vector<2x8x8x32xbf16>
      tpu.vector_store %arg9[%c0_124, %c0_125, %c0_126, %c0_127], %529 {strides = array<i32>} : memref<2x8x8x32xbf16, #tpu.memory_space<vmem>>, vector<2x8x8x32xbf16>,
    } else {
    }
    %c0 = arith.constant 0 : index
    %c0_1 = arith.constant 0 : index
    %c0_2 = arith.constant 0 : index
    %3 = vector.load %arg7[%c0, %c0_1, %c0_2] : memref<2x8x32xf32, #tpu.memory_space<vmem>>, vector<2x8x32xf32>
    %c0_3 = arith.constant 0 : index
    %c0_4 = arith.constant 0 : index
    %c0_5 = arith.constant 0 : index
    %c0_6 = arith.constant 0 : index
    %4 = vector.load %arg9[%c0_3, %c0_4, %c0_5, %c0_6] : memref<2x8x8x32xbf16, #tpu.memory_space<vmem>>, vector<2x8x8x32xbf16>
    %c0_7 = arith.constant 0 : index
    %c0_8 = arith.constant 0 : index
    %c0_9 = arith.constant 0 : index
    %5 = vector.load %arg5[%c0_7, %c0_8, %c0_9] : memref<2x288x32xbf16, #tpu.memory_space<vmem>>, vector<1x288x32xbf16>
    %6 = vector.shape_cast %5 : vector<1x288x32xbf16> to vector<288x32xbf16>
    %7 = vector.extract_strided_slice %3 {offsets = [0, 0, 0], sizes = [1, 1, 32], strides = [1, 1, 1]} : vector<2x8x32xf32> to vector<1x1x32xf32>
    %8 = vector.shape_cast %7 : vector<1x1x32xf32> to vector<1x32xf32>
    %9 = vector.extract_strided_slice %4 {offsets = [0, 7, 0, 0], sizes = [2, 1, 8, 32], strides = [1, 1, 1, 1]} : vector<2x8x8x32xbf16> to vector<2x1x8x32xbf16>
    %10 = vector.extract_strided_slice %4 {offsets = [0, 0, 0, 0], sizes = [2, 7, 8, 32], strides = [1, 1, 1, 1]} : vector<2x8x8x32xbf16> to vector<2x7x8x32xbf16>
    %11 = tpu.concatenate %9, %10 in 1 : vector<2x1x8x32xbf16>, vector<2x7x8x32xbf16> -> vector<2x8x8x32xbf16>
    %12 = vector.extract_strided_slice %4 {offsets = [0, 1, 0, 0], sizes = [2, 7, 8, 32], strides = [1, 1, 1, 1]} : vector<2x8x8x32xbf16> to vector<2x7x8x32xbf16>
    %13 = vector.extract_strided_slice %4 {offsets = [0, 0, 0, 0], sizes = [2, 1, 8, 32], strides = [1, 1, 1, 1]} : vector<2x8x8x32xbf16> to vector<2x1x8x32xbf16>
    %14 = tpu.concatenate %12, %13 in 1 : vector<2x7x8x32xbf16>, vector<2x1x8x32xbf16> -> vector<2x8x8x32xbf16>
    %15 = vector.extract_strided_slice %11 {offsets = [0, 0, 7, 0], sizes = [2, 8, 1, 32], strides = [1, 1, 1, 1]} : vector<2x8x8x32xbf16> to vector<2x8x1x32xbf16>
    %16 = vector.extract_strided_slice %11 {offsets = [0, 0, 0, 0], sizes = [2, 8, 7, 32], strides = [1, 1, 1, 1]} : vector<2x8x8x32xbf16> to vector<2x8x7x32xbf16>
    %17 = tpu.concatenate %15, %16 in 2 : vector<2x8x1x32xbf16>, vector<2x8x7x32xbf16> -> vector<2x8x8x32xbf16>
    %18 = vector.extract_strided_slice %11 {offsets = [0, 0, 1, 0], sizes = [2, 8, 7, 32], strides = [1, 1, 1, 1]} : vector<2x8x8x32xbf16> to vector<2x8x7x32xbf16>
    %19 = vector.extract_strided_slice %11 {offsets = [0, 0, 0, 0], sizes = [2, 8, 1, 32], strides = [1, 1, 1, 1]} : vector<2x8x8x32xbf16> to vector<2x8x1x32xbf16>
    %20 = tpu.concatenate %18, %19 in 2 : vector<2x8x7x32xbf16>, vector<2x8x1x32xbf16> -> vector<2x8x8x32xbf16>
    %21 = vector.extract_strided_slice %4 {offsets = [0, 0, 7, 0], sizes = [2, 8, 1, 32], strides = [1, 1, 1, 1]} : vector<2x8x8x32xbf16> to vector<2x8x1x32xbf16>
    %22 = vector.extract_strided_slice %4 {offsets = [0, 0, 0, 0], sizes = [2, 8, 7, 32], strides = [1, 1, 1, 1]} : vector<2x8x8x32xbf16> to vector<2x8x7x32xbf16>
    %23 = tpu.concatenate %21, %22 in 2 : vector<2x8x1x32xbf16>, vector<2x8x7x32xbf16> -> vector<2x8x8x32xbf16>
    %24 = vector.extract_strided_slice %4 {offsets = [0, 0, 1, 0], sizes = [2, 8, 7, 32], strides = [1, 1, 1, 1]} : vector<2x8x8x32xbf16> to vector<2x8x7x32xbf16>
    %25 = vector.extract_strided_slice %4 {offsets = [0, 0, 0, 0], sizes = [2, 8, 1, 32], strides = [1, 1, 1, 1]} : vector<2x8x8x32xbf16> to vector<2x8x1x32xbf16>
    %26 = tpu.concatenate %24, %25 in 2 : vector<2x8x7x32xbf16>, vector<2x8x1x32xbf16> -> vector<2x8x8x32xbf16>
    %27 = vector.extract_strided_slice %14 {offsets = [0, 0, 7, 0], sizes = [2, 8, 1, 32], strides = [1, 1, 1, 1]} : vector<2x8x8x32xbf16> to vector<2x8x1x32xbf16>
    %28 = vector.extract_strided_slice %14 {offsets = [0, 0, 0, 0], sizes = [2, 8, 7, 32], strides = [1, 1, 1, 1]} : vector<2x8x8x32xbf16> to vector<2x8x7x32xbf16>
    %29 = tpu.concatenate %27, %28 in 2 : vector<2x8x1x32xbf16>, vector<2x8x7x32xbf16> -> vector<2x8x8x32xbf16>
    %30 = vector.extract_strided_slice %14 {offsets = [0, 0, 1, 0], sizes = [2, 8, 7, 32], strides = [1, 1, 1, 1]} : vector<2x8x8x32xbf16> to vector<2x8x7x32xbf16>
    %31 = vector.extract_strided_slice %14 {offsets = [0, 0, 0, 0], sizes = [2, 8, 1, 32], strides = [1, 1, 1, 1]} : vector<2x8x8x32xbf16> to vector<2x8x1x32xbf16>
    %32 = tpu.concatenate %30, %31 in 2 : vector<2x8x7x32xbf16>, vector<2x8x1x32xbf16> -> vector<2x8x8x32xbf16>
    %cst = arith.constant 0.000000e+00 : f32
    %33 = vector.broadcast %cst : f32 to vector<128x32xf32>
    %34 = vector.shape_cast %17 : vector<2x8x8x32xbf16> to vector<128x32xbf16>
    %35 = vector.extract_strided_slice %6 {offsets = [0, 0], sizes = [32, 32], strides = [1, 1]} : vector<288x32xbf16> to vector<32x32xbf16>
    %cst_10 = arith.constant dense<0.000000e+00> : vector<128x32xf32>
    %36 = tpu.matmul %34, %35, %cst_10 {dimension_numbers = #tpu.dot_dimension_numbers<[1], [0], [0], [1], [0, 0, 1, 1], [], []>} : vector<128x32xbf16>, vector<32x32xbf16>, vector<128x32xf32> -> vector<128x32xf32>
    %37 = arith.addf %33, %36 : vector<128x32xf32>
    %38 = vector.shape_cast %11 : vector<2x8x8x32xbf16> to vector<128x32xbf16>
    %39 = vector.extract_strided_slice %6 {offsets = [32, 0], sizes = [32, 32], strides = [1, 1]} : vector<288x32xbf16> to vector<32x32xbf16>
    %cst_11 = arith.constant dense<0.000000e+00> : vector<128x32xf32>
    %40 = tpu.matmul %38, %39, %cst_11 {dimension_numbers = #tpu.dot_dimension_numbers<[1], [0], [0], [1], [0, 0, 1, 1], [], []>} : vector<128x32xbf16>, vector<32x32xbf16>, vector<128x32xf32> -> vector<128x32xf32>
    %41 = arith.addf %37, %40 : vector<128x32xf32>
    %42 = vector.shape_cast %20 : vector<2x8x8x32xbf16> to vector<128x32xbf16>
    %43 = vector.extract_strided_slice %6 {offsets = [64, 0], sizes = [32, 32], strides = [1, 1]} : vector<288x32xbf16> to vector<32x32xbf16>
    %cst_12 = arith.constant dense<0.000000e+00> : vector<128x32xf32>
    %44 = tpu.matmul %42, %43, %cst_12 {dimension_numbers = #tpu.dot_dimension_numbers<[1], [0], [0], [1], [0, 0, 1, 1], [], []>} : vector<128x32xbf16>, vector<32x32xbf16>, vector<128x32xf32> -> vector<128x32xf32>
    %45 = arith.addf %41, %44 : vector<128x32xf32>
    %46 = vector.shape_cast %23 : vector<2x8x8x32xbf16> to vector<128x32xbf16>
    %47 = vector.extract_strided_slice %6 {offsets = [96, 0], sizes = [32, 32], strides = [1, 1]} : vector<288x32xbf16> to vector<32x32xbf16>
    %cst_13 = arith.constant dense<0.000000e+00> : vector<128x32xf32>
    %48 = tpu.matmul %46, %47, %cst_13 {dimension_numbers = #tpu.dot_dimension_numbers<[1], [0], [0], [1], [0, 0, 1, 1], [], []>} : vector<128x32xbf16>, vector<32x32xbf16>, vector<128x32xf32> -> vector<128x32xf32>
    %49 = arith.addf %45, %48 : vector<128x32xf32>
    %50 = vector.shape_cast %4 : vector<2x8x8x32xbf16> to vector<128x32xbf16>
    %51 = vector.extract_strided_slice %6 {offsets = [128, 0], sizes = [32, 32], strides = [1, 1]} : vector<288x32xbf16> to vector<32x32xbf16>
    %cst_14 = arith.constant dense<0.000000e+00> : vector<128x32xf32>
    %52 = tpu.matmul %50, %51, %cst_14 {dimension_numbers = #tpu.dot_dimension_numbers<[1], [0], [0], [1], [0, 0, 1, 1], [], []>} : vector<128x32xbf16>, vector<32x32xbf16>, vector<128x32xf32> -> vector<128x32xf32>
    %53 = arith.addf %49, %52 : vector<128x32xf32>
    %54 = vector.shape_cast %26 : vector<2x8x8x32xbf16> to vector<128x32xbf16>
    %55 = vector.extract_strided_slice %6 {offsets = [160, 0], sizes = [32, 32], strides = [1, 1]} : vector<288x32xbf16> to vector<32x32xbf16>
    %cst_15 = arith.constant dense<0.000000e+00> : vector<128x32xf32>
    %56 = tpu.matmul %54, %55, %cst_15 {dimension_numbers = #tpu.dot_dimension_numbers<[1], [0], [0], [1], [0, 0, 1, 1], [], []>} : vector<128x32xbf16>, vector<32x32xbf16>, vector<128x32xf32> -> vector<128x32xf32>
    %57 = arith.addf %53, %56 : vector<128x32xf32>
    %58 = vector.shape_cast %29 : vector<2x8x8x32xbf16> to vector<128x32xbf16>
    %59 = vector.extract_strided_slice %6 {offsets = [192, 0], sizes = [32, 32], strides = [1, 1]} : vector<288x32xbf16> to vector<32x32xbf16>
    %cst_16 = arith.constant dense<0.000000e+00> : vector<128x32xf32>
    %60 = tpu.matmul %58, %59, %cst_16 {dimension_numbers = #tpu.dot_dimension_numbers<[1], [0], [0], [1], [0, 0, 1, 1], [], []>} : vector<128x32xbf16>, vector<32x32xbf16>, vector<128x32xf32> -> vector<128x32xf32>
    %61 = arith.addf %57, %60 : vector<128x32xf32>
    %62 = vector.shape_cast %14 : vector<2x8x8x32xbf16> to vector<128x32xbf16>
    %63 = vector.extract_strided_slice %6 {offsets = [224, 0], sizes = [32, 32], strides = [1, 1]} : vector<288x32xbf16> to vector<32x32xbf16>
    %cst_17 = arith.constant dense<0.000000e+00> : vector<128x32xf32>
    %64 = tpu.matmul %62, %63, %cst_17 {dimension_numbers = #tpu.dot_dimension_numbers<[1], [0], [0], [1], [0, 0, 1, 1], [], []>} : vector<128x32xbf16>, vector<32x32xbf16>, vector<128x32xf32> -> vector<128x32xf32>
    %65 = arith.addf %61, %64 : vector<128x32xf32>
    %66 = vector.shape_cast %32 : vector<2x8x8x32xbf16> to vector<128x32xbf16>
    %67 = vector.extract_strided_slice %6 {offsets = [256, 0], sizes = [32, 32], strides = [1, 1]} : vector<288x32xbf16> to vector<32x32xbf16>
    %cst_18 = arith.constant dense<0.000000e+00> : vector<128x32xf32>
    %68 = tpu.matmul %66, %67, %cst_18 {dimension_numbers = #tpu.dot_dimension_numbers<[1], [0], [0], [1], [0, 0, 1, 1], [], []>} : vector<128x32xbf16>, vector<32x32xbf16>, vector<128x32xf32> -> vector<128x32xf32>
    %69 = arith.addf %65, %68 : vector<128x32xf32>
    %70 = vector.broadcast %8 : vector<1x32xf32> to vector<128x32xf32>
    %71 = arith.addf %69, %70 : vector<128x32xf32>
    %72 = vector.extract_strided_slice %3 {offsets = [0, 1, 0], sizes = [1, 1, 32], strides = [1, 1, 1]} : vector<2x8x32xf32> to vector<1x1x32xf32>
    %73 = vector.shape_cast %72 : vector<1x1x32xf32> to vector<1x32xf32>
    %74 = vector.extract_strided_slice %3 {offsets = [0, 2, 0], sizes = [1, 1, 32], strides = [1, 1, 1]} : vector<2x8x32xf32> to vector<1x1x32xf32>
    %75 = vector.shape_cast %74 : vector<1x1x32xf32> to vector<1x32xf32>
    %76 = vector.shape_cast %71 : vector<128x32xf32> to vector<2x64x32xf32>
    %cst_19 = arith.constant dense<0.000000e+00> : vector<2x32xf32>
    %77 = vector.multi_reduction <add>, %76, %cst_19 [1] : vector<2x64x32xf32> to vector<2x32xf32>
    %78 = vector.shape_cast %77 : vector<2x32xf32> to vector<2x1x32xf32>
    %cst_20 = arith.constant 6.400000e+01 : f32
    %79 = vector.broadcast %cst_20 : f32 to vector<2x1x32xf32>
    %80 = arith.divf %78, %79 : vector<2x1x32xf32>
    %81 = arith.mulf %76, %76 : vector<2x64x32xf32>
    %cst_21 = arith.constant dense<0.000000e+00> : vector<2x32xf32>
    %82 = vector.multi_reduction <add>, %81, %cst_21 [1] : vector<2x64x32xf32> to vector<2x32xf32>
    %83 = vector.shape_cast %82 : vector<2x32xf32> to vector<2x1x32xf32>
    %cst_22 = arith.constant 6.400000e+01 : f32
    %84 = vector.broadcast %cst_22 : f32 to vector<2x1x32xf32>
    %85 = arith.divf %83, %84 : vector<2x1x32xf32>
    %86 = arith.mulf %80, %80 : vector<2x1x32xf32>
    %87 = arith.subf %85, %86 : vector<2x1x32xf32>
    %cst_23 = arith.constant 0.000000e+00 : f32
    %88 = vector.broadcast %cst_23 : f32 to vector<2x1x32xf32>
    %89 = arith.maximumf %87, %88 : vector<2x1x32xf32>
    %90 = vector.broadcast %80 : vector<2x1x32xf32> to vector<2x64x32xf32>
    %91 = arith.subf %76, %90 : vector<2x64x32xf32>
    %cst_24 = arith.constant 9.99999974E-6 : f32
    %92 = vector.broadcast %cst_24 : f32 to vector<2x1x32xf32>
    %93 = arith.addf %89, %92 : vector<2x1x32xf32>
    %94 = math.rsqrt %93 : vector<2x1x32xf32>
    %95 = vector.broadcast %94 : vector<2x1x32xf32> to vector<2x64x32xf32>
    %96 = arith.mulf %91, %95 : vector<2x64x32xf32>
    %97 = vector.shape_cast %73 : vector<1x32xf32> to vector<1x1x32xf32>
    %98 = vector.broadcast %97 : vector<1x1x32xf32> to vector<2x64x32xf32>
    %99 = arith.mulf %96, %98 : vector<2x64x32xf32>
    %100 = vector.shape_cast %75 : vector<1x32xf32> to vector<1x1x32xf32>
    %101 = vector.broadcast %100 : vector<1x1x32xf32> to vector<2x64x32xf32>
    %102 = arith.addf %99, %101 : vector<2x64x32xf32>
    %103 = vector.shape_cast %102 : vector<2x64x32xf32> to vector<128x32xf32>
    %cst_25 = arith.constant 0.000000e+00 : f32
    %104 = vector.broadcast %cst_25 : f32 to vector<128x32xf32>
    %105 = arith.maximumf %103, %104 : vector<128x32xf32>
    %106 = vector.shape_cast %105 : vector<128x32xf32> to vector<2x8x8x32xf32>
    %107 = arith.truncf %106 : vector<2x8x8x32xf32> to vector<2x8x8x32xbf16>
    %c0_26 = arith.constant 0 : index
    %c0_27 = arith.constant 0 : index
    %c0_28 = arith.constant 0 : index
    %108 = vector.load %arg6[%c0_26, %c0_27, %c0_28] : memref<2x288x32xbf16, #tpu.memory_space<vmem>>, vector<1x288x32xbf16>
    %109 = vector.shape_cast %108 : vector<1x288x32xbf16> to vector<288x32xbf16>
    %110 = vector.extract_strided_slice %3 {offsets = [0, 3, 0], sizes = [1, 1, 32], strides = [1, 1, 1]} : vector<2x8x32xf32> to vector<1x1x32xf32>
    %111 = vector.shape_cast %110 : vector<1x1x32xf32> to vector<1x32xf32>
    %112 = vector.extract_strided_slice %107 {offsets = [0, 7, 0, 0], sizes = [2, 1, 8, 32], strides = [1, 1, 1, 1]} : vector<2x8x8x32xbf16> to vector<2x1x8x32xbf16>
    %113 = vector.extract_strided_slice %107 {offsets = [0, 0, 0, 0], sizes = [2, 7, 8, 32], strides = [1, 1, 1, 1]} : vector<2x8x8x32xbf16> to vector<2x7x8x32xbf16>
    %114 = tpu.concatenate %112, %113 in 1 : vector<2x1x8x32xbf16>, vector<2x7x8x32xbf16> -> vector<2x8x8x32xbf16>
    %115 = vector.extract_strided_slice %107 {offsets = [0, 1, 0, 0], sizes = [2, 7, 8, 32], strides = [1, 1, 1, 1]} : vector<2x8x8x32xbf16> to vector<2x7x8x32xbf16>
    %116 = vector.extract_strided_slice %107 {offsets = [0, 0, 0, 0], sizes = [2, 1, 8, 32], strides = [1, 1, 1, 1]} : vector<2x8x8x32xbf16> to vector<2x1x8x32xbf16>
    %117 = tpu.concatenate %115, %116 in 1 : vector<2x7x8x32xbf16>, vector<2x1x8x32xbf16> -> vector<2x8x8x32xbf16>
    %118 = vector.extract_strided_slice %114 {offsets = [0, 0, 7, 0], sizes = [2, 8, 1, 32], strides = [1, 1, 1, 1]} : vector<2x8x8x32xbf16> to vector<2x8x1x32xbf16>
    %119 = vector.extract_strided_slice %114 {offsets = [0, 0, 0, 0], sizes = [2, 8, 7, 32], strides = [1, 1, 1, 1]} : vector<2x8x8x32xbf16> to vector<2x8x7x32xbf16>
    %120 = tpu.concatenate %118, %119 in 2 : vector<2x8x1x32xbf16>, vector<2x8x7x32xbf16> -> vector<2x8x8x32xbf16>
    %121 = vector.extract_strided_slice %114 {offsets = [0, 0, 1, 0], sizes = [2, 8, 7, 32], strides = [1, 1, 1, 1]} : vector<2x8x8x32xbf16> to vector<2x8x7x32xbf16>
    %122 = vector.extract_strided_slice %114 {offsets = [0, 0, 0, 0], sizes = [2, 8, 1, 32], strides = [1, 1, 1, 1]} : vector<2x8x8x32xbf16> to vector<2x8x1x32xbf16>
    %123 = tpu.concatenate %121, %122 in 2 : vector<2x8x7x32xbf16>, vector<2x8x1x32xbf16> -> vector<2x8x8x32xbf16>
    %124 = vector.extract_strided_slice %107 {offsets = [0, 0, 7, 0], sizes = [2, 8, 1, 32], strides = [1, 1, 1, 1]} : vector<2x8x8x32xbf16> to vector<2x8x1x32xbf16>
    %125 = vector.extract_strided_slice %107 {offsets = [0, 0, 0, 0], sizes = [2, 8, 7, 32], strides = [1, 1, 1, 1]} : vector<2x8x8x32xbf16> to vector<2x8x7x32xbf16>
    %126 = tpu.concatenate %124, %125 in 2 : vector<2x8x1x32xbf16>, vector<2x8x7x32xbf16> -> vector<2x8x8x32xbf16>
    %127 = vector.extract_strided_slice %107 {offsets = [0, 0, 1, 0], sizes = [2, 8, 7, 32], strides = [1, 1, 1, 1]} : vector<2x8x8x32xbf16> to vector<2x8x7x32xbf16>
    %128 = vector.extract_strided_slice %107 {offsets = [0, 0, 0, 0], sizes = [2, 8, 1, 32], strides = [1, 1, 1, 1]} : vector<2x8x8x32xbf16> to vector<2x8x1x32xbf16>
    %129 = tpu.concatenate %127, %128 in 2 : vector<2x8x7x32xbf16>, vector<2x8x1x32xbf16> -> vector<2x8x8x32xbf16>
    %130 = vector.extract_strided_slice %117 {offsets = [0, 0, 7, 0], sizes = [2, 8, 1, 32], strides = [1, 1, 1, 1]} : vector<2x8x8x32xbf16> to vector<2x8x1x32xbf16>
    %131 = vector.extract_strided_slice %117 {offsets = [0, 0, 0, 0], sizes = [2, 8, 7, 32], strides = [1, 1, 1, 1]} : vector<2x8x8x32xbf16> to vector<2x8x7x32xbf16>
    %132 = tpu.concatenate %130, %131 in 2 : vector<2x8x1x32xbf16>, vector<2x8x7x32xbf16> -> vector<2x8x8x32xbf16>
    %133 = vector.extract_strided_slice %117 {offsets = [0, 0, 1, 0], sizes = [2, 8, 7, 32], strides = [1, 1, 1, 1]} : vector<2x8x8x32xbf16> to vector<2x8x7x32xbf16>
    %134 = vector.extract_strided_slice %117 {offsets = [0, 0, 0, 0], sizes = [2, 8, 1, 32], strides = [1, 1, 1, 1]} : vector<2x8x8x32xbf16> to vector<2x8x1x32xbf16>
    %135 = tpu.concatenate %133, %134 in 2 : vector<2x8x7x32xbf16>, vector<2x8x1x32xbf16> -> vector<2x8x8x32xbf16>
    %cst_29 = arith.constant 0.000000e+00 : f32
    %136 = vector.broadcast %cst_29 : f32 to vector<128x32xf32>
    %137 = vector.shape_cast %120 : vector<2x8x8x32xbf16> to vector<128x32xbf16>
    %138 = vector.extract_strided_slice %109 {offsets = [0, 0], sizes = [32, 32], strides = [1, 1]} : vector<288x32xbf16> to vector<32x32xbf16>
    %cst_30 = arith.constant dense<0.000000e+00> : vector<128x32xf32>
    %139 = tpu.matmul %137, %138, %cst_30 {dimension_numbers = #tpu.dot_dimension_numbers<[1], [0], [0], [1], [0, 0, 1, 1], [], []>} : vector<128x32xbf16>, vector<32x32xbf16>, vector<128x32xf32> -> vector<128x32xf32>
    %140 = arith.addf %136, %139 : vector<128x32xf32>
    %141 = vector.shape_cast %114 : vector<2x8x8x32xbf16> to vector<128x32xbf16>
    %142 = vector.extract_strided_slice %109 {offsets = [32, 0], sizes = [32, 32], strides = [1, 1]} : vector<288x32xbf16> to vector<32x32xbf16>
    %cst_31 = arith.constant dense<0.000000e+00> : vector<128x32xf32>
    %143 = tpu.matmul %141, %142, %cst_31 {dimension_numbers = #tpu.dot_dimension_numbers<[1], [0], [0], [1], [0, 0, 1, 1], [], []>} : vector<128x32xbf16>, vector<32x32xbf16>, vector<128x32xf32> -> vector<128x32xf32>
    %144 = arith.addf %140, %143 : vector<128x32xf32>
    %145 = vector.shape_cast %123 : vector<2x8x8x32xbf16> to vector<128x32xbf16>
    %146 = vector.extract_strided_slice %109 {offsets = [64, 0], sizes = [32, 32], strides = [1, 1]} : vector<288x32xbf16> to vector<32x32xbf16>
    %cst_32 = arith.constant dense<0.000000e+00> : vector<128x32xf32>
    %147 = tpu.matmul %145, %146, %cst_32 {dimension_numbers = #tpu.dot_dimension_numbers<[1], [0], [0], [1], [0, 0, 1, 1], [], []>} : vector<128x32xbf16>, vector<32x32xbf16>, vector<128x32xf32> -> vector<128x32xf32>
    %148 = arith.addf %144, %147 : vector<128x32xf32>
    %149 = vector.shape_cast %126 : vector<2x8x8x32xbf16> to vector<128x32xbf16>
    %150 = vector.extract_strided_slice %109 {offsets = [96, 0], sizes = [32, 32], strides = [1, 1]} : vector<288x32xbf16> to vector<32x32xbf16>
    %cst_33 = arith.constant dense<0.000000e+00> : vector<128x32xf32>
    %151 = tpu.matmul %149, %150, %cst_33 {dimension_numbers = #tpu.dot_dimension_numbers<[1], [0], [0], [1], [0, 0, 1, 1], [], []>} : vector<128x32xbf16>, vector<32x32xbf16>, vector<128x32xf32> -> vector<128x32xf32>
    %152 = arith.addf %148, %151 : vector<128x32xf32>
    %153 = vector.shape_cast %107 : vector<2x8x8x32xbf16> to vector<128x32xbf16>
    %154 = vector.extract_strided_slice %109 {offsets = [128, 0], sizes = [32, 32], strides = [1, 1]} : vector<288x32xbf16> to vector<32x32xbf16>
    %cst_34 = arith.constant dense<0.000000e+00> : vector<128x32xf32>
    %155 = tpu.matmul %153, %154, %cst_34 {dimension_numbers = #tpu.dot_dimension_numbers<[1], [0], [0], [1], [0, 0, 1, 1], [], []>} : vector<128x32xbf16>, vector<32x32xbf16>, vector<128x32xf32> -> vector<128x32xf32>
    %156 = arith.addf %152, %155 : vector<128x32xf32>
    %157 = vector.shape_cast %129 : vector<2x8x8x32xbf16> to vector<128x32xbf16>
    %158 = vector.extract_strided_slice %109 {offsets = [160, 0], sizes = [32, 32], strides = [1, 1]} : vector<288x32xbf16> to vector<32x32xbf16>
    %cst_35 = arith.constant dense<0.000000e+00> : vector<128x32xf32>
    %159 = tpu.matmul %157, %158, %cst_35 {dimension_numbers = #tpu.dot_dimension_numbers<[1], [0], [0], [1], [0, 0, 1, 1], [], []>} : vector<128x32xbf16>, vector<32x32xbf16>, vector<128x32xf32> -> vector<128x32xf32>
    %160 = arith.addf %156, %159 : vector<128x32xf32>
    %161 = vector.shape_cast %132 : vector<2x8x8x32xbf16> to vector<128x32xbf16>
    %162 = vector.extract_strided_slice %109 {offsets = [192, 0], sizes = [32, 32], strides = [1, 1]} : vector<288x32xbf16> to vector<32x32xbf16>
    %cst_36 = arith.constant dense<0.000000e+00> : vector<128x32xf32>
    %163 = tpu.matmul %161, %162, %cst_36 {dimension_numbers = #tpu.dot_dimension_numbers<[1], [0], [0], [1], [0, 0, 1, 1], [], []>} : vector<128x32xbf16>, vector<32x32xbf16>, vector<128x32xf32> -> vector<128x32xf32>
    %164 = arith.addf %160, %163 : vector<128x32xf32>
    %165 = vector.shape_cast %117 : vector<2x8x8x32xbf16> to vector<128x32xbf16>
    %166 = vector.extract_strided_slice %109 {offsets = [224, 0], sizes = [32, 32], strides = [1, 1]} : vector<288x32xbf16> to vector<32x32xbf16>
    %cst_37 = arith.constant dense<0.000000e+00> : vector<128x32xf32>
    %167 = tpu.matmul %165, %166, %cst_37 {dimension_numbers = #tpu.dot_dimension_numbers<[1], [0], [0], [1], [0, 0, 1, 1], [], []>} : vector<128x32xbf16>, vector<32x32xbf16>, vector<128x32xf32> -> vector<128x32xf32>
    %168 = arith.addf %164, %167 : vector<128x32xf32>
    %169 = vector.shape_cast %135 : vector<2x8x8x32xbf16> to vector<128x32xbf16>
    %170 = vector.extract_strided_slice %109 {offsets = [256, 0], sizes = [32, 32], strides = [1, 1]} : vector<288x32xbf16> to vector<32x32xbf16>
    %cst_38 = arith.constant dense<0.000000e+00> : vector<128x32xf32>
    %171 = tpu.matmul %169, %170, %cst_38 {dimension_numbers = #tpu.dot_dimension_numbers<[1], [0], [0], [1], [0, 0, 1, 1], [], []>} : vector<128x32xbf16>, vector<32x32xbf16>, vector<128x32xf32> -> vector<128x32xf32>
    %172 = arith.addf %168, %171 : vector<128x32xf32>
    %173 = vector.broadcast %111 : vector<1x32xf32> to vector<128x32xf32>
    %174 = arith.addf %172, %173 : vector<128x32xf32>
    %175 = vector.extract_strided_slice %3 {offsets = [0, 4, 0], sizes = [1, 1, 32], strides = [1, 1, 1]} : vector<2x8x32xf32> to vector<1x1x32xf32>
    %176 = vector.shape_cast %175 : vector<1x1x32xf32> to vector<1x32xf32>
    %177 = vector.extract_strided_slice %3 {offsets = [0, 5, 0], sizes = [1, 1, 32], strides = [1, 1, 1]} : vector<2x8x32xf32> to vector<1x1x32xf32>
    %178 = vector.shape_cast %177 : vector<1x1x32xf32> to vector<1x32xf32>
    %179 = vector.shape_cast %174 : vector<128x32xf32> to vector<2x64x32xf32>
    %cst_39 = arith.constant dense<0.000000e+00> : vector<2x32xf32>
    %180 = vector.multi_reduction <add>, %179, %cst_39 [1] : vector<2x64x32xf32> to vector<2x32xf32>
    %181 = vector.shape_cast %180 : vector<2x32xf32> to vector<2x1x32xf32>
    %cst_40 = arith.constant 6.400000e+01 : f32
    %182 = vector.broadcast %cst_40 : f32 to vector<2x1x32xf32>
    %183 = arith.divf %181, %182 : vector<2x1x32xf32>
    %184 = arith.mulf %179, %179 : vector<2x64x32xf32>
    %cst_41 = arith.constant dense<0.000000e+00> : vector<2x32xf32>
    %185 = vector.multi_reduction <add>, %184, %cst_41 [1] : vector<2x64x32xf32> to vector<2x32xf32>
    %186 = vector.shape_cast %185 : vector<2x32xf32> to vector<2x1x32xf32>
    %cst_42 = arith.constant 6.400000e+01 : f32
    %187 = vector.broadcast %cst_42 : f32 to vector<2x1x32xf32>
    %188 = arith.divf %186, %187 : vector<2x1x32xf32>
    %189 = arith.mulf %183, %183 : vector<2x1x32xf32>
    %190 = arith.subf %188, %189 : vector<2x1x32xf32>
    %cst_43 = arith.constant 0.000000e+00 : f32
    %191 = vector.broadcast %cst_43 : f32 to vector<2x1x32xf32>
    %192 = arith.maximumf %190, %191 : vector<2x1x32xf32>
    %193 = vector.broadcast %183 : vector<2x1x32xf32> to vector<2x64x32xf32>
    %194 = arith.subf %179, %193 : vector<2x64x32xf32>
    %cst_44 = arith.constant 9.99999974E-6 : f32
    %195 = vector.broadcast %cst_44 : f32 to vector<2x1x32xf32>
    %196 = arith.addf %192, %195 : vector<2x1x32xf32>
    %197 = math.rsqrt %196 : vector<2x1x32xf32>
    %198 = vector.broadcast %197 : vector<2x1x32xf32> to vector<2x64x32xf32>
    %199 = arith.mulf %194, %198 : vector<2x64x32xf32>
    %200 = vector.shape_cast %176 : vector<1x32xf32> to vector<1x1x32xf32>
    %201 = vector.broadcast %200 : vector<1x1x32xf32> to vector<2x64x32xf32>
    %202 = arith.mulf %199, %201 : vector<2x64x32xf32>
    %203 = vector.shape_cast %178 : vector<1x32xf32> to vector<1x1x32xf32>
    %204 = vector.broadcast %203 : vector<1x1x32xf32> to vector<2x64x32xf32>
    %205 = arith.addf %202, %204 : vector<2x64x32xf32>
    %206 = vector.shape_cast %205 : vector<2x64x32xf32> to vector<128x32xf32>
    %207 = vector.shape_cast %4 : vector<2x8x8x32xbf16> to vector<128x32xbf16>
    %208 = arith.extf %207 : vector<128x32xbf16> to vector<128x32xf32>
    %209 = arith.addf %208, %206 : vector<128x32xf32>
    %cst_45 = arith.constant 0.000000e+00 : f32
    %210 = vector.broadcast %cst_45 : f32 to vector<128x32xf32>
    %211 = arith.maximumf %209, %210 : vector<128x32xf32>
    %212 = vector.shape_cast %211 : vector<128x32xf32> to vector<2x8x8x32xf32>
    %213 = arith.truncf %212 : vector<2x8x8x32xf32> to vector<2x8x8x32xbf16>
    %c0_46 = arith.constant 0 : index
    %c0_47 = arith.constant 0 : index
    %c0_48 = arith.constant 0 : index
    %c0_49 = arith.constant 0 : index
    %214 = vector.load %arg9[%c0_46, %c0_47, %c0_48, %c0_49] : memref<2x8x8x32xbf16, #tpu.memory_space<vmem>>, vector<2x8x8x32xbf16>
    tpu.vector_store %arg9[%c0_46, %c0_47, %c0_48, %c0_49], %213 {strides = array<i32>} : memref<2x8x8x32xbf16, #tpu.memory_space<vmem>>, vector<2x8x8x32xbf16>,
    %c0_50 = arith.constant 0 : index
    %c0_51 = arith.constant 0 : index
    %c0_52 = arith.constant 0 : index
    %c0_53 = arith.constant 0 : index
    %215 = vector.load %arg9[%c0_50, %c0_51, %c0_52, %c0_53] : memref<2x8x8x32xbf16, #tpu.memory_space<vmem>>, vector<2x8x8x32xbf16>
    %c1 = arith.constant 1 : index
    %c0_54 = arith.constant 0 : index
    %c0_55 = arith.constant 0 : index
    %216 = vector.load %arg5[%c1, %c0_54, %c0_55] : memref<2x288x32xbf16, #tpu.memory_space<vmem>>, vector<1x288x32xbf16>
    %217 = vector.shape_cast %216 : vector<1x288x32xbf16> to vector<288x32xbf16>
    %218 = vector.extract_strided_slice %3 {offsets = [1, 0, 0], sizes = [1, 1, 32], strides = [1, 1, 1]} : vector<2x8x32xf32> to vector<1x1x32xf32>
    %219 = vector.shape_cast %218 : vector<1x1x32xf32> to vector<1x32xf32>
    %220 = vector.extract_strided_slice %215 {offsets = [0, 7, 0, 0], sizes = [2, 1, 8, 32], strides = [1, 1, 1, 1]} : vector<2x8x8x32xbf16> to vector<2x1x8x32xbf16>
    %221 = vector.extract_strided_slice %215 {offsets = [0, 0, 0, 0], sizes = [2, 7, 8, 32], strides = [1, 1, 1, 1]} : vector<2x8x8x32xbf16> to vector<2x7x8x32xbf16>
    %222 = tpu.concatenate %220, %221 in 1 : vector<2x1x8x32xbf16>, vector<2x7x8x32xbf16> -> vector<2x8x8x32xbf16>
    %223 = vector.extract_strided_slice %215 {offsets = [0, 1, 0, 0], sizes = [2, 7, 8, 32], strides = [1, 1, 1, 1]} : vector<2x8x8x32xbf16> to vector<2x7x8x32xbf16>
    %224 = vector.extract_strided_slice %215 {offsets = [0, 0, 0, 0], sizes = [2, 1, 8, 32], strides = [1, 1, 1, 1]} : vector<2x8x8x32xbf16> to vector<2x1x8x32xbf16>
    %225 = tpu.concatenate %223, %224 in 1 : vector<2x7x8x32xbf16>, vector<2x1x8x32xbf16> -> vector<2x8x8x32xbf16>
    %226 = vector.extract_strided_slice %222 {offsets = [0, 0, 7, 0], sizes = [2, 8, 1, 32], strides = [1, 1, 1, 1]} : vector<2x8x8x32xbf16> to vector<2x8x1x32xbf16>
    %227 = vector.extract_strided_slice %222 {offsets = [0, 0, 0, 0], sizes = [2, 8, 7, 32], strides = [1, 1, 1, 1]} : vector<2x8x8x32xbf16> to vector<2x8x7x32xbf16>
    %228 = tpu.concatenate %226, %227 in 2 : vector<2x8x1x32xbf16>, vector<2x8x7x32xbf16> -> vector<2x8x8x32xbf16>
    %229 = vector.extract_strided_slice %222 {offsets = [0, 0, 1, 0], sizes = [2, 8, 7, 32], strides = [1, 1, 1, 1]} : vector<2x8x8x32xbf16> to vector<2x8x7x32xbf16>
    %230 = vector.extract_strided_slice %222 {offsets = [0, 0, 0, 0], sizes = [2, 8, 1, 32], strides = [1, 1, 1, 1]} : vector<2x8x8x32xbf16> to vector<2x8x1x32xbf16>
    %231 = tpu.concatenate %229, %230 in 2 : vector<2x8x7x32xbf16>, vector<2x8x1x32xbf16> -> vector<2x8x8x32xbf16>
    %232 = vector.extract_strided_slice %215 {offsets = [0, 0, 7, 0], sizes = [2, 8, 1, 32], strides = [1, 1, 1, 1]} : vector<2x8x8x32xbf16> to vector<2x8x1x32xbf16>
    %233 = vector.extract_strided_slice %215 {offsets = [0, 0, 0, 0], sizes = [2, 8, 7, 32], strides = [1, 1, 1, 1]} : vector<2x8x8x32xbf16> to vector<2x8x7x32xbf16>
    %234 = tpu.concatenate %232, %233 in 2 : vector<2x8x1x32xbf16>, vector<2x8x7x32xbf16> -> vector<2x8x8x32xbf16>
    %235 = vector.extract_strided_slice %215 {offsets = [0, 0, 1, 0], sizes = [2, 8, 7, 32], strides = [1, 1, 1, 1]} : vector<2x8x8x32xbf16> to vector<2x8x7x32xbf16>
    %236 = vector.extract_strided_slice %215 {offsets = [0, 0, 0, 0], sizes = [2, 8, 1, 32], strides = [1, 1, 1, 1]} : vector<2x8x8x32xbf16> to vector<2x8x1x32xbf16>
    %237 = tpu.concatenate %235, %236 in 2 : vector<2x8x7x32xbf16>, vector<2x8x1x32xbf16> -> vector<2x8x8x32xbf16>
    %238 = vector.extract_strided_slice %225 {offsets = [0, 0, 7, 0], sizes = [2, 8, 1, 32], strides = [1, 1, 1, 1]} : vector<2x8x8x32xbf16> to vector<2x8x1x32xbf16>
    %239 = vector.extract_strided_slice %225 {offsets = [0, 0, 0, 0], sizes = [2, 8, 7, 32], strides = [1, 1, 1, 1]} : vector<2x8x8x32xbf16> to vector<2x8x7x32xbf16>
    %240 = tpu.concatenate %238, %239 in 2 : vector<2x8x1x32xbf16>, vector<2x8x7x32xbf16> -> vector<2x8x8x32xbf16>
    %241 = vector.extract_strided_slice %225 {offsets = [0, 0, 1, 0], sizes = [2, 8, 7, 32], strides = [1, 1, 1, 1]} : vector<2x8x8x32xbf16> to vector<2x8x7x32xbf16>
    %242 = vector.extract_strided_slice %225 {offsets = [0, 0, 0, 0], sizes = [2, 8, 1, 32], strides = [1, 1, 1, 1]} : vector<2x8x8x32xbf16> to vector<2x8x1x32xbf16>
    %243 = tpu.concatenate %241, %242 in 2 : vector<2x8x7x32xbf16>, vector<2x8x1x32xbf16> -> vector<2x8x8x32xbf16>
    %cst_56 = arith.constant 0.000000e+00 : f32
    %244 = vector.broadcast %cst_56 : f32 to vector<128x32xf32>
    %245 = vector.shape_cast %228 : vector<2x8x8x32xbf16> to vector<128x32xbf16>
    %246 = vector.extract_strided_slice %217 {offsets = [0, 0], sizes = [32, 32], strides = [1, 1]} : vector<288x32xbf16> to vector<32x32xbf16>
    %cst_57 = arith.constant dense<0.000000e+00> : vector<128x32xf32>
    %247 = tpu.matmul %245, %246, %cst_57 {dimension_numbers = #tpu.dot_dimension_numbers<[1], [0], [0], [1], [0, 0, 1, 1], [], []>} : vector<128x32xbf16>, vector<32x32xbf16>, vector<128x32xf32> -> vector<128x32xf32>
    %248 = arith.addf %244, %247 : vector<128x32xf32>
    %249 = vector.shape_cast %222 : vector<2x8x8x32xbf16> to vector<128x32xbf16>
    %250 = vector.extract_strided_slice %217 {offsets = [32, 0], sizes = [32, 32], strides = [1, 1]} : vector<288x32xbf16> to vector<32x32xbf16>
    %cst_58 = arith.constant dense<0.000000e+00> : vector<128x32xf32>
    %251 = tpu.matmul %249, %250, %cst_58 {dimension_numbers = #tpu.dot_dimension_numbers<[1], [0], [0], [1], [0, 0, 1, 1], [], []>} : vector<128x32xbf16>, vector<32x32xbf16>, vector<128x32xf32> -> vector<128x32xf32>
    %252 = arith.addf %248, %251 : vector<128x32xf32>
    %253 = vector.shape_cast %231 : vector<2x8x8x32xbf16> to vector<128x32xbf16>
    %254 = vector.extract_strided_slice %217 {offsets = [64, 0], sizes = [32, 32], strides = [1, 1]} : vector<288x32xbf16> to vector<32x32xbf16>
    %cst_59 = arith.constant dense<0.000000e+00> : vector<128x32xf32>
    %255 = tpu.matmul %253, %254, %cst_59 {dimension_numbers = #tpu.dot_dimension_numbers<[1], [0], [0], [1], [0, 0, 1, 1], [], []>} : vector<128x32xbf16>, vector<32x32xbf16>, vector<128x32xf32> -> vector<128x32xf32>
    %256 = arith.addf %252, %255 : vector<128x32xf32>
    %257 = vector.shape_cast %234 : vector<2x8x8x32xbf16> to vector<128x32xbf16>
    %258 = vector.extract_strided_slice %217 {offsets = [96, 0], sizes = [32, 32], strides = [1, 1]} : vector<288x32xbf16> to vector<32x32xbf16>
    %cst_60 = arith.constant dense<0.000000e+00> : vector<128x32xf32>
    %259 = tpu.matmul %257, %258, %cst_60 {dimension_numbers = #tpu.dot_dimension_numbers<[1], [0], [0], [1], [0, 0, 1, 1], [], []>} : vector<128x32xbf16>, vector<32x32xbf16>, vector<128x32xf32> -> vector<128x32xf32>
    %260 = arith.addf %256, %259 : vector<128x32xf32>
    %261 = vector.shape_cast %215 : vector<2x8x8x32xbf16> to vector<128x32xbf16>
    %262 = vector.extract_strided_slice %217 {offsets = [128, 0], sizes = [32, 32], strides = [1, 1]} : vector<288x32xbf16> to vector<32x32xbf16>
    %cst_61 = arith.constant dense<0.000000e+00> : vector<128x32xf32>
    %263 = tpu.matmul %261, %262, %cst_61 {dimension_numbers = #tpu.dot_dimension_numbers<[1], [0], [0], [1], [0, 0, 1, 1], [], []>} : vector<128x32xbf16>, vector<32x32xbf16>, vector<128x32xf32> -> vector<128x32xf32>
    %264 = arith.addf %260, %263 : vector<128x32xf32>
    %265 = vector.shape_cast %237 : vector<2x8x8x32xbf16> to vector<128x32xbf16>
    %266 = vector.extract_strided_slice %217 {offsets = [160, 0], sizes = [32, 32], strides = [1, 1]} : vector<288x32xbf16> to vector<32x32xbf16>
    %cst_62 = arith.constant dense<0.000000e+00> : vector<128x32xf32>
    %267 = tpu.matmul %265, %266, %cst_62 {dimension_numbers = #tpu.dot_dimension_numbers<[1], [0], [0], [1], [0, 0, 1, 1], [], []>} : vector<128x32xbf16>, vector<32x32xbf16>, vector<128x32xf32> -> vector<128x32xf32>
    %268 = arith.addf %264, %267 : vector<128x32xf32>
    %269 = vector.shape_cast %240 : vector<2x8x8x32xbf16> to vector<128x32xbf16>
    %270 = vector.extract_strided_slice %217 {offsets = [192, 0], sizes = [32, 32], strides = [1, 1]} : vector<288x32xbf16> to vector<32x32xbf16>
    %cst_63 = arith.constant dense<0.000000e+00> : vector<128x32xf32>
    %271 = tpu.matmul %269, %270, %cst_63 {dimension_numbers = #tpu.dot_dimension_numbers<[1], [0], [0], [1], [0, 0, 1, 1], [], []>} : vector<128x32xbf16>, vector<32x32xbf16>, vector<128x32xf32> -> vector<128x32xf32>
    %272 = arith.addf %268, %271 : vector<128x32xf32>
    %273 = vector.shape_cast %225 : vector<2x8x8x32xbf16> to vector<128x32xbf16>
    %274 = vector.extract_strided_slice %217 {offsets = [224, 0], sizes = [32, 32], strides = [1, 1]} : vector<288x32xbf16> to vector<32x32xbf16>
    %cst_64 = arith.constant dense<0.000000e+00> : vector<128x32xf32>
    %275 = tpu.matmul %273, %274, %cst_64 {dimension_numbers = #tpu.dot_dimension_numbers<[1], [0], [0], [1], [0, 0, 1, 1], [], []>} : vector<128x32xbf16>, vector<32x32xbf16>, vector<128x32xf32> -> vector<128x32xf32>
    %276 = arith.addf %272, %275 : vector<128x32xf32>
    %277 = vector.shape_cast %243 : vector<2x8x8x32xbf16> to vector<128x32xbf16>
    %278 = vector.extract_strided_slice %217 {offsets = [256, 0], sizes = [32, 32], strides = [1, 1]} : vector<288x32xbf16> to vector<32x32xbf16>
    %cst_65 = arith.constant dense<0.000000e+00> : vector<128x32xf32>
    %279 = tpu.matmul %277, %278, %cst_65 {dimension_numbers = #tpu.dot_dimension_numbers<[1], [0], [0], [1], [0, 0, 1, 1], [], []>} : vector<128x32xbf16>, vector<32x32xbf16>, vector<128x32xf32> -> vector<128x32xf32>
    %280 = arith.addf %276, %279 : vector<128x32xf32>
    %281 = vector.broadcast %219 : vector<1x32xf32> to vector<128x32xf32>
    %282 = arith.addf %280, %281 : vector<128x32xf32>
    %283 = vector.extract_strided_slice %3 {offsets = [1, 1, 0], sizes = [1, 1, 32], strides = [1, 1, 1]} : vector<2x8x32xf32> to vector<1x1x32xf32>
    %284 = vector.shape_cast %283 : vector<1x1x32xf32> to vector<1x32xf32>
    %285 = vector.extract_strided_slice %3 {offsets = [1, 2, 0], sizes = [1, 1, 32], strides = [1, 1, 1]} : vector<2x8x32xf32> to vector<1x1x32xf32>
    %286 = vector.shape_cast %285 : vector<1x1x32xf32> to vector<1x32xf32>
    %287 = vector.shape_cast %282 : vector<128x32xf32> to vector<2x64x32xf32>
    %cst_66 = arith.constant dense<0.000000e+00> : vector<2x32xf32>
    %288 = vector.multi_reduction <add>, %287, %cst_66 [1] : vector<2x64x32xf32> to vector<2x32xf32>
    %289 = vector.shape_cast %288 : vector<2x32xf32> to vector<2x1x32xf32>
    %cst_67 = arith.constant 6.400000e+01 : f32
    %290 = vector.broadcast %cst_67 : f32 to vector<2x1x32xf32>
    %291 = arith.divf %289, %290 : vector<2x1x32xf32>
    %292 = arith.mulf %287, %287 : vector<2x64x32xf32>
    %cst_68 = arith.constant dense<0.000000e+00> : vector<2x32xf32>
    %293 = vector.multi_reduction <add>, %292, %cst_68 [1] : vector<2x64x32xf32> to vector<2x32xf32>
    %294 = vector.shape_cast %293 : vector<2x32xf32> to vector<2x1x32xf32>
    %cst_69 = arith.constant 6.400000e+01 : f32
    %295 = vector.broadcast %cst_69 : f32 to vector<2x1x32xf32>
    %296 = arith.divf %294, %295 : vector<2x1x32xf32>
    %297 = arith.mulf %291, %291 : vector<2x1x32xf32>
    %298 = arith.subf %296, %297 : vector<2x1x32xf32>
    %cst_70 = arith.constant 0.000000e+00 : f32
    %299 = vector.broadcast %cst_70 : f32 to vector<2x1x32xf32>
    %300 = arith.maximumf %298, %299 : vector<2x1x32xf32>
    %301 = vector.broadcast %291 : vector<2x1x32xf32> to vector<2x64x32xf32>
    %302 = arith.subf %287, %301 : vector<2x64x32xf32>
    %cst_71 = arith.constant 9.99999974E-6 : f32
    %303 = vector.broadcast %cst_71 : f32 to vector<2x1x32xf32>
    %304 = arith.addf %300, %303 : vector<2x1x32xf32>
    %305 = math.rsqrt %304 : vector<2x1x32xf32>
    %306 = vector.broadcast %305 : vector<2x1x32xf32> to vector<2x64x32xf32>
    %307 = arith.mulf %302, %306 : vector<2x64x32xf32>
    %308 = vector.shape_cast %284 : vector<1x32xf32> to vector<1x1x32xf32>
    %309 = vector.broadcast %308 : vector<1x1x32xf32> to vector<2x64x32xf32>
    %310 = arith.mulf %307, %309 : vector<2x64x32xf32>
    %311 = vector.shape_cast %286 : vector<1x32xf32> to vector<1x1x32xf32>
    %312 = vector.broadcast %311 : vector<1x1x32xf32> to vector<2x64x32xf32>
    %313 = arith.addf %310, %312 : vector<2x64x32xf32>
    %314 = vector.shape_cast %313 : vector<2x64x32xf32> to vector<128x32xf32>
    %cst_72 = arith.constant 0.000000e+00 : f32
    %315 = vector.broadcast %cst_72 : f32 to vector<128x32xf32>
    %316 = arith.maximumf %314, %315 : vector<128x32xf32>
    %317 = vector.shape_cast %316 : vector<128x32xf32> to vector<2x8x8x32xf32>
    %318 = arith.truncf %317 : vector<2x8x8x32xf32> to vector<2x8x8x32xbf16>
    %c1_73 = arith.constant 1 : index
    %c0_74 = arith.constant 0 : index
    %c0_75 = arith.constant 0 : index
    %319 = vector.load %arg6[%c1_73, %c0_74, %c0_75] : memref<2x288x32xbf16, #tpu.memory_space<vmem>>, vector<1x288x32xbf16>
    %320 = vector.shape_cast %319 : vector<1x288x32xbf16> to vector<288x32xbf16>
    %321 = vector.extract_strided_slice %3 {offsets = [1, 3, 0], sizes = [1, 1, 32], strides = [1, 1, 1]} : vector<2x8x32xf32> to vector<1x1x32xf32>
    %322 = vector.shape_cast %321 : vector<1x1x32xf32> to vector<1x32xf32>
    %323 = vector.extract_strided_slice %318 {offsets = [0, 7, 0, 0], sizes = [2, 1, 8, 32], strides = [1, 1, 1, 1]} : vector<2x8x8x32xbf16> to vector<2x1x8x32xbf16>
    %324 = vector.extract_strided_slice %318 {offsets = [0, 0, 0, 0], sizes = [2, 7, 8, 32], strides = [1, 1, 1, 1]} : vector<2x8x8x32xbf16> to vector<2x7x8x32xbf16>
    %325 = tpu.concatenate %323, %324 in 1 : vector<2x1x8x32xbf16>, vector<2x7x8x32xbf16> -> vector<2x8x8x32xbf16>
    %326 = vector.extract_strided_slice %318 {offsets = [0, 1, 0, 0], sizes = [2, 7, 8, 32], strides = [1, 1, 1, 1]} : vector<2x8x8x32xbf16> to vector<2x7x8x32xbf16>
    %327 = vector.extract_strided_slice %318 {offsets = [0, 0, 0, 0], sizes = [2, 1, 8, 32], strides = [1, 1, 1, 1]} : vector<2x8x8x32xbf16> to vector<2x1x8x32xbf16>
    %328 = tpu.concatenate %326, %327 in 1 : vector<2x7x8x32xbf16>, vector<2x1x8x32xbf16> -> vector<2x8x8x32xbf16>
    %329 = vector.extract_strided_slice %325 {offsets = [0, 0, 7, 0], sizes = [2, 8, 1, 32], strides = [1, 1, 1, 1]} : vector<2x8x8x32xbf16> to vector<2x8x1x32xbf16>
    %330 = vector.extract_strided_slice %325 {offsets = [0, 0, 0, 0], sizes = [2, 8, 7, 32], strides = [1, 1, 1, 1]} : vector<2x8x8x32xbf16> to vector<2x8x7x32xbf16>
    %331 = tpu.concatenate %329, %330 in 2 : vector<2x8x1x32xbf16>, vector<2x8x7x32xbf16> -> vector<2x8x8x32xbf16>
    %332 = vector.extract_strided_slice %325 {offsets = [0, 0, 1, 0], sizes = [2, 8, 7, 32], strides = [1, 1, 1, 1]} : vector<2x8x8x32xbf16> to vector<2x8x7x32xbf16>
    %333 = vector.extract_strided_slice %325 {offsets = [0, 0, 0, 0], sizes = [2, 8, 1, 32], strides = [1, 1, 1, 1]} : vector<2x8x8x32xbf16> to vector<2x8x1x32xbf16>
    %334 = tpu.concatenate %332, %333 in 2 : vector<2x8x7x32xbf16>, vector<2x8x1x32xbf16> -> vector<2x8x8x32xbf16>
    %335 = vector.extract_strided_slice %318 {offsets = [0, 0, 7, 0], sizes = [2, 8, 1, 32], strides = [1, 1, 1, 1]} : vector<2x8x8x32xbf16> to vector<2x8x1x32xbf16>
    %336 = vector.extract_strided_slice %318 {offsets = [0, 0, 0, 0], sizes = [2, 8, 7, 32], strides = [1, 1, 1, 1]} : vector<2x8x8x32xbf16> to vector<2x8x7x32xbf16>
    %337 = tpu.concatenate %335, %336 in 2 : vector<2x8x1x32xbf16>, vector<2x8x7x32xbf16> -> vector<2x8x8x32xbf16>
    %338 = vector.extract_strided_slice %318 {offsets = [0, 0, 1, 0], sizes = [2, 8, 7, 32], strides = [1, 1, 1, 1]} : vector<2x8x8x32xbf16> to vector<2x8x7x32xbf16>
    %339 = vector.extract_strided_slice %318 {offsets = [0, 0, 0, 0], sizes = [2, 8, 1, 32], strides = [1, 1, 1, 1]} : vector<2x8x8x32xbf16> to vector<2x8x1x32xbf16>
    %340 = tpu.concatenate %338, %339 in 2 : vector<2x8x7x32xbf16>, vector<2x8x1x32xbf16> -> vector<2x8x8x32xbf16>
    %341 = vector.extract_strided_slice %328 {offsets = [0, 0, 7, 0], sizes = [2, 8, 1, 32], strides = [1, 1, 1, 1]} : vector<2x8x8x32xbf16> to vector<2x8x1x32xbf16>
    %342 = vector.extract_strided_slice %328 {offsets = [0, 0, 0, 0], sizes = [2, 8, 7, 32], strides = [1, 1, 1, 1]} : vector<2x8x8x32xbf16> to vector<2x8x7x32xbf16>
    %343 = tpu.concatenate %341, %342 in 2 : vector<2x8x1x32xbf16>, vector<2x8x7x32xbf16> -> vector<2x8x8x32xbf16>
    %344 = vector.extract_strided_slice %328 {offsets = [0, 0, 1, 0], sizes = [2, 8, 7, 32], strides = [1, 1, 1, 1]} : vector<2x8x8x32xbf16> to vector<2x8x7x32xbf16>
    %345 = vector.extract_strided_slice %328 {offsets = [0, 0, 0, 0], sizes = [2, 8, 1, 32], strides = [1, 1, 1, 1]} : vector<2x8x8x32xbf16> to vector<2x8x1x32xbf16>
    %346 = tpu.concatenate %344, %345 in 2 : vector<2x8x7x32xbf16>, vector<2x8x1x32xbf16> -> vector<2x8x8x32xbf16>
    %cst_76 = arith.constant 0.000000e+00 : f32
    %347 = vector.broadcast %cst_76 : f32 to vector<128x32xf32>
    %348 = vector.shape_cast %331 : vector<2x8x8x32xbf16> to vector<128x32xbf16>
    %349 = vector.extract_strided_slice %320 {offsets = [0, 0], sizes = [32, 32], strides = [1, 1]} : vector<288x32xbf16> to vector<32x32xbf16>
    %cst_77 = arith.constant dense<0.000000e+00> : vector<128x32xf32>
    %350 = tpu.matmul %348, %349, %cst_77 {dimension_numbers = #tpu.dot_dimension_numbers<[1], [0], [0], [1], [0, 0, 1, 1], [], []>} : vector<128x32xbf16>, vector<32x32xbf16>, vector<128x32xf32> -> vector<128x32xf32>
    %351 = arith.addf %347, %350 : vector<128x32xf32>
    %352 = vector.shape_cast %325 : vector<2x8x8x32xbf16> to vector<128x32xbf16>
    %353 = vector.extract_strided_slice %320 {offsets = [32, 0], sizes = [32, 32], strides = [1, 1]} : vector<288x32xbf16> to vector<32x32xbf16>
    %cst_78 = arith.constant dense<0.000000e+00> : vector<128x32xf32>
    %354 = tpu.matmul %352, %353, %cst_78 {dimension_numbers = #tpu.dot_dimension_numbers<[1], [0], [0], [1], [0, 0, 1, 1], [], []>} : vector<128x32xbf16>, vector<32x32xbf16>, vector<128x32xf32> -> vector<128x32xf32>
    %355 = arith.addf %351, %354 : vector<128x32xf32>
    %356 = vector.shape_cast %334 : vector<2x8x8x32xbf16> to vector<128x32xbf16>
    %357 = vector.extract_strided_slice %320 {offsets = [64, 0], sizes = [32, 32], strides = [1, 1]} : vector<288x32xbf16> to vector<32x32xbf16>
    %cst_79 = arith.constant dense<0.000000e+00> : vector<128x32xf32>
    %358 = tpu.matmul %356, %357, %cst_79 {dimension_numbers = #tpu.dot_dimension_numbers<[1], [0], [0], [1], [0, 0, 1, 1], [], []>} : vector<128x32xbf16>, vector<32x32xbf16>, vector<128x32xf32> -> vector<128x32xf32>
    %359 = arith.addf %355, %358 : vector<128x32xf32>
    %360 = vector.shape_cast %337 : vector<2x8x8x32xbf16> to vector<128x32xbf16>
    %361 = vector.extract_strided_slice %320 {offsets = [96, 0], sizes = [32, 32], strides = [1, 1]} : vector<288x32xbf16> to vector<32x32xbf16>
    %cst_80 = arith.constant dense<0.000000e+00> : vector<128x32xf32>
    %362 = tpu.matmul %360, %361, %cst_80 {dimension_numbers = #tpu.dot_dimension_numbers<[1], [0], [0], [1], [0, 0, 1, 1], [], []>} : vector<128x32xbf16>, vector<32x32xbf16>, vector<128x32xf32> -> vector<128x32xf32>
    %363 = arith.addf %359, %362 : vector<128x32xf32>
    %364 = vector.shape_cast %318 : vector<2x8x8x32xbf16> to vector<128x32xbf16>
    %365 = vector.extract_strided_slice %320 {offsets = [128, 0], sizes = [32, 32], strides = [1, 1]} : vector<288x32xbf16> to vector<32x32xbf16>
    %cst_81 = arith.constant dense<0.000000e+00> : vector<128x32xf32>
    %366 = tpu.matmul %364, %365, %cst_81 {dimension_numbers = #tpu.dot_dimension_numbers<[1], [0], [0], [1], [0, 0, 1, 1], [], []>} : vector<128x32xbf16>, vector<32x32xbf16>, vector<128x32xf32> -> vector<128x32xf32>
    %367 = arith.addf %363, %366 : vector<128x32xf32>
    %368 = vector.shape_cast %340 : vector<2x8x8x32xbf16> to vector<128x32xbf16>
    %369 = vector.extract_strided_slice %320 {offsets = [160, 0], sizes = [32, 32], strides = [1, 1]} : vector<288x32xbf16> to vector<32x32xbf16>
    %cst_82 = arith.constant dense<0.000000e+00> : vector<128x32xf32>
    %370 = tpu.matmul %368, %369, %cst_82 {dimension_numbers = #tpu.dot_dimension_numbers<[1], [0], [0], [1], [0, 0, 1, 1], [], []>} : vector<128x32xbf16>, vector<32x32xbf16>, vector<128x32xf32> -> vector<128x32xf32>
    %371 = arith.addf %367, %370 : vector<128x32xf32>
    %372 = vector.shape_cast %343 : vector<2x8x8x32xbf16> to vector<128x32xbf16>
    %373 = vector.extract_strided_slice %320 {offsets = [192, 0], sizes = [32, 32], strides = [1, 1]} : vector<288x32xbf16> to vector<32x32xbf16>
    %cst_83 = arith.constant dense<0.000000e+00> : vector<128x32xf32>
    %374 = tpu.matmul %372, %373, %cst_83 {dimension_numbers = #tpu.dot_dimension_numbers<[1], [0], [0], [1], [0, 0, 1, 1], [], []>} : vector<128x32xbf16>, vector<32x32xbf16>, vector<128x32xf32> -> vector<128x32xf32>
    %375 = arith.addf %371, %374 : vector<128x32xf32>
    %376 = vector.shape_cast %328 : vector<2x8x8x32xbf16> to vector<128x32xbf16>
    %377 = vector.extract_strided_slice %320 {offsets = [224, 0], sizes = [32, 32], strides = [1, 1]} : vector<288x32xbf16> to vector<32x32xbf16>
    %cst_84 = arith.constant dense<0.000000e+00> : vector<128x32xf32>
    %378 = tpu.matmul %376, %377, %cst_84 {dimension_numbers = #tpu.dot_dimension_numbers<[1], [0], [0], [1], [0, 0, 1, 1], [], []>} : vector<128x32xbf16>, vector<32x32xbf16>, vector<128x32xf32> -> vector<128x32xf32>
    %379 = arith.addf %375, %378 : vector<128x32xf32>
    %380 = vector.shape_cast %346 : vector<2x8x8x32xbf16> to vector<128x32xbf16>
    %381 = vector.extract_strided_slice %320 {offsets = [256, 0], sizes = [32, 32], strides = [1, 1]} : vector<288x32xbf16> to vector<32x32xbf16>
    %cst_85 = arith.constant dense<0.000000e+00> : vector<128x32xf32>
    %382 = tpu.matmul %380, %381, %cst_85 {dimension_numbers = #tpu.dot_dimension_numbers<[1], [0], [0], [1], [0, 0, 1, 1], [], []>} : vector<128x32xbf16>, vector<32x32xbf16>, vector<128x32xf32> -> vector<128x32xf32>
    %383 = arith.addf %379, %382 : vector<128x32xf32>
    %384 = vector.broadcast %322 : vector<1x32xf32> to vector<128x32xf32>
    %385 = arith.addf %383, %384 : vector<128x32xf32>
    %386 = vector.extract_strided_slice %3 {offsets = [1, 4, 0], sizes = [1, 1, 32], strides = [1, 1, 1]} : vector<2x8x32xf32> to vector<1x1x32xf32>
    %387 = vector.shape_cast %386 : vector<1x1x32xf32> to vector<1x32xf32>
    %388 = vector.extract_strided_slice %3 {offsets = [1, 5, 0], sizes = [1, 1, 32], strides = [1, 1, 1]} : vector<2x8x32xf32> to vector<1x1x32xf32>
    %389 = vector.shape_cast %388 : vector<1x1x32xf32> to vector<1x32xf32>
    %390 = vector.shape_cast %385 : vector<128x32xf32> to vector<2x64x32xf32>
    %cst_86 = arith.constant dense<0.000000e+00> : vector<2x32xf32>
    %391 = vector.multi_reduction <add>, %390, %cst_86 [1] : vector<2x64x32xf32> to vector<2x32xf32>
    %392 = vector.shape_cast %391 : vector<2x32xf32> to vector<2x1x32xf32>
    %cst_87 = arith.constant 6.400000e+01 : f32
    %393 = vector.broadcast %cst_87 : f32 to vector<2x1x32xf32>
    %394 = arith.divf %392, %393 : vector<2x1x32xf32>
    %395 = arith.mulf %390, %390 : vector<2x64x32xf32>
    %cst_88 = arith.constant dense<0.000000e+00> : vector<2x32xf32>
    %396 = vector.multi_reduction <add>, %395, %cst_88 [1] : vector<2x64x32xf32> to vector<2x32xf32>
    %397 = vector.shape_cast %396 : vector<2x32xf32> to vector<2x1x32xf32>
    %cst_89 = arith.constant 6.400000e+01 : f32
    %398 = vector.broadcast %cst_89 : f32 to vector<2x1x32xf32>
    %399 = arith.divf %397, %398 : vector<2x1x32xf32>
    %400 = arith.mulf %394, %394 : vector<2x1x32xf32>
    %401 = arith.subf %399, %400 : vector<2x1x32xf32>
    %cst_90 = arith.constant 0.000000e+00 : f32
    %402 = vector.broadcast %cst_90 : f32 to vector<2x1x32xf32>
    %403 = arith.maximumf %401, %402 : vector<2x1x32xf32>
    %404 = vector.broadcast %394 : vector<2x1x32xf32> to vector<2x64x32xf32>
    %405 = arith.subf %390, %404 : vector<2x64x32xf32>
    %cst_91 = arith.constant 9.99999974E-6 : f32
    %406 = vector.broadcast %cst_91 : f32 to vector<2x1x32xf32>
    %407 = arith.addf %403, %406 : vector<2x1x32xf32>
    %408 = math.rsqrt %407 : vector<2x1x32xf32>
    %409 = vector.broadcast %408 : vector<2x1x32xf32> to vector<2x64x32xf32>
    %410 = arith.mulf %405, %409 : vector<2x64x32xf32>
    %411 = vector.shape_cast %387 : vector<1x32xf32> to vector<1x1x32xf32>
    %412 = vector.broadcast %411 : vector<1x1x32xf32> to vector<2x64x32xf32>
    %413 = arith.mulf %410, %412 : vector<2x64x32xf32>
    %414 = vector.shape_cast %389 : vector<1x32xf32> to vector<1x1x32xf32>
    %415 = vector.broadcast %414 : vector<1x1x32xf32> to vector<2x64x32xf32>
    %416 = arith.addf %413, %415 : vector<2x64x32xf32>
    %417 = vector.shape_cast %416 : vector<2x64x32xf32> to vector<128x32xf32>
    %418 = vector.shape_cast %215 : vector<2x8x8x32xbf16> to vector<128x32xbf16>
    %419 = arith.extf %418 : vector<128x32xbf16> to vector<128x32xf32>
    %420 = arith.addf %419, %417 : vector<128x32xf32>
    %cst_92 = arith.constant 0.000000e+00 : f32
    %421 = vector.broadcast %cst_92 : f32 to vector<128x32xf32>
    %422 = arith.maximumf %420, %421 : vector<128x32xf32>
    %423 = vector.shape_cast %422 : vector<128x32xf32> to vector<2x8x8x32xf32>
    %424 = arith.truncf %423 : vector<2x8x8x32xf32> to vector<2x8x8x32xbf16>
    %c0_93 = arith.constant 0 : index
    %c0_94 = arith.constant 0 : index
    %c0_95 = arith.constant 0 : index
    %c0_96 = arith.constant 0 : index
    %425 = vector.load %arg9[%c0_93, %c0_94, %c0_95, %c0_96] : memref<2x8x8x32xbf16, #tpu.memory_space<vmem>>, vector<2x8x8x32xbf16>
    tpu.vector_store %arg9[%c0_93, %c0_94, %c0_95, %c0_96], %424 {strides = array<i32>} : memref<2x8x8x32xbf16, #tpu.memory_space<vmem>>, vector<2x8x8x32xbf16>,
    %c0_i32_97 = arith.constant 0 : i32
    %426 = arith.cmpi eq, %arg1, %c0_i32_97 : i32
    %427 = arith.extui %426 : i1 to i32
    %c0_i32_98 = arith.constant 0 : i32
    %428 = arith.cmpi ne, %427, %c0_i32_98 : i32
    scf.if %428 {
      %429 = vector.shape_cast %422 : vector<128x32xf32> to vector<2x8x8x32xf32>
      %c0_99 = arith.constant 0 : index
      %c0_100 = arith.constant 0 : index
      %c0_101 = arith.constant 0 : index
      %c0_102 = arith.constant 0 : index
      %430 = vector.load %arg8[%c0_99, %c0_100, %c0_101, %c0_102] : memref<2x8x8x32xf32, #tpu.memory_space<vmem>>, vector<2x8x8x32xf32>
      tpu.vector_store %arg8[%c0_99, %c0_100, %c0_101, %c0_102], %429 {strides = array<i32>} : memref<2x8x8x32xf32, #tpu.memory_space<vmem>>, vector<2x8x8x32xf32>,
    } else {
    }
    return
  }
  func.func @transform_0(%arg0: i32, %arg1: i32) -> (i32, i32, i32, i32) {
    %c0_i32 = arith.constant 0 : i32
    %c0_i32_0 = arith.constant 0 : i32
    %c0_i32_1 = arith.constant 0 : i32
    %c0_i32_2 = arith.constant 0 : i32
    return %arg0, %c0_i32, %c0_i32_0, %c0_i32_1 : i32, i32, i32, i32
  }
  func.func @transform_1(%arg0: i32, %arg1: i32) -> (i32, i32) {
    %c0_i32 = arith.constant 0 : i32
    %c0_i32_0 = arith.constant 0 : i32
    %c0_i32_1 = arith.constant 0 : i32
    return %c0_i32, %c0_i32_0 : i32, i32
  }
  func.func @transform_2(%arg0: i32, %arg1: i32) -> (i32, i32) {
    %c0_i32 = arith.constant 0 : i32
    %c0_i32_0 = arith.constant 0 : i32
    %c0_i32_1 = arith.constant 0 : i32
    return %c0_i32, %c0_i32_0 : i32, i32
  }
  func.func @transform_3(%arg0: i32, %arg1: i32) -> (i32, i32, i32) {
    %c0_i32 = arith.constant 0 : i32
    %c0_i32_0 = arith.constant 0 : i32
    %c0_i32_1 = arith.constant 0 : i32
    return %arg1, %c0_i32, %c0_i32_0 : i32, i32, i32
  }
  func.func @transform_4(%arg0: i32, %arg1: i32) -> (i32, i32, i32) {
    %c0_i32 = arith.constant 0 : i32
    %c0_i32_0 = arith.constant 0 : i32
    %c0_i32_1 = arith.constant 0 : i32
    return %arg1, %c0_i32, %c0_i32_0 : i32, i32, i32
  }
  func.func @transform_5(%arg0: i32, %arg1: i32) -> (i32, i32, i32) {
    %c0_i32 = arith.constant 0 : i32
    %c0_i32_0 = arith.constant 0 : i32
    %c0_i32_1 = arith.constant 0 : i32
    return %arg1, %c0_i32, %c0_i32_0 : i32, i32, i32
  }
  func.func @transform_6(%arg0: i32, %arg1: i32) -> (i32, i32, i32, i32) {
    %c0_i32 = arith.constant 0 : i32
    %c0_i32_0 = arith.constant 0 : i32
    %c0_i32_1 = arith.constant 0 : i32
    %c0_i32_2 = arith.constant 0 : i32
    return %arg0, %c0_i32, %c0_i32_0, %c0_i32_1 : i32, i32, i32, i32
  }
}

</mosaic_0001>

<llo_original>
// kernel: board_representation_forward_batched.1
$region0: #{board_representation_forward_batched.1}
  #allocation0 [shape = 'u32[]', space=smem, size = 0x4, offset = 0x4, fixed_abs, tag = 'smem constant byte address 0x4 - core index']
  #allocation1 [shape = 'u32[72,128]{1,0:T(1,128)}', space=vmem, size = 0x9000, scoped, tag = 'internal scratch']
  #allocation2 [shape = 'bf16[2,8,8,32]{3,2,1,0:T(8,128)(2,1)}', space=vmem, size = 0x8000, scoped, tag = 'scratch operand']
  %s0 = inlined_call_operand.vmem [shape: bf16[2,8,8,16], index: 0, kind: input, shape index: {}]
  %s1 = inlined_call_operand.vmem [shape: bf16[144,32], index: 1, kind: input, shape index: {}]
  %s2 = inlined_call_operand.vmem [shape: f32[8,32], index: 2, kind: input, shape index: {}]
  %s3 = inlined_call_operand.vmem [shape: bf16[2,288,32], index: 3, kind: input, shape index: {}]
  %s4 = inlined_call_operand.vmem [shape: bf16[2,288,32], index: 4, kind: input, shape index: {}]
  %s5 = inlined_call_operand.vmem [shape: f32[2,8,32], index: 5, kind: input, shape index: {}]
  %s6 = inlined_call_operand.hbm [shape: f32[2,8,8,32], index: 6, kind: output, shape index: {}]
  %s7 = sld [smem:[#allocation0]]
  $region42: #{board_representation_forward_batched.1} parent=0
    _
  %s9 = ssub.s32 1, %s7
  %s10 = scalar_select 0, %s9, %s7
  $region1: #{board_representation_forward_batched.1} parent=0
    #allocation3 [shape = 'u8[65536]{0}', space=vmem, size = 0x10000, scoped, tag = 'output window, operand 0, single buffered']
    #allocation4 [shape = 's32[1]{0}', space=sflag, size = 0x4, scoped, tag = 'scoped memory for board_representation_forward_batched.1']
    %11 = vsyncpa [#allocation4], 0
    // Predicated region
    $region2: #{board_representation_forward_batched.1} parent=1 // pred_check
      _
    $region3: #{board_representation_forward_batched.1} parent=1 // pred_check_branch
      %13 = sbr.rel (0) target = $region5
    $region4: #{board_representation_forward_batched.1} parent=1 // pred_region
      _
    $region5: #{board_representation_forward_batched.1} parent=1 // pred_fallthru
      _
    // Predicated region
    $region6: #{board_representation_forward_batched.1} parent=1 // pred_check
      _
    $region7: #{board_representation_forward_batched.1} parent=1 // pred_check_branch
      %15 = sbr.rel (0) target = $region9
    $region8: #{board_representation_forward_batched.1} parent=1 // pred_region
      _
    $region9: #{board_representation_forward_batched.1} parent=1 // pred_fallthru
      _
    // Predicated region
    $region10: #{board_representation_forward_batched.1} parent=1 // pred_check
      _
    $region11: #{board_representation_forward_batched.1} parent=1 // pred_check_branch
      %17 = sbr.rel (0) target = $region13
    $region12: #{board_representation_forward_batched.1} parent=1 // pred_region
      _
    $region13: #{board_representation_forward_batched.1} parent=1 // pred_fallthru
      _
    // Predicated region
    $region14: #{board_representation_forward_batched.1} parent=1 // pred_check
      _
    $region15: #{board_representation_forward_batched.1} parent=1 // pred_check_branch
      %19 = sbr.rel (0) target = $region17
    $region16: #{board_representation_forward_batched.1} parent=1 // pred_region
      _
    $region17: #{board_representation_forward_batched.1} parent=1 // pred_fallthru
      _
    // Predicated region
    $region18: #{board_representation_forward_batched.1} parent=1 // pred_check
      _
    $region19: #{board_representation_forward_batched.1} parent=1 // pred_check_branch
      %21 = sbr.rel (0) target = $region21
    $region20: #{board_representation_forward_batched.1} parent=1 // pred_region
      _
    $region21: #{board_representation_forward_batched.1} parent=1 // pred_fallthru
      _
    // Predicated region
    $region22: #{board_representation_forward_batched.1} parent=1 // pred_check
      _
    $region23: #{board_representation_forward_batched.1} parent=1 // pred_check_branch
      %23 = sbr.rel (0) target = $region25
    $region24: #{board_representation_forward_batched.1} parent=1 // pred_region
      _
    $region25: #{board_representation_forward_batched.1} parent=1 // pred_fallthru
      _
    %p25 = scmp.eq.s32.totalorder 0, 0
    // Predicated region
    $region26: #{board_representation_forward_batched.1} parent=1 // pred_check
      %p26 = pneg %p25
    $region27: #{board_representation_forward_batched.1} parent=1 // pred_check_branch
      %28 = sbr.rel (%p26) target = $region29
    $region28: #{board_representation_forward_batched.1} parent=1 // pred_region
      %v29 = vld [vmem:[%s2] sm:$0xff]
      %v30 = vld [vmem:[%s0] sm:$0xf]
      %v31 = vld [vmem:[%s0 + $0x4] sm:$0xf]
      %v32 = vld [vmem:[%s0 + $0x8] sm:$0xf]
      %v33 = vld [vmem:[%s0 + $0xc] sm:$0xf]
      %v34 = vld [vmem:[%s0 + $0x10] sm:$0xf]
      %v35 = vld [vmem:[%s0 + $0x14] sm:$0xf]
      %v36 = vld [vmem:[%s0 + $0x18] sm:$0xf]
      %v37 = vld [vmem:[%s0 + $0x1c] sm:$0xf]
      %v38 = vld [vmem:[%s0 + $0x20] sm:$0xf]
      %v39 = vld [vmem:[%s0 + $0x24] sm:$0xf]
      %v40 = vld [vmem:[%s0 + $0x28] sm:$0xf]
      %v41 = vld [vmem:[%s0 + $0x2c] sm:$0xf]
      %v42 = vld [vmem:[%s0 + $0x30] sm:$0xf]
      %v43 = vld [vmem:[%s0 + $0x34] sm:$0xf]
      %v44 = vld [vmem:[%s0 + $0x38] sm:$0xf]
      %v45 = vld [vmem:[%s0 + $0x3c] sm:$0xf]
      %v46 = vld [vmem:[%s1] sm:$0xf]
      %v47 = vld [vmem:[%s1 + $0x4] sm:$0xf]
      %v48 = vld [vmem:[%s1 + $0x8] sm:$0xf]
      %v49 = vld [vmem:[%s1 + $0xc] sm:$0xf]
      %v50 = vld [vmem:[%s1 + $0x10] sm:$0xf]
      %v51 = vld [vmem:[%s1 + $0x14] sm:$0xf]
      %v52 = vld [vmem:[%s1 + $0x18] sm:$0xf]
      %v53 = vld [vmem:[%s1 + $0x1c] sm:$0xf]
      %v54 = vld [vmem:[%s1 + $0x20] sm:$0xf]
      %v55 = vld [vmem:[%s1 + $0x24] sm:$0xf]
      %v56 = vld [vmem:[%s1 + $0x28] sm:$0xf]
      %v57 = vld [vmem:[%s1 + $0x2c] sm:$0xf]
      %v58 = vld [vmem:[%s1 + $0x30] sm:$0xf]
      %v59 = vld [vmem:[%s1 + $0x34] sm:$0xf]
      %v60 = vld [vmem:[%s1 + $0x38] sm:$0xf]
      %v61 = vld [vmem:[%s1 + $0x3c] sm:$0xf]
      %v62 = vld [vmem:[%s1 + $0x40] sm:$0xf]
      %v63 = vld [vmem:[%s1 + $0x44] sm:$0xf]
      %v80 = vunpack.c.l.b16 %v37
      %v81 = vunpack.c.l.b16 %v30
      %v82 = vunpack.c.l.b16 %v31
      %v83 = vunpack.c.l.b16 %v32
      %v84 = vunpack.c.l.b16 %v33
      %v85 = vunpack.c.l.b16 %v34
      %v86 = vunpack.c.l.b16 %v35
      %v87 = vunpack.c.l.b16 %v36
      %v88 = vunpack.c.l.b16 %v45
      %v89 = vunpack.c.l.b16 %v38
      %v90 = vunpack.c.l.b16 %v39
      %v91 = vunpack.c.l.b16 %v40
      %v92 = vunpack.c.l.b16 %v41
      %v93 = vunpack.c.l.b16 %v42
      %v94 = vunpack.c.l.b16 %v43
      %v95 = vunpack.c.l.b16 %v44
      %v96 = vpack.c.b16 %v80, %v80
      %v97 = vpack.c.b16 %v81, %v81
      %v98 = vpack.c.b16 %v82, %v82
      %v99 = vpack.c.b16 %v83, %v83
      %v100 = vpack.c.b16 %v84, %v84
      %v101 = vpack.c.b16 %v85, %v85
      %v102 = vpack.c.b16 %v86, %v86
      %v103 = vpack.c.b16 %v87, %v87
      %v104 = vpack.c.b16 %v88, %v88
      %v105 = vpack.c.b16 %v89, %v89
      %v106 = vpack.c.b16 %v90, %v90
      %v107 = vpack.c.b16 %v91, %v91
      %v108 = vpack.c.b16 %v92, %v92
      %v109 = vpack.c.b16 %v93, %v93
      %v110 = vpack.c.b16 %v94, %v94
      %v111 = vpack.c.b16 %v95, %v95
      %v113 = vshrl.u32 %v96, 16
      %v115 = vrot.slane %v113, 3
      %v117 = vshrl.u32 %v97, 16
      %v119 = vrot.slane %v117, 3
      %v121 = vshrl.u32 %v98, 16
      %v123 = vrot.slane %v121, 3
      %v125 = vshrl.u32 %v99, 16
      %v127 = vrot.slane %v125, 3
      %v129 = vshrl.u32 %v100, 16
      %v131 = vrot.slane %v129, 3
      %v133 = vshrl.u32 %v101, 16
      %v135 = vrot.slane %v133, 3
      %v137 = vshrl.u32 %v102, 16
      %v139 = vrot.slane %v137, 3
      %v141 = vshrl.u32 %v103, 16
      %v143 = vrot.slane %v141, 3
      %v145 = vshrl.u32 %v104, 16
      %v147 = vrot.slane %v145, 3
      %v149 = vshrl.u32 %v105, 16
      %v151 = vrot.slane %v149, 3
      %v153 = vshrl.u32 %v106, 16
      %v155 = vrot.slane %v153, 3
      %v157 = vshrl.u32 %v107, 16
      %v159 = vrot.slane %v157, 3
      %v161 = vshrl.u32 %v108, 16
      %v163 = vrot.slane %v161, 3
      %v165 = vshrl.u32 %v109, 16
      %v167 = vrot.slane %v165, 3
      %v169 = vshrl.u32 %v110, 16
      %v171 = vrot.slane %v169, 3
      %v173 = vshrl.u32 %v111, 16
      %v175 = vrot.slane %v173, 3
      %v192 = vrot.slane %v113, 7
      %v193 = vshll.u32 %v96, 16
      %v195 = vor.u32 %v192, %v193
      %v196 = vrot.slane %v117, 7
      %v197 = vshll.u32 %v97, 16
      %v199 = vor.u32 %v196, %v197
      %v200 = vrot.slane %v121, 7
      %v201 = vshll.u32 %v98, 16
      %v203 = vor.u32 %v200, %v201
      %v204 = vrot.slane %v125, 7
      %v205 = vshll.u32 %v99, 16
      %v207 = vor.u32 %v204, %v205
      %v208 = vrot.slane %v129, 7
      %v209 = vshll.u32 %v100, 16
      %v211 = vor.u32 %v208, %v209
      %v212 = vrot.slane %v133, 7
      %v213 = vshll.u32 %v101, 16
      %v215 = vor.u32 %v212, %v213
      %v216 = vrot.slane %v137, 7
      %v217 = vshll.u32 %v102, 16
      %v219 = vor.u32 %v216, %v217
      %v220 = vrot.slane %v141, 7
      %v221 = vshll.u32 %v103, 16
      %v223 = vor.u32 %v220, %v221
      %v224 = vrot.slane %v145, 7
      %v225 = vshll.u32 %v104, 16
      %v227 = vor.u32 %v224, %v225
      %v228 = vrot.slane %v149, 7
      %v229 = vshll.u32 %v105, 16
      %v231 = vor.u32 %v228, %v229
      %v232 = vrot.slane %v153, 7
      %v233 = vshll.u32 %v106, 16
      %v235 = vor.u32 %v232, %v233
      %v236 = vrot.slane %v157, 7
      %v237 = vshll.u32 %v107, 16
      %v239 = vor.u32 %v236, %v237
      %v240 = vrot.slane %v161, 7
      %v241 = vshll.u32 %v108, 16
      %v243 = vor.u32 %v240, %v241
      %v244 = vrot.slane %v165, 7
      %v245 = vshll.u32 %v109, 16
      %v247 = vor.u32 %v244, %v245
      %v248 = vrot.slane %v169, 7
      %v249 = vshll.u32 %v110, 16
      %v251 = vor.u32 %v248, %v249
      %v252 = vrot.slane %v173, 7
      %v253 = vshll.u32 %v111, 16
      %v255 = vor.u32 %v252, %v253
      %vm272 = vcmask 1040384
      %vm273 = vsmask.f32 256
      %vm274 = vmand %vm272, %vm273
      %v275 = vsel %vm274, %v115, %v195
      %v276 = vsel %vm274, %v119, %v199
      %v277 = vsel %vm274, %v123, %v203
      %v278 = vsel %vm274, %v127, %v207
      %v279 = vsel %vm274, %v131, %v211
      %v280 = vsel %vm274, %v135, %v215
      %v281 = vsel %vm274, %v139, %v219
      %v282 = vsel %vm274, %v143, %v223
      %v283 = vsel %vm274, %v147, %v227
      %v284 = vsel %vm274, %v151, %v231
      %v285 = vsel %vm274, %v155, %v235
      %v286 = vsel %vm274, %v159, %v239
      %v287 = vsel %vm274, %v163, %v243
      %v288 = vsel %vm274, %v167, %v247
      %v289 = vsel %vm274, %v171, %v251
      %v290 = vsel %vm274, %v175, %v255
      %v291 = vrot.slane %v193, 1
      %v292 = vor.u32 %v113, %v291
      %v293 = vrot.slane %v197, 1
      %v294 = vor.u32 %v117, %v293
      %v295 = vrot.slane %v201, 1
      %v296 = vor.u32 %v121, %v295
      %v297 = vrot.slane %v205, 1
      %v298 = vor.u32 %v125, %v297
      %v299 = vrot.slane %v209, 1
      %v300 = vor.u32 %v129, %v299
      %v301 = vrot.slane %v213, 1
      %v302 = vor.u32 %v133, %v301
      %v303 = vrot.slane %v217, 1
      %v304 = vor.u32 %v137, %v303
      %v305 = vrot.slane %v221, 1
      %v306 = vor.u32 %v141, %v305
      %v307 = vrot.slane %v225, 1
      %v308 = vor.u32 %v145, %v307
      %v309 = vrot.slane %v229, 1
      %v310 = vor.u32 %v149, %v309
      %v311 = vrot.slane %v233, 1
      %v312 = vor.u32 %v153, %v311
      %v313 = vrot.slane %v237, 1
      %v314 = vor.u32 %v157, %v313
      %v315 = vrot.slane %v241, 1
      %v316 = vor.u32 %v161, %v315
      %v317 = vrot.slane %v245, 1
      %v318 = vor.u32 %v165, %v317
      %v319 = vrot.slane %v249, 1
      %v320 = vor.u32 %v169, %v319
      %v321 = vrot.slane %v253, 1
      %v322 = vor.u32 %v173, %v321
      %v339 = vrot.slane %v193, 5
      %v340 = vrot.slane %v197, 5
      %v341 = vrot.slane %v201, 5
      %v342 = vrot.slane %v205, 5
      %v343 = vrot.slane %v209, 5
      %v344 = vrot.slane %v213, 5
      %v345 = vrot.slane %v217, 5
      %v346 = vrot.slane %v221, 5
      %v347 = vrot.slane %v225, 5
      %v348 = vrot.slane %v229, 5
      %v349 = vrot.slane %v233, 5
      %v350 = vrot.slane %v237, 5
      %v351 = vrot.slane %v241, 5
      %v352 = vrot.slane %v245, 5
      %v353 = vrot.slane %v249, 5
      %v354 = vrot.slane %v253, 5
      %vm371 = vcmask 1043456
      %vm372 = vsmask.f32 3328
      %vm373 = vmand %vm371, %vm372
      %v374 = vsel %vm373, %v292, %v339
      %v375 = vsel %vm373, %v294, %v340
      %v376 = vsel %vm373, %v296, %v341
      %v377 = vsel %vm373, %v298, %v342
      %v378 = vsel %vm373, %v300, %v343
      %v379 = vsel %vm373, %v302, %v344
      %v380 = vsel %vm373, %v304, %v345
      %v381 = vsel %vm373, %v306, %v346
      %v382 = vsel %vm373, %v308, %v347
      %v383 = vsel %vm373, %v310, %v348
      %v384 = vsel %vm373, %v312, %v349
      %v385 = vsel %vm373, %v314, %v350
      %v386 = vsel %vm373, %v316, %v351
      %v387 = vsel %vm373, %v318, %v352
      %v388 = vsel %vm373, %v320, %v353
      %v389 = vsel %vm373, %v322, %v354
      %v390 = vpack.c.b16 %v81, %v80
      %v391 = vpack.c.b16 %v83, %v82
      %v392 = vpack.c.b16 %v85, %v84
      %v393 = vpack.c.b16 %v87, %v86
      %v394 = vpack.c.b16 %v89, %v88
      %v395 = vpack.c.b16 %v91, %v90
      %v396 = vpack.c.b16 %v93, %v92
      %v397 = vpack.c.b16 %v95, %v94
      %v400 = vunpack.c.l.b16 %v48
      %v401 = vunpack.c.l.b16 %v49
      %v402 = vpack.c.b16 %v401, %v400
      %vm404 = vcmask 130048
      %v406 = vsel %vm404, %v390, 0
      %v409 = vsel %vm404, %v391, 0
      %v412 = vsel %vm404, %v392, 0
      %v415 = vsel %vm404, %v393, 0
      %v418 = vsel %vm404, %v394, 0
      %v421 = vsel %vm404, %v395, 0
      %v424 = vsel %vm404, %v396, 0
      %v427 = vsel %vm404, %v397, 0
      %429 = vmatpush.bf16.msra.mxu0 0
      %430 = vmatpush.bf16.msra.mxu0 0
      %431 = vmatpush.bf16.msra.mxu0 0
      %432 = vmatpush.bf16.msra.mxu0 0
      %433 = vmatpush.bf16.msra.mxu0 0
      %434 = vmatpush.bf16.msra.mxu0 0
      %435 = vmatpush.bf16.msra.mxu0 0
      %436 = vmatpush.bf16.msra.mxu0 %v402
      %437 = vmatmul.bf16.gmra.mxu0 %v406
      %v438 = vpop.f32.mrf.mxu0
      %v439 = vadd.f32 0.0, %v438
      %v440 = vpop.f32.mrf.mxu0
      %v441 = vadd.f32 0.0, %v440
      %442 = vmatmul.bf16.gmra.mxu0 %v409
      %v443 = vpop.f32.mrf.mxu0
      %v444 = vadd.f32 0.0, %v443
      %v445 = vpop.f32.mrf.mxu0
      %v446 = vadd.f32 0.0, %v445
      %447 = vmatmul.bf16.gmra.mxu0 %v412
      %v448 = vpop.f32.mrf.mxu0
      %v449 = vadd.f32 0.0, %v448
      %v450 = vpop.f32.mrf.mxu0
      %v451 = vadd.f32 0.0, %v450
      %452 = vmatmul.bf16.gmra.mxu0 %v415
      %v453 = vpop.f32.mrf.mxu0
      %v454 = vadd.f32 0.0, %v453
      %v455 = vpop.f32.mrf.mxu0
      %v456 = vadd.f32 0.0, %v455
      %457 = vmatmul.bf16.gmra.mxu0 %v418
      %v458 = vpop.f32.mrf.mxu0
      %v459 = vadd.f32 0.0, %v458
      %v460 = vpop.f32.mrf.mxu0
      %v461 = vadd.f32 0.0, %v460
      %462 = vmatmul.bf16.gmra.mxu0 %v421
      %v463 = vpop.f32.mrf.mxu0
      %v464 = vadd.f32 0.0, %v463
      %v465 = vpop.f32.mrf.mxu0
      %v466 = vadd.f32 0.0, %v465
      %467 = vmatmul.bf16.gmra.mxu0 %v424
      %v468 = vpop.f32.mrf.mxu0
      %v469 = vadd.f32 0.0, %v468
      %v470 = vpop.f32.mrf.mxu0
      %v471 = vadd.f32 0.0, %v470
      %472 = vmatmul.bf16.gmra.mxu0 %v427
      %v473 = vpop.f32.mrf.mxu0
      %v474 = vadd.f32 0.0, %v473
      %v475 = vpop.f32.mrf.mxu0
      %v476 = vadd.f32 0.0, %v475
      %477 = vdwg.mxu0
      %v494 = vunpack.c.l.b16 %v275
      %v495 = vunpack.c.l.b16 %v276
      %v496 = vunpack.c.l.b16 %v277
      %v497 = vunpack.c.l.b16 %v278
      %v498 = vunpack.c.l.b16 %v279
      %v499 = vunpack.c.l.b16 %v280
      %v500 = vunpack.c.l.b16 %v281
      %v501 = vunpack.c.l.b16 %v282
      %v502 = vunpack.c.l.b16 %v283
      %v503 = vunpack.c.l.b16 %v284
      %v504 = vunpack.c.l.b16 %v285
      %v505 = vunpack.c.l.b16 %v286
      %v506 = vunpack.c.l.b16 %v287
      %v507 = vunpack.c.l.b16 %v288
      %v508 = vunpack.c.l.b16 %v289
      %v509 = vunpack.c.l.b16 %v290
      %v510 = vpack.c.b16 %v495, %v494
      %v511 = vpack.c.b16 %v497, %v496
      %v512 = vpack.c.b16 %v499, %v498
      %v513 = vpack.c.b16 %v501, %v500
      %v514 = vpack.c.b16 %v503, %v502
      %v515 = vpack.c.b16 %v505, %v504
      %v516 = vpack.c.b16 %v507, %v506
      %v517 = vpack.c.b16 %v509, %v508
      %v520 = vunpack.c.l.b16 %v46
      %v521 = vunpack.c.l.b16 %v47
      %v522 = vpack.c.b16 %v521, %v520
      %v525 = vsel %vm404, %v510, 0
      %v528 = vsel %vm404, %v511, 0
      %v531 = vsel %vm404, %v512, 0
      %v534 = vsel %vm404, %v513, 0
      %v537 = vsel %vm404, %v514, 0
      %v540 = vsel %vm404, %v515, 0
      %v543 = vsel %vm404, %v516, 0
      %v546 = vsel %vm404, %v517, 0
      %548 = vmatpush.bf16.msra.mxu0 0
      %549 = vmatpush.bf16.msra.mxu0 0
      %550 = vmatpush.bf16.msra.mxu0 0
      %551 = vmatpush.bf16.msra.mxu0 0
      %552 = vmatpush.bf16.msra.mxu0 0
      %553 = vmatpush.bf16.msra.mxu0 0
      %554 = vmatpush.bf16.msra.mxu0 0
      %555 = vmatpush.bf16.msra.mxu0 %v522
      %556 = vmatmul.bf16.gmra.mxu0 %v525
      %v557 = vpop.f32.mrf.mxu0
      %v558 = vadd.f32 %v439, %v557
      %v559 = vpop.f32.mrf.mxu0
      %v560 = vadd.f32 %v441, %v559
      %561 = vmatmul.bf16.gmra.mxu0 %v528
      %v562 = vpop.f32.mrf.mxu0
      %v563 = vadd.f32 %v444, %v562
      %v564 = vpop.f32.mrf.mxu0
      %v565 = vadd.f32 %v446, %v564
      %566 = vmatmul.bf16.gmra.mxu0 %v531
      %v567 = vpop.f32.mrf.mxu0
      %v568 = vadd.f32 %v449, %v567
      %v569 = vpop.f32.mrf.mxu0
      %v570 = vadd.f32 %v451, %v569
      %571 = vmatmul.bf16.gmra.mxu0 %v534
      %v572 = vpop.f32.mrf.mxu0
      %v573 = vadd.f32 %v454, %v572
      %v574 = vpop.f32.mrf.mxu0
      %v575 = vadd.f32 %v456, %v574
      %576 = vmatmul.bf16.gmra.mxu0 %v537
      %v577 = vpop.f32.mrf.mxu0
      %v578 = vadd.f32 %v459, %v577
      %v579 = vpop.f32.mrf.mxu0
      %v580 = vadd.f32 %v461, %v579
      %581 = vmatmul.bf16.gmra.mxu0 %v540
      %v582 = vpop.f32.mrf.mxu0
      %v583 = vadd.f32 %v464, %v582
      %v584 = vpop.f32.mrf.mxu0
      %v585 = vadd.f32 %v466, %v584
      %586 = vmatmul.bf16.gmra.mxu0 %v543
      %v587 = vpop.f32.mrf.mxu0
      %v588 = vadd.f32 %v469, %v587
      %v589 = vpop.f32.mrf.mxu0
      %v590 = vadd.f32 %v471, %v589
      %591 = vmatmul.bf16.gmra.mxu0 %v546
      %v592 = vpop.f32.mrf.mxu0
      %v593 = vadd.f32 %v474, %v592
      %v594 = vpop.f32.mrf.mxu0
      %v595 = vadd.f32 %v476, %v594
      %596 = vdwg.mxu0
      %v613 = vunpack.c.l.b16 %v374
      %v614 = vunpack.c.l.b16 %v375
      %v615 = vunpack.c.l.b16 %v376
      %v616 = vunpack.c.l.b16 %v377
      %v617 = vunpack.c.l.b16 %v378
      %v618 = vunpack.c.l.b16 %v379
      %v619 = vunpack.c.l.b16 %v380
      %v620 = vunpack.c.l.b16 %v381
      %v621 = vunpack.c.l.b16 %v382
      %v622 = vunpack.c.l.b16 %v383
      %v623 = vunpack.c.l.b16 %v384
      %v624 = vunpack.c.l.b16 %v385
      %v625 = vunpack.c.l.b16 %v386
      %v626 = vunpack.c.l.b16 %v387
      %v627 = vunpack.c.l.b16 %v388
      %v628 = vunpack.c.l.b16 %v389
      %v629 = vpack.c.b16 %v614, %v613
      %v630 = vpack.c.b16 %v616, %v615
      %v631 = vpack.c.b16 %v618, %v617
      %v632 = vpack.c.b16 %v620, %v619
      %v633 = vpack.c.b16 %v622, %v621
      %v634 = vpack.c.b16 %v624, %v623
      %v635 = vpack.c.b16 %v626, %v625
      %v636 = vpack.c.b16 %v628, %v627
      %v639 = vunpack.c.l.b16 %v50
      %v640 = vunpack.c.l.b16 %v51
      %v641 = vpack.c.b16 %v640, %v639
      %v644 = vsel %vm404, %v629, 0
      %v647 = vsel %vm404, %v630, 0
      %v650 = vsel %vm404, %v631, 0
      %v653 = vsel %vm404, %v632, 0
      %v656 = vsel %vm404, %v633, 0
      %v659 = vsel %vm404, %v634, 0
      %v662 = vsel %vm404, %v635, 0
      %v665 = vsel %vm404, %v636, 0
      %667 = vmatpush.bf16.msra.mxu0 0
      %668 = vmatpush.bf16.msra.mxu0 0
      %669 = vmatpush.bf16.msra.mxu0 0
      %670 = vmatpush.bf16.msra.mxu0 0
      %671 = vmatpush.bf16.msra.mxu0 0
      %672 = vmatpush.bf16.msra.mxu0 0
      %673 = vmatpush.bf16.msra.mxu0 0
      %674 = vmatpush.bf16.msra.mxu0 %v641
      %675 = vmatmul.bf16.gmra.mxu0 %v644
      %v676 = vpop.f32.mrf.mxu0
      %v677 = vadd.f32 0.0, %v676
      %v678 = vpop.f32.mrf.mxu0
      %v679 = vadd.f32 0.0, %v678
      %680 = vmatmul.bf16.gmra.mxu0 %v647
      %v681 = vpop.f32.mrf.mxu0
      %v682 = vadd.f32 0.0, %v681
      %v683 = vpop.f32.mrf.mxu0
      %v684 = vadd.f32 0.0, %v683
      %685 = vmatmul.bf16.gmra.mxu0 %v650
      %v686 = vpop.f32.mrf.mxu0
      %v687 = vadd.f32 0.0, %v686
      %v688 = vpop.f32.mrf.mxu0
      %v689 = vadd.f32 0.0, %v688
      %690 = vmatmul.bf16.gmra.mxu0 %v653
      %v691 = vpop.f32.mrf.mxu0
      %v692 = vadd.f32 0.0, %v691
      %v693 = vpop.f32.mrf.mxu0
      %v694 = vadd.f32 0.0, %v693
      %695 = vmatmul.bf16.gmra.mxu0 %v656
      %v696 = vpop.f32.mrf.mxu0
      %v697 = vadd.f32 0.0, %v696
      %v698 = vpop.f32.mrf.mxu0
      %v699 = vadd.f32 0.0, %v698
      %700 = vmatmul.bf16.gmra.mxu0 %v659
      %v701 = vpop.f32.mrf.mxu0
      %v702 = vadd.f32 0.0, %v701
      %v703 = vpop.f32.mrf.mxu0
      %v704 = vadd.f32 0.0, %v703
      %705 = vmatmul.bf16.gmra.mxu0 %v662
      %v706 = vpop.f32.mrf.mxu0
      %v707 = vadd.f32 0.0, %v706
      %v708 = vpop.f32.mrf.mxu0
      %v709 = vadd.f32 0.0, %v708
      %710 = vmatmul.bf16.gmra.mxu0 %v665
      %v711 = vpop.f32.mrf.mxu0
      %v712 = vadd.f32 0.0, %v711
      %v713 = vpop.f32.mrf.mxu0
      %v714 = vadd.f32 0.0, %v713
      %715 = vdwg.mxu0
      %v716 = vadd.f32 %v558, %v677
      %v717 = vadd.f32 %v560, %v679
      %v718 = vadd.f32 %v563, %v682
      %v719 = vadd.f32 %v565, %v684
      %v720 = vadd.f32 %v568, %v687
      %v721 = vadd.f32 %v570, %v689
      %v722 = vadd.f32 %v573, %v692
      %v723 = vadd.f32 %v575, %v694
      %v724 = vadd.f32 %v578, %v697
      %v725 = vadd.f32 %v580, %v699
      %v726 = vadd.f32 %v583, %v702
      %v727 = vadd.f32 %v585, %v704
      %v728 = vadd.f32 %v588, %v707
      %v729 = vadd.f32 %v590, %v709
      %v730 = vadd.f32 %v593, %v712
      %v731 = vadd.f32 %v595, %v714
      %v732 = vpack.c.b16 %v496, %v495
      %v733 = vpack.c.b16 %v498, %v497
      %v734 = vpack.c.b16 %v500, %v499
      %v735 = vpack.c.b16 %v494, %v501
      %v736 = vpack.c.b16 %v504, %v503
      %v737 = vpack.c.b16 %v506, %v505
      %v738 = vpack.c.b16 %v508, %v507
      %v739 = vpack.c.b16 %v502, %v509
      %v742 = vunpack.c.l.b16 %v52
      %v743 = vunpack.c.l.b16 %v53
      %v744 = vpack.c.b16 %v743, %v742
      %v747 = vsel %vm404, %v732, 0
      %v750 = vsel %vm404, %v733, 0
      %v753 = vsel %vm404, %v734, 0
      %v756 = vsel %vm404, %v735, 0
      %v759 = vsel %vm404, %v736, 0
      %v762 = vsel %vm404, %v737, 0
      %v765 = vsel %vm404, %v738, 0
      %v768 = vsel %vm404, %v739, 0
      %770 = vmatpush.bf16.msra.mxu0 0
      %771 = vmatpush.bf16.msra.mxu0 0
      %772 = vmatpush.bf16.msra.mxu0 0
      %773 = vmatpush.bf16.msra.mxu0 0
      %774 = vmatpush.bf16.msra.mxu0 0
      %775 = vmatpush.bf16.msra.mxu0 0
      %776 = vmatpush.bf16.msra.mxu0 0
      %777 = vmatpush.bf16.msra.mxu0 %v744
      %778 = vmatmul.bf16.gmra.mxu0 %v747
      %v779 = vpop.f32.mrf.mxu0
      %v780 = vadd.f32 0.0, %v779
      %v781 = vpop.f32.mrf.mxu0
      %v782 = vadd.f32 0.0, %v781
      %783 = vmatmul.bf16.gmra.mxu0 %v750
      %v784 = vpop.f32.mrf.mxu0
      %v785 = vadd.f32 0.0, %v784
      %v786 = vpop.f32.mrf.mxu0
      %v787 = vadd.f32 0.0, %v786
      %788 = vmatmul.bf16.gmra.mxu0 %v753
      %v789 = vpop.f32.mrf.mxu0
      %v790 = vadd.f32 0.0, %v789
      %v791 = vpop.f32.mrf.mxu0
      %v792 = vadd.f32 0.0, %v791
      %793 = vmatmul.bf16.gmra.mxu0 %v756
      %v794 = vpop.f32.mrf.mxu0
      %v795 = vadd.f32 0.0, %v794
      %v796 = vpop.f32.mrf.mxu0
      %v797 = vadd.f32 0.0, %v796
      %798 = vmatmul.bf16.gmra.mxu0 %v759
      %v799 = vpop.f32.mrf.mxu0
      %v800 = vadd.f32 0.0, %v799
      %v801 = vpop.f32.mrf.mxu0
      %v802 = vadd.f32 0.0, %v801
      %803 = vmatmul.bf16.gmra.mxu0 %v762
      %v804 = vpop.f32.mrf.mxu0
      %v805 = vadd.f32 0.0, %v804
      %v806 = vpop.f32.mrf.mxu0
      %v807 = vadd.f32 0.0, %v806
      %808 = vmatmul.bf16.gmra.mxu0 %v765
      %v809 = vpop.f32.mrf.mxu0
      %v810 = vadd.f32 0.0, %v809
      %v811 = vpop.f32.mrf.mxu0
      %v812 = vadd.f32 0.0, %v811
      %813 = vmatmul.bf16.gmra.mxu0 %v768
      %v814 = vpop.f32.mrf.mxu0
      %v815 = vadd.f32 0.0, %v814
      %v816 = vpop.f32.mrf.mxu0
      %v817 = vadd.f32 0.0, %v816
      %818 = vdwg.mxu0
      %v819 = vadd.f32 %v716, %v780
      %v820 = vadd.f32 %v717, %v782
      %v821 = vadd.f32 %v718, %v785
      %v822 = vadd.f32 %v719, %v787
      %v823 = vadd.f32 %v720, %v790
      %v824 = vadd.f32 %v721, %v792
      %v825 = vadd.f32 %v722, %v795
      %v826 = vadd.f32 %v723, %v797
      %v827 = vadd.f32 %v724, %v800
      %v828 = vadd.f32 %v725, %v802
      %v829 = vadd.f32 %v726, %v805
      %v830 = vadd.f32 %v727, %v807
      %v831 = vadd.f32 %v728, %v810
      %v832 = vadd.f32 %v729, %v812
      %v833 = vadd.f32 %v730, %v815
      %v834 = vadd.f32 %v731, %v817
      %v835 = vpack.c.b16 %v82, %v81
      %v836 = vpack.c.b16 %v84, %v83
      %v837 = vpack.c.b16 %v86, %v85
      %v838 = vpack.c.b16 %v80, %v87
      %v839 = vpack.c.b16 %v90, %v89
      %v840 = vpack.c.b16 %v92, %v91
      %v841 = vpack.c.b16 %v94, %v93
      %v842 = vpack.c.b16 %v88, %v95
      %v845 = vunpack.c.l.b16 %v54
      %v846 = vunpack.c.l.b16 %v55
      %v847 = vpack.c.b16 %v846, %v845
      %v850 = vsel %vm404, %v835, 0
      %v853 = vsel %vm404, %v836, 0
      %v856 = vsel %vm404, %v837, 0
      %v859 = vsel %vm404, %v838, 0
      %v862 = vsel %vm404, %v839, 0
      %v865 = vsel %vm404, %v840, 0
      %v868 = vsel %vm404, %v841, 0
      %v871 = vsel %vm404, %v842, 0
      %873 = vmatpush.bf16.msra.mxu0 0
      %874 = vmatpush.bf16.msra.mxu0 0
      %875 = vmatpush.bf16.msra.mxu0 0
      %876 = vmatpush.bf16.msra.mxu0 0
      %877 = vmatpush.bf16.msra.mxu0 0
      %878 = vmatpush.bf16.msra.mxu0 0
      %879 = vmatpush.bf16.msra.mxu0 0
      %880 = vmatpush.bf16.msra.mxu0 %v847
      %881 = vmatmul.bf16.gmra.mxu0 %v850
      %v882 = vpop.f32.mrf.mxu0
      %v883 = vadd.f32 0.0, %v882
      %v884 = vpop.f32.mrf.mxu0
      %v885 = vadd.f32 0.0, %v884
      %886 = vmatmul.bf16.gmra.mxu0 %v853
      %v887 = vpop.f32.mrf.mxu0
      %v888 = vadd.f32 0.0, %v887
      %v889 = vpop.f32.mrf.mxu0
      %v890 = vadd.f32 0.0, %v889
      %891 = vmatmul.bf16.gmra.mxu0 %v856
      %v892 = vpop.f32.mrf.mxu0
      %v893 = vadd.f32 0.0, %v892
      %v894 = vpop.f32.mrf.mxu0
      %v895 = vadd.f32 0.0, %v894
      %896 = vmatmul.bf16.gmra.mxu0 %v859
      %v897 = vpop.f32.mrf.mxu0
      %v898 = vadd.f32 0.0, %v897
      %v899 = vpop.f32.mrf.mxu0
      %v900 = vadd.f32 0.0, %v899
      %901 = vmatmul.bf16.gmra.mxu0 %v862
      %v902 = vpop.f32.mrf.mxu0
      %v903 = vadd.f32 0.0, %v902
      %v904 = vpop.f32.mrf.mxu0
      %v905 = vadd.f32 0.0, %v904
      %906 = vmatmul.bf16.gmra.mxu0 %v865
      %v907 = vpop.f32.mrf.mxu0
      %v908 = vadd.f32 0.0, %v907
      %v909 = vpop.f32.mrf.mxu0
      %v910 = vadd.f32 0.0, %v909
      %911 = vmatmul.bf16.gmra.mxu0 %v868
      %v912 = vpop.f32.mrf.mxu0
      %v913 = vadd.f32 0.0, %v912
      %v914 = vpop.f32.mrf.mxu0
      %v915 = vadd.f32 0.0, %v914
      %916 = vmatmul.bf16.gmra.mxu0 %v871
      %v917 = vpop.f32.mrf.mxu0
      %v918 = vadd.f32 0.0, %v917
      %v919 = vpop.f32.mrf.mxu0
      %v920 = vadd.f32 0.0, %v919
      %921 = vdwg.mxu0
      %v922 = vadd.f32 %v819, %v883
      %v923 = vadd.f32 %v820, %v885
      %v924 = vadd.f32 %v821, %v888
      %v925 = vadd.f32 %v822, %v890
      %v926 = vadd.f32 %v823, %v893
      %v927 = vadd.f32 %v824, %v895
      %v928 = vadd.f32 %v825, %v898
      %v929 = vadd.f32 %v826, %v900
      %v930 = vadd.f32 %v827, %v903
      %v931 = vadd.f32 %v828, %v905
      %v932 = vadd.f32 %v829, %v908
      %v933 = vadd.f32 %v830, %v910
      %v934 = vadd.f32 %v831, %v913
      %v935 = vadd.f32 %v832, %v915
      %v936 = vadd.f32 %v833, %v918
      %v937 = vadd.f32 %v834, %v920
      %v938 = vpack.c.b16 %v615, %v614
      %v939 = vpack.c.b16 %v617, %v616
      %v940 = vpack.c.b16 %v619, %v618
      %v941 = vpack.c.b16 %v613, %v620
      %v942 = vpack.c.b16 %v623, %v622
      %v943 = vpack.c.b16 %v625, %v624
      %v944 = vpack.c.b16 %v627, %v626
      %v945 = vpack.c.b16 %v621, %v628
      %v948 = vunpack.c.l.b16 %v56
      %v949 = vunpack.c.l.b16 %v57
      %v950 = vpack.c.b16 %v949, %v948
      %v953 = vsel %vm404, %v938, 0
      %v956 = vsel %vm404, %v939, 0
      %v959 = vsel %vm404, %v940, 0
      %v962 = vsel %vm404, %v941, 0
      %v965 = vsel %vm404, %v942, 0
      %v968 = vsel %vm404, %v943, 0
      %v971 = vsel %vm404, %v944, 0
      %v974 = vsel %vm404, %v945, 0
      %976 = vmatpush.bf16.msra.mxu0 0
      %977 = vmatpush.bf16.msra.mxu0 0
      %978 = vmatpush.bf16.msra.mxu0 0
      %979 = vmatpush.bf16.msra.mxu0 0
      %980 = vmatpush.bf16.msra.mxu0 0
      %981 = vmatpush.bf16.msra.mxu0 0
      %982 = vmatpush.bf16.msra.mxu0 0
      %983 = vmatpush.bf16.msra.mxu0 %v950
      %984 = vmatmul.bf16.gmra.mxu0 %v953
      %v985 = vpop.f32.mrf.mxu0
      %v986 = vadd.f32 0.0, %v985
      %v987 = vpop.f32.mrf.mxu0
      %v988 = vadd.f32 0.0, %v987
      %989 = vmatmul.bf16.gmra.mxu0 %v956
      %v990 = vpop.f32.mrf.mxu0
      %v991 = vadd.f32 0.0, %v990
      %v992 = vpop.f32.mrf.mxu0
      %v993 = vadd.f32 0.0, %v992
      %994 = vmatmul.bf16.gmra.mxu0 %v959
      %v995 = vpop.f32.mrf.mxu0
      %v996 = vadd.f32 0.0, %v995
      %v997 = vpop.f32.mrf.mxu0
      %v998 = vadd.f32 0.0, %v997
      %999 = vmatmul.bf16.gmra.mxu0 %v962
      %v1000 = vpop.f32.mrf.mxu0
      %v1001 = vadd.f32 0.0, %v1000
      %v1002 = vpop.f32.mrf.mxu0
      %v1003 = vadd.f32 0.0, %v1002
      %1004 = vmatmul.bf16.gmra.mxu0 %v965
      %v1005 = vpop.f32.mrf.mxu0
      %v1006 = vadd.f32 0.0, %v1005
      %v1007 = vpop.f32.mrf.mxu0
      %v1008 = vadd.f32 0.0, %v1007
      %1009 = vmatmul.bf16.gmra.mxu0 %v968
      %v1010 = vpop.f32.mrf.mxu0
      %v1011 = vadd.f32 0.0, %v1010
      %v1012 = vpop.f32.mrf.mxu0
      %v1013 = vadd.f32 0.0, %v1012
      %1014 = vmatmul.bf16.gmra.mxu0 %v971
      %v1015 = vpop.f32.mrf.mxu0
      %v1016 = vadd.f32 0.0, %v1015
      %v1017 = vpop.f32.mrf.mxu0
      %v1018 = vadd.f32 0.0, %v1017
      %1019 = vmatmul.bf16.gmra.mxu0 %v974
      %v1020 = vpop.f32.mrf.mxu0
      %v1021 = vadd.f32 0.0, %v1020
      %v1022 = vpop.f32.mrf.mxu0
      %v1023 = vadd.f32 0.0, %v1022
      %1024 = vdwg.mxu0
      %v1025 = vadd.f32 %v922, %v986
      %v1026 = vadd.f32 %v923, %v988
      %v1027 = vadd.f32 %v924, %v991
      %v1028 = vadd.f32 %v925, %v993
      %v1029 = vadd.f32 %v926, %v996
      %v1030 = vadd.f32 %v927, %v998
      %v1031 = vadd.f32 %v928, %v1001
      %v1032 = vadd.f32 %v929, %v1003
      %v1033 = vadd.f32 %v930, %v1006
      %v1034 = vadd.f32 %v931, %v1008
      %v1035 = vadd.f32 %v932, %v1011
      %v1036 = vadd.f32 %v933, %v1013
      %v1037 = vadd.f32 %v934, %v1016
      %v1038 = vadd.f32 %v935, %v1018
      %v1039 = vadd.f32 %v936, %v1021
      %v1040 = vadd.f32 %v937, %v1023
      %v1043 = vunpack.c.l.b16 %v58
      %v1044 = vunpack.c.l.b16 %v59
      %v1045 = vpack.c.b16 %v1044, %v1043
      %1047 = vmatpush.bf16.msra.mxu0 0
      %1048 = vmatpush.bf16.msra.mxu0 0
      %1049 = vmatpush.bf16.msra.mxu0 0
      %1050 = vmatpush.bf16.msra.mxu0 0
      %1051 = vmatpush.bf16.msra.mxu0 0
      %1052 = vmatpush.bf16.msra.mxu0 0
      %1053 = vmatpush.bf16.msra.mxu0 0
      %1054 = vmatpush.bf16.msra.mxu0 %v1045
      %1055 = vmatmul.bf16.gmra.mxu0 %v528
      %v1056 = vpop.f32.mrf.mxu0
      %v1057 = vadd.f32 0.0, %v1056
      %v1058 = vpop.f32.mrf.mxu0
      %v1059 = vadd.f32 0.0, %v1058
      %1060 = vmatmul.bf16.gmra.mxu0 %v531
      %v1061 = vpop.f32.mrf.mxu0
      %v1062 = vadd.f32 0.0, %v1061
      %v1063 = vpop.f32.mrf.mxu0
      %v1064 = vadd.f32 0.0, %v1063
      %1065 = vmatmul.bf16.gmra.mxu0 %v534
      %v1066 = vpop.f32.mrf.mxu0
      %v1067 = vadd.f32 0.0, %v1066
      %v1068 = vpop.f32.mrf.mxu0
      %v1069 = vadd.f32 0.0, %v1068
      %1070 = vmatmul.bf16.gmra.mxu0 %v525
      %v1071 = vpop.f32.mrf.mxu0
      %v1072 = vadd.f32 0.0, %v1071
      %v1073 = vpop.f32.mrf.mxu0
      %v1074 = vadd.f32 0.0, %v1073
      %1075 = vmatmul.bf16.gmra.mxu0 %v540
      %v1076 = vpop.f32.mrf.mxu0
      %v1077 = vadd.f32 0.0, %v1076
      %v1078 = vpop.f32.mrf.mxu0
      %v1079 = vadd.f32 0.0, %v1078
      %1080 = vmatmul.bf16.gmra.mxu0 %v543
      %v1081 = vpop.f32.mrf.mxu0
      %v1082 = vadd.f32 0.0, %v1081
      %v1083 = vpop.f32.mrf.mxu0
      %v1084 = vadd.f32 0.0, %v1083
      %1085 = vmatmul.bf16.gmra.mxu0 %v546
      %v1086 = vpop.f32.mrf.mxu0
      %v1087 = vadd.f32 0.0, %v1086
      %v1088 = vpop.f32.mrf.mxu0
      %v1089 = vadd.f32 0.0, %v1088
      %1090 = vmatmul.bf16.gmra.mxu0 %v537
      %v1091 = vpop.f32.mrf.mxu0
      %v1092 = vadd.f32 0.0, %v1091
      %v1093 = vpop.f32.mrf.mxu0
      %v1094 = vadd.f32 0.0, %v1093
      %1095 = vdwg.mxu0
      %v1096 = vadd.f32 %v1025, %v1057
      %v1097 = vadd.f32 %v1026, %v1059
      %v1098 = vadd.f32 %v1027, %v1062
      %v1099 = vadd.f32 %v1028, %v1064
      %v1100 = vadd.f32 %v1029, %v1067
      %v1101 = vadd.f32 %v1030, %v1069
      %v1102 = vadd.f32 %v1031, %v1072
      %v1103 = vadd.f32 %v1032, %v1074
      %v1104 = vadd.f32 %v1033, %v1077
      %v1105 = vadd.f32 %v1034, %v1079
      %v1106 = vadd.f32 %v1035, %v1082
      %v1107 = vadd.f32 %v1036, %v1084
      %v1108 = vadd.f32 %v1037, %v1087
      %v1109 = vadd.f32 %v1038, %v1089
      %v1110 = vadd.f32 %v1039, %v1092
      %v1111 = vadd.f32 %v1040, %v1094
      %v1114 = vunpack.c.l.b16 %v60
      %v1115 = vunpack.c.l.b16 %v61
      %v1116 = vpack.c.b16 %v1115, %v1114
      %1118 = vmatpush.bf16.msra.mxu0 0
      %1119 = vmatpush.bf16.msra.mxu0 0
      %1120 = vmatpush.bf16.msra.mxu0 0
      %1121 = vmatpush.bf16.msra.mxu0 0
      %1122 = vmatpush.bf16.msra.mxu0 0
      %1123 = vmatpush.bf16.msra.mxu0 0
      %1124 = vmatpush.bf16.msra.mxu0 0
      %1125 = vmatpush.bf16.msra.mxu0 %v1116
      %1126 = vmatmul.bf16.gmra.mxu0 %v409
      %v1127 = vpop.f32.mrf.mxu0
      %v1128 = vadd.f32 0.0, %v1127
      %v1129 = vpop.f32.mrf.mxu0
      %v1130 = vadd.f32 0.0, %v1129
      %1131 = vmatmul.bf16.gmra.mxu0 %v412
      %v1132 = vpop.f32.mrf.mxu0
      %v1133 = vadd.f32 0.0, %v1132
      %v1134 = vpop.f32.mrf.mxu0
      %v1135 = vadd.f32 0.0, %v1134
      %1136 = vmatmul.bf16.gmra.mxu0 %v415
      %v1137 = vpop.f32.mrf.mxu0
      %v1138 = vadd.f32 0.0, %v1137
      %v1139 = vpop.f32.mrf.mxu0
      %v1140 = vadd.f32 0.0, %v1139
      %1141 = vmatmul.bf16.gmra.mxu0 %v406
      %v1142 = vpop.f32.mrf.mxu0
      %v1143 = vadd.f32 0.0, %v1142
      %v1144 = vpop.f32.mrf.mxu0
      %v1145 = vadd.f32 0.0, %v1144
      %1146 = vmatmul.bf16.gmra.mxu0 %v421
      %v1147 = vpop.f32.mrf.mxu0
      %v1148 = vadd.f32 0.0, %v1147
      %v1149 = vpop.f32.mrf.mxu0
      %v1150 = vadd.f32 0.0, %v1149
      %1151 = vmatmul.bf16.gmra.mxu0 %v424
      %v1152 = vpop.f32.mrf.mxu0
      %v1153 = vadd.f32 0.0, %v1152
      %v1154 = vpop.f32.mrf.mxu0
      %v1155 = vadd.f32 0.0, %v1154
      %1156 = vmatmul.bf16.gmra.mxu0 %v427
      %v1157 = vpop.f32.mrf.mxu0
      %v1158 = vadd.f32 0.0, %v1157
      %v1159 = vpop.f32.mrf.mxu0
      %v1160 = vadd.f32 0.0, %v1159
      %1161 = vmatmul.bf16.gmra.mxu0 %v418
      %v1162 = vpop.f32.mrf.mxu0
      %v1163 = vadd.f32 0.0, %v1162
      %v1164 = vpop.f32.mrf.mxu0
      %v1165 = vadd.f32 0.0, %v1164
      %1166 = vdwg.mxu0
      %v1167 = vadd.f32 %v1096, %v1128
      %v1168 = vadd.f32 %v1097, %v1130
      %v1169 = vadd.f32 %v1098, %v1133
      %v1170 = vadd.f32 %v1099, %v1135
      %v1171 = vadd.f32 %v1100, %v1138
      %v1172 = vadd.f32 %v1101, %v1140
      %v1173 = vadd.f32 %v1102, %v1143
      %v1174 = vadd.f32 %v1103, %v1145
      %v1175 = vadd.f32 %v1104, %v1148
      %v1176 = vadd.f32 %v1105, %v1150
      %v1177 = vadd.f32 %v1106, %v1153
      %v1178 = vadd.f32 %v1107, %v1155
      %v1179 = vadd.f32 %v1108, %v1158
      %v1180 = vadd.f32 %v1109, %v1160
      %v1181 = vadd.f32 %v1110, %v1163
      %v1182 = vadd.f32 %v1111, %v1165
      %v1185 = vunpack.c.l.b16 %v62
      %v1186 = vunpack.c.l.b16 %v63
      %v1187 = vpack.c.b16 %v1186, %v1185
      %1189 = vmatpush.bf16.msra.mxu0 0
      %1190 = vmatpush.bf16.msra.mxu0 0
      %1191 = vmatpush.bf16.msra.mxu0 0
      %1192 = vmatpush.bf16.msra.mxu0 0
      %1193 = vmatpush.bf16.msra.mxu0 0
      %1194 = vmatpush.bf16.msra.mxu0 0
      %1195 = vmatpush.bf16.msra.mxu0 0
      %1196 = vmatpush.bf16.msra.mxu0 %v1187
      %1197 = vmatmul.bf16.gmra.mxu0 %v647
      %v1198 = vpop.f32.mrf.mxu0
      %v1199 = vadd.f32 0.0, %v1198
      %v1200 = vpop.f32.mrf.mxu0
      %v1201 = vadd.f32 0.0, %v1200
      %1202 = vmatmul.bf16.gmra.mxu0 %v650
      %v1203 = vpop.f32.mrf.mxu0
      %v1204 = vadd.f32 0.0, %v1203
      %v1205 = vpop.f32.mrf.mxu0
      %v1206 = vadd.f32 0.0, %v1205
      %1207 = vmatmul.bf16.gmra.mxu0 %v653
      %v1208 = vpop.f32.mrf.mxu0
      %v1209 = vadd.f32 0.0, %v1208
      %v1210 = vpop.f32.mrf.mxu0
      %v1211 = vadd.f32 0.0, %v1210
      %1212 = vmatmul.bf16.gmra.mxu0 %v644
      %v1213 = vpop.f32.mrf.mxu0
      %v1214 = vadd.f32 0.0, %v1213
      %v1215 = vpop.f32.mrf.mxu0
      %v1216 = vadd.f32 0.0, %v1215
      %1217 = vmatmul.bf16.gmra.mxu0 %v659
      %v1218 = vpop.f32.mrf.mxu0
      %v1219 = vadd.f32 0.0, %v1218
      %v1220 = vpop.f32.mrf.mxu0
      %v1221 = vadd.f32 0.0, %v1220
      %1222 = vmatmul.bf16.gmra.mxu0 %v662
      %v1223 = vpop.f32.mrf.mxu0
      %v1224 = vadd.f32 0.0, %v1223
      %v1225 = vpop.f32.mrf.mxu0
      %v1226 = vadd.f32 0.0, %v1225
      %1227 = vmatmul.bf16.gmra.mxu0 %v665
      %v1228 = vpop.f32.mrf.mxu0
      %v1229 = vadd.f32 0.0, %v1228
      %v1230 = vpop.f32.mrf.mxu0
      %v1231 = vadd.f32 0.0, %v1230
      %1232 = vmatmul.bf16.gmra.mxu0 %v656
      %v1233 = vpop.f32.mrf.mxu0
      %v1234 = vadd.f32 0.0, %v1233
      %v1235 = vpop.f32.mrf.mxu0
      %v1236 = vadd.f32 0.0, %v1235
      %1237 = vdwg.mxu0
      %v1238 = vadd.f32 %v1167, %v1199
      %v1239 = vadd.f32 %v1168, %v1201
      %v1240 = vadd.f32 %v1169, %v1204
      %v1241 = vadd.f32 %v1170, %v1206
      %v1242 = vadd.f32 %v1171, %v1209
      %v1243 = vadd.f32 %v1172, %v1211
      %v1244 = vadd.f32 %v1173, %v1214
      %v1245 = vadd.f32 %v1174, %v1216
      %v1246 = vadd.f32 %v1175, %v1219
      %v1247 = vadd.f32 %v1176, %v1221
      %v1248 = vadd.f32 %v1177, %v1224
      %v1249 = vadd.f32 %v1178, %v1226
      %v1250 = vadd.f32 %v1179, %v1229
      %v1251 = vadd.f32 %v1180, %v1231
      %v1252 = vadd.f32 %v1181, %v1234
      %v1253 = vadd.f32 %v1182, %v1236
      %v1254 = vperm.slane %v29, 0
      %v1255 = vadd.f32 %v1238, %v1254
      %v1256 = vadd.f32 %v1239, %v1254
      %v1257 = vadd.f32 %v1240, %v1254
      %v1258 = vadd.f32 %v1241, %v1254
      %v1259 = vadd.f32 %v1242, %v1254
      %v1260 = vadd.f32 %v1243, %v1254
      %v1261 = vadd.f32 %v1244, %v1254
      %v1262 = vadd.f32 %v1245, %v1254
      %v1263 = vadd.f32 %v1246, %v1254
      %v1264 = vadd.f32 %v1247, %v1254
      %v1265 = vadd.f32 %v1248, %v1254
      %v1266 = vadd.f32 %v1249, %v1254
      %v1267 = vadd.f32 %v1250, %v1254
      %v1268 = vadd.f32 %v1251, %v1254
      %v1269 = vadd.f32 %v1252, %v1254
      %v1270 = vadd.f32 %v1253, %v1254
      %vm1271 = vcmask 261120
      %v1272 = vsel %vm1271, %v1255, 0.0
      %v1273 = vsel %vm1271, %v1256, 0.0
      %v1274 = vadd.f32 %v1272, %v1273
      %v1275 = vsel %vm1271, %v1257, 0.0
      %v1276 = vadd.f32 %v1274, %v1275
      %v1277 = vsel %vm1271, %v1258, 0.0
      %v1278 = vadd.f32 %v1276, %v1277
      %v1279 = vsel %vm1271, %v1259, 0.0
      %v1280 = vadd.f32 %v1278, %v1279
      %v1281 = vsel %vm1271, %v1260, 0.0
      %v1282 = vadd.f32 %v1280, %v1281
      %v1283 = vsel %vm1271, %v1261, 0.0
      %v1284 = vadd.f32 %v1282, %v1283
      %v1285 = vsel %vm1271, %v1262, 0.0
      %v1286 = vadd.f32 %v1284, %v1285
      %v1287 = vrot.slane %v1286, 4
      %v1288 = vadd.f32 %v1286, %v1287
      %v1289 = vrot.slane %v1288, 2
      %v1290 = vadd.f32 %v1288, %v1289
      %v1291 = vrot.slane %v1290, 1
      %v1292 = vadd.f32 %v1290, %v1291
      %v1293 = vsel %vm1271, %v1263, 0.0
      %v1294 = vsel %vm1271, %v1264, 0.0
      %v1295 = vadd.f32 %v1293, %v1294
      %v1296 = vsel %vm1271, %v1265, 0.0
      %v1297 = vadd.f32 %v1295, %v1296
      %v1298 = vsel %vm1271, %v1266, 0.0
      %v1299 = vadd.f32 %v1297, %v1298
      %v1300 = vsel %vm1271, %v1267, 0.0
      %v1301 = vadd.f32 %v1299, %v1300
      %v1302 = vsel %vm1271, %v1268, 0.0
      %v1303 = vadd.f32 %v1301, %v1302
      %v1304 = vsel %vm1271, %v1269, 0.0
      %v1305 = vadd.f32 %v1303, %v1304
      %v1306 = vsel %vm1271, %v1270, 0.0
      %v1307 = vadd.f32 %v1305, %v1306
      %v1308 = vrot.slane %v1307, 4
      %v1309 = vadd.f32 %v1307, %v1308
      %v1310 = vrot.slane %v1309, 2
      %v1311 = vadd.f32 %v1309, %v1310
      %v1312 = vrot.slane %v1311, 1
      %v1313 = vadd.f32 %v1311, %v1312
      %v1314 = vrcp.pop 64.0
      %v1315 = vmul.f32 64.0, %v1314
      %v1316 = vsub.f32 1.0, %v1315
      %v1317 = vmul.f32 %v1314, %v1316
      %v1318 = vadd.f32 %v1314, %v1317
      %vm1319 = vweird.f32 %v1314
      %v1320 = vsel %vm1319, %v1314, %v1318
      %v1321 = vmul.f32 %v1292, %v1320
      %v1322 = vmul.f32 %v1313, %v1320
      %v1323 = vmul.f32 %v1255, %v1255
      %v1324 = vmul.f32 %v1256, %v1256
      %v1325 = vmul.f32 %v1257, %v1257
      %v1326 = vmul.f32 %v1258, %v1258
      %v1327 = vmul.f32 %v1259, %v1259
      %v1328 = vmul.f32 %v1260, %v1260
      %v1329 = vmul.f32 %v1261, %v1261
      %v1330 = vmul.f32 %v1262, %v1262
      %v1331 = vmul.f32 %v1263, %v1263
      %v1332 = vmul.f32 %v1264, %v1264
      %v1333 = vmul.f32 %v1265, %v1265
      %v1334 = vmul.f32 %v1266, %v1266
      %v1335 = vmul.f32 %v1267, %v1267
      %v1336 = vmul.f32 %v1268, %v1268
      %v1337 = vmul.f32 %v1269, %v1269
      %v1338 = vmul.f32 %v1270, %v1270
      %v1339 = vsel %vm1271, %v1323, 0.0
      %v1340 = vsel %vm1271, %v1324, 0.0
      %v1341 = vadd.f32 %v1339, %v1340
      %v1342 = vsel %vm1271, %v1325, 0.0
      %v1343 = vadd.f32 %v1341, %v1342
      %v1344 = vsel %vm1271, %v1326, 0.0
      %v1345 = vadd.f32 %v1343, %v1344
      %v1346 = vsel %vm1271, %v1327, 0.0
      %v1347 = vadd.f32 %v1345, %v1346
      %v1348 = vsel %vm1271, %v1328, 0.0
      %v1349 = vadd.f32 %v1347, %v1348
      %v1350 = vsel %vm1271, %v1329, 0.0
      %v1351 = vadd.f32 %v1349, %v1350
      %v1352 = vsel %vm1271, %v1330, 0.0
      %v1353 = vadd.f32 %v1351, %v1352
      %v1354 = vrot.slane %v1353, 4
      %v1355 = vadd.f32 %v1353, %v1354
      %v1356 = vrot.slane %v1355, 2
      %v1357 = vadd.f32 %v1355, %v1356
      %v1358 = vrot.slane %v1357, 1
      %v1359 = vadd.f32 %v1357, %v1358
      %v1360 = vsel %vm1271, %v1331, 0.0
      %v1361 = vsel %vm1271, %v1332, 0.0
      %v1362 = vadd.f32 %v1360, %v1361
      %v1363 = vsel %vm1271, %v1333, 0.0
      %v1364 = vadd.f32 %v1362, %v1363
      %v1365 = vsel %vm1271, %v1334, 0.0
      %v1366 = vadd.f32 %v1364, %v1365
      %v1367 = vsel %vm1271, %v1335, 0.0
      %v1368 = vadd.f32 %v1366, %v1367
      %v1369 = vsel %vm1271, %v1336, 0.0
      %v1370 = vadd.f32 %v1368, %v1369
      %v1371 = vsel %vm1271, %v1337, 0.0
      %v1372 = vadd.f32 %v1370, %v1371
      %v1373 = vsel %vm1271, %v1338, 0.0
      %v1374 = vadd.f32 %v1372, %v1373
      %v1375 = vrot.slane %v1374, 4
      %v1376 = vadd.f32 %v1374, %v1375
      %v1377 = vrot.slane %v1376, 2
      %v1378 = vadd.f32 %v1376, %v1377
      %v1379 = vrot.slane %v1378, 1
      %v1380 = vadd.f32 %v1378, %v1379
      %v1381 = vmul.f32 %v1359, %v1320
      %v1382 = vmul.f32 %v1380, %v1320
      %v1383 = vmul.f32 %v1321, %v1321
      %v1384 = vmul.f32 %v1322, %v1322
      %v1385 = vsub.f32 %v1381, %v1383
      %v1386 = vsub.f32 %v1382, %v1384
      %v1387 = vmax.f32 %v1385, 0.0
      %v1388 = vmax.f32 %v1386, 0.0
      %v1389 = vsub.f32 %v1255, %v1321
      %v1390 = vsub.f32 %v1256, %v1321
      %v1391 = vsub.f32 %v1257, %v1321
      %v1392 = vsub.f32 %v1258, %v1321
      %v1393 = vsub.f32 %v1259, %v1321
      %v1394 = vsub.f32 %v1260, %v1321
      %v1395 = vsub.f32 %v1261, %v1321
      %v1396 = vsub.f32 %v1262, %v1321
      %v1397 = vsub.f32 %v1263, %v1322
      %v1398 = vsub.f32 %v1264, %v1322
      %v1399 = vsub.f32 %v1265, %v1322
      %v1400 = vsub.f32 %v1266, %v1322
      %v1401 = vsub.f32 %v1267, %v1322
      %v1402 = vsub.f32 %v1268, %v1322
      %v1403 = vsub.f32 %v1269, %v1322
      %v1404 = vsub.f32 %v1270, %v1322
      %v1405 = vadd.f32 %v1387, 1e-05
      %v1406 = vadd.f32 %v1388, 1e-05
      %v1407 = vrsqrt.pop %v1405
      %v1408 = vmul.f32 %v1407, %v1405
      %v1409 = vmul.f32 %v1408, %v1407
      %v1410 = vmul.f32 0.5, %v1409
      %v1411 = vsub.f32 1.5, %v1410
      %v1412 = vmul.f32 %v1407, %v1411
      %vm1413 = vweird.f32 %v1405
      %vm1414 = vweird.f32 %v1407
      %vm1415 = vmor %vm1413, %vm1414
      %v1416 = vsel %vm1415, %v1407, %v1412
      %v1417 = vrsqrt.pop %v1406
      %v1418 = vmul.f32 %v1417, %v1406
      %v1419 = vmul.f32 %v1418, %v1417
      %v1420 = vmul.f32 0.5, %v1419
      %v1421 = vsub.f32 1.5, %v1420
      %v1422 = vmul.f32 %v1417, %v1421
      %vm1423 = vweird.f32 %v1406
      %vm1424 = vweird.f32 %v1417
      %vm1425 = vmor %vm1423, %vm1424
      %v1426 = vsel %vm1425, %v1417, %v1422
      %v1427 = vmul.f32 %v1389, %v1416
      %v1428 = vmul.f32 %v1390, %v1416
      %v1429 = vmul.f32 %v1391, %v1416
      %v1430 = vmul.f32 %v1392, %v1416
      %v1431 = vmul.f32 %v1393, %v1416
      %v1432 = vmul.f32 %v1394, %v1416
      %v1433 = vmul.f32 %v1395, %v1416
      %v1434 = vmul.f32 %v1396, %v1416
      %v1435 = vmul.f32 %v1397, %v1426
      %v1436 = vmul.f32 %v1398, %v1426
      %v1437 = vmul.f32 %v1399, %v1426
      %v1438 = vmul.f32 %v1400, %v1426
      %v1439 = vmul.f32 %v1401, %v1426
      %v1440 = vmul.f32 %v1402, %v1426
      %v1441 = vmul.f32 %v1403, %v1426
      %v1442 = vmul.f32 %v1404, %v1426
      %v1443 = vperm.slane %v29, 1
      %v1444 = vmul.f32 %v1427, %v1443
      %v1445 = vmul.f32 %v1428, %v1443
      %v1446 = vmul.f32 %v1429, %v1443
      %v1447 = vmul.f32 %v1430, %v1443
      %v1448 = vmul.f32 %v1431, %v1443
      %v1449 = vmul.f32 %v1432, %v1443
      %v1450 = vmul.f32 %v1433, %v1443
      %v1451 = vmul.f32 %v1434, %v1443
      %v1452 = vmul.f32 %v1435, %v1443
      %v1453 = vmul.f32 %v1436, %v1443
      %v1454 = vmul.f32 %v1437, %v1443
      %v1455 = vmul.f32 %v1438, %v1443
      %v1456 = vmul.f32 %v1439, %v1443
      %v1457 = vmul.f32 %v1440, %v1443
      %v1458 = vmul.f32 %v1441, %v1443
      %v1459 = vmul.f32 %v1442, %v1443
      %v1460 = vperm.slane %v29, 2
      %v1461 = vadd.f32 %v1444, %v1460
      %v1462 = vadd.f32 %v1445, %v1460
      %v1463 = vadd.f32 %v1446, %v1460
      %v1464 = vadd.f32 %v1447, %v1460
      %v1465 = vadd.f32 %v1448, %v1460
      %v1466 = vadd.f32 %v1449, %v1460
      %v1467 = vadd.f32 %v1450, %v1460
      %v1468 = vadd.f32 %v1451, %v1460
      %v1469 = vadd.f32 %v1452, %v1460
      %v1470 = vadd.f32 %v1453, %v1460
      %v1471 = vadd.f32 %v1454, %v1460
      %v1472 = vadd.f32 %v1455, %v1460
      %v1473 = vadd.f32 %v1456, %v1460
      %v1474 = vadd.f32 %v1457, %v1460
      %v1475 = vadd.f32 %v1458, %v1460
      %v1476 = vadd.f32 %v1459, %v1460
      %v1477 = vmax.f32 %v1461, 0.0
      %v1478 = vmax.f32 %v1462, 0.0
      %v1479 = vmax.f32 %v1463, 0.0
      %v1480 = vmax.f32 %v1464, 0.0
      %v1481 = vmax.f32 %v1465, 0.0
      %v1482 = vmax.f32 %v1466, 0.0
      %v1483 = vmax.f32 %v1467, 0.0
      %v1484 = vmax.f32 %v1468, 0.0
      %v1485 = vmax.f32 %v1469, 0.0
      %v1486 = vmax.f32 %v1470, 0.0
      %v1487 = vmax.f32 %v1471, 0.0
      %v1488 = vmax.f32 %v1472, 0.0
      %v1489 = vmax.f32 %v1473, 0.0
      %v1490 = vmax.f32 %v1474, 0.0
      %v1491 = vmax.f32 %v1475, 0.0
      %v1492 = vmax.f32 %v1476, 0.0
      %v1493 = vpack.c.bf16 %v1477, %v1477
      %v1494 = vpack.c.bf16 %v1478, %v1478
      %v1495 = vpack.c.bf16 %v1479, %v1479
      %v1496 = vpack.c.bf16 %v1480, %v1480
      %v1497 = vpack.c.bf16 %v1481, %v1481
      %v1498 = vpack.c.bf16 %v1482, %v1482
      %v1499 = vpack.c.bf16 %v1483, %v1483
      %v1500 = vpack.c.bf16 %v1484, %v1484
      %v1501 = vpack.c.bf16 %v1485, %v1485
      %v1502 = vpack.c.bf16 %v1486, %v1486
      %v1503 = vpack.c.bf16 %v1487, %v1487
      %v1504 = vpack.c.bf16 %v1488, %v1488
      %v1505 = vpack.c.bf16 %v1489, %v1489
      %v1506 = vpack.c.bf16 %v1490, %v1490
      %v1507 = vpack.c.bf16 %v1491, %v1491
      %v1508 = vpack.c.bf16 %v1492, %v1492
      %vm1509 = vcmask 257024
      %1510 = vst.msk [vmem:[#allocation2] sm:$0xf] %vm1509, %v1493
      %1511 = vst.msk [vmem:[#allocation2 + $0x4] sm:$0xf] %vm1509, %v1494
      %1512 = vst.msk [vmem:[#allocation2 + $0x8] sm:$0xf] %vm1509, %v1495
      %1513 = vst.msk [vmem:[#allocation2 + $0xc] sm:$0xf] %vm1509, %v1496
      %1514 = vst.msk [vmem:[#allocation2 + $0x10] sm:$0xf] %vm1509, %v1497
      %1515 = vst.msk [vmem:[#allocation2 + $0x14] sm:$0xf] %vm1509, %v1498
      %1516 = vst.msk [vmem:[#allocation2 + $0x18] sm:$0xf] %vm1509, %v1499
      %1517 = vst.msk [vmem:[#allocation2 + $0x1c] sm:$0xf] %vm1509, %v1500
      %1518 = vst.msk [vmem:[#allocation2 + $0x20] sm:$0xf] %vm1509, %v1501
      %1519 = vst.msk [vmem:[#allocation2 + $0x24] sm:$0xf] %vm1509, %v1502
      %1520 = vst.msk [vmem:[#allocation2 + $0x28] sm:$0xf] %vm1509, %v1503
      %1521 = vst.msk [vmem:[#allocation2 + $0x2c] sm:$0xf] %vm1509, %v1504
      %1522 = vst.msk [vmem:[#allocation2 + $0x30] sm:$0xf] %vm1509, %v1505
      %1523 = vst.msk [vmem:[#allocation2 + $0x34] sm:$0xf] %vm1509, %v1506
      %1524 = vst.msk [vmem:[#allocation2 + $0x38] sm:$0xf] %vm1509, %v1507
      %1525 = vst.msk [vmem:[#allocation2 + $0x3c] sm:$0xf] %vm1509, %v1508
    $region29: #{board_representation_forward_batched.1} parent=1 // pred_fallthru
      _
    %v1526 = vld [vmem:[%s5] sm:$0xff]
    %v1527 = vld [vmem:[%s5 + $0x8] sm:$0xff]
    %v1528 = vld [vmem:[#allocation2] sm:$0xf]
    %v1529 = vld [vmem:[#allocation2 + $0x4] sm:$0xf]
    %v1530 = vld [vmem:[#allocation2 + $0x8] sm:$0xf]
    %v1531 = vld [vmem:[#allocation2 + $0xc] sm:$0xf]
    %v1532 = vld [vmem:[#allocation2 + $0x10] sm:$0xf]
    %v1533 = vld [vmem:[#allocation2 + $0x14] sm:$0xf]
    %v1534 = vld [vmem:[#allocation2 + $0x18] sm:$0xf]
    %v1535 = vld [vmem:[#allocation2 + $0x1c] sm:$0xf]
    %v1536 = vld [vmem:[#allocation2 + $0x20] sm:$0xf]
    %v1537 = vld [vmem:[#allocation2 + $0x24] sm:$0xf]
    %v1538 = vld [vmem:[#allocation2 + $0x28] sm:$0xf]
    %v1539 = vld [vmem:[#allocation2 + $0x2c] sm:$0xf]
    %v1540 = vld [vmem:[#allocation2 + $0x30] sm:$0xf]
    %v1541 = vld [vmem:[#allocation2 + $0x34] sm:$0xf]
    %v1542 = vld [vmem:[#allocation2 + $0x38] sm:$0xf]
    %v1543 = vld [vmem:[#allocation2 + $0x3c] sm:$0xf]
    %v1544 = vld [vmem:[%s3] sm:$0xf]
    %v1545 = vld [vmem:[%s3 + $0x4] sm:$0xf]
    %v1546 = vld [vmem:[%s3 + $0x8] sm:$0xf]
    %v1547 = vld [vmem:[%s3 + $0xc] sm:$0xf]
    %v1548 = vld [vmem:[%s3 + $0x10] sm:$0xf]
    %v1549 = vld [vmem:[%s3 + $0x14] sm:$0xf]
    %v1550 = vld [vmem:[%s3 + $0x18] sm:$0xf]
    %v1551 = vld [vmem:[%s3 + $0x1c] sm:$0xf]
    %v1552 = vld [vmem:[%s3 + $0x20] sm:$0xf]
    %v1553 = vld [vmem:[%s3 + $0x24] sm:$0xf]
    %v1554 = vld [vmem:[%s3 + $0x28] sm:$0xf]
    %v1555 = vld [vmem:[%s3 + $0x2c] sm:$0xf]
    %v1556 = vld [vmem:[%s3 + $0x30] sm:$0xf]
    %v1557 = vld [vmem:[%s3 + $0x34] sm:$0xf]
    %v1558 = vld [vmem:[%s3 + $0x38] sm:$0xf]
    %v1559 = vld [vmem:[%s3 + $0x3c] sm:$0xf]
    %v1560 = vld [vmem:[%s3 + $0x40] sm:$0xf]
    %v1561 = vld [vmem:[%s3 + $0x44] sm:$0xf]
    %v1562 = vld [vmem:[%s3 + $0x48] sm:$0xf]
    %v1563 = vld [vmem:[%s3 + $0x4c] sm:$0xf]
    %v1564 = vld [vmem:[%s3 + $0x50] sm:$0xf]
    %v1565 = vld [vmem:[%s3 + $0x54] sm:$0xf]
    %v1566 = vld [vmem:[%s3 + $0x58] sm:$0xf]
    %v1567 = vld [vmem:[%s3 + $0x5c] sm:$0xf]
    %v1568 = vld [vmem:[%s3 + $0x60] sm:$0xf]
    %v1569 = vld [vmem:[%s3 + $0x64] sm:$0xf]
    %v1570 = vld [vmem:[%s3 + $0x68] sm:$0xf]
    %v1571 = vld [vmem:[%s3 + $0x6c] sm:$0xf]
    %v1572 = vld [vmem:[%s3 + $0x70] sm:$0xf]
    %v1573 = vld [vmem:[%s3 + $0x74] sm:$0xf]
    %v1574 = vld [vmem:[%s3 + $0x78] sm:$0xf]
    %v1575 = vld [vmem:[%s3 + $0x7c] sm:$0xf]
    %v1576 = vld [vmem:[%s3 + $0x80] sm:$0xf]
    %v1577 = vld [vmem:[%s3 + $0x84] sm:$0xf]
    %v1578 = vld [vmem:[%s3 + $0x88] sm:$0xf]
    %v1579 = vld [vmem:[%s3 + $0x8c] sm:$0xf]
    %v1596 = vunpack.c.l.b16 %v1535
    %v1597 = vunpack.c.l.b16 %v1528
    %v1598 = vunpack.c.l.b16 %v1529
    %v1599 = vunpack.c.l.b16 %v1530
    %v1600 = vunpack.c.l.b16 %v1531
    %v1601 = vunpack.c.l.b16 %v1532
    %v1602 = vunpack.c.l.b16 %v1533
    %v1603 = vunpack.c.l.b16 %v1534
    %v1604 = vunpack.c.l.b16 %v1543
    %v1605 = vunpack.c.l.b16 %v1536
    %v1606 = vunpack.c.l.b16 %v1537
    %v1607 = vunpack.c.l.b16 %v1538
    %v1608 = vunpack.c.l.b16 %v1539
    %v1609 = vunpack.c.l.b16 %v1540
    %v1610 = vunpack.c.l.b16 %v1541
    %v1611 = vunpack.c.l.b16 %v1542
    %v1612 = vpack.c.b16 %v1596, %v1596
    %v1613 = vpack.c.b16 %v1597, %v1597
    %v1614 = vpack.c.b16 %v1598, %v1598
    %v1615 = vpack.c.b16 %v1599, %v1599
    %v1616 = vpack.c.b16 %v1600, %v1600
    %v1617 = vpack.c.b16 %v1601, %v1601
    %v1618 = vpack.c.b16 %v1602, %v1602
    %v1619 = vpack.c.b16 %v1603, %v1603
    %v1620 = vpack.c.b16 %v1604, %v1604
    %v1621 = vpack.c.b16 %v1605, %v1605
    %v1622 = vpack.c.b16 %v1606, %v1606
    %v1623 = vpack.c.b16 %v1607, %v1607
    %v1624 = vpack.c.b16 %v1608, %v1608
    %v1625 = vpack.c.b16 %v1609, %v1609
    %v1626 = vpack.c.b16 %v1610, %v1610
    %v1627 = vpack.c.b16 %v1611, %v1611
    %v1629 = vshrl.u32 %v1612, 16
    %v1631 = vrot.slane %v1629, 3
    %v1633 = vshrl.u32 %v1613, 16
    %v1635 = vrot.slane %v1633, 3
    %v1637 = vshrl.u32 %v1614, 16
    %v1639 = vrot.slane %v1637, 3
    %v1641 = vshrl.u32 %v1615, 16
    %v1643 = vrot.slane %v1641, 3
    %v1645 = vshrl.u32 %v1616, 16
    %v1647 = vrot.slane %v1645, 3
    %v1649 = vshrl.u32 %v1617, 16
    %v1651 = vrot.slane %v1649, 3
    %v1653 = vshrl.u32 %v1618, 16
    %v1655 = vrot.slane %v1653, 3
    %v1657 = vshrl.u32 %v1619, 16
    %v1659 = vrot.slane %v1657, 3
    %v1661 = vshrl.u32 %v1620, 16
    %v1663 = vrot.slane %v1661, 3
    %v1665 = vshrl.u32 %v1621, 16
    %v1667 = vrot.slane %v1665, 3
    %v1669 = vshrl.u32 %v1622, 16
    %v1671 = vrot.slane %v1669, 3
    %v1673 = vshrl.u32 %v1623, 16
    %v1675 = vrot.slane %v1673, 3
    %v1677 = vshrl.u32 %v1624, 16
    %v1679 = vrot.slane %v1677, 3
    %v1681 = vshrl.u32 %v1625, 16
    %v1683 = vrot.slane %v1681, 3
    %v1685 = vshrl.u32 %v1626, 16
    %v1687 = vrot.slane %v1685, 3
    %v1689 = vshrl.u32 %v1627, 16
    %v1691 = vrot.slane %v1689, 3
    %v1708 = vrot.slane %v1629, 7
    %v1709 = vshll.u32 %v1612, 16
    %v1711 = vor.u32 %v1708, %v1709
    %v1712 = vrot.slane %v1633, 7
    %v1713 = vshll.u32 %v1613, 16
    %v1715 = vor.u32 %v1712, %v1713
    %v1716 = vrot.slane %v1637, 7
    %v1717 = vshll.u32 %v1614, 16
    %v1719 = vor.u32 %v1716, %v1717
    %v1720 = vrot.slane %v1641, 7
    %v1721 = vshll.u32 %v1615, 16
    %v1723 = vor.u32 %v1720, %v1721
    %v1724 = vrot.slane %v1645, 7
    %v1725 = vshll.u32 %v1616, 16
    %v1727 = vor.u32 %v1724, %v1725
    %v1728 = vrot.slane %v1649, 7
    %v1729 = vshll.u32 %v1617, 16
    %v1731 = vor.u32 %v1728, %v1729
    %v1732 = vrot.slane %v1653, 7
    %v1733 = vshll.u32 %v1618, 16
    %v1735 = vor.u32 %v1732, %v1733
    %v1736 = vrot.slane %v1657, 7
    %v1737 = vshll.u32 %v1619, 16
    %v1739 = vor.u32 %v1736, %v1737
    %v1740 = vrot.slane %v1661, 7
    %v1741 = vshll.u32 %v1620, 16
    %v1743 = vor.u32 %v1740, %v1741
    %v1744 = vrot.slane %v1665, 7
    %v1745 = vshll.u32 %v1621, 16
    %v1747 = vor.u32 %v1744, %v1745
    %v1748 = vrot.slane %v1669, 7
    %v1749 = vshll.u32 %v1622, 16
    %v1751 = vor.u32 %v1748, %v1749
    %v1752 = vrot.slane %v1673, 7
    %v1753 = vshll.u32 %v1623, 16
    %v1755 = vor.u32 %v1752, %v1753
    %v1756 = vrot.slane %v1677, 7
    %v1757 = vshll.u32 %v1624, 16
    %v1759 = vor.u32 %v1756, %v1757
    %v1760 = vrot.slane %v1681, 7
    %v1761 = vshll.u32 %v1625, 16
    %v1763 = vor.u32 %v1760, %v1761
    %v1764 = vrot.slane %v1685, 7
    %v1765 = vshll.u32 %v1626, 16
    %v1767 = vor.u32 %v1764, %v1765
    %v1768 = vrot.slane %v1689, 7
    %v1769 = vshll.u32 %v1627, 16
    %v1771 = vor.u32 %v1768, %v1769
    %vm1788 = vcmask 1040384
    %vm1789 = vsmask.f32 256
    %vm1790 = vmand %vm1788, %vm1789
    %v1791 = vsel %vm1790, %v1631, %v1711
    %v1792 = vsel %vm1790, %v1635, %v1715
    %v1793 = vsel %vm1790, %v1639, %v1719
    %v1794 = vsel %vm1790, %v1643, %v1723
    %v1795 = vsel %vm1790, %v1647, %v1727
    %v1796 = vsel %vm1790, %v1651, %v1731
    %v1797 = vsel %vm1790, %v1655, %v1735
    %v1798 = vsel %vm1790, %v1659, %v1739
    %v1799 = vsel %vm1790, %v1663, %v1743
    %v1800 = vsel %vm1790, %v1667, %v1747
    %v1801 = vsel %vm1790, %v1671, %v1751
    %v1802 = vsel %vm1790, %v1675, %v1755
    %v1803 = vsel %vm1790, %v1679, %v1759
    %v1804 = vsel %vm1790, %v1683, %v1763
    %v1805 = vsel %vm1790, %v1687, %v1767
    %v1806 = vsel %vm1790, %v1691, %v1771
    %v1807 = vrot.slane %v1709, 1
    %v1808 = vor.u32 %v1629, %v1807
    %v1809 = vrot.slane %v1713, 1
    %v1810 = vor.u32 %v1633, %v1809
    %v1811 = vrot.slane %v1717, 1
    %v1812 = vor.u32 %v1637, %v1811
    %v1813 = vrot.slane %v1721, 1
    %v1814 = vor.u32 %v1641, %v1813
    %v1815 = vrot.slane %v1725, 1
    %v1816 = vor.u32 %v1645, %v1815
    %v1817 = vrot.slane %v1729, 1
    %v1818 = vor.u32 %v1649, %v1817
    %v1819 = vrot.slane %v1733, 1
    %v1820 = vor.u32 %v1653, %v1819
    %v1821 = vrot.slane %v1737, 1
    %v1822 = vor.u32 %v1657, %v1821
    %v1823 = vrot.slane %v1741, 1
    %v1824 = vor.u32 %v1661, %v1823
    %v1825 = vrot.slane %v1745, 1
    %v1826 = vor.u32 %v1665, %v1825
    %v1827 = vrot.slane %v1749, 1
    %v1828 = vor.u32 %v1669, %v1827
    %v1829 = vrot.slane %v1753, 1
    %v1830 = vor.u32 %v1673, %v1829
    %v1831 = vrot.slane %v1757, 1
    %v1832 = vor.u32 %v1677, %v1831
    %v1833 = vrot.slane %v1761, 1
    %v1834 = vor.u32 %v1681, %v1833
    %v1835 = vrot.slane %v1765, 1
    %v1836 = vor.u32 %v1685, %v1835
    %v1837 = vrot.slane %v1769, 1
    %v1838 = vor.u32 %v1689, %v1837
    %v1855 = vrot.slane %v1709, 5
    %v1856 = vrot.slane %v1713, 5
    %v1857 = vrot.slane %v1717, 5
    %v1858 = vrot.slane %v1721, 5
    %v1859 = vrot.slane %v1725, 5
    %v1860 = vrot.slane %v1729, 5
    %v1861 = vrot.slane %v1733, 5
    %v1862 = vrot.slane %v1737, 5
    %v1863 = vrot.slane %v1741, 5
    %v1864 = vrot.slane %v1745, 5
    %v1865 = vrot.slane %v1749, 5
    %v1866 = vrot.slane %v1753, 5
    %v1867 = vrot.slane %v1757, 5
    %v1868 = vrot.slane %v1761, 5
    %v1869 = vrot.slane %v1765, 5
    %v1870 = vrot.slane %v1769, 5
    %vm1887 = vcmask 1043456
    %vm1888 = vsmask.f32 3328
    %vm1889 = vmand %vm1887, %vm1888
    %v1890 = vsel %vm1889, %v1808, %v1855
    %v1891 = vsel %vm1889, %v1810, %v1856
    %v1892 = vsel %vm1889, %v1812, %v1857
    %v1893 = vsel %vm1889, %v1814, %v1858
    %v1894 = vsel %vm1889, %v1816, %v1859
    %v1895 = vsel %vm1889, %v1818, %v1860
    %v1896 = vsel %vm1889, %v1820, %v1861
    %v1897 = vsel %vm1889, %v1822, %v1862
    %v1898 = vsel %vm1889, %v1824, %v1863
    %v1899 = vsel %vm1889, %v1826, %v1864
    %v1900 = vsel %vm1889, %v1828, %v1865
    %v1901 = vsel %vm1889, %v1830, %v1866
    %v1902 = vsel %vm1889, %v1832, %v1867
    %v1903 = vsel %vm1889, %v1834, %v1868
    %v1904 = vsel %vm1889, %v1836, %v1869
    %v1905 = vsel %vm1889, %v1838, %v1870
    %v1906 = vpack.c.b16 %v1597, %v1596
    %v1907 = vpack.c.b16 %v1599, %v1598
    %v1908 = vpack.c.b16 %v1601, %v1600
    %v1909 = vpack.c.b16 %v1603, %v1602
    %v1910 = vpack.c.b16 %v1605, %v1604
    %v1911 = vpack.c.b16 %v1607, %v1606
    %v1912 = vpack.c.b16 %v1609, %v1608
    %v1913 = vpack.c.b16 %v1611, %v1610
    %v1918 = vunpack.c.l.b16 %v1548
    %v1919 = vunpack.c.l.b16 %v1549
    %v1920 = vunpack.c.l.b16 %v1550
    %v1921 = vunpack.c.l.b16 %v1551
    %v1922 = vpack.c.b16 %v1919, %v1918
    %v1923 = vpack.c.b16 %v1921, %v1920
    %vm1926 = vcmask 261120
    %v1928 = vsel %vm1926, %v1906, 0
    %v1931 = vsel %vm1926, %v1907, 0
    %v1934 = vsel %vm1926, %v1908, 0
    %v1937 = vsel %vm1926, %v1909, 0
    %v1940 = vsel %vm1926, %v1910, 0
    %v1943 = vsel %vm1926, %v1911, 0
    %v1946 = vsel %vm1926, %v1912, 0
    %v1949 = vsel %vm1926, %v1913, 0
    %1951 = vmatpush.bf16.msra.mxu0 0
    %1952 = vmatpush.bf16.msra.mxu0 0
    %1953 = vmatpush.bf16.msra.mxu0 0
    %1954 = vmatpush.bf16.msra.mxu0 0
    %1955 = vmatpush.bf16.msra.mxu0 0
    %1956 = vmatpush.bf16.msra.mxu0 0
    %1957 = vmatpush.bf16.msra.mxu0 %v1923
    %1958 = vmatpush.bf16.msra.mxu0 %v1922
    %1959 = vmatmul.bf16.gmra.mxu0 %v1928
    %v1960 = vpop.f32.mrf.mxu0
    %v1961 = vadd.f32 0.0, %v1960
    %v1962 = vpop.f32.mrf.mxu0
    %v1963 = vadd.f32 0.0, %v1962
    %1964 = vmatmul.bf16.gmra.mxu0 %v1931
    %v1965 = vpop.f32.mrf.mxu0
    %v1966 = vadd.f32 0.0, %v1965
    %v1967 = vpop.f32.mrf.mxu0
    %v1968 = vadd.f32 0.0, %v1967
    %1969 = vmatmul.bf16.gmra.mxu0 %v1934
    %v1970 = vpop.f32.mrf.mxu0
    %v1971 = vadd.f32 0.0, %v1970
    %v1972 = vpop.f32.mrf.mxu0
    %v1973 = vadd.f32 0.0, %v1972
    %1974 = vmatmul.bf16.gmra.mxu0 %v1937
    %v1975 = vpop.f32.mrf.mxu0
    %v1976 = vadd.f32 0.0, %v1975
    %v1977 = vpop.f32.mrf.mxu0
    %v1978 = vadd.f32 0.0, %v1977
    %1979 = vmatmul.bf16.gmra.mxu0 %v1940
    %v1980 = vpop.f32.mrf.mxu0
    %v1981 = vadd.f32 0.0, %v1980
    %v1982 = vpop.f32.mrf.mxu0
    %v1983 = vadd.f32 0.0, %v1982
    %1984 = vmatmul.bf16.gmra.mxu0 %v1943
    %v1985 = vpop.f32.mrf.mxu0
    %v1986 = vadd.f32 0.0, %v1985
    %v1987 = vpop.f32.mrf.mxu0
    %v1988 = vadd.f32 0.0, %v1987
    %1989 = vmatmul.bf16.gmra.mxu0 %v1946
    %v1990 = vpop.f32.mrf.mxu0
    %v1991 = vadd.f32 0.0, %v1990
    %v1992 = vpop.f32.mrf.mxu0
    %v1993 = vadd.f32 0.0, %v1992
    %1994 = vmatmul.bf16.gmra.mxu0 %v1949
    %v1995 = vpop.f32.mrf.mxu0
    %v1996 = vadd.f32 0.0, %v1995
    %v1997 = vpop.f32.mrf.mxu0
    %v1998 = vadd.f32 0.0, %v1997
    %1999 = vdwg.mxu0
    %v2016 = vunpack.c.l.b16 %v1791
    %v2017 = vunpack.c.l.b16 %v1792
    %v2018 = vunpack.c.l.b16 %v1793
    %v2019 = vunpack.c.l.b16 %v1794
    %v2020 = vunpack.c.l.b16 %v1795
    %v2021 = vunpack.c.l.b16 %v1796
    %v2022 = vunpack.c.l.b16 %v1797
    %v2023 = vunpack.c.l.b16 %v1798
    %v2024 = vunpack.c.l.b16 %v1799
    %v2025 = vunpack.c.l.b16 %v1800
    %v2026 = vunpack.c.l.b16 %v1801
    %v2027 = vunpack.c.l.b16 %v1802
    %v2028 = vunpack.c.l.b16 %v1803
    %v2029 = vunpack.c.l.b16 %v1804
    %v2030 = vunpack.c.l.b16 %v1805
    %v2031 = vunpack.c.l.b16 %v1806
    %v2032 = vpack.c.b16 %v2017, %v2016
    %v2033 = vpack.c.b16 %v2019, %v2018
    %v2034 = vpack.c.b16 %v2021, %v2020
    %v2035 = vpack.c.b16 %v2023, %v2022
    %v2036 = vpack.c.b16 %v2025, %v2024
    %v2037 = vpack.c.b16 %v2027, %v2026
    %v2038 = vpack.c.b16 %v2029, %v2028
    %v2039 = vpack.c.b16 %v2031, %v2030
    %v2044 = vunpack.c.l.b16 %v1544
    %v2045 = vunpack.c.l.b16 %v1545
    %v2046 = vunpack.c.l.b16 %v1546
    %v2047 = vunpack.c.l.b16 %v1547
    %v2048 = vpack.c.b16 %v2045, %v2044
    %v2049 = vpack.c.b16 %v2047, %v2046
    %v2053 = vsel %vm1926, %v2032, 0
    %v2056 = vsel %vm1926, %v2033, 0
    %v2059 = vsel %vm1926, %v2034, 0
    %v2062 = vsel %vm1926, %v2035, 0
    %v2065 = vsel %vm1926, %v2036, 0
    %v2068 = vsel %vm1926, %v2037, 0
    %v2071 = vsel %vm1926, %v2038, 0
    %v2074 = vsel %vm1926, %v2039, 0
    %2076 = vmatpush.bf16.msra.mxu0 0
    %2077 = vmatpush.bf16.msra.mxu0 0
    %2078 = vmatpush.bf16.msra.mxu0 0
    %2079 = vmatpush.bf16.msra.mxu0 0
    %2080 = vmatpush.bf16.msra.mxu0 0
    %2081 = vmatpush.bf16.msra.mxu0 0
    %2082 = vmatpush.bf16.msra.mxu0 %v2049
    %2083 = vmatpush.bf16.msra.mxu0 %v2048
    %2084 = vmatmul.bf16.gmra.mxu0 %v2053
    %v2085 = vpop.f32.mrf.mxu0
    %v2086 = vadd.f32 %v1961, %v2085
    %v2087 = vpop.f32.mrf.mxu0
    %v2088 = vadd.f32 %v1963, %v2087
    %2089 = vmatmul.bf16.gmra.mxu0 %v2056
    %v2090 = vpop.f32.mrf.mxu0
    %v2091 = vadd.f32 %v1966, %v2090
    %v2092 = vpop.f32.mrf.mxu0
    %v2093 = vadd.f32 %v1968, %v2092
    %2094 = vmatmul.bf16.gmra.mxu0 %v2059
    %v2095 = vpop.f32.mrf.mxu0
    %v2096 = vadd.f32 %v1971, %v2095
    %v2097 = vpop.f32.mrf.mxu0
    %v2098 = vadd.f32 %v1973, %v2097
    %2099 = vmatmul.bf16.gmra.mxu0 %v2062
    %v2100 = vpop.f32.mrf.mxu0
    %v2101 = vadd.f32 %v1976, %v2100
    %v2102 = vpop.f32.mrf.mxu0
    %v2103 = vadd.f32 %v1978, %v2102
    %2104 = vmatmul.bf16.gmra.mxu0 %v2065
    %v2105 = vpop.f32.mrf.mxu0
    %v2106 = vadd.f32 %v1981, %v2105
    %v2107 = vpop.f32.mrf.mxu0
    %v2108 = vadd.f32 %v1983, %v2107
    %2109 = vmatmul.bf16.gmra.mxu0 %v2068
    %v2110 = vpop.f32.mrf.mxu0
    %v2111 = vadd.f32 %v1986, %v2110
    %v2112 = vpop.f32.mrf.mxu0
    %v2113 = vadd.f32 %v1988, %v2112
    %2114 = vmatmul.bf16.gmra.mxu0 %v2071
    %v2115 = vpop.f32.mrf.mxu0
    %v2116 = vadd.f32 %v1991, %v2115
    %v2117 = vpop.f32.mrf.mxu0
    %v2118 = vadd.f32 %v1993, %v2117
    %2119 = vmatmul.bf16.gmra.mxu0 %v2074
    %v2120 = vpop.f32.mrf.mxu0
    %v2121 = vadd.f32 %v1996, %v2120
    %v2122 = vpop.f32.mrf.mxu0
    %v2123 = vadd.f32 %v1998, %v2122
    %2124 = vdwg.mxu0
    %v2141 = vunpack.c.l.b16 %v1890
    %v2142 = vunpack.c.l.b16 %v1891
    %v2143 = vunpack.c.l.b16 %v1892
    %v2144 = vunpack.c.l.b16 %v1893
    %v2145 = vunpack.c.l.b16 %v1894
    %v2146 = vunpack.c.l.b16 %v1895
    %v2147 = vunpack.c.l.b16 %v1896
    %v2148 = vunpack.c.l.b16 %v1897
    %v2149 = vunpack.c.l.b16 %v1898
    %v2150 = vunpack.c.l.b16 %v1899
    %v2151 = vunpack.c.l.b16 %v1900
    %v2152 = vunpack.c.l.b16 %v1901
    %v2153 = vunpack.c.l.b16 %v1902
    %v2154 = vunpack.c.l.b16 %v1903
    %v2155 = vunpack.c.l.b16 %v1904
    %v2156 = vunpack.c.l.b16 %v1905
    %v2157 = vpack.c.b16 %v2142, %v2141
    %v2158 = vpack.c.b16 %v2144, %v2143
    %v2159 = vpack.c.b16 %v2146, %v2145
    %v2160 = vpack.c.b16 %v2148, %v2147
    %v2161 = vpack.c.b16 %v2150, %v2149
    %v2162 = vpack.c.b16 %v2152, %v2151
    %v2163 = vpack.c.b16 %v2154, %v2153
    %v2164 = vpack.c.b16 %v2156, %v2155
    %v2169 = vunpack.c.l.b16 %v1552
    %v2170 = vunpack.c.l.b16 %v1553
    %v2171 = vunpack.c.l.b16 %v1554
    %v2172 = vunpack.c.l.b16 %v1555
    %v2173 = vpack.c.b16 %v2170, %v2169
    %v2174 = vpack.c.b16 %v2172, %v2171
    %v2178 = vsel %vm1926, %v2157, 0
    %v2181 = vsel %vm1926, %v2158, 0
    %v2184 = vsel %vm1926, %v2159, 0
    %v2187 = vsel %vm1926, %v2160, 0
    %v2190 = vsel %vm1926, %v2161, 0
    %v2193 = vsel %vm1926, %v2162, 0
    %v2196 = vsel %vm1926, %v2163, 0
    %v2199 = vsel %vm1926, %v2164, 0
    %2201 = vmatpush.bf16.msra.mxu0 0
    %2202 = vmatpush.bf16.msra.mxu0 0
    %2203 = vmatpush.bf16.msra.mxu0 0
    %2204 = vmatpush.bf16.msra.mxu0 0
    %2205 = vmatpush.bf16.msra.mxu0 0
    %2206 = vmatpush.bf16.msra.mxu0 0
    %2207 = vmatpush.bf16.msra.mxu0 %v2174
    %2208 = vmatpush.bf16.msra.mxu0 %v2173
    %2209 = vmatmul.bf16.gmra.mxu0 %v2178
    %v2210 = vpop.f32.mrf.mxu0
    %v2211 = vadd.f32 0.0, %v2210
    %v2212 = vpop.f32.mrf.mxu0
    %v2213 = vadd.f32 0.0, %v2212
    %2214 = vmatmul.bf16.gmra.mxu0 %v2181
    %v2215 = vpop.f32.mrf.mxu0
    %v2216 = vadd.f32 0.0, %v2215
    %v2217 = vpop.f32.mrf.mxu0
    %v2218 = vadd.f32 0.0, %v2217
    %2219 = vmatmul.bf16.gmra.mxu0 %v2184
    %v2220 = vpop.f32.mrf.mxu0
    %v2221 = vadd.f32 0.0, %v2220
    %v2222 = vpop.f32.mrf.mxu0
    %v2223 = vadd.f32 0.0, %v2222
    %2224 = vmatmul.bf16.gmra.mxu0 %v2187
    %v2225 = vpop.f32.mrf.mxu0
    %v2226 = vadd.f32 0.0, %v2225
    %v2227 = vpop.f32.mrf.mxu0
    %v2228 = vadd.f32 0.0, %v2227
    %2229 = vmatmul.bf16.gmra.mxu0 %v2190
    %v2230 = vpop.f32.mrf.mxu0
    %v2231 = vadd.f32 0.0, %v2230
    %v2232 = vpop.f32.mrf.mxu0
    %v2233 = vadd.f32 0.0, %v2232
    %2234 = vmatmul.bf16.gmra.mxu0 %v2193
    %v2235 = vpop.f32.mrf.mxu0
    %v2236 = vadd.f32 0.0, %v2235
    %v2237 = vpop.f32.mrf.mxu0
    %v2238 = vadd.f32 0.0, %v2237
    %2239 = vmatmul.bf16.gmra.mxu0 %v2196
    %v2240 = vpop.f32.mrf.mxu0
    %v2241 = vadd.f32 0.0, %v2240
    %v2242 = vpop.f32.mrf.mxu0
    %v2243 = vadd.f32 0.0, %v2242
    %2244 = vmatmul.bf16.gmra.mxu0 %v2199
    %v2245 = vpop.f32.mrf.mxu0
    %v2246 = vadd.f32 0.0, %v2245
    %v2247 = vpop.f32.mrf.mxu0
    %v2248 = vadd.f32 0.0, %v2247
    %2249 = vdwg.mxu0
    %v2250 = vadd.f32 %v2086, %v2211
    %v2251 = vadd.f32 %v2088, %v2213
    %v2252 = vadd.f32 %v2091, %v2216
    %v2253 = vadd.f32 %v2093, %v2218
    %v2254 = vadd.f32 %v2096, %v2221
    %v2255 = vadd.f32 %v2098, %v2223
    %v2256 = vadd.f32 %v2101, %v2226
    %v2257 = vadd.f32 %v2103, %v2228
    %v2258 = vadd.f32 %v2106, %v2231
    %v2259 = vadd.f32 %v2108, %v2233
    %v2260 = vadd.f32 %v2111, %v2236
    %v2261 = vadd.f32 %v2113, %v2238
    %v2262 = vadd.f32 %v2116, %v2241
    %v2263 = vadd.f32 %v2118, %v2243
    %v2264 = vadd.f32 %v2121, %v2246
    %v2265 = vadd.f32 %v2123, %v2248
    %v2266 = vpack.c.b16 %v2018, %v2017
    %v2267 = vpack.c.b16 %v2020, %v2019
    %v2268 = vpack.c.b16 %v2022, %v2021
    %v2269 = vpack.c.b16 %v2016, %v2023
    %v2270 = vpack.c.b16 %v2026, %v2025
    %v2271 = vpack.c.b16 %v2028, %v2027
    %v2272 = vpack.c.b16 %v2030, %v2029
    %v2273 = vpack.c.b16 %v2024, %v2031
    %v2278 = vunpack.c.l.b16 %v1556
    %v2279 = vunpack.c.l.b16 %v1557
    %v2280 = vunpack.c.l.b16 %v1558
    %v2281 = vunpack.c.l.b16 %v1559
    %v2282 = vpack.c.b16 %v2279, %v2278
    %v2283 = vpack.c.b16 %v2281, %v2280
    %v2287 = vsel %vm1926, %v2266, 0
    %v2290 = vsel %vm1926, %v2267, 0
    %v2293 = vsel %vm1926, %v2268, 0
    %v2296 = vsel %vm1926, %v2269, 0
    %v2299 = vsel %vm1926, %v2270, 0
    %v2302 = vsel %vm1926, %v2271, 0
    %v2305 = vsel %vm1926, %v2272, 0
    %v2308 = vsel %vm1926, %v2273, 0
    %2310 = vmatpush.bf16.msra.mxu0 0
    %2311 = vmatpush.bf16.msra.mxu0 0
    %2312 = vmatpush.bf16.msra.mxu0 0
    %2313 = vmatpush.bf16.msra.mxu0 0
    %2314 = vmatpush.bf16.msra.mxu0 0
    %2315 = vmatpush.bf16.msra.mxu0 0
    %2316 = vmatpush.bf16.msra.mxu0 %v2283
    %2317 = vmatpush.bf16.msra.mxu0 %v2282
    %2318 = vmatmul.bf16.gmra.mxu0 %v2287
    %v2319 = vpop.f32.mrf.mxu0
    %v2320 = vadd.f32 0.0, %v2319
    %v2321 = vpop.f32.mrf.mxu0
    %v2322 = vadd.f32 0.0, %v2321
    %2323 = vmatmul.bf16.gmra.mxu0 %v2290
    %v2324 = vpop.f32.mrf.mxu0
    %v2325 = vadd.f32 0.0, %v2324
    %v2326 = vpop.f32.mrf.mxu0
    %v2327 = vadd.f32 0.0, %v2326
    %2328 = vmatmul.bf16.gmra.mxu0 %v2293
    %v2329 = vpop.f32.mrf.mxu0
    %v2330 = vadd.f32 0.0, %v2329
    %v2331 = vpop.f32.mrf.mxu0
    %v2332 = vadd.f32 0.0, %v2331
    %2333 = vmatmul.bf16.gmra.mxu0 %v2296
    %v2334 = vpop.f32.mrf.mxu0
    %v2335 = vadd.f32 0.0, %v2334
    %v2336 = vpop.f32.mrf.mxu0
    %v2337 = vadd.f32 0.0, %v2336
    %2338 = vmatmul.bf16.gmra.mxu0 %v2299
    %v2339 = vpop.f32.mrf.mxu0
    %v2340 = vadd.f32 0.0, %v2339
    %v2341 = vpop.f32.mrf.mxu0
    %v2342 = vadd.f32 0.0, %v2341
    %2343 = vmatmul.bf16.gmra.mxu0 %v2302
    %v2344 = vpop.f32.mrf.mxu0
    %v2345 = vadd.f32 0.0, %v2344
    %v2346 = vpop.f32.mrf.mxu0
    %v2347 = vadd.f32 0.0, %v2346
    %2348 = vmatmul.bf16.gmra.mxu0 %v2305
    %v2349 = vpop.f32.mrf.mxu0
    %v2350 = vadd.f32 0.0, %v2349
    %v2351 = vpop.f32.mrf.mxu0
    %v2352 = vadd.f32 0.0, %v2351
    %2353 = vmatmul.bf16.gmra.mxu0 %v2308
    %v2354 = vpop.f32.mrf.mxu0
    %v2355 = vadd.f32 0.0, %v2354
    %v2356 = vpop.f32.mrf.mxu0
    %v2357 = vadd.f32 0.0, %v2356
    %2358 = vdwg.mxu0
    %v2359 = vadd.f32 %v2250, %v2320
    %v2360 = vadd.f32 %v2251, %v2322
    %v2361 = vadd.f32 %v2252, %v2325
    %v2362 = vadd.f32 %v2253, %v2327
    %v2363 = vadd.f32 %v2254, %v2330
    %v2364 = vadd.f32 %v2255, %v2332
    %v2365 = vadd.f32 %v2256, %v2335
    %v2366 = vadd.f32 %v2257, %v2337
    %v2367 = vadd.f32 %v2258, %v2340
    %v2368 = vadd.f32 %v2259, %v2342
    %v2369 = vadd.f32 %v2260, %v2345
    %v2370 = vadd.f32 %v2261, %v2347
    %v2371 = vadd.f32 %v2262, %v2350
    %v2372 = vadd.f32 %v2263, %v2352
    %v2373 = vadd.f32 %v2264, %v2355
    %v2374 = vadd.f32 %v2265, %v2357
    %v2375 = vpack.c.b16 %v1598, %v1597
    %v2376 = vpack.c.b16 %v1600, %v1599
    %v2377 = vpack.c.b16 %v1602, %v1601
    %v2378 = vpack.c.b16 %v1596, %v1603
    %v2379 = vpack.c.b16 %v1606, %v1605
    %v2380 = vpack.c.b16 %v1608, %v1607
    %v2381 = vpack.c.b16 %v1610, %v1609
    %v2382 = vpack.c.b16 %v1604, %v1611
    %v2387 = vunpack.c.l.b16 %v1560
    %v2388 = vunpack.c.l.b16 %v1561
    %v2389 = vunpack.c.l.b16 %v1562
    %v2390 = vunpack.c.l.b16 %v1563
    %v2391 = vpack.c.b16 %v2388, %v2387
    %v2392 = vpack.c.b16 %v2390, %v2389
    %v2396 = vsel %vm1926, %v2375, 0
    %v2399 = vsel %vm1926, %v2376, 0
    %v2402 = vsel %vm1926, %v2377, 0
    %v2405 = vsel %vm1926, %v2378, 0
    %v2408 = vsel %vm1926, %v2379, 0
    %v2411 = vsel %vm1926, %v2380, 0
    %v2414 = vsel %vm1926, %v2381, 0
    %v2417 = vsel %vm1926, %v2382, 0
    %2419 = vmatpush.bf16.msra.mxu0 0
    %2420 = vmatpush.bf16.msra.mxu0 0
    %2421 = vmatpush.bf16.msra.mxu0 0
    %2422 = vmatpush.bf16.msra.mxu0 0
    %2423 = vmatpush.bf16.msra.mxu0 0
    %2424 = vmatpush.bf16.msra.mxu0 0
    %2425 = vmatpush.bf16.msra.mxu0 %v2392
    %2426 = vmatpush.bf16.msra.mxu0 %v2391
    %2427 = vmatmul.bf16.gmra.mxu0 %v2396
    %v2428 = vpop.f32.mrf.mxu0
    %v2429 = vadd.f32 0.0, %v2428
    %v2430 = vpop.f32.mrf.mxu0
    %v2431 = vadd.f32 0.0, %v2430
    %2432 = vmatmul.bf16.gmra.mxu0 %v2399
    %v2433 = vpop.f32.mrf.mxu0
    %v2434 = vadd.f32 0.0, %v2433
    %v2435 = vpop.f32.mrf.mxu0
    %v2436 = vadd.f32 0.0, %v2435
    %2437 = vmatmul.bf16.gmra.mxu0 %v2402
    %v2438 = vpop.f32.mrf.mxu0
    %v2439 = vadd.f32 0.0, %v2438
    %v2440 = vpop.f32.mrf.mxu0
    %v2441 = vadd.f32 0.0, %v2440
    %2442 = vmatmul.bf16.gmra.mxu0 %v2405
    %v2443 = vpop.f32.mrf.mxu0
    %v2444 = vadd.f32 0.0, %v2443
    %v2445 = vpop.f32.mrf.mxu0
    %v2446 = vadd.f32 0.0, %v2445
    %2447 = vmatmul.bf16.gmra.mxu0 %v2408
    %v2448 = vpop.f32.mrf.mxu0
    %v2449 = vadd.f32 0.0, %v2448
    %v2450 = vpop.f32.mrf.mxu0
    %v2451 = vadd.f32 0.0, %v2450
    %2452 = vmatmul.bf16.gmra.mxu0 %v2411
    %v2453 = vpop.f32.mrf.mxu0
    %v2454 = vadd.f32 0.0, %v2453
    %v2455 = vpop.f32.mrf.mxu0
    %v2456 = vadd.f32 0.0, %v2455
    %2457 = vmatmul.bf16.gmra.mxu0 %v2414
    %v2458 = vpop.f32.mrf.mxu0
    %v2459 = vadd.f32 0.0, %v2458
    %v2460 = vpop.f32.mrf.mxu0
    %v2461 = vadd.f32 0.0, %v2460
    %2462 = vmatmul.bf16.gmra.mxu0 %v2417
    %v2463 = vpop.f32.mrf.mxu0
    %v2464 = vadd.f32 0.0, %v2463
    %v2465 = vpop.f32.mrf.mxu0
    %v2466 = vadd.f32 0.0, %v2465
    %2467 = vdwg.mxu0
    %v2468 = vadd.f32 %v2359, %v2429
    %v2469 = vadd.f32 %v2360, %v2431
    %v2470 = vadd.f32 %v2361, %v2434
    %v2471 = vadd.f32 %v2362, %v2436
    %v2472 = vadd.f32 %v2363, %v2439
    %v2473 = vadd.f32 %v2364, %v2441
    %v2474 = vadd.f32 %v2365, %v2444
    %v2475 = vadd.f32 %v2366, %v2446
    %v2476 = vadd.f32 %v2367, %v2449
    %v2477 = vadd.f32 %v2368, %v2451
    %v2478 = vadd.f32 %v2369, %v2454
    %v2479 = vadd.f32 %v2370, %v2456
    %v2480 = vadd.f32 %v2371, %v2459
    %v2481 = vadd.f32 %v2372, %v2461
    %v2482 = vadd.f32 %v2373, %v2464
    %v2483 = vadd.f32 %v2374, %v2466
    %v2484 = vpack.c.b16 %v2143, %v2142
    %v2485 = vpack.c.b16 %v2145, %v2144
    %v2486 = vpack.c.b16 %v2147, %v2146
    %v2487 = vpack.c.b16 %v2141, %v2148
    %v2488 = vpack.c.b16 %v2151, %v2150
    %v2489 = vpack.c.b16 %v2153, %v2152
    %v2490 = vpack.c.b16 %v2155, %v2154
    %v2491 = vpack.c.b16 %v2149, %v2156
    %v2496 = vunpack.c.l.b16 %v1564
    %v2497 = vunpack.c.l.b16 %v1565
    %v2498 = vunpack.c.l.b16 %v1566
    %v2499 = vunpack.c.l.b16 %v1567
    %v2500 = vpack.c.b16 %v2497, %v2496
    %v2501 = vpack.c.b16 %v2499, %v2498
    %v2505 = vsel %vm1926, %v2484, 0
    %v2508 = vsel %vm1926, %v2485, 0
    %v2511 = vsel %vm1926, %v2486, 0
    %v2514 = vsel %vm1926, %v2487, 0
    %v2517 = vsel %vm1926, %v2488, 0
    %v2520 = vsel %vm1926, %v2489, 0
    %v2523 = vsel %vm1926, %v2490, 0
    %v2526 = vsel %vm1926, %v2491, 0
    %2528 = vmatpush.bf16.msra.mxu0 0
    %2529 = vmatpush.bf16.msra.mxu0 0
    %2530 = vmatpush.bf16.msra.mxu0 0
    %2531 = vmatpush.bf16.msra.mxu0 0
    %2532 = vmatpush.bf16.msra.mxu0 0
    %2533 = vmatpush.bf16.msra.mxu0 0
    %2534 = vmatpush.bf16.msra.mxu0 %v2501
    %2535 = vmatpush.bf16.msra.mxu0 %v2500
    %2536 = vmatmul.bf16.gmra.mxu0 %v2505
    %v2537 = vpop.f32.mrf.mxu0
    %v2538 = vadd.f32 0.0, %v2537
    %v2539 = vpop.f32.mrf.mxu0
    %v2540 = vadd.f32 0.0, %v2539
    %2541 = vmatmul.bf16.gmra.mxu0 %v2508
    %v2542 = vpop.f32.mrf.mxu0
    %v2543 = vadd.f32 0.0, %v2542
    %v2544 = vpop.f32.mrf.mxu0
    %v2545 = vadd.f32 0.0, %v2544
    %2546 = vmatmul.bf16.gmra.mxu0 %v2511
    %v2547 = vpop.f32.mrf.mxu0
    %v2548 = vadd.f32 0.0, %v2547
    %v2549 = vpop.f32.mrf.mxu0
    %v2550 = vadd.f32 0.0, %v2549
    %2551 = vmatmul.bf16.gmra.mxu0 %v2514
    %v2552 = vpop.f32.mrf.mxu0
    %v2553 = vadd.f32 0.0, %v2552
    %v2554 = vpop.f32.mrf.mxu0
    %v2555 = vadd.f32 0.0, %v2554
    %2556 = vmatmul.bf16.gmra.mxu0 %v2517
    %v2557 = vpop.f32.mrf.mxu0
    %v2558 = vadd.f32 0.0, %v2557
    %v2559 = vpop.f32.mrf.mxu0
    %v2560 = vadd.f32 0.0, %v2559
    %2561 = vmatmul.bf16.gmra.mxu0 %v2520
    %v2562 = vpop.f32.mrf.mxu0
    %v2563 = vadd.f32 0.0, %v2562
    %v2564 = vpop.f32.mrf.mxu0
    %v2565 = vadd.f32 0.0, %v2564
    %2566 = vmatmul.bf16.gmra.mxu0 %v2523
    %v2567 = vpop.f32.mrf.mxu0
    %v2568 = vadd.f32 0.0, %v2567
    %v2569 = vpop.f32.mrf.mxu0
    %v2570 = vadd.f32 0.0, %v2569
    %2571 = vmatmul.bf16.gmra.mxu0 %v2526
    %v2572 = vpop.f32.mrf.mxu0
    %v2573 = vadd.f32 0.0, %v2572
    %v2574 = vpop.f32.mrf.mxu0
    %v2575 = vadd.f32 0.0, %v2574
    %2576 = vdwg.mxu0
    %v2577 = vadd.f32 %v2468, %v2538
    %v2578 = vadd.f32 %v2469, %v2540
    %v2579 = vadd.f32 %v2470, %v2543
    %v2580 = vadd.f32 %v2471, %v2545
    %v2581 = vadd.f32 %v2472, %v2548
    %v2582 = vadd.f32 %v2473, %v2550
    %v2583 = vadd.f32 %v2474, %v2553
    %v2584 = vadd.f32 %v2475, %v2555
    %v2585 = vadd.f32 %v2476, %v2558
    %v2586 = vadd.f32 %v2477, %v2560
    %v2587 = vadd.f32 %v2478, %v2563
    %v2588 = vadd.f32 %v2479, %v2565
    %v2589 = vadd.f32 %v2480, %v2568
    %v2590 = vadd.f32 %v2481, %v2570
    %v2591 = vadd.f32 %v2482, %v2573
    %v2592 = vadd.f32 %v2483, %v2575
    %v2597 = vunpack.c.l.b16 %v1568
    %v2598 = vunpack.c.l.b16 %v1569
    %v2599 = vunpack.c.l.b16 %v1570
    %v2600 = vunpack.c.l.b16 %v1571
    %v2601 = vpack.c.b16 %v2598, %v2597
    %v2602 = vpack.c.b16 %v2600, %v2599
    %2605 = vmatpush.bf16.msra.mxu0 0
    %2606 = vmatpush.bf16.msra.mxu0 0
    %2607 = vmatpush.bf16.msra.mxu0 0
    %2608 = vmatpush.bf16.msra.mxu0 0
    %2609 = vmatpush.bf16.msra.mxu0 0
    %2610 = vmatpush.bf16.msra.mxu0 0
    %2611 = vmatpush.bf16.msra.mxu0 %v2602
    %2612 = vmatpush.bf16.msra.mxu0 %v2601
    %2613 = vmatmul.bf16.gmra.mxu0 %v2056
    %v2614 = vpop.f32.mrf.mxu0
    %v2615 = vadd.f32 0.0, %v2614
    %v2616 = vpop.f32.mrf.mxu0
    %v2617 = vadd.f32 0.0, %v2616
    %2618 = vmatmul.bf16.gmra.mxu0 %v2059
    %v2619 = vpop.f32.mrf.mxu0
    %v2620 = vadd.f32 0.0, %v2619
    %v2621 = vpop.f32.mrf.mxu0
    %v2622 = vadd.f32 0.0, %v2621
    %2623 = vmatmul.bf16.gmra.mxu0 %v2062
    %v2624 = vpop.f32.mrf.mxu0
    %v2625 = vadd.f32 0.0, %v2624
    %v2626 = vpop.f32.mrf.mxu0
    %v2627 = vadd.f32 0.0, %v2626
    %2628 = vmatmul.bf16.gmra.mxu0 %v2053
    %v2629 = vpop.f32.mrf.mxu0
    %v2630 = vadd.f32 0.0, %v2629
    %v2631 = vpop.f32.mrf.mxu0
    %v2632 = vadd.f32 0.0, %v2631
    %2633 = vmatmul.bf16.gmra.mxu0 %v2068
    %v2634 = vpop.f32.mrf.mxu0
    %v2635 = vadd.f32 0.0, %v2634
    %v2636 = vpop.f32.mrf.mxu0
    %v2637 = vadd.f32 0.0, %v2636
    %2638 = vmatmul.bf16.gmra.mxu0 %v2071
    %v2639 = vpop.f32.mrf.mxu0
    %v2640 = vadd.f32 0.0, %v2639
    %v2641 = vpop.f32.mrf.mxu0
    %v2642 = vadd.f32 0.0, %v2641
    %2643 = vmatmul.bf16.gmra.mxu0 %v2074
    %v2644 = vpop.f32.mrf.mxu0
    %v2645 = vadd.f32 0.0, %v2644
    %v2646 = vpop.f32.mrf.mxu0
    %v2647 = vadd.f32 0.0, %v2646
    %2648 = vmatmul.bf16.gmra.mxu0 %v2065
    %v2649 = vpop.f32.mrf.mxu0
    %v2650 = vadd.f32 0.0, %v2649
    %v2651 = vpop.f32.mrf.mxu0
    %v2652 = vadd.f32 0.0, %v2651
    %2653 = vdwg.mxu0
    %v2654 = vadd.f32 %v2577, %v2615
    %v2655 = vadd.f32 %v2578, %v2617
    %v2656 = vadd.f32 %v2579, %v2620
    %v2657 = vadd.f32 %v2580, %v2622
    %v2658 = vadd.f32 %v2581, %v2625
    %v2659 = vadd.f32 %v2582, %v2627
    %v2660 = vadd.f32 %v2583, %v2630
    %v2661 = vadd.f32 %v2584, %v2632
    %v2662 = vadd.f32 %v2585, %v2635
    %v2663 = vadd.f32 %v2586, %v2637
    %v2664 = vadd.f32 %v2587, %v2640
    %v2665 = vadd.f32 %v2588, %v2642
    %v2666 = vadd.f32 %v2589, %v2645
    %v2667 = vadd.f32 %v2590, %v2647
    %v2668 = vadd.f32 %v2591, %v2650
    %v2669 = vadd.f32 %v2592, %v2652
    %v2674 = vunpack.c.l.b16 %v1572
    %v2675 = vunpack.c.l.b16 %v1573
    %v2676 = vunpack.c.l.b16 %v1574
    %v2677 = vunpack.c.l.b16 %v1575
    %v2678 = vpack.c.b16 %v2675, %v2674
    %v2679 = vpack.c.b16 %v2677, %v2676
    %2682 = vmatpush.bf16.msra.mxu0 0
    %2683 = vmatpush.bf16.msra.mxu0 0
    %2684 = vmatpush.bf16.msra.mxu0 0
    %2685 = vmatpush.bf16.msra.mxu0 0
    %2686 = vmatpush.bf16.msra.mxu0 0
    %2687 = vmatpush.bf16.msra.mxu0 0
    %2688 = vmatpush.bf16.msra.mxu0 %v2679
    %2689 = vmatpush.bf16.msra.mxu0 %v2678
    %2690 = vmatmul.bf16.gmra.mxu0 %v1931
    %v2691 = vpop.f32.mrf.mxu0
    %v2692 = vadd.f32 0.0, %v2691
    %v2693 = vpop.f32.mrf.mxu0
    %v2694 = vadd.f32 0.0, %v2693
    %2695 = vmatmul.bf16.gmra.mxu0 %v1934
    %v2696 = vpop.f32.mrf.mxu0
    %v2697 = vadd.f32 0.0, %v2696
    %v2698 = vpop.f32.mrf.mxu0
    %v2699 = vadd.f32 0.0, %v2698
    %2700 = vmatmul.bf16.gmra.mxu0 %v1937
    %v2701 = vpop.f32.mrf.mxu0
    %v2702 = vadd.f32 0.0, %v2701
    %v2703 = vpop.f32.mrf.mxu0
    %v2704 = vadd.f32 0.0, %v2703
    %2705 = vmatmul.bf16.gmra.mxu0 %v1928
    %v2706 = vpop.f32.mrf.mxu0
    %v2707 = vadd.f32 0.0, %v2706
    %v2708 = vpop.f32.mrf.mxu0
    %v2709 = vadd.f32 0.0, %v2708
    %2710 = vmatmul.bf16.gmra.mxu0 %v1943
    %v2711 = vpop.f32.mrf.mxu0
    %v2712 = vadd.f32 0.0, %v2711
    %v2713 = vpop.f32.mrf.mxu0
    %v2714 = vadd.f32 0.0, %v2713
    %2715 = vmatmul.bf16.gmra.mxu0 %v1946
    %v2716 = vpop.f32.mrf.mxu0
    %v2717 = vadd.f32 0.0, %v2716
    %v2718 = vpop.f32.mrf.mxu0
    %v2719 = vadd.f32 0.0, %v2718
    %2720 = vmatmul.bf16.gmra.mxu0 %v1949
    %v2721 = vpop.f32.mrf.mxu0
    %v2722 = vadd.f32 0.0, %v2721
    %v2723 = vpop.f32.mrf.mxu0
    %v2724 = vadd.f32 0.0, %v2723
    %2725 = vmatmul.bf16.gmra.mxu0 %v1940
    %v2726 = vpop.f32.mrf.mxu0
    %v2727 = vadd.f32 0.0, %v2726
    %v2728 = vpop.f32.mrf.mxu0
    %v2729 = vadd.f32 0.0, %v2728
    %2730 = vdwg.mxu0
    %v2731 = vadd.f32 %v2654, %v2692
    %v2732 = vadd.f32 %v2655, %v2694
    %v2733 = vadd.f32 %v2656, %v2697
    %v2734 = vadd.f32 %v2657, %v2699
    %v2735 = vadd.f32 %v2658, %v2702
    %v2736 = vadd.f32 %v2659, %v2704
    %v2737 = vadd.f32 %v2660, %v2707
    %v2738 = vadd.f32 %v2661, %v2709
    %v2739 = vadd.f32 %v2662, %v2712
    %v2740 = vadd.f32 %v2663, %v2714
    %v2741 = vadd.f32 %v2664, %v2717
    %v2742 = vadd.f32 %v2665, %v2719
    %v2743 = vadd.f32 %v2666, %v2722
    %v2744 = vadd.f32 %v2667, %v2724
    %v2745 = vadd.f32 %v2668, %v2727
    %v2746 = vadd.f32 %v2669, %v2729
    %v2751 = vunpack.c.l.b16 %v1576
    %v2752 = vunpack.c.l.b16 %v1577
    %v2753 = vunpack.c.l.b16 %v1578
    %v2754 = vunpack.c.l.b16 %v1579
    %v2755 = vpack.c.b16 %v2752, %v2751
    %v2756 = vpack.c.b16 %v2754, %v2753
    %2759 = vmatpush.bf16.msra.mxu0 0
    %2760 = vmatpush.bf16.msra.mxu0 0
    %2761 = vmatpush.bf16.msra.mxu0 0
    %2762 = vmatpush.bf16.msra.mxu0 0
    %2763 = vmatpush.bf16.msra.mxu0 0
    %2764 = vmatpush.bf16.msra.mxu0 0
    %2765 = vmatpush.bf16.msra.mxu0 %v2756
    %2766 = vmatpush.bf16.msra.mxu0 %v2755
    %2767 = vmatmul.bf16.gmra.mxu0 %v2181
    %v2768 = vpop.f32.mrf.mxu0
    %v2769 = vadd.f32 0.0, %v2768
    %v2770 = vpop.f32.mrf.mxu0
    %v2771 = vadd.f32 0.0, %v2770
    %2772 = vmatmul.bf16.gmra.mxu0 %v2184
    %v2773 = vpop.f32.mrf.mxu0
    %v2774 = vadd.f32 0.0, %v2773
    %v2775 = vpop.f32.mrf.mxu0
    %v2776 = vadd.f32 0.0, %v2775
    %2777 = vmatmul.bf16.gmra.mxu0 %v2187
    %v2778 = vpop.f32.mrf.mxu0
    %v2779 = vadd.f32 0.0, %v2778
    %v2780 = vpop.f32.mrf.mxu0
    %v2781 = vadd.f32 0.0, %v2780
    %2782 = vmatmul.bf16.gmra.mxu0 %v2178
    %v2783 = vpop.f32.mrf.mxu0
    %v2784 = vadd.f32 0.0, %v2783
    %v2785 = vpop.f32.mrf.mxu0
    %v2786 = vadd.f32 0.0, %v2785
    %2787 = vmatmul.bf16.gmra.mxu0 %v2193
    %v2788 = vpop.f32.mrf.mxu0
    %v2789 = vadd.f32 0.0, %v2788
    %v2790 = vpop.f32.mrf.mxu0
    %v2791 = vadd.f32 0.0, %v2790
    %2792 = vmatmul.bf16.gmra.mxu0 %v2196
    %v2793 = vpop.f32.mrf.mxu0
    %v2794 = vadd.f32 0.0, %v2793
    %v2795 = vpop.f32.mrf.mxu0
    %v2796 = vadd.f32 0.0, %v2795
    %2797 = vmatmul.bf16.gmra.mxu0 %v2199
    %v2798 = vpop.f32.mrf.mxu0
    %v2799 = vadd.f32 0.0, %v2798
    %v2800 = vpop.f32.mrf.mxu0
    %v2801 = vadd.f32 0.0, %v2800
    %2802 = vmatmul.bf16.gmra.mxu0 %v2190
    %v2803 = vpop.f32.mrf.mxu0
    %v2804 = vadd.f32 0.0, %v2803
    %v2805 = vpop.f32.mrf.mxu0
    %v2806 = vadd.f32 0.0, %v2805
    %2807 = vdwg.mxu0
    %v2808 = vadd.f32 %v2731, %v2769
    %v2809 = vadd.f32 %v2732, %v2771
    %v2810 = vadd.f32 %v2733, %v2774
    %v2811 = vadd.f32 %v2734, %v2776
    %v2812 = vadd.f32 %v2735, %v2779
    %v2813 = vadd.f32 %v2736, %v2781
    %v2814 = vadd.f32 %v2737, %v2784
    %v2815 = vadd.f32 %v2738, %v2786
    %v2816 = vadd.f32 %v2739, %v2789
    %v2817 = vadd.f32 %v2740, %v2791
    %v2818 = vadd.f32 %v2741, %v2794
    %v2819 = vadd.f32 %v2742, %v2796
    %v2820 = vadd.f32 %v2743, %v2799
    %v2821 = vadd.f32 %v2744, %v2801
    %v2822 = vadd.f32 %v2745, %v2804
    %v2823 = vadd.f32 %v2746, %v2806
    %v2824 = vperm.slane %v1526, 0
    %v2825 = vadd.f32 %v2808, %v2824
    %v2826 = vadd.f32 %v2809, %v2824
    %v2827 = vadd.f32 %v2810, %v2824
    %v2828 = vadd.f32 %v2811, %v2824
    %v2829 = vadd.f32 %v2812, %v2824
    %v2830 = vadd.f32 %v2813, %v2824
    %v2831 = vadd.f32 %v2814, %v2824
    %v2832 = vadd.f32 %v2815, %v2824
    %v2833 = vadd.f32 %v2816, %v2824
    %v2834 = vadd.f32 %v2817, %v2824
    %v2835 = vadd.f32 %v2818, %v2824
    %v2836 = vadd.f32 %v2819, %v2824
    %v2837 = vadd.f32 %v2820, %v2824
    %v2838 = vadd.f32 %v2821, %v2824
    %v2839 = vadd.f32 %v2822, %v2824
    %v2840 = vadd.f32 %v2823, %v2824
    %v2841 = vsel %vm1926, %v2825, 0.0
    %v2842 = vsel %vm1926, %v2826, 0.0
    %v2843 = vadd.f32 %v2841, %v2842
    %v2844 = vsel %vm1926, %v2827, 0.0
    %v2845 = vadd.f32 %v2843, %v2844
    %v2846 = vsel %vm1926, %v2828, 0.0
    %v2847 = vadd.f32 %v2845, %v2846
    %v2848 = vsel %vm1926, %v2829, 0.0
    %v2849 = vadd.f32 %v2847, %v2848
    %v2850 = vsel %vm1926, %v2830, 0.0
    %v2851 = vadd.f32 %v2849, %v2850
    %v2852 = vsel %vm1926, %v2831, 0.0
    %v2853 = vadd.f32 %v2851, %v2852
    %v2854 = vsel %vm1926, %v2832, 0.0
    %v2855 = vadd.f32 %v2853, %v2854
    %v2856 = vrot.slane %v2855, 4
    %v2857 = vadd.f32 %v2855, %v2856
    %v2858 = vrot.slane %v2857, 2
    %v2859 = vadd.f32 %v2857, %v2858
    %v2860 = vrot.slane %v2859, 1
    %v2861 = vadd.f32 %v2859, %v2860
    %v2862 = vsel %vm1926, %v2833, 0.0
    %v2863 = vsel %vm1926, %v2834, 0.0
    %v2864 = vadd.f32 %v2862, %v2863
    %v2865 = vsel %vm1926, %v2835, 0.0
    %v2866 = vadd.f32 %v2864, %v2865
    %v2867 = vsel %vm1926, %v2836, 0.0
    %v2868 = vadd.f32 %v2866, %v2867
    %v2869 = vsel %vm1926, %v2837, 0.0
    %v2870 = vadd.f32 %v2868, %v2869
    %v2871 = vsel %vm1926, %v2838, 0.0
    %v2872 = vadd.f32 %v2870, %v2871
    %v2873 = vsel %vm1926, %v2839, 0.0
    %v2874 = vadd.f32 %v2872, %v2873
    %v2875 = vsel %vm1926, %v2840, 0.0
    %v2876 = vadd.f32 %v2874, %v2875
    %v2877 = vrot.slane %v2876, 4
    %v2878 = vadd.f32 %v2876, %v2877
    %v2879 = vrot.slane %v2878, 2
    %v2880 = vadd.f32 %v2878, %v2879
    %v2881 = vrot.slane %v2880, 1
    %v2882 = vadd.f32 %v2880, %v2881
    %v2883 = vrcp.pop 64.0
    %v2884 = vmul.f32 64.0, %v2883
    %v2885 = vsub.f32 1.0, %v2884
    %v2886 = vmul.f32 %v2883, %v2885
    %v2887 = vadd.f32 %v2883, %v2886
    %vm2888 = vweird.f32 %v2883
    %v2889 = vsel %vm2888, %v2883, %v2887
    %v2890 = vmul.f32 %v2861, %v2889
    %v2891 = vmul.f32 %v2882, %v2889
    %v2892 = vmul.f32 %v2825, %v2825
    %v2893 = vmul.f32 %v2826, %v2826
    %v2894 = vmul.f32 %v2827, %v2827
    %v2895 = vmul.f32 %v2828, %v2828
    %v2896 = vmul.f32 %v2829, %v2829
    %v2897 = vmul.f32 %v2830, %v2830
    %v2898 = vmul.f32 %v2831, %v2831
    %v2899 = vmul.f32 %v2832, %v2832
    %v2900 = vmul.f32 %v2833, %v2833
    %v2901 = vmul.f32 %v2834, %v2834
    %v2902 = vmul.f32 %v2835, %v2835
    %v2903 = vmul.f32 %v2836, %v2836
    %v2904 = vmul.f32 %v2837, %v2837
    %v2905 = vmul.f32 %v2838, %v2838
    %v2906 = vmul.f32 %v2839, %v2839
    %v2907 = vmul.f32 %v2840, %v2840
    %v2908 = vsel %vm1926, %v2892, 0.0
    %v2909 = vsel %vm1926, %v2893, 0.0
    %v2910 = vadd.f32 %v2908, %v2909
    %v2911 = vsel %vm1926, %v2894, 0.0
    %v2912 = vadd.f32 %v2910, %v2911
    %v2913 = vsel %vm1926, %v2895, 0.0
    %v2914 = vadd.f32 %v2912, %v2913
    %v2915 = vsel %vm1926, %v2896, 0.0
    %v2916 = vadd.f32 %v2914, %v2915
    %v2917 = vsel %vm1926, %v2897, 0.0
    %v2918 = vadd.f32 %v2916, %v2917
    %v2919 = vsel %vm1926, %v2898, 0.0
    %v2920 = vadd.f32 %v2918, %v2919
    %v2921 = vsel %vm1926, %v2899, 0.0
    %v2922 = vadd.f32 %v2920, %v2921
    %v2923 = vrot.slane %v2922, 4
    %v2924 = vadd.f32 %v2922, %v2923
    %v2925 = vrot.slane %v2924, 2
    %v2926 = vadd.f32 %v2924, %v2925
    %v2927 = vrot.slane %v2926, 1
    %v2928 = vadd.f32 %v2926, %v2927
    %v2929 = vsel %vm1926, %v2900, 0.0
    %v2930 = vsel %vm1926, %v2901, 0.0
    %v2931 = vadd.f32 %v2929, %v2930
    %v2932 = vsel %vm1926, %v2902, 0.0
    %v2933 = vadd.f32 %v2931, %v2932
    %v2934 = vsel %vm1926, %v2903, 0.0
    %v2935 = vadd.f32 %v2933, %v2934
    %v2936 = vsel %vm1926, %v2904, 0.0
    %v2937 = vadd.f32 %v2935, %v2936
    %v2938 = vsel %vm1926, %v2905, 0.0
    %v2939 = vadd.f32 %v2937, %v2938
    %v2940 = vsel %vm1926, %v2906, 0.0
    %v2941 = vadd.f32 %v2939, %v2940
    %v2942 = vsel %vm1926, %v2907, 0.0
    %v2943 = vadd.f32 %v2941, %v2942
    %v2944 = vrot.slane %v2943, 4
    %v2945 = vadd.f32 %v2943, %v2944
    %v2946 = vrot.slane %v2945, 2
    %v2947 = vadd.f32 %v2945, %v2946
    %v2948 = vrot.slane %v2947, 1
    %v2949 = vadd.f32 %v2947, %v2948
    %v2950 = vmul.f32 %v2928, %v2889
    %v2951 = vmul.f32 %v2949, %v2889
    %v2952 = vmul.f32 %v2890, %v2890
    %v2953 = vmul.f32 %v2891, %v2891
    %v2954 = vsub.f32 %v2950, %v2952
    %v2955 = vsub.f32 %v2951, %v2953
    %v2956 = vmax.f32 %v2954, 0.0
    %v2957 = vmax.f32 %v2955, 0.0
    %v2958 = vsub.f32 %v2825, %v2890
    %v2959 = vsub.f32 %v2826, %v2890
    %v2960 = vsub.f32 %v2827, %v2890
    %v2961 = vsub.f32 %v2828, %v2890
    %v2962 = vsub.f32 %v2829, %v2890
    %v2963 = vsub.f32 %v2830, %v2890
    %v2964 = vsub.f32 %v2831, %v2890
    %v2965 = vsub.f32 %v2832, %v2890
    %v2966 = vsub.f32 %v2833, %v2891
    %v2967 = vsub.f32 %v2834, %v2891
    %v2968 = vsub.f32 %v2835, %v2891
    %v2969 = vsub.f32 %v2836, %v2891
    %v2970 = vsub.f32 %v2837, %v2891
    %v2971 = vsub.f32 %v2838, %v2891
    %v2972 = vsub.f32 %v2839, %v2891
    %v2973 = vsub.f32 %v2840, %v2891
    %v2974 = vadd.f32 %v2956, 1e-05
    %v2975 = vadd.f32 %v2957, 1e-05
    %v2976 = vrsqrt.pop %v2974
    %v2977 = vmul.f32 %v2976, %v2974
    %v2978 = vmul.f32 %v2977, %v2976
    %v2979 = vmul.f32 0.5, %v2978
    %v2980 = vsub.f32 1.5, %v2979
    %v2981 = vmul.f32 %v2976, %v2980
    %vm2982 = vweird.f32 %v2974
    %vm2983 = vweird.f32 %v2976
    %vm2984 = vmor %vm2982, %vm2983
    %v2985 = vsel %vm2984, %v2976, %v2981
    %v2986 = vrsqrt.pop %v2975
    %v2987 = vmul.f32 %v2986, %v2975
    %v2988 = vmul.f32 %v2987, %v2986
    %v2989 = vmul.f32 0.5, %v2988
    %v2990 = vsub.f32 1.5, %v2989
    %v2991 = vmul.f32 %v2986, %v2990
    %vm2992 = vweird.f32 %v2975
    %vm2993 = vweird.f32 %v2986
    %vm2994 = vmor %vm2992, %vm2993
    %v2995 = vsel %vm2994, %v2986, %v2991
    %v2996 = vmul.f32 %v2958, %v2985
    %v2997 = vmul.f32 %v2959, %v2985
    %v2998 = vmul.f32 %v2960, %v2985
    %v2999 = vmul.f32 %v2961, %v2985
    %v3000 = vmul.f32 %v2962, %v2985
    %v3001 = vmul.f32 %v2963, %v2985
    %v3002 = vmul.f32 %v2964, %v2985
    %v3003 = vmul.f32 %v2965, %v2985
    %v3004 = vmul.f32 %v2966, %v2995
    %v3005 = vmul.f32 %v2967, %v2995
    %v3006 = vmul.f32 %v2968, %v2995
    %v3007 = vmul.f32 %v2969, %v2995
    %v3008 = vmul.f32 %v2970, %v2995
    %v3009 = vmul.f32 %v2971, %v2995
    %v3010 = vmul.f32 %v2972, %v2995
    %v3011 = vmul.f32 %v2973, %v2995
    %v3012 = vperm.slane %v1526, 1
    %v3013 = vmul.f32 %v2996, %v3012
    %v3014 = vmul.f32 %v2997, %v3012
    %v3015 = vmul.f32 %v2998, %v3012
    %v3016 = vmul.f32 %v2999, %v3012
    %v3017 = vmul.f32 %v3000, %v3012
    %v3018 = vmul.f32 %v3001, %v3012
    %v3019 = vmul.f32 %v3002, %v3012
    %v3020 = vmul.f32 %v3003, %v3012
    %v3021 = vmul.f32 %v3004, %v3012
    %v3022 = vmul.f32 %v3005, %v3012
    %v3023 = vmul.f32 %v3006, %v3012
    %v3024 = vmul.f32 %v3007, %v3012
    %v3025 = vmul.f32 %v3008, %v3012
    %v3026 = vmul.f32 %v3009, %v3012
    %v3027 = vmul.f32 %v3010, %v3012
    %v3028 = vmul.f32 %v3011, %v3012
    %v3029 = vperm.slane %v1526, 2
    %v3030 = vadd.f32 %v3013, %v3029
    %v3031 = vadd.f32 %v3014, %v3029
    %v3032 = vadd.f32 %v3015, %v3029
    %v3033 = vadd.f32 %v3016, %v3029
    %v3034 = vadd.f32 %v3017, %v3029
    %v3035 = vadd.f32 %v3018, %v3029
    %v3036 = vadd.f32 %v3019, %v3029
    %v3037 = vadd.f32 %v3020, %v3029
    %v3038 = vadd.f32 %v3021, %v3029
    %v3039 = vadd.f32 %v3022, %v3029
    %v3040 = vadd.f32 %v3023, %v3029
    %v3041 = vadd.f32 %v3024, %v3029
    %v3042 = vadd.f32 %v3025, %v3029
    %v3043 = vadd.f32 %v3026, %v3029
    %v3044 = vadd.f32 %v3027, %v3029
    %v3045 = vadd.f32 %v3028, %v3029
    %v3046 = vmax.f32 %v3030, 0.0
    %v3047 = vmax.f32 %v3031, 0.0
    %v3048 = vmax.f32 %v3032, 0.0
    %v3049 = vmax.f32 %v3033, 0.0
    %v3050 = vmax.f32 %v3034, 0.0
    %v3051 = vmax.f32 %v3035, 0.0
    %v3052 = vmax.f32 %v3036, 0.0
    %v3053 = vmax.f32 %v3037, 0.0
    %v3054 = vmax.f32 %v3038, 0.0
    %v3055 = vmax.f32 %v3039, 0.0
    %v3056 = vmax.f32 %v3040, 0.0
    %v3057 = vmax.f32 %v3041, 0.0
    %v3058 = vmax.f32 %v3042, 0.0
    %v3059 = vmax.f32 %v3043, 0.0
    %v3060 = vmax.f32 %v3044, 0.0
    %v3061 = vmax.f32 %v3045, 0.0
    %v3062 = vpack.c.bf16 %v3046, %v3046
    %v3063 = vpack.c.bf16 %v3047, %v3047
    %v3064 = vpack.c.bf16 %v3048, %v3048
    %v3065 = vpack.c.bf16 %v3049, %v3049
    %v3066 = vpack.c.bf16 %v3050, %v3050
    %v3067 = vpack.c.bf16 %v3051, %v3051
    %v3068 = vpack.c.bf16 %v3052, %v3052
    %v3069 = vpack.c.bf16 %v3053, %v3053
    %v3070 = vpack.c.bf16 %v3054, %v3054
    %v3071 = vpack.c.bf16 %v3055, %v3055
    %v3072 = vpack.c.bf16 %v3056, %v3056
    %v3073 = vpack.c.bf16 %v3057, %v3057
    %v3074 = vpack.c.bf16 %v3058, %v3058
    %v3075 = vpack.c.bf16 %v3059, %v3059
    %v3076 = vpack.c.bf16 %v3060, %v3060
    %v3077 = vpack.c.bf16 %v3061, %v3061
    %v3078 = vld [vmem:[%s4] sm:$0xf]
    %v3079 = vld [vmem:[%s4 + $0x4] sm:$0xf]
    %v3080 = vld [vmem:[%s4 + $0x8] sm:$0xf]
    %v3081 = vld [vmem:[%s4 + $0xc] sm:$0xf]
    %v3082 = vld [vmem:[%s4 + $0x10] sm:$0xf]
    %v3083 = vld [vmem:[%s4 + $0x14] sm:$0xf]
    %v3084 = vld [vmem:[%s4 + $0x18] sm:$0xf]
    %v3085 = vld [vmem:[%s4 + $0x1c] sm:$0xf]
    %v3086 = vld [vmem:[%s4 + $0x20] sm:$0xf]
    %v3087 = vld [vmem:[%s4 + $0x24] sm:$0xf]
    %v3088 = vld [vmem:[%s4 + $0x28] sm:$0xf]
    %v3089 = vld [vmem:[%s4 + $0x2c] sm:$0xf]
    %v3090 = vld [vmem:[%s4 + $0x30] sm:$0xf]
    %v3091 = vld [vmem:[%s4 + $0x34] sm:$0xf]
    %v3092 = vld [vmem:[%s4 + $0x38] sm:$0xf]
    %v3093 = vld [vmem:[%s4 + $0x3c] sm:$0xf]
    %v3094 = vld [vmem:[%s4 + $0x40] sm:$0xf]
    %v3095 = vld [vmem:[%s4 + $0x44] sm:$0xf]
    %v3096 = vld [vmem:[%s4 + $0x48] sm:$0xf]
    %v3097 = vld [vmem:[%s4 + $0x4c] sm:$0xf]
    %v3098 = vld [vmem:[%s4 + $0x50] sm:$0xf]
    %v3099 = vld [vmem:[%s4 + $0x54] sm:$0xf]
    %v3100 = vld [vmem:[%s4 + $0x58] sm:$0xf]
    %v3101 = vld [vmem:[%s4 + $0x5c] sm:$0xf]
    %v3102 = vld [vmem:[%s4 + $0x60] sm:$0xf]
    %v3103 = vld [vmem:[%s4 + $0x64] sm:$0xf]
    %v3104 = vld [vmem:[%s4 + $0x68] sm:$0xf]
    %v3105 = vld [vmem:[%s4 + $0x6c] sm:$0xf]
    %v3106 = vld [vmem:[%s4 + $0x70] sm:$0xf]
    %v3107 = vld [vmem:[%s4 + $0x74] sm:$0xf]
    %v3108 = vld [vmem:[%s4 + $0x78] sm:$0xf]
    %v3109 = vld [vmem:[%s4 + $0x7c] sm:$0xf]
    %v3110 = vld [vmem:[%s4 + $0x80] sm:$0xf]
    %v3111 = vld [vmem:[%s4 + $0x84] sm:$0xf]
    %v3112 = vld [vmem:[%s4 + $0x88] sm:$0xf]
    %v3113 = vld [vmem:[%s4 + $0x8c] sm:$0xf]
    %v3130 = vunpack.c.l.b16 %v3069
    %v3131 = vunpack.c.l.b16 %v3062
    %v3132 = vunpack.c.l.b16 %v3063
    %v3133 = vunpack.c.l.b16 %v3064
    %v3134 = vunpack.c.l.b16 %v3065
    %v3135 = vunpack.c.l.b16 %v3066
    %v3136 = vunpack.c.l.b16 %v3067
    %v3137 = vunpack.c.l.b16 %v3068
    %v3138 = vunpack.c.l.b16 %v3077
    %v3139 = vunpack.c.l.b16 %v3070
    %v3140 = vunpack.c.l.b16 %v3071
    %v3141 = vunpack.c.l.b16 %v3072
    %v3142 = vunpack.c.l.b16 %v3073
    %v3143 = vunpack.c.l.b16 %v3074
    %v3144 = vunpack.c.l.b16 %v3075
    %v3145 = vunpack.c.l.b16 %v3076
    %v3146 = vpack.c.b16 %v3130, %v3130
    %v3147 = vpack.c.b16 %v3131, %v3131
    %v3148 = vpack.c.b16 %v3132, %v3132
    %v3149 = vpack.c.b16 %v3133, %v3133
    %v3150 = vpack.c.b16 %v3134, %v3134
    %v3151 = vpack.c.b16 %v3135, %v3135
    %v3152 = vpack.c.b16 %v3136, %v3136
    %v3153 = vpack.c.b16 %v3137, %v3137
    %v3154 = vpack.c.b16 %v3138, %v3138
    %v3155 = vpack.c.b16 %v3139, %v3139
    %v3156 = vpack.c.b16 %v3140, %v3140
    %v3157 = vpack.c.b16 %v3141, %v3141
    %v3158 = vpack.c.b16 %v3142, %v3142
    %v3159 = vpack.c.b16 %v3143, %v3143
    %v3160 = vpack.c.b16 %v3144, %v3144
    %v3161 = vpack.c.b16 %v3145, %v3145
    %v3163 = vshrl.u32 %v3146, 16
    %v3165 = vrot.slane %v3163, 3
    %v3167 = vshrl.u32 %v3147, 16
    %v3169 = vrot.slane %v3167, 3
    %v3171 = vshrl.u32 %v3148, 16
    %v3173 = vrot.slane %v3171, 3
    %v3175 = vshrl.u32 %v3149, 16
    %v3177 = vrot.slane %v3175, 3
    %v3179 = vshrl.u32 %v3150, 16
    %v3181 = vrot.slane %v3179, 3
    %v3183 = vshrl.u32 %v3151, 16
    %v3185 = vrot.slane %v3183, 3
    %v3187 = vshrl.u32 %v3152, 16
    %v3189 = vrot.slane %v3187, 3
    %v3191 = vshrl.u32 %v3153, 16
    %v3193 = vrot.slane %v3191, 3
    %v3195 = vshrl.u32 %v3154, 16
    %v3197 = vrot.slane %v3195, 3
    %v3199 = vshrl.u32 %v3155, 16
    %v3201 = vrot.slane %v3199, 3
    %v3203 = vshrl.u32 %v3156, 16
    %v3205 = vrot.slane %v3203, 3
    %v3207 = vshrl.u32 %v3157, 16
    %v3209 = vrot.slane %v3207, 3
    %v3211 = vshrl.u32 %v3158, 16
    %v3213 = vrot.slane %v3211, 3
    %v3215 = vshrl.u32 %v3159, 16
    %v3217 = vrot.slane %v3215, 3
    %v3219 = vshrl.u32 %v3160, 16
    %v3221 = vrot.slane %v3219, 3
    %v3223 = vshrl.u32 %v3161, 16
    %v3225 = vrot.slane %v3223, 3
    %v3242 = vrot.slane %v3163, 7
    %v3243 = vshll.u32 %v3146, 16
    %v3245 = vor.u32 %v3242, %v3243
    %v3246 = vrot.slane %v3167, 7
    %v3247 = vshll.u32 %v3147, 16
    %v3249 = vor.u32 %v3246, %v3247
    %v3250 = vrot.slane %v3171, 7
    %v3251 = vshll.u32 %v3148, 16
    %v3253 = vor.u32 %v3250, %v3251
    %v3254 = vrot.slane %v3175, 7
    %v3255 = vshll.u32 %v3149, 16
    %v3257 = vor.u32 %v3254, %v3255
    %v3258 = vrot.slane %v3179, 7
    %v3259 = vshll.u32 %v3150, 16
    %v3261 = vor.u32 %v3258, %v3259
    %v3262 = vrot.slane %v3183, 7
    %v3263 = vshll.u32 %v3151, 16
    %v3265 = vor.u32 %v3262, %v3263
    %v3266 = vrot.slane %v3187, 7
    %v3267 = vshll.u32 %v3152, 16
    %v3269 = vor.u32 %v3266, %v3267
    %v3270 = vrot.slane %v3191, 7
    %v3271 = vshll.u32 %v3153, 16
    %v3273 = vor.u32 %v3270, %v3271
    %v3274 = vrot.slane %v3195, 7
    %v3275 = vshll.u32 %v3154, 16
    %v3277 = vor.u32 %v3274, %v3275
    %v3278 = vrot.slane %v3199, 7
    %v3279 = vshll.u32 %v3155, 16
    %v3281 = vor.u32 %v3278, %v3279
    %v3282 = vrot.slane %v3203, 7
    %v3283 = vshll.u32 %v3156, 16
    %v3285 = vor.u32 %v3282, %v3283
    %v3286 = vrot.slane %v3207, 7
    %v3287 = vshll.u32 %v3157, 16
    %v3289 = vor.u32 %v3286, %v3287
    %v3290 = vrot.slane %v3211, 7
    %v3291 = vshll.u32 %v3158, 16
    %v3293 = vor.u32 %v3290, %v3291
    %v3294 = vrot.slane %v3215, 7
    %v3295 = vshll.u32 %v3159, 16
    %v3297 = vor.u32 %v3294, %v3295
    %v3298 = vrot.slane %v3219, 7
    %v3299 = vshll.u32 %v3160, 16
    %v3301 = vor.u32 %v3298, %v3299
    %v3302 = vrot.slane %v3223, 7
    %v3303 = vshll.u32 %v3161, 16
    %v3305 = vor.u32 %v3302, %v3303
    %v3322 = vsel %vm1790, %v3165, %v3245
    %v3323 = vsel %vm1790, %v3169, %v3249
    %v3324 = vsel %vm1790, %v3173, %v3253
    %v3325 = vsel %vm1790, %v3177, %v3257
    %v3326 = vsel %vm1790, %v3181, %v3261
    %v3327 = vsel %vm1790, %v3185, %v3265
    %v3328 = vsel %vm1790, %v3189, %v3269
    %v3329 = vsel %vm1790, %v3193, %v3273
    %v3330 = vsel %vm1790, %v3197, %v3277
    %v3331 = vsel %vm1790, %v3201, %v3281
    %v3332 = vsel %vm1790, %v3205, %v3285
    %v3333 = vsel %vm1790, %v3209, %v3289
    %v3334 = vsel %vm1790, %v3213, %v3293
    %v3335 = vsel %vm1790, %v3217, %v3297
    %v3336 = vsel %vm1790, %v3221, %v3301
    %v3337 = vsel %vm1790, %v3225, %v3305
    %v3338 = vrot.slane %v3243, 1
    %v3339 = vor.u32 %v3163, %v3338
    %v3340 = vrot.slane %v3247, 1
    %v3341 = vor.u32 %v3167, %v3340
    %v3342 = vrot.slane %v3251, 1
    %v3343 = vor.u32 %v3171, %v3342
    %v3344 = vrot.slane %v3255, 1
    %v3345 = vor.u32 %v3175, %v3344
    %v3346 = vrot.slane %v3259, 1
    %v3347 = vor.u32 %v3179, %v3346
    %v3348 = vrot.slane %v3263, 1
    %v3349 = vor.u32 %v3183, %v3348
    %v3350 = vrot.slane %v3267, 1
    %v3351 = vor.u32 %v3187, %v3350
    %v3352 = vrot.slane %v3271, 1
    %v3353 = vor.u32 %v3191, %v3352
    %v3354 = vrot.slane %v3275, 1
    %v3355 = vor.u32 %v3195, %v3354
    %v3356 = vrot.slane %v3279, 1
    %v3357 = vor.u32 %v3199, %v3356
    %v3358 = vrot.slane %v3283, 1
    %v3359 = vor.u32 %v3203, %v3358
    %v3360 = vrot.slane %v3287, 1
    %v3361 = vor.u32 %v3207, %v3360
    %v3362 = vrot.slane %v3291, 1
    %v3363 = vor.u32 %v3211, %v3362
    %v3364 = vrot.slane %v3295, 1
    %v3365 = vor.u32 %v3215, %v3364
    %v3366 = vrot.slane %v3299, 1
    %v3367 = vor.u32 %v3219, %v3366
    %v3368 = vrot.slane %v3303, 1
    %v3369 = vor.u32 %v3223, %v3368
    %v3386 = vrot.slane %v3243, 5
    %v3387 = vrot.slane %v3247, 5
    %v3388 = vrot.slane %v3251, 5
    %v3389 = vrot.slane %v3255, 5
    %v3390 = vrot.slane %v3259, 5
    %v3391 = vrot.slane %v3263, 5
    %v3392 = vrot.slane %v3267, 5
    %v3393 = vrot.slane %v3271, 5
    %v3394 = vrot.slane %v3275, 5
    %v3395 = vrot.slane %v3279, 5
    %v3396 = vrot.slane %v3283, 5
    %v3397 = vrot.slane %v3287, 5
    %v3398 = vrot.slane %v3291, 5
    %v3399 = vrot.slane %v3295, 5
    %v3400 = vrot.slane %v3299, 5
    %v3401 = vrot.slane %v3303, 5
    %v3418 = vsel %vm1889, %v3339, %v3386
    %v3419 = vsel %vm1889, %v3341, %v3387
    %v3420 = vsel %vm1889, %v3343, %v3388
    %v3421 = vsel %vm1889, %v3345, %v3389
    %v3422 = vsel %vm1889, %v3347, %v3390
    %v3423 = vsel %vm1889, %v3349, %v3391
    %v3424 = vsel %vm1889, %v3351, %v3392
    %v3425 = vsel %vm1889, %v3353, %v3393
    %v3426 = vsel %vm1889, %v3355, %v3394
    %v3427 = vsel %vm1889, %v3357, %v3395
    %v3428 = vsel %vm1889, %v3359, %v3396
    %v3429 = vsel %vm1889, %v3361, %v3397
    %v3430 = vsel %vm1889, %v3363, %v3398
    %v3431 = vsel %vm1889, %v3365, %v3399
    %v3432 = vsel %vm1889, %v3367, %v3400
    %v3433 = vsel %vm1889, %v3369, %v3401
    %v3434 = vpack.c.b16 %v3131, %v3130
    %v3435 = vpack.c.b16 %v3133, %v3132
    %v3436 = vpack.c.b16 %v3135, %v3134
    %v3437 = vpack.c.b16 %v3137, %v3136
    %v3438 = vpack.c.b16 %v3139, %v3138
    %v3439 = vpack.c.b16 %v3141, %v3140
    %v3440 = vpack.c.b16 %v3143, %v3142
    %v3441 = vpack.c.b16 %v3145, %v3144
    %v3446 = vunpack.c.l.b16 %v3082
    %v3447 = vunpack.c.l.b16 %v3083
    %v3448 = vunpack.c.l.b16 %v3084
    %v3449 = vunpack.c.l.b16 %v3085
    %v3450 = vpack.c.b16 %v3447, %v3446
    %v3451 = vpack.c.b16 %v3449, %v3448
    %v3455 = vsel %vm1926, %v3434, 0
    %v3458 = vsel %vm1926, %v3435, 0
    %v3461 = vsel %vm1926, %v3436, 0
    %v3464 = vsel %vm1926, %v3437, 0
    %v3467 = vsel %vm1926, %v3438, 0
    %v3470 = vsel %vm1926, %v3439, 0
    %v3473 = vsel %vm1926, %v3440, 0
    %v3476 = vsel %vm1926, %v3441, 0
    %3478 = vmatpush.bf16.msra.mxu0 0
    %3479 = vmatpush.bf16.msra.mxu0 0
    %3480 = vmatpush.bf16.msra.mxu0 0
    %3481 = vmatpush.bf16.msra.mxu0 0
    %3482 = vmatpush.bf16.msra.mxu0 0
    %3483 = vmatpush.bf16.msra.mxu0 0
    %3484 = vmatpush.bf16.msra.mxu0 %v3451
    %3485 = vmatpush.bf16.msra.mxu0 %v3450
    %3486 = vmatmul.bf16.gmra.mxu0 %v3455
    %v3487 = vpop.f32.mrf.mxu0
    %v3488 = vadd.f32 0.0, %v3487
    %v3489 = vpop.f32.mrf.mxu0
    %v3490 = vadd.f32 0.0, %v3489
    %3491 = vmatmul.bf16.gmra.mxu0 %v3458
    %v3492 = vpop.f32.mrf.mxu0
    %v3493 = vadd.f32 0.0, %v3492
    %v3494 = vpop.f32.mrf.mxu0
    %v3495 = vadd.f32 0.0, %v3494
    %3496 = vmatmul.bf16.gmra.mxu0 %v3461
    %v3497 = vpop.f32.mrf.mxu0
    %v3498 = vadd.f32 0.0, %v3497
    %v3499 = vpop.f32.mrf.mxu0
    %v3500 = vadd.f32 0.0, %v3499
    %3501 = vmatmul.bf16.gmra.mxu0 %v3464
    %v3502 = vpop.f32.mrf.mxu0
    %v3503 = vadd.f32 0.0, %v3502
    %v3504 = vpop.f32.mrf.mxu0
    %v3505 = vadd.f32 0.0, %v3504
    %3506 = vmatmul.bf16.gmra.mxu0 %v3467
    %v3507 = vpop.f32.mrf.mxu0
    %v3508 = vadd.f32 0.0, %v3507
    %v3509 = vpop.f32.mrf.mxu0
    %v3510 = vadd.f32 0.0, %v3509
    %3511 = vmatmul.bf16.gmra.mxu0 %v3470
    %v3512 = vpop.f32.mrf.mxu0
    %v3513 = vadd.f32 0.0, %v3512
    %v3514 = vpop.f32.mrf.mxu0
    %v3515 = vadd.f32 0.0, %v3514
    %3516 = vmatmul.bf16.gmra.mxu0 %v3473
    %v3517 = vpop.f32.mrf.mxu0
    %v3518 = vadd.f32 0.0, %v3517
    %v3519 = vpop.f32.mrf.mxu0
    %v3520 = vadd.f32 0.0, %v3519
    %3521 = vmatmul.bf16.gmra.mxu0 %v3476
    %v3522 = vpop.f32.mrf.mxu0
    %v3523 = vadd.f32 0.0, %v3522
    %v3524 = vpop.f32.mrf.mxu0
    %v3525 = vadd.f32 0.0, %v3524
    %3526 = vdwg.mxu0
    %v3543 = vunpack.c.l.b16 %v3322
    %v3544 = vunpack.c.l.b16 %v3323
    %v3545 = vunpack.c.l.b16 %v3324
    %v3546 = vunpack.c.l.b16 %v3325
    %v3547 = vunpack.c.l.b16 %v3326
    %v3548 = vunpack.c.l.b16 %v3327
    %v3549 = vunpack.c.l.b16 %v3328
    %v3550 = vunpack.c.l.b16 %v3329
    %v3551 = vunpack.c.l.b16 %v3330
    %v3552 = vunpack.c.l.b16 %v3331
    %v3553 = vunpack.c.l.b16 %v3332
    %v3554 = vunpack.c.l.b16 %v3333
    %v3555 = vunpack.c.l.b16 %v3334
    %v3556 = vunpack.c.l.b16 %v3335
    %v3557 = vunpack.c.l.b16 %v3336
    %v3558 = vunpack.c.l.b16 %v3337
    %v3559 = vpack.c.b16 %v3544, %v3543
    %v3560 = vpack.c.b16 %v3546, %v3545
    %v3561 = vpack.c.b16 %v3548, %v3547
    %v3562 = vpack.c.b16 %v3550, %v3549
    %v3563 = vpack.c.b16 %v3552, %v3551
    %v3564 = vpack.c.b16 %v3554, %v3553
    %v3565 = vpack.c.b16 %v3556, %v3555
    %v3566 = vpack.c.b16 %v3558, %v3557
    %v3571 = vunpack.c.l.b16 %v3078
    %v3572 = vunpack.c.l.b16 %v3079
    %v3573 = vunpack.c.l.b16 %v3080
    %v3574 = vunpack.c.l.b16 %v3081
    %v3575 = vpack.c.b16 %v3572, %v3571
    %v3576 = vpack.c.b16 %v3574, %v3573
    %v3580 = vsel %vm1926, %v3559, 0
    %v3583 = vsel %vm1926, %v3560, 0
    %v3586 = vsel %vm1926, %v3561, 0
    %v3589 = vsel %vm1926, %v3562, 0
    %v3592 = vsel %vm1926, %v3563, 0
    %v3595 = vsel %vm1926, %v3564, 0
    %v3598 = vsel %vm1926, %v3565, 0
    %v3601 = vsel %vm1926, %v3566, 0
    %3603 = vmatpush.bf16.msra.mxu0 0
    %3604 = vmatpush.bf16.msra.mxu0 0
    %3605 = vmatpush.bf16.msra.mxu0 0
    %3606 = vmatpush.bf16.msra.mxu0 0
    %3607 = vmatpush.bf16.msra.mxu0 0
    %3608 = vmatpush.bf16.msra.mxu0 0
    %3609 = vmatpush.bf16.msra.mxu0 %v3576
    %3610 = vmatpush.bf16.msra.mxu0 %v3575
    %3611 = vmatmul.bf16.gmra.mxu0 %v3580
    %v3612 = vpop.f32.mrf.mxu0
    %v3613 = vadd.f32 %v3488, %v3612
    %v3614 = vpop.f32.mrf.mxu0
    %v3615 = vadd.f32 %v3490, %v3614
    %3616 = vmatmul.bf16.gmra.mxu0 %v3583
    %v3617 = vpop.f32.mrf.mxu0
    %v3618 = vadd.f32 %v3493, %v3617
    %v3619 = vpop.f32.mrf.mxu0
    %v3620 = vadd.f32 %v3495, %v3619
    %3621 = vmatmul.bf16.gmra.mxu0 %v3586
    %v3622 = vpop.f32.mrf.mxu0
    %v3623 = vadd.f32 %v3498, %v3622
    %v3624 = vpop.f32.mrf.mxu0
    %v3625 = vadd.f32 %v3500, %v3624
    %3626 = vmatmul.bf16.gmra.mxu0 %v3589
    %v3627 = vpop.f32.mrf.mxu0
    %v3628 = vadd.f32 %v3503, %v3627
    %v3629 = vpop.f32.mrf.mxu0
    %v3630 = vadd.f32 %v3505, %v3629
    %3631 = vmatmul.bf16.gmra.mxu0 %v3592
    %v3632 = vpop.f32.mrf.mxu0
    %v3633 = vadd.f32 %v3508, %v3632
    %v3634 = vpop.f32.mrf.mxu0
    %v3635 = vadd.f32 %v3510, %v3634
    %3636 = vmatmul.bf16.gmra.mxu0 %v3595
    %v3637 = vpop.f32.mrf.mxu0
    %v3638 = vadd.f32 %v3513, %v3637
    %v3639 = vpop.f32.mrf.mxu0
    %v3640 = vadd.f32 %v3515, %v3639
    %3641 = vmatmul.bf16.gmra.mxu0 %v3598
    %v3642 = vpop.f32.mrf.mxu0
    %v3643 = vadd.f32 %v3518, %v3642
    %v3644 = vpop.f32.mrf.mxu0
    %v3645 = vadd.f32 %v3520, %v3644
    %3646 = vmatmul.bf16.gmra.mxu0 %v3601
    %v3647 = vpop.f32.mrf.mxu0
    %v3648 = vadd.f32 %v3523, %v3647
    %v3649 = vpop.f32.mrf.mxu0
    %v3650 = vadd.f32 %v3525, %v3649
    %3651 = vdwg.mxu0
    %v3668 = vunpack.c.l.b16 %v3418
    %v3669 = vunpack.c.l.b16 %v3419
    %v3670 = vunpack.c.l.b16 %v3420
    %v3671 = vunpack.c.l.b16 %v3421
    %v3672 = vunpack.c.l.b16 %v3422
    %v3673 = vunpack.c.l.b16 %v3423
    %v3674 = vunpack.c.l.b16 %v3424
    %v3675 = vunpack.c.l.b16 %v3425
    %v3676 = vunpack.c.l.b16 %v3426
    %v3677 = vunpack.c.l.b16 %v3427
    %v3678 = vunpack.c.l.b16 %v3428
    %v3679 = vunpack.c.l.b16 %v3429
    %v3680 = vunpack.c.l.b16 %v3430
    %v3681 = vunpack.c.l.b16 %v3431
    %v3682 = vunpack.c.l.b16 %v3432
    %v3683 = vunpack.c.l.b16 %v3433
    %v3684 = vpack.c.b16 %v3669, %v3668
    %v3685 = vpack.c.b16 %v3671, %v3670
    %v3686 = vpack.c.b16 %v3673, %v3672
    %v3687 = vpack.c.b16 %v3675, %v3674
    %v3688 = vpack.c.b16 %v3677, %v3676
    %v3689 = vpack.c.b16 %v3679, %v3678
    %v3690 = vpack.c.b16 %v3681, %v3680
    %v3691 = vpack.c.b16 %v3683, %v3682
    %v3696 = vunpack.c.l.b16 %v3086
    %v3697 = vunpack.c.l.b16 %v3087
    %v3698 = vunpack.c.l.b16 %v3088
    %v3699 = vunpack.c.l.b16 %v3089
    %v3700 = vpack.c.b16 %v3697, %v3696
    %v3701 = vpack.c.b16 %v3699, %v3698
    %v3705 = vsel %vm1926, %v3684, 0
    %v3708 = vsel %vm1926, %v3685, 0
    %v3711 = vsel %vm1926, %v3686, 0
    %v3714 = vsel %vm1926, %v3687, 0
    %v3717 = vsel %vm1926, %v3688, 0
    %v3720 = vsel %vm1926, %v3689, 0
    %v3723 = vsel %vm1926, %v3690, 0
    %v3726 = vsel %vm1926, %v3691, 0
    %3728 = vmatpush.bf16.msra.mxu0 0
    %3729 = vmatpush.bf16.msra.mxu0 0
    %3730 = vmatpush.bf16.msra.mxu0 0
    %3731 = vmatpush.bf16.msra.mxu0 0
    %3732 = vmatpush.bf16.msra.mxu0 0
    %3733 = vmatpush.bf16.msra.mxu0 0
    %3734 = vmatpush.bf16.msra.mxu0 %v3701
    %3735 = vmatpush.bf16.msra.mxu0 %v3700
    %3736 = vmatmul.bf16.gmra.mxu0 %v3705
    %v3737 = vpop.f32.mrf.mxu0
    %v3738 = vadd.f32 0.0, %v3737
    %v3739 = vpop.f32.mrf.mxu0
    %v3740 = vadd.f32 0.0, %v3739
    %3741 = vmatmul.bf16.gmra.mxu0 %v3708
    %v3742 = vpop.f32.mrf.mxu0
    %v3743 = vadd.f32 0.0, %v3742
    %v3744 = vpop.f32.mrf.mxu0
    %v3745 = vadd.f32 0.0, %v3744
    %3746 = vmatmul.bf16.gmra.mxu0 %v3711
    %v3747 = vpop.f32.mrf.mxu0
    %v3748 = vadd.f32 0.0, %v3747
    %v3749 = vpop.f32.mrf.mxu0
    %v3750 = vadd.f32 0.0, %v3749
    %3751 = vmatmul.bf16.gmra.mxu0 %v3714
    %v3752 = vpop.f32.mrf.mxu0
    %v3753 = vadd.f32 0.0, %v3752
    %v3754 = vpop.f32.mrf.mxu0
    %v3755 = vadd.f32 0.0, %v3754
    %3756 = vmatmul.bf16.gmra.mxu0 %v3717
    %v3757 = vpop.f32.mrf.mxu0
    %v3758 = vadd.f32 0.0, %v3757
    %v3759 = vpop.f32.mrf.mxu0
    %v3760 = vadd.f32 0.0, %v3759
    %3761 = vmatmul.bf16.gmra.mxu0 %v3720
    %v3762 = vpop.f32.mrf.mxu0
    %v3763 = vadd.f32 0.0, %v3762
    %v3764 = vpop.f32.mrf.mxu0
    %v3765 = vadd.f32 0.0, %v3764
    %3766 = vmatmul.bf16.gmra.mxu0 %v3723
    %v3767 = vpop.f32.mrf.mxu0
    %v3768 = vadd.f32 0.0, %v3767
    %v3769 = vpop.f32.mrf.mxu0
    %v3770 = vadd.f32 0.0, %v3769
    %3771 = vmatmul.bf16.gmra.mxu0 %v3726
    %v3772 = vpop.f32.mrf.mxu0
    %v3773 = vadd.f32 0.0, %v3772
    %v3774 = vpop.f32.mrf.mxu0
    %v3775 = vadd.f32 0.0, %v3774
    %3776 = vdwg.mxu0
    %v3777 = vadd.f32 %v3613, %v3738
    %v3778 = vadd.f32 %v3615, %v3740
    %v3779 = vadd.f32 %v3618, %v3743
    %v3780 = vadd.f32 %v3620, %v3745
    %v3781 = vadd.f32 %v3623, %v3748
    %v3782 = vadd.f32 %v3625, %v3750
    %v3783 = vadd.f32 %v3628, %v3753
    %v3784 = vadd.f32 %v3630, %v3755
    %v3785 = vadd.f32 %v3633, %v3758
    %v3786 = vadd.f32 %v3635, %v3760
    %v3787 = vadd.f32 %v3638, %v3763
    %v3788 = vadd.f32 %v3640, %v3765
    %v3789 = vadd.f32 %v3643, %v3768
    %v3790 = vadd.f32 %v3645, %v3770
    %v3791 = vadd.f32 %v3648, %v3773
    %v3792 = vadd.f32 %v3650, %v3775
    %v3793 = vpack.c.b16 %v3545, %v3544
    %v3794 = vpack.c.b16 %v3547, %v3546
    %v3795 = vpack.c.b16 %v3549, %v3548
    %v3796 = vpack.c.b16 %v3543, %v3550
    %v3797 = vpack.c.b16 %v3553, %v3552
    %v3798 = vpack.c.b16 %v3555, %v3554
    %v3799 = vpack.c.b16 %v3557, %v3556
    %v3800 = vpack.c.b16 %v3551, %v3558
    %v3805 = vunpack.c.l.b16 %v3090
    %v3806 = vunpack.c.l.b16 %v3091
    %v3807 = vunpack.c.l.b16 %v3092
    %v3808 = vunpack.c.l.b16 %v3093
    %v3809 = vpack.c.b16 %v3806, %v3805
    %v3810 = vpack.c.b16 %v3808, %v3807
    %v3814 = vsel %vm1926, %v3793, 0
    %v3817 = vsel %vm1926, %v3794, 0
    %v3820 = vsel %vm1926, %v3795, 0
    %v3823 = vsel %vm1926, %v3796, 0
    %v3826 = vsel %vm1926, %v3797, 0
    %v3829 = vsel %vm1926, %v3798, 0
    %v3832 = vsel %vm1926, %v3799, 0
    %v3835 = vsel %vm1926, %v3800, 0
    %3837 = vmatpush.bf16.msra.mxu0 0
    %3838 = vmatpush.bf16.msra.mxu0 0
    %3839 = vmatpush.bf16.msra.mxu0 0
    %3840 = vmatpush.bf16.msra.mxu0 0
    %3841 = vmatpush.bf16.msra.mxu0 0
    %3842 = vmatpush.bf16.msra.mxu0 0
    %3843 = vmatpush.bf16.msra.mxu0 %v3810
    %3844 = vmatpush.bf16.msra.mxu0 %v3809
    %3845 = vmatmul.bf16.gmra.mxu0 %v3814
    %v3846 = vpop.f32.mrf.mxu0
    %v3847 = vadd.f32 0.0, %v3846
    %v3848 = vpop.f32.mrf.mxu0
    %v3849 = vadd.f32 0.0, %v3848
    %3850 = vmatmul.bf16.gmra.mxu0 %v3817
    %v3851 = vpop.f32.mrf.mxu0
    %v3852 = vadd.f32 0.0, %v3851
    %v3853 = vpop.f32.mrf.mxu0
    %v3854 = vadd.f32 0.0, %v3853
    %3855 = vmatmul.bf16.gmra.mxu0 %v3820
    %v3856 = vpop.f32.mrf.mxu0
    %v3857 = vadd.f32 0.0, %v3856
    %v3858 = vpop.f32.mrf.mxu0
    %v3859 = vadd.f32 0.0, %v3858
    %3860 = vmatmul.bf16.gmra.mxu0 %v3823
    %v3861 = vpop.f32.mrf.mxu0
    %v3862 = vadd.f32 0.0, %v3861
    %v3863 = vpop.f32.mrf.mxu0
    %v3864 = vadd.f32 0.0, %v3863
    %3865 = vmatmul.bf16.gmra.mxu0 %v3826
    %v3866 = vpop.f32.mrf.mxu0
    %v3867 = vadd.f32 0.0, %v3866
    %v3868 = vpop.f32.mrf.mxu0
    %v3869 = vadd.f32 0.0, %v3868
    %3870 = vmatmul.bf16.gmra.mxu0 %v3829
    %v3871 = vpop.f32.mrf.mxu0
    %v3872 = vadd.f32 0.0, %v3871
    %v3873 = vpop.f32.mrf.mxu0
    %v3874 = vadd.f32 0.0, %v3873
    %3875 = vmatmul.bf16.gmra.mxu0 %v3832
    %v3876 = vpop.f32.mrf.mxu0
    %v3877 = vadd.f32 0.0, %v3876
    %v3878 = vpop.f32.mrf.mxu0
    %v3879 = vadd.f32 0.0, %v3878
    %3880 = vmatmul.bf16.gmra.mxu0 %v3835
    %v3881 = vpop.f32.mrf.mxu0
    %v3882 = vadd.f32 0.0, %v3881
    %v3883 = vpop.f32.mrf.mxu0
    %v3884 = vadd.f32 0.0, %v3883
    %3885 = vdwg.mxu0
    %v3886 = vadd.f32 %v3777, %v3847
    %v3887 = vadd.f32 %v3778, %v3849
    %v3888 = vadd.f32 %v3779, %v3852
    %v3889 = vadd.f32 %v3780, %v3854
    %v3890 = vadd.f32 %v3781, %v3857
    %v3891 = vadd.f32 %v3782, %v3859
    %v3892 = vadd.f32 %v3783, %v3862
    %v3893 = vadd.f32 %v3784, %v3864
    %v3894 = vadd.f32 %v3785, %v3867
    %v3895 = vadd.f32 %v3786, %v3869
    %v3896 = vadd.f32 %v3787, %v3872
    %v3897 = vadd.f32 %v3788, %v3874
    %v3898 = vadd.f32 %v3789, %v3877
    %v3899 = vadd.f32 %v3790, %v3879
    %v3900 = vadd.f32 %v3791, %v3882
    %v3901 = vadd.f32 %v3792, %v3884
    %v3902 = vpack.c.b16 %v3132, %v3131
    %v3903 = vpack.c.b16 %v3134, %v3133
    %v3904 = vpack.c.b16 %v3136, %v3135
    %v3905 = vpack.c.b16 %v3130, %v3137
    %v3906 = vpack.c.b16 %v3140, %v3139
    %v3907 = vpack.c.b16 %v3142, %v3141
    %v3908 = vpack.c.b16 %v3144, %v3143
    %v3909 = vpack.c.b16 %v3138, %v3145
    %v3914 = vunpack.c.l.b16 %v3094
    %v3915 = vunpack.c.l.b16 %v3095
    %v3916 = vunpack.c.l.b16 %v3096
    %v3917 = vunpack.c.l.b16 %v3097
    %v3918 = vpack.c.b16 %v3915, %v3914
    %v3919 = vpack.c.b16 %v3917, %v3916
    %v3923 = vsel %vm1926, %v3902, 0
    %v3926 = vsel %vm1926, %v3903, 0
    %v3929 = vsel %vm1926, %v3904, 0
    %v3932 = vsel %vm1926, %v3905, 0
    %v3935 = vsel %vm1926, %v3906, 0
    %v3938 = vsel %vm1926, %v3907, 0
    %v3941 = vsel %vm1926, %v3908, 0
    %v3944 = vsel %vm1926, %v3909, 0
    %3946 = vmatpush.bf16.msra.mxu0 0
    %3947 = vmatpush.bf16.msra.mxu0 0
    %3948 = vmatpush.bf16.msra.mxu0 0
    %3949 = vmatpush.bf16.msra.mxu0 0
    %3950 = vmatpush.bf16.msra.mxu0 0
    %3951 = vmatpush.bf16.msra.mxu0 0
    %3952 = vmatpush.bf16.msra.mxu0 %v3919
    %3953 = vmatpush.bf16.msra.mxu0 %v3918
    %3954 = vmatmul.bf16.gmra.mxu0 %v3923
    %v3955 = vpop.f32.mrf.mxu0
    %v3956 = vadd.f32 0.0, %v3955
    %v3957 = vpop.f32.mrf.mxu0
    %v3958 = vadd.f32 0.0, %v3957
    %3959 = vmatmul.bf16.gmra.mxu0 %v3926
    %v3960 = vpop.f32.mrf.mxu0
    %v3961 = vadd.f32 0.0, %v3960
    %v3962 = vpop.f32.mrf.mxu0
    %v3963 = vadd.f32 0.0, %v3962
    %3964 = vmatmul.bf16.gmra.mxu0 %v3929
    %v3965 = vpop.f32.mrf.mxu0
    %v3966 = vadd.f32 0.0, %v3965
    %v3967 = vpop.f32.mrf.mxu0
    %v3968 = vadd.f32 0.0, %v3967
    %3969 = vmatmul.bf16.gmra.mxu0 %v3932
    %v3970 = vpop.f32.mrf.mxu0
    %v3971 = vadd.f32 0.0, %v3970
    %v3972 = vpop.f32.mrf.mxu0
    %v3973 = vadd.f32 0.0, %v3972
    %3974 = vmatmul.bf16.gmra.mxu0 %v3935
    %v3975 = vpop.f32.mrf.mxu0
    %v3976 = vadd.f32 0.0, %v3975
    %v3977 = vpop.f32.mrf.mxu0
    %v3978 = vadd.f32 0.0, %v3977
    %3979 = vmatmul.bf16.gmra.mxu0 %v3938
    %v3980 = vpop.f32.mrf.mxu0
    %v3981 = vadd.f32 0.0, %v3980
    %v3982 = vpop.f32.mrf.mxu0
    %v3983 = vadd.f32 0.0, %v3982
    %3984 = vmatmul.bf16.gmra.mxu0 %v3941
    %v3985 = vpop.f32.mrf.mxu0
    %v3986 = vadd.f32 0.0, %v3985
    %v3987 = vpop.f32.mrf.mxu0
    %v3988 = vadd.f32 0.0, %v3987
    %3989 = vmatmul.bf16.gmra.mxu0 %v3944
    %v3990 = vpop.f32.mrf.mxu0
    %v3991 = vadd.f32 0.0, %v3990
    %v3992 = vpop.f32.mrf.mxu0
    %v3993 = vadd.f32 0.0, %v3992
    %3994 = vdwg.mxu0
    %v3995 = vadd.f32 %v3886, %v3956
    %v3996 = vadd.f32 %v3887, %v3958
    %v3997 = vadd.f32 %v3888, %v3961
    %v3998 = vadd.f32 %v3889, %v3963
    %v3999 = vadd.f32 %v3890, %v3966
    %v4000 = vadd.f32 %v3891, %v3968
    %v4001 = vadd.f32 %v3892, %v3971
    %v4002 = vadd.f32 %v3893, %v3973
    %v4003 = vadd.f32 %v3894, %v3976
    %v4004 = vadd.f32 %v3895, %v3978
    %v4005 = vadd.f32 %v3896, %v3981
    %v4006 = vadd.f32 %v3897, %v3983
    %v4007 = vadd.f32 %v3898, %v3986
    %v4008 = vadd.f32 %v3899, %v3988
    %v4009 = vadd.f32 %v3900, %v3991
    %v4010 = vadd.f32 %v3901, %v3993
    %v4011 = vpack.c.b16 %v3670, %v3669
    %v4012 = vpack.c.b16 %v3672, %v3671
    %v4013 = vpack.c.b16 %v3674, %v3673
    %v4014 = vpack.c.b16 %v3668, %v3675
    %v4015 = vpack.c.b16 %v3678, %v3677
    %v4016 = vpack.c.b16 %v3680, %v3679
    %v4017 = vpack.c.b16 %v3682, %v3681
    %v4018 = vpack.c.b16 %v3676, %v3683
    %v4023 = vunpack.c.l.b16 %v3098
    %v4024 = vunpack.c.l.b16 %v3099
    %v4025 = vunpack.c.l.b16 %v3100
    %v4026 = vunpack.c.l.b16 %v3101
    %v4027 = vpack.c.b16 %v4024, %v4023
    %v4028 = vpack.c.b16 %v4026, %v4025
    %v4032 = vsel %vm1926, %v4011, 0
    %v4035 = vsel %vm1926, %v4012, 0
    %v4038 = vsel %vm1926, %v4013, 0
    %v4041 = vsel %vm1926, %v4014, 0
    %v4044 = vsel %vm1926, %v4015, 0
    %v4047 = vsel %vm1926, %v4016, 0
    %v4050 = vsel %vm1926, %v4017, 0
    %v4053 = vsel %vm1926, %v4018, 0
    %4055 = vmatpush.bf16.msra.mxu0 0
    %4056 = vmatpush.bf16.msra.mxu0 0
    %4057 = vmatpush.bf16.msra.mxu0 0
    %4058 = vmatpush.bf16.msra.mxu0 0
    %4059 = vmatpush.bf16.msra.mxu0 0
    %4060 = vmatpush.bf16.msra.mxu0 0
    %4061 = vmatpush.bf16.msra.mxu0 %v4028
    %4062 = vmatpush.bf16.msra.mxu0 %v4027
    %4063 = vmatmul.bf16.gmra.mxu0 %v4032
    %v4064 = vpop.f32.mrf.mxu0
    %v4065 = vadd.f32 0.0, %v4064
    %v4066 = vpop.f32.mrf.mxu0
    %v4067 = vadd.f32 0.0, %v4066
    %4068 = vmatmul.bf16.gmra.mxu0 %v4035
    %v4069 = vpop.f32.mrf.mxu0
    %v4070 = vadd.f32 0.0, %v4069
    %v4071 = vpop.f32.mrf.mxu0
    %v4072 = vadd.f32 0.0, %v4071
    %4073 = vmatmul.bf16.gmra.mxu0 %v4038
    %v4074 = vpop.f32.mrf.mxu0
    %v4075 = vadd.f32 0.0, %v4074
    %v4076 = vpop.f32.mrf.mxu0
    %v4077 = vadd.f32 0.0, %v4076
    %4078 = vmatmul.bf16.gmra.mxu0 %v4041
    %v4079 = vpop.f32.mrf.mxu0
    %v4080 = vadd.f32 0.0, %v4079
    %v4081 = vpop.f32.mrf.mxu0
    %v4082 = vadd.f32 0.0, %v4081
    %4083 = vmatmul.bf16.gmra.mxu0 %v4044
    %v4084 = vpop.f32.mrf.mxu0
    %v4085 = vadd.f32 0.0, %v4084
    %v4086 = vpop.f32.mrf.mxu0
    %v4087 = vadd.f32 0.0, %v4086
    %4088 = vmatmul.bf16.gmra.mxu0 %v4047
    %v4089 = vpop.f32.mrf.mxu0
    %v4090 = vadd.f32 0.0, %v4089
    %v4091 = vpop.f32.mrf.mxu0
    %v4092 = vadd.f32 0.0, %v4091
    %4093 = vmatmul.bf16.gmra.mxu0 %v4050
    %v4094 = vpop.f32.mrf.mxu0
    %v4095 = vadd.f32 0.0, %v4094
    %v4096 = vpop.f32.mrf.mxu0
    %v4097 = vadd.f32 0.0, %v4096
    %4098 = vmatmul.bf16.gmra.mxu0 %v4053
    %v4099 = vpop.f32.mrf.mxu0
    %v4100 = vadd.f32 0.0, %v4099
    %v4101 = vpop.f32.mrf.mxu0
    %v4102 = vadd.f32 0.0, %v4101
    %4103 = vdwg.mxu0
    %v4104 = vadd.f32 %v3995, %v4065
    %v4105 = vadd.f32 %v3996, %v4067
    %v4106 = vadd.f32 %v3997, %v4070
    %v4107 = vadd.f32 %v3998, %v4072
    %v4108 = vadd.f32 %v3999, %v4075
    %v4109 = vadd.f32 %v4000, %v4077
    %v4110 = vadd.f32 %v4001, %v4080
    %v4111 = vadd.f32 %v4002, %v4082
    %v4112 = vadd.f32 %v4003, %v4085
    %v4113 = vadd.f32 %v4004, %v4087
    %v4114 = vadd.f32 %v4005, %v4090
    %v4115 = vadd.f32 %v4006, %v4092
    %v4116 = vadd.f32 %v4007, %v4095
    %v4117 = vadd.f32 %v4008, %v4097
    %v4118 = vadd.f32 %v4009, %v4100
    %v4119 = vadd.f32 %v4010, %v4102
    %v4124 = vunpack.c.l.b16 %v3102
    %v4125 = vunpack.c.l.b16 %v3103
    %v4126 = vunpack.c.l.b16 %v3104
    %v4127 = vunpack.c.l.b16 %v3105
    %v4128 = vpack.c.b16 %v4125, %v4124
    %v4129 = vpack.c.b16 %v4127, %v4126
    %4132 = vmatpush.bf16.msra.mxu0 0
    %4133 = vmatpush.bf16.msra.mxu0 0
    %4134 = vmatpush.bf16.msra.mxu0 0
    %4135 = vmatpush.bf16.msra.mxu0 0
    %4136 = vmatpush.bf16.msra.mxu0 0
    %4137 = vmatpush.bf16.msra.mxu0 0
    %4138 = vmatpush.bf16.msra.mxu0 %v4129
    %4139 = vmatpush.bf16.msra.mxu0 %v4128
    %4140 = vmatmul.bf16.gmra.mxu0 %v3583
    %v4141 = vpop.f32.mrf.mxu0
    %v4142 = vadd.f32 0.0, %v4141
    %v4143 = vpop.f32.mrf.mxu0
    %v4144 = vadd.f32 0.0, %v4143
    %4145 = vmatmul.bf16.gmra.mxu0 %v3586
    %v4146 = vpop.f32.mrf.mxu0
    %v4147 = vadd.f32 0.0, %v4146
    %v4148 = vpop.f32.mrf.mxu0
    %v4149 = vadd.f32 0.0, %v4148
    %4150 = vmatmul.bf16.gmra.mxu0 %v3589
    %v4151 = vpop.f32.mrf.mxu0
    %v4152 = vadd.f32 0.0, %v4151
    %v4153 = vpop.f32.mrf.mxu0
    %v4154 = vadd.f32 0.0, %v4153
    %4155 = vmatmul.bf16.gmra.mxu0 %v3580
    %v4156 = vpop.f32.mrf.mxu0
    %v4157 = vadd.f32 0.0, %v4156
    %v4158 = vpop.f32.mrf.mxu0
    %v4159 = vadd.f32 0.0, %v4158
    %4160 = vmatmul.bf16.gmra.mxu0 %v3595
    %v4161 = vpop.f32.mrf.mxu0
    %v4162 = vadd.f32 0.0, %v4161
    %v4163 = vpop.f32.mrf.mxu0
    %v4164 = vadd.f32 0.0, %v4163
    %4165 = vmatmul.bf16.gmra.mxu0 %v3598
    %v4166 = vpop.f32.mrf.mxu0
    %v4167 = vadd.f32 0.0, %v4166
    %v4168 = vpop.f32.mrf.mxu0
    %v4169 = vadd.f32 0.0, %v4168
    %4170 = vmatmul.bf16.gmra.mxu0 %v3601
    %v4171 = vpop.f32.mrf.mxu0
    %v4172 = vadd.f32 0.0, %v4171
    %v4173 = vpop.f32.mrf.mxu0
    %v4174 = vadd.f32 0.0, %v4173
    %4175 = vmatmul.bf16.gmra.mxu0 %v3592
    %v4176 = vpop.f32.mrf.mxu0
    %v4177 = vadd.f32 0.0, %v4176
    %v4178 = vpop.f32.mrf.mxu0
    %v4179 = vadd.f32 0.0, %v4178
    %4180 = vdwg.mxu0
    %v4181 = vadd.f32 %v4104, %v4142
    %v4182 = vadd.f32 %v4105, %v4144
    %v4183 = vadd.f32 %v4106, %v4147
    %v4184 = vadd.f32 %v4107, %v4149
    %v4185 = vadd.f32 %v4108, %v4152
    %v4186 = vadd.f32 %v4109, %v4154
    %v4187 = vadd.f32 %v4110, %v4157
    %v4188 = vadd.f32 %v4111, %v4159
    %v4189 = vadd.f32 %v4112, %v4162
    %v4190 = vadd.f32 %v4113, %v4164
    %v4191 = vadd.f32 %v4114, %v4167
    %v4192 = vadd.f32 %v4115, %v4169
    %v4193 = vadd.f32 %v4116, %v4172
    %v4194 = vadd.f32 %v4117, %v4174
    %v4195 = vadd.f32 %v4118, %v4177
    %v4196 = vadd.f32 %v4119, %v4179
    %v4201 = vunpack.c.l.b16 %v3106
    %v4202 = vunpack.c.l.b16 %v3107
    %v4203 = vunpack.c.l.b16 %v3108
    %v4204 = vunpack.c.l.b16 %v3109
    %v4205 = vpack.c.b16 %v4202, %v4201
    %v4206 = vpack.c.b16 %v4204, %v4203
    %4209 = vmatpush.bf16.msra.mxu0 0
    %4210 = vmatpush.bf16.msra.mxu0 0
    %4211 = vmatpush.bf16.msra.mxu0 0
    %4212 = vmatpush.bf16.msra.mxu0 0
    %4213 = vmatpush.bf16.msra.mxu0 0
    %4214 = vmatpush.bf16.msra.mxu0 0
    %4215 = vmatpush.bf16.msra.mxu0 %v4206
    %4216 = vmatpush.bf16.msra.mxu0 %v4205
    %4217 = vmatmul.bf16.gmra.mxu0 %v3458
    %v4218 = vpop.f32.mrf.mxu0
    %v4219 = vadd.f32 0.0, %v4218
    %v4220 = vpop.f32.mrf.mxu0
    %v4221 = vadd.f32 0.0, %v4220
    %4222 = vmatmul.bf16.gmra.mxu0 %v3461
    %v4223 = vpop.f32.mrf.mxu0
    %v4224 = vadd.f32 0.0, %v4223
    %v4225 = vpop.f32.mrf.mxu0
    %v4226 = vadd.f32 0.0, %v4225
    %4227 = vmatmul.bf16.gmra.mxu0 %v3464
    %v4228 = vpop.f32.mrf.mxu0
    %v4229 = vadd.f32 0.0, %v4228
    %v4230 = vpop.f32.mrf.mxu0
    %v4231 = vadd.f32 0.0, %v4230
    %4232 = vmatmul.bf16.gmra.mxu0 %v3455
    %v4233 = vpop.f32.mrf.mxu0
    %v4234 = vadd.f32 0.0, %v4233
    %v4235 = vpop.f32.mrf.mxu0
    %v4236 = vadd.f32 0.0, %v4235
    %4237 = vmatmul.bf16.gmra.mxu0 %v3470
    %v4238 = vpop.f32.mrf.mxu0
    %v4239 = vadd.f32 0.0, %v4238
    %v4240 = vpop.f32.mrf.mxu0
    %v4241 = vadd.f32 0.0, %v4240
    %4242 = vmatmul.bf16.gmra.mxu0 %v3473
    %v4243 = vpop.f32.mrf.mxu0
    %v4244 = vadd.f32 0.0, %v4243
    %v4245 = vpop.f32.mrf.mxu0
    %v4246 = vadd.f32 0.0, %v4245
    %4247 = vmatmul.bf16.gmra.mxu0 %v3476
    %v4248 = vpop.f32.mrf.mxu0
    %v4249 = vadd.f32 0.0, %v4248
    %v4250 = vpop.f32.mrf.mxu0
    %v4251 = vadd.f32 0.0, %v4250
    %4252 = vmatmul.bf16.gmra.mxu0 %v3467
    %v4253 = vpop.f32.mrf.mxu0
    %v4254 = vadd.f32 0.0, %v4253
    %v4255 = vpop.f32.mrf.mxu0
    %v4256 = vadd.f32 0.0, %v4255
    %4257 = vdwg.mxu0
    %v4258 = vadd.f32 %v4181, %v4219
    %v4259 = vadd.f32 %v4182, %v4221
    %v4260 = vadd.f32 %v4183, %v4224
    %v4261 = vadd.f32 %v4184, %v4226
    %v4262 = vadd.f32 %v4185, %v4229
    %v4263 = vadd.f32 %v4186, %v4231
    %v4264 = vadd.f32 %v4187, %v4234
    %v4265 = vadd.f32 %v4188, %v4236
    %v4266 = vadd.f32 %v4189, %v4239
    %v4267 = vadd.f32 %v4190, %v4241
    %v4268 = vadd.f32 %v4191, %v4244
    %v4269 = vadd.f32 %v4192, %v4246
    %v4270 = vadd.f32 %v4193, %v4249
    %v4271 = vadd.f32 %v4194, %v4251
    %v4272 = vadd.f32 %v4195, %v4254
    %v4273 = vadd.f32 %v4196, %v4256
    %v4278 = vunpack.c.l.b16 %v3110
    %v4279 = vunpack.c.l.b16 %v3111
    %v4280 = vunpack.c.l.b16 %v3112
    %v4281 = vunpack.c.l.b16 %v3113
    %v4282 = vpack.c.b16 %v4279, %v4278
    %v4283 = vpack.c.b16 %v4281, %v4280
    %4286 = vmatpush.bf16.msra.mxu0 0
    %4287 = vmatpush.bf16.msra.mxu0 0
    %4288 = vmatpush.bf16.msra.mxu0 0
    %4289 = vmatpush.bf16.msra.mxu0 0
    %4290 = vmatpush.bf16.msra.mxu0 0
    %4291 = vmatpush.bf16.msra.mxu0 0
    %4292 = vmatpush.bf16.msra.mxu0 %v4283
    %4293 = vmatpush.bf16.msra.mxu0 %v4282
    %4294 = vmatmul.bf16.gmra.mxu0 %v3708
    %v4295 = vpop.f32.mrf.mxu0
    %v4296 = vadd.f32 0.0, %v4295
    %v4297 = vpop.f32.mrf.mxu0
    %v4298 = vadd.f32 0.0, %v4297
    %4299 = vmatmul.bf16.gmra.mxu0 %v3711
    %v4300 = vpop.f32.mrf.mxu0
    %v4301 = vadd.f32 0.0, %v4300
    %v4302 = vpop.f32.mrf.mxu0
    %v4303 = vadd.f32 0.0, %v4302
    %4304 = vmatmul.bf16.gmra.mxu0 %v3714
    %v4305 = vpop.f32.mrf.mxu0
    %v4306 = vadd.f32 0.0, %v4305
    %v4307 = vpop.f32.mrf.mxu0
    %v4308 = vadd.f32 0.0, %v4307
    %4309 = vmatmul.bf16.gmra.mxu0 %v3705
    %v4310 = vpop.f32.mrf.mxu0
    %v4311 = vadd.f32 0.0, %v4310
    %v4312 = vpop.f32.mrf.mxu0
    %v4313 = vadd.f32 0.0, %v4312
    %4314 = vmatmul.bf16.gmra.mxu0 %v3720
    %v4315 = vpop.f32.mrf.mxu0
    %v4316 = vadd.f32 0.0, %v4315
    %v4317 = vpop.f32.mrf.mxu0
    %v4318 = vadd.f32 0.0, %v4317
    %4319 = vmatmul.bf16.gmra.mxu0 %v3723
    %v4320 = vpop.f32.mrf.mxu0
    %v4321 = vadd.f32 0.0, %v4320
    %v4322 = vpop.f32.mrf.mxu0
    %v4323 = vadd.f32 0.0, %v4322
    %4324 = vmatmul.bf16.gmra.mxu0 %v3726
    %v4325 = vpop.f32.mrf.mxu0
    %v4326 = vadd.f32 0.0, %v4325
    %v4327 = vpop.f32.mrf.mxu0
    %v4328 = vadd.f32 0.0, %v4327
    %4329 = vmatmul.bf16.gmra.mxu0 %v3717
    %v4330 = vpop.f32.mrf.mxu0
    %v4331 = vadd.f32 0.0, %v4330
    %v4332 = vpop.f32.mrf.mxu0
    %v4333 = vadd.f32 0.0, %v4332
    %4334 = vdwg.mxu0
    %v4335 = vadd.f32 %v4258, %v4296
    %v4336 = vadd.f32 %v4259, %v4298
    %v4337 = vadd.f32 %v4260, %v4301
    %v4338 = vadd.f32 %v4261, %v4303
    %v4339 = vadd.f32 %v4262, %v4306
    %v4340 = vadd.f32 %v4263, %v4308
    %v4341 = vadd.f32 %v4264, %v4311
    %v4342 = vadd.f32 %v4265, %v4313
    %v4343 = vadd.f32 %v4266, %v4316
    %v4344 = vadd.f32 %v4267, %v4318
    %v4345 = vadd.f32 %v4268, %v4321
    %v4346 = vadd.f32 %v4269, %v4323
    %v4347 = vadd.f32 %v4270, %v4326
    %v4348 = vadd.f32 %v4271, %v4328
    %v4349 = vadd.f32 %v4272, %v4331
    %v4350 = vadd.f32 %v4273, %v4333
    %v4351 = vperm.slane %v1526, 3
    %v4352 = vadd.f32 %v4335, %v4351
    %v4353 = vadd.f32 %v4336, %v4351
    %v4354 = vadd.f32 %v4337, %v4351
    %v4355 = vadd.f32 %v4338, %v4351
    %v4356 = vadd.f32 %v4339, %v4351
    %v4357 = vadd.f32 %v4340, %v4351
    %v4358 = vadd.f32 %v4341, %v4351
    %v4359 = vadd.f32 %v4342, %v4351
    %v4360 = vadd.f32 %v4343, %v4351
    %v4361 = vadd.f32 %v4344, %v4351
    %v4362 = vadd.f32 %v4345, %v4351
    %v4363 = vadd.f32 %v4346, %v4351
    %v4364 = vadd.f32 %v4347, %v4351
    %v4365 = vadd.f32 %v4348, %v4351
    %v4366 = vadd.f32 %v4349, %v4351
    %v4367 = vadd.f32 %v4350, %v4351
    %v4368 = vsel %vm1926, %v4352, 0.0
    %v4369 = vsel %vm1926, %v4353, 0.0
    %v4370 = vadd.f32 %v4368, %v4369
    %v4371 = vsel %vm1926, %v4354, 0.0
    %v4372 = vadd.f32 %v4370, %v4371
    %v4373 = vsel %vm1926, %v4355, 0.0
    %v4374 = vadd.f32 %v4372, %v4373
    %v4375 = vsel %vm1926, %v4356, 0.0
    %v4376 = vadd.f32 %v4374, %v4375
    %v4377 = vsel %vm1926, %v4357, 0.0
    %v4378 = vadd.f32 %v4376, %v4377
    %v4379 = vsel %vm1926, %v4358, 0.0
    %v4380 = vadd.f32 %v4378, %v4379
    %v4381 = vsel %vm1926, %v4359, 0.0
    %v4382 = vadd.f32 %v4380, %v4381
    %v4383 = vrot.slane %v4382, 4
    %v4384 = vadd.f32 %v4382, %v4383
    %v4385 = vrot.slane %v4384, 2
    %v4386 = vadd.f32 %v4384, %v4385
    %v4387 = vrot.slane %v4386, 1
    %v4388 = vadd.f32 %v4386, %v4387
    %v4389 = vsel %vm1926, %v4360, 0.0
    %v4390 = vsel %vm1926, %v4361, 0.0
    %v4391 = vadd.f32 %v4389, %v4390
    %v4392 = vsel %vm1926, %v4362, 0.0
    %v4393 = vadd.f32 %v4391, %v4392
    %v4394 = vsel %vm1926, %v4363, 0.0
    %v4395 = vadd.f32 %v4393, %v4394
    %v4396 = vsel %vm1926, %v4364, 0.0
    %v4397 = vadd.f32 %v4395, %v4396
    %v4398 = vsel %vm1926, %v4365, 0.0
    %v4399 = vadd.f32 %v4397, %v4398
    %v4400 = vsel %vm1926, %v4366, 0.0
    %v4401 = vadd.f32 %v4399, %v4400
    %v4402 = vsel %vm1926, %v4367, 0.0
    %v4403 = vadd.f32 %v4401, %v4402
    %v4404 = vrot.slane %v4403, 4
    %v4405 = vadd.f32 %v4403, %v4404
    %v4406 = vrot.slane %v4405, 2
    %v4407 = vadd.f32 %v4405, %v4406
    %v4408 = vrot.slane %v4407, 1
    %v4409 = vadd.f32 %v4407, %v4408
    %v4410 = vmul.f32 %v4388, %v2889
    %v4411 = vmul.f32 %v4409, %v2889
    %v4412 = vmul.f32 %v4352, %v4352
    %v4413 = vmul.f32 %v4353, %v4353
    %v4414 = vmul.f32 %v4354, %v4354
    %v4415 = vmul.f32 %v4355, %v4355
    %v4416 = vmul.f32 %v4356, %v4356
    %v4417 = vmul.f32 %v4357, %v4357
    %v4418 = vmul.f32 %v4358, %v4358
    %v4419 = vmul.f32 %v4359, %v4359
    %v4420 = vmul.f32 %v4360, %v4360
    %v4421 = vmul.f32 %v4361, %v4361
    %v4422 = vmul.f32 %v4362, %v4362
    %v4423 = vmul.f32 %v4363, %v4363
    %v4424 = vmul.f32 %v4364, %v4364
    %v4425 = vmul.f32 %v4365, %v4365
    %v4426 = vmul.f32 %v4366, %v4366
    %v4427 = vmul.f32 %v4367, %v4367
    %v4428 = vsel %vm1926, %v4412, 0.0
    %v4429 = vsel %vm1926, %v4413, 0.0
    %v4430 = vadd.f32 %v4428, %v4429
    %v4431 = vsel %vm1926, %v4414, 0.0
    %v4432 = vadd.f32 %v4430, %v4431
    %v4433 = vsel %vm1926, %v4415, 0.0
    %v4434 = vadd.f32 %v4432, %v4433
    %v4435 = vsel %vm1926, %v4416, 0.0
    %v4436 = vadd.f32 %v4434, %v4435
    %v4437 = vsel %vm1926, %v4417, 0.0
    %v4438 = vadd.f32 %v4436, %v4437
    %v4439 = vsel %vm1926, %v4418, 0.0
    %v4440 = vadd.f32 %v4438, %v4439
    %v4441 = vsel %vm1926, %v4419, 0.0
    %v4442 = vadd.f32 %v4440, %v4441
    %v4443 = vrot.slane %v4442, 4
    %v4444 = vadd.f32 %v4442, %v4443
    %v4445 = vrot.slane %v4444, 2
    %v4446 = vadd.f32 %v4444, %v4445
    %v4447 = vrot.slane %v4446, 1
    %v4448 = vadd.f32 %v4446, %v4447
    %v4449 = vsel %vm1926, %v4420, 0.0
    %v4450 = vsel %vm1926, %v4421, 0.0
    %v4451 = vadd.f32 %v4449, %v4450
    %v4452 = vsel %vm1926, %v4422, 0.0
    %v4453 = vadd.f32 %v4451, %v4452
    %v4454 = vsel %vm1926, %v4423, 0.0
    %v4455 = vadd.f32 %v4453, %v4454
    %v4456 = vsel %vm1926, %v4424, 0.0
    %v4457 = vadd.f32 %v4455, %v4456
    %v4458 = vsel %vm1926, %v4425, 0.0
    %v4459 = vadd.f32 %v4457, %v4458
    %v4460 = vsel %vm1926, %v4426, 0.0
    %v4461 = vadd.f32 %v4459, %v4460
    %v4462 = vsel %vm1926, %v4427, 0.0
    %v4463 = vadd.f32 %v4461, %v4462
    %v4464 = vrot.slane %v4463, 4
    %v4465 = vadd.f32 %v4463, %v4464
    %v4466 = vrot.slane %v4465, 2
    %v4467 = vadd.f32 %v4465, %v4466
    %v4468 = vrot.slane %v4467, 1
    %v4469 = vadd.f32 %v4467, %v4468
    %v4470 = vmul.f32 %v4448, %v2889
    %v4471 = vmul.f32 %v4469, %v2889
    %v4472 = vmul.f32 %v4410, %v4410
    %v4473 = vmul.f32 %v4411, %v4411
    %v4474 = vsub.f32 %v4470, %v4472
    %v4475 = vsub.f32 %v4471, %v4473
    %v4476 = vmax.f32 %v4474, 0.0
    %v4477 = vmax.f32 %v4475, 0.0
    %v4478 = vsub.f32 %v4352, %v4410
    %v4479 = vsub.f32 %v4353, %v4410
    %v4480 = vsub.f32 %v4354, %v4410
    %v4481 = vsub.f32 %v4355, %v4410
    %v4482 = vsub.f32 %v4356, %v4410
    %v4483 = vsub.f32 %v4357, %v4410
    %v4484 = vsub.f32 %v4358, %v4410
    %v4485 = vsub.f32 %v4359, %v4410
    %v4486 = vsub.f32 %v4360, %v4411
    %v4487 = vsub.f32 %v4361, %v4411
    %v4488 = vsub.f32 %v4362, %v4411
    %v4489 = vsub.f32 %v4363, %v4411
    %v4490 = vsub.f32 %v4364, %v4411
    %v4491 = vsub.f32 %v4365, %v4411
    %v4492 = vsub.f32 %v4366, %v4411
    %v4493 = vsub.f32 %v4367, %v4411
    %v4494 = vadd.f32 %v4476, 1e-05
    %v4495 = vadd.f32 %v4477, 1e-05
    %v4496 = vrsqrt.pop %v4494
    %v4497 = vmul.f32 %v4496, %v4494
    %v4498 = vmul.f32 %v4497, %v4496
    %v4499 = vmul.f32 0.5, %v4498
    %v4500 = vsub.f32 1.5, %v4499
    %v4501 = vmul.f32 %v4496, %v4500
    %vm4502 = vweird.f32 %v4494
    %vm4503 = vweird.f32 %v4496
    %vm4504 = vmor %vm4502, %vm4503
    %v4505 = vsel %vm4504, %v4496, %v4501
    %v4506 = vrsqrt.pop %v4495
    %v4507 = vmul.f32 %v4506, %v4495
    %v4508 = vmul.f32 %v4507, %v4506
    %v4509 = vmul.f32 0.5, %v4508
    %v4510 = vsub.f32 1.5, %v4509
    %v4511 = vmul.f32 %v4506, %v4510
    %vm4512 = vweird.f32 %v4495
    %vm4513 = vweird.f32 %v4506
    %vm4514 = vmor %vm4512, %vm4513
    %v4515 = vsel %vm4514, %v4506, %v4511
    %v4516 = vmul.f32 %v4478, %v4505
    %v4517 = vmul.f32 %v4479, %v4505
    %v4518 = vmul.f32 %v4480, %v4505
    %v4519 = vmul.f32 %v4481, %v4505
    %v4520 = vmul.f32 %v4482, %v4505
    %v4521 = vmul.f32 %v4483, %v4505
    %v4522 = vmul.f32 %v4484, %v4505
    %v4523 = vmul.f32 %v4485, %v4505
    %v4524 = vmul.f32 %v4486, %v4515
    %v4525 = vmul.f32 %v4487, %v4515
    %v4526 = vmul.f32 %v4488, %v4515
    %v4527 = vmul.f32 %v4489, %v4515
    %v4528 = vmul.f32 %v4490, %v4515
    %v4529 = vmul.f32 %v4491, %v4515
    %v4530 = vmul.f32 %v4492, %v4515
    %v4531 = vmul.f32 %v4493, %v4515
    %v4532 = vperm.slane %v1526, 4
    %v4533 = vmul.f32 %v4516, %v4532
    %v4534 = vmul.f32 %v4517, %v4532
    %v4535 = vmul.f32 %v4518, %v4532
    %v4536 = vmul.f32 %v4519, %v4532
    %v4537 = vmul.f32 %v4520, %v4532
    %v4538 = vmul.f32 %v4521, %v4532
    %v4539 = vmul.f32 %v4522, %v4532
    %v4540 = vmul.f32 %v4523, %v4532
    %v4541 = vmul.f32 %v4524, %v4532
    %v4542 = vmul.f32 %v4525, %v4532
    %v4543 = vmul.f32 %v4526, %v4532
    %v4544 = vmul.f32 %v4527, %v4532
    %v4545 = vmul.f32 %v4528, %v4532
    %v4546 = vmul.f32 %v4529, %v4532
    %v4547 = vmul.f32 %v4530, %v4532
    %v4548 = vmul.f32 %v4531, %v4532
    %v4549 = vperm.slane %v1526, 5
    %v4550 = vadd.f32 %v4533, %v4549
    %v4551 = vadd.f32 %v4534, %v4549
    %v4552 = vadd.f32 %v4535, %v4549
    %v4553 = vadd.f32 %v4536, %v4549
    %v4554 = vadd.f32 %v4537, %v4549
    %v4555 = vadd.f32 %v4538, %v4549
    %v4556 = vadd.f32 %v4539, %v4549
    %v4557 = vadd.f32 %v4540, %v4549
    %v4558 = vadd.f32 %v4541, %v4549
    %v4559 = vadd.f32 %v4542, %v4549
    %v4560 = vadd.f32 %v4543, %v4549
    %v4561 = vadd.f32 %v4544, %v4549
    %v4562 = vadd.f32 %v4545, %v4549
    %v4563 = vadd.f32 %v4546, %v4549
    %v4564 = vadd.f32 %v4547, %v4549
    %v4565 = vadd.f32 %v4548, %v4549
    %v4566 = vunpack.c.l.bf16 %v1528
    %v4567 = vunpack.c.l.bf16 %v1529
    %v4568 = vunpack.c.l.bf16 %v1530
    %v4569 = vunpack.c.l.bf16 %v1531
    %v4570 = vunpack.c.l.bf16 %v1532
    %v4571 = vunpack.c.l.bf16 %v1533
    %v4572 = vunpack.c.l.bf16 %v1534
    %v4573 = vunpack.c.l.bf16 %v1535
    %v4574 = vunpack.c.l.bf16 %v1536
    %v4575 = vunpack.c.l.bf16 %v1537
    %v4576 = vunpack.c.l.bf16 %v1538
    %v4577 = vunpack.c.l.bf16 %v1539
    %v4578 = vunpack.c.l.bf16 %v1540
    %v4579 = vunpack.c.l.bf16 %v1541
    %v4580 = vunpack.c.l.bf16 %v1542
    %v4581 = vunpack.c.l.bf16 %v1543
    %v4582 = vadd.f32 %v4566, %v4550
    %v4583 = vadd.f32 %v4567, %v4551
    %v4584 = vadd.f32 %v4568, %v4552
    %v4585 = vadd.f32 %v4569, %v4553
    %v4586 = vadd.f32 %v4570, %v4554
    %v4587 = vadd.f32 %v4571, %v4555
    %v4588 = vadd.f32 %v4572, %v4556
    %v4589 = vadd.f32 %v4573, %v4557
    %v4590 = vadd.f32 %v4574, %v4558
    %v4591 = vadd.f32 %v4575, %v4559
    %v4592 = vadd.f32 %v4576, %v4560
    %v4593 = vadd.f32 %v4577, %v4561
    %v4594 = vadd.f32 %v4578, %v4562
    %v4595 = vadd.f32 %v4579, %v4563
    %v4596 = vadd.f32 %v4580, %v4564
    %v4597 = vadd.f32 %v4581, %v4565
    %v4598 = vmax.f32 %v4582, 0.0
    %v4599 = vmax.f32 %v4583, 0.0
    %v4600 = vmax.f32 %v4584, 0.0
    %v4601 = vmax.f32 %v4585, 0.0
    %v4602 = vmax.f32 %v4586, 0.0
    %v4603 = vmax.f32 %v4587, 0.0
    %v4604 = vmax.f32 %v4588, 0.0
    %v4605 = vmax.f32 %v4589, 0.0
    %v4606 = vmax.f32 %v4590, 0.0
    %v4607 = vmax.f32 %v4591, 0.0
    %v4608 = vmax.f32 %v4592, 0.0
    %v4609 = vmax.f32 %v4593, 0.0
    %v4610 = vmax.f32 %v4594, 0.0
    %v4611 = vmax.f32 %v4595, 0.0
    %v4612 = vmax.f32 %v4596, 0.0
    %v4613 = vmax.f32 %v4597, 0.0
    %v4614 = vpack.c.bf16 %v4598, %v4598
    %v4615 = vpack.c.bf16 %v4599, %v4599
    %v4616 = vpack.c.bf16 %v4600, %v4600
    %v4617 = vpack.c.bf16 %v4601, %v4601
    %v4618 = vpack.c.bf16 %v4602, %v4602
    %v4619 = vpack.c.bf16 %v4603, %v4603
    %v4620 = vpack.c.bf16 %v4604, %v4604
    %v4621 = vpack.c.bf16 %v4605, %v4605
    %v4622 = vpack.c.bf16 %v4606, %v4606
    %v4623 = vpack.c.bf16 %v4607, %v4607
    %v4624 = vpack.c.bf16 %v4608, %v4608
    %v4625 = vpack.c.bf16 %v4609, %v4609
    %v4626 = vpack.c.bf16 %v4610, %v4610
    %v4627 = vpack.c.bf16 %v4611, %v4611
    %v4628 = vpack.c.bf16 %v4612, %v4612
    %v4629 = vpack.c.bf16 %v4613, %v4613
    %vm4630 = vcmask 257024
    %4631 = vst.msk [vmem:[#allocation2] sm:$0xf] %vm4630, %v4614
    %4632 = vst.msk [vmem:[#allocation2 + $0x4] sm:$0xf] %vm4630, %v4615
    %4633 = vst.msk [vmem:[#allocation2 + $0x8] sm:$0xf] %vm4630, %v4616
    %4634 = vst.msk [vmem:[#allocation2 + $0xc] sm:$0xf] %vm4630, %v4617
    %4635 = vst.msk [vmem:[#allocation2 + $0x10] sm:$0xf] %vm4630, %v4618
    %4636 = vst.msk [vmem:[#allocation2 + $0x14] sm:$0xf] %vm4630, %v4619
    %4637 = vst.msk [vmem:[#allocation2 + $0x18] sm:$0xf] %vm4630, %v4620
    %4638 = vst.msk [vmem:[#allocation2 + $0x1c] sm:$0xf] %vm4630, %v4621
    %4639 = vst.msk [vmem:[#allocation2 + $0x20] sm:$0xf] %vm4630, %v4622
    %4640 = vst.msk [vmem:[#allocation2 + $0x24] sm:$0xf] %vm4630, %v4623
    %4641 = vst.msk [vmem:[#allocation2 + $0x28] sm:$0xf] %vm4630, %v4624
    %4642 = vst.msk [vmem:[#allocation2 + $0x2c] sm:$0xf] %vm4630, %v4625
    %4643 = vst.msk [vmem:[#allocation2 + $0x30] sm:$0xf] %vm4630, %v4626
    %4644 = vst.msk [vmem:[#allocation2 + $0x34] sm:$0xf] %vm4630, %v4627
    %4645 = vst.msk [vmem:[#allocation2 + $0x38] sm:$0xf] %vm4630, %v4628
    %4646 = vst.msk [vmem:[#allocation2 + $0x3c] sm:$0xf] %vm4630, %v4629
    %v4647 = vld [vmem:[#allocation2] sm:$0xf]
    %v4648 = vld [vmem:[#allocation2 + $0x4] sm:$0xf]
    %v4649 = vld [vmem:[#allocation2 + $0x8] sm:$0xf]
    %v4650 = vld [vmem:[#allocation2 + $0xc] sm:$0xf]
    %v4651 = vld [vmem:[#allocation2 + $0x10] sm:$0xf]
    %v4652 = vld [vmem:[#allocation2 + $0x14] sm:$0xf]
    %v4653 = vld [vmem:[#allocation2 + $0x18] sm:$0xf]
    %v4654 = vld [vmem:[#allocation2 + $0x1c] sm:$0xf]
    %v4655 = vld [vmem:[#allocation2 + $0x20] sm:$0xf]
    %v4656 = vld [vmem:[#allocation2 + $0x24] sm:$0xf]
    %v4657 = vld [vmem:[#allocation2 + $0x28] sm:$0xf]
    %v4658 = vld [vmem:[#allocation2 + $0x2c] sm:$0xf]
    %v4659 = vld [vmem:[#allocation2 + $0x30] sm:$0xf]
    %v4660 = vld [vmem:[#allocation2 + $0x34] sm:$0xf]
    %v4661 = vld [vmem:[#allocation2 + $0x38] sm:$0xf]
    %v4662 = vld [vmem:[#allocation2 + $0x3c] sm:$0xf]
    %s4663 = scalar_lea.vmem %s3, 144
    %v4664 = vld [vmem:[%s4663] sm:$0xf]
    %v4665 = vld [vmem:[%s4663 + $0x4] sm:$0xf]
    %v4666 = vld [vmem:[%s4663 + $0x8] sm:$0xf]
    %v4667 = vld [vmem:[%s4663 + $0xc] sm:$0xf]
    %v4668 = vld [vmem:[%s4663 + $0x10] sm:$0xf]
    %v4669 = vld [vmem:[%s4663 + $0x14] sm:$0xf]
    %v4670 = vld [vmem:[%s4663 + $0x18] sm:$0xf]
    %v4671 = vld [vmem:[%s4663 + $0x1c] sm:$0xf]
    %v4672 = vld [vmem:[%s4663 + $0x20] sm:$0xf]
    %v4673 = vld [vmem:[%s4663 + $0x24] sm:$0xf]
    %v4674 = vld [vmem:[%s4663 + $0x28] sm:$0xf]
    %v4675 = vld [vmem:[%s4663 + $0x2c] sm:$0xf]
    %v4676 = vld [vmem:[%s4663 + $0x30] sm:$0xf]
    %v4677 = vld [vmem:[%s4663 + $0x34] sm:$0xf]
    %v4678 = vld [vmem:[%s4663 + $0x38] sm:$0xf]
    %v4679 = vld [vmem:[%s4663 + $0x3c] sm:$0xf]
    %v4680 = vld [vmem:[%s4663 + $0x40] sm:$0xf]
    %v4681 = vld [vmem:[%s4663 + $0x44] sm:$0xf]
    %v4682 = vld [vmem:[%s4663 + $0x48] sm:$0xf]
    %v4683 = vld [vmem:[%s4663 + $0x4c] sm:$0xf]
    %v4684 = vld [vmem:[%s4663 + $0x50] sm:$0xf]
    %v4685 = vld [vmem:[%s4663 + $0x54] sm:$0xf]
    %v4686 = vld [vmem:[%s4663 + $0x58] sm:$0xf]
    %v4687 = vld [vmem:[%s4663 + $0x5c] sm:$0xf]
    %v4688 = vld [vmem:[%s4663 + $0x60] sm:$0xf]
    %v4689 = vld [vmem:[%s4663 + $0x64] sm:$0xf]
    %v4690 = vld [vmem:[%s4663 + $0x68] sm:$0xf]
    %v4691 = vld [vmem:[%s4663 + $0x6c] sm:$0xf]
    %v4692 = vld [vmem:[%s4663 + $0x70] sm:$0xf]
    %v4693 = vld [vmem:[%s4663 + $0x74] sm:$0xf]
    %v4694 = vld [vmem:[%s4663 + $0x78] sm:$0xf]
    %v4695 = vld [vmem:[%s4663 + $0x7c] sm:$0xf]
    %v4696 = vld [vmem:[%s4663 + $0x80] sm:$0xf]
    %v4697 = vld [vmem:[%s4663 + $0x84] sm:$0xf]
    %v4698 = vld [vmem:[%s4663 + $0x88] sm:$0xf]
    %v4699 = vld [vmem:[%s4663 + $0x8c] sm:$0xf]
    %v4716 = vunpack.c.l.b16 %v4654
    %v4717 = vunpack.c.l.b16 %v4647
    %v4718 = vunpack.c.l.b16 %v4648
    %v4719 = vunpack.c.l.b16 %v4649
    %v4720 = vunpack.c.l.b16 %v4650
    %v4721 = vunpack.c.l.b16 %v4651
    %v4722 = vunpack.c.l.b16 %v4652
    %v4723 = vunpack.c.l.b16 %v4653
    %v4724 = vunpack.c.l.b16 %v4662
    %v4725 = vunpack.c.l.b16 %v4655
    %v4726 = vunpack.c.l.b16 %v4656
    %v4727 = vunpack.c.l.b16 %v4657
    %v4728 = vunpack.c.l.b16 %v4658
    %v4729 = vunpack.c.l.b16 %v4659
    %v4730 = vunpack.c.l.b16 %v4660
    %v4731 = vunpack.c.l.b16 %v4661
    %v4732 = vpack.c.b16 %v4716, %v4716
    %v4733 = vpack.c.b16 %v4717, %v4717
    %v4734 = vpack.c.b16 %v4718, %v4718
    %v4735 = vpack.c.b16 %v4719, %v4719
    %v4736 = vpack.c.b16 %v4720, %v4720
    %v4737 = vpack.c.b16 %v4721, %v4721
    %v4738 = vpack.c.b16 %v4722, %v4722
    %v4739 = vpack.c.b16 %v4723, %v4723
    %v4740 = vpack.c.b16 %v4724, %v4724
    %v4741 = vpack.c.b16 %v4725, %v4725
    %v4742 = vpack.c.b16 %v4726, %v4726
    %v4743 = vpack.c.b16 %v4727, %v4727
    %v4744 = vpack.c.b16 %v4728, %v4728
    %v4745 = vpack.c.b16 %v4729, %v4729
    %v4746 = vpack.c.b16 %v4730, %v4730
    %v4747 = vpack.c.b16 %v4731, %v4731
    %v4749 = vshrl.u32 %v4732, 16
    %v4751 = vrot.slane %v4749, 3
    %v4753 = vshrl.u32 %v4733, 16
    %v4755 = vrot.slane %v4753, 3
    %v4757 = vshrl.u32 %v4734, 16
    %v4759 = vrot.slane %v4757, 3
    %v4761 = vshrl.u32 %v4735, 16
    %v4763 = vrot.slane %v4761, 3
    %v4765 = vshrl.u32 %v4736, 16
    %v4767 = vrot.slane %v4765, 3
    %v4769 = vshrl.u32 %v4737, 16
    %v4771 = vrot.slane %v4769, 3
    %v4773 = vshrl.u32 %v4738, 16
    %v4775 = vrot.slane %v4773, 3
    %v4777 = vshrl.u32 %v4739, 16
    %v4779 = vrot.slane %v4777, 3
    %v4781 = vshrl.u32 %v4740, 16
    %v4783 = vrot.slane %v4781, 3
    %v4785 = vshrl.u32 %v4741, 16
    %v4787 = vrot.slane %v4785, 3
    %v4789 = vshrl.u32 %v4742, 16
    %v4791 = vrot.slane %v4789, 3
    %v4793 = vshrl.u32 %v4743, 16
    %v4795 = vrot.slane %v4793, 3
    %v4797 = vshrl.u32 %v4744, 16
    %v4799 = vrot.slane %v4797, 3
    %v4801 = vshrl.u32 %v4745, 16
    %v4803 = vrot.slane %v4801, 3
    %v4805 = vshrl.u32 %v4746, 16
    %v4807 = vrot.slane %v4805, 3
    %v4809 = vshrl.u32 %v4747, 16
    %v4811 = vrot.slane %v4809, 3
    %v4828 = vrot.slane %v4749, 7
    %v4829 = vshll.u32 %v4732, 16
    %v4831 = vor.u32 %v4828, %v4829
    %v4832 = vrot.slane %v4753, 7
    %v4833 = vshll.u32 %v4733, 16
    %v4835 = vor.u32 %v4832, %v4833
    %v4836 = vrot.slane %v4757, 7
    %v4837 = vshll.u32 %v4734, 16
    %v4839 = vor.u32 %v4836, %v4837
    %v4840 = vrot.slane %v4761, 7
    %v4841 = vshll.u32 %v4735, 16
    %v4843 = vor.u32 %v4840, %v4841
    %v4844 = vrot.slane %v4765, 7
    %v4845 = vshll.u32 %v4736, 16
    %v4847 = vor.u32 %v4844, %v4845
    %v4848 = vrot.slane %v4769, 7
    %v4849 = vshll.u32 %v4737, 16
    %v4851 = vor.u32 %v4848, %v4849
    %v4852 = vrot.slane %v4773, 7
    %v4853 = vshll.u32 %v4738, 16
    %v4855 = vor.u32 %v4852, %v4853
    %v4856 = vrot.slane %v4777, 7
    %v4857 = vshll.u32 %v4739, 16
    %v4859 = vor.u32 %v4856, %v4857
    %v4860 = vrot.slane %v4781, 7
    %v4861 = vshll.u32 %v4740, 16
    %v4863 = vor.u32 %v4860, %v4861
    %v4864 = vrot.slane %v4785, 7
    %v4865 = vshll.u32 %v4741, 16
    %v4867 = vor.u32 %v4864, %v4865
    %v4868 = vrot.slane %v4789, 7
    %v4869 = vshll.u32 %v4742, 16
    %v4871 = vor.u32 %v4868, %v4869
    %v4872 = vrot.slane %v4793, 7
    %v4873 = vshll.u32 %v4743, 16
    %v4875 = vor.u32 %v4872, %v4873
    %v4876 = vrot.slane %v4797, 7
    %v4877 = vshll.u32 %v4744, 16
    %v4879 = vor.u32 %v4876, %v4877
    %v4880 = vrot.slane %v4801, 7
    %v4881 = vshll.u32 %v4745, 16
    %v4883 = vor.u32 %v4880, %v4881
    %v4884 = vrot.slane %v4805, 7
    %v4885 = vshll.u32 %v4746, 16
    %v4887 = vor.u32 %v4884, %v4885
    %v4888 = vrot.slane %v4809, 7
    %v4889 = vshll.u32 %v4747, 16
    %v4891 = vor.u32 %v4888, %v4889
    %v4908 = vsel %vm1790, %v4751, %v4831
    %v4909 = vsel %vm1790, %v4755, %v4835
    %v4910 = vsel %vm1790, %v4759, %v4839
    %v4911 = vsel %vm1790, %v4763, %v4843
    %v4912 = vsel %vm1790, %v4767, %v4847
    %v4913 = vsel %vm1790, %v4771, %v4851
    %v4914 = vsel %vm1790, %v4775, %v4855
    %v4915 = vsel %vm1790, %v4779, %v4859
    %v4916 = vsel %vm1790, %v4783, %v4863
    %v4917 = vsel %vm1790, %v4787, %v4867
    %v4918 = vsel %vm1790, %v4791, %v4871
    %v4919 = vsel %vm1790, %v4795, %v4875
    %v4920 = vsel %vm1790, %v4799, %v4879
    %v4921 = vsel %vm1790, %v4803, %v4883
    %v4922 = vsel %vm1790, %v4807, %v4887
    %v4923 = vsel %vm1790, %v4811, %v4891
    %v4924 = vrot.slane %v4829, 1
    %v4925 = vor.u32 %v4749, %v4924
    %v4926 = vrot.slane %v4833, 1
    %v4927 = vor.u32 %v4753, %v4926
    %v4928 = vrot.slane %v4837, 1
    %v4929 = vor.u32 %v4757, %v4928
    %v4930 = vrot.slane %v4841, 1
    %v4931 = vor.u32 %v4761, %v4930
    %v4932 = vrot.slane %v4845, 1
    %v4933 = vor.u32 %v4765, %v4932
    %v4934 = vrot.slane %v4849, 1
    %v4935 = vor.u32 %v4769, %v4934
    %v4936 = vrot.slane %v4853, 1
    %v4937 = vor.u32 %v4773, %v4936
    %v4938 = vrot.slane %v4857, 1
    %v4939 = vor.u32 %v4777, %v4938
    %v4940 = vrot.slane %v4861, 1
    %v4941 = vor.u32 %v4781, %v4940
    %v4942 = vrot.slane %v4865, 1
    %v4943 = vor.u32 %v4785, %v4942
    %v4944 = vrot.slane %v4869, 1
    %v4945 = vor.u32 %v4789, %v4944
    %v4946 = vrot.slane %v4873, 1
    %v4947 = vor.u32 %v4793, %v4946
    %v4948 = vrot.slane %v4877, 1
    %v4949 = vor.u32 %v4797, %v4948
    %v4950 = vrot.slane %v4881, 1
    %v4951 = vor.u32 %v4801, %v4950
    %v4952 = vrot.slane %v4885, 1
    %v4953 = vor.u32 %v4805, %v4952
    %v4954 = vrot.slane %v4889, 1
    %v4955 = vor.u32 %v4809, %v4954
    %v4972 = vrot.slane %v4829, 5
    %v4973 = vrot.slane %v4833, 5
    %v4974 = vrot.slane %v4837, 5
    %v4975 = vrot.slane %v4841, 5
    %v4976 = vrot.slane %v4845, 5
    %v4977 = vrot.slane %v4849, 5
    %v4978 = vrot.slane %v4853, 5
    %v4979 = vrot.slane %v4857, 5
    %v4980 = vrot.slane %v4861, 5
    %v4981 = vrot.slane %v4865, 5
    %v4982 = vrot.slane %v4869, 5
    %v4983 = vrot.slane %v4873, 5
    %v4984 = vrot.slane %v4877, 5
    %v4985 = vrot.slane %v4881, 5
    %v4986 = vrot.slane %v4885, 5
    %v4987 = vrot.slane %v4889, 5
    %v5004 = vsel %vm1889, %v4925, %v4972
    %v5005 = vsel %vm1889, %v4927, %v4973
    %v5006 = vsel %vm1889, %v4929, %v4974
    %v5007 = vsel %vm1889, %v4931, %v4975
    %v5008 = vsel %vm1889, %v4933, %v4976
    %v5009 = vsel %vm1889, %v4935, %v4977
    %v5010 = vsel %vm1889, %v4937, %v4978
    %v5011 = vsel %vm1889, %v4939, %v4979
    %v5012 = vsel %vm1889, %v4941, %v4980
    %v5013 = vsel %vm1889, %v4943, %v4981
    %v5014 = vsel %vm1889, %v4945, %v4982
    %v5015 = vsel %vm1889, %v4947, %v4983
    %v5016 = vsel %vm1889, %v4949, %v4984
    %v5017 = vsel %vm1889, %v4951, %v4985
    %v5018 = vsel %vm1889, %v4953, %v4986
    %v5019 = vsel %vm1889, %v4955, %v4987
    %v5020 = vpack.c.b16 %v4717, %v4716
    %v5021 = vpack.c.b16 %v4719, %v4718
    %v5022 = vpack.c.b16 %v4721, %v4720
    %v5023 = vpack.c.b16 %v4723, %v4722
    %v5024 = vpack.c.b16 %v4725, %v4724
    %v5025 = vpack.c.b16 %v4727, %v4726
    %v5026 = vpack.c.b16 %v4729, %v4728
    %v5027 = vpack.c.b16 %v4731, %v4730
    %v5032 = vunpack.c.l.b16 %v4668
    %v5033 = vunpack.c.l.b16 %v4669
    %v5034 = vunpack.c.l.b16 %v4670
    %v5035 = vunpack.c.l.b16 %v4671
    %v5036 = vpack.c.b16 %v5033, %v5032
    %v5037 = vpack.c.b16 %v5035, %v5034
    %v5041 = vsel %vm1926, %v5020, 0
    %v5044 = vsel %vm1926, %v5021, 0
    %v5047 = vsel %vm1926, %v5022, 0
    %v5050 = vsel %vm1926, %v5023, 0
    %v5053 = vsel %vm1926, %v5024, 0
    %v5056 = vsel %vm1926, %v5025, 0
    %v5059 = vsel %vm1926, %v5026, 0
    %v5062 = vsel %vm1926, %v5027, 0
    %5064 = vmatpush.bf16.msra.mxu0 0
    %5065 = vmatpush.bf16.msra.mxu0 0
    %5066 = vmatpush.bf16.msra.mxu0 0
    %5067 = vmatpush.bf16.msra.mxu0 0
    %5068 = vmatpush.bf16.msra.mxu0 0
    %5069 = vmatpush.bf16.msra.mxu0 0
    %5070 = vmatpush.bf16.msra.mxu0 %v5037
    %5071 = vmatpush.bf16.msra.mxu0 %v5036
    %5072 = vmatmul.bf16.gmra.mxu0 %v5041
    %v5073 = vpop.f32.mrf.mxu0
    %v5074 = vadd.f32 0.0, %v5073
    %v5075 = vpop.f32.mrf.mxu0
    %v5076 = vadd.f32 0.0, %v5075
    %5077 = vmatmul.bf16.gmra.mxu0 %v5044
    %v5078 = vpop.f32.mrf.mxu0
    %v5079 = vadd.f32 0.0, %v5078
    %v5080 = vpop.f32.mrf.mxu0
    %v5081 = vadd.f32 0.0, %v5080
    %5082 = vmatmul.bf16.gmra.mxu0 %v5047
    %v5083 = vpop.f32.mrf.mxu0
    %v5084 = vadd.f32 0.0, %v5083
    %v5085 = vpop.f32.mrf.mxu0
    %v5086 = vadd.f32 0.0, %v5085
    %5087 = vmatmul.bf16.gmra.mxu0 %v5050
    %v5088 = vpop.f32.mrf.mxu0
    %v5089 = vadd.f32 0.0, %v5088
    %v5090 = vpop.f32.mrf.mxu0
    %v5091 = vadd.f32 0.0, %v5090
    %5092 = vmatmul.bf16.gmra.mxu0 %v5053
    %v5093 = vpop.f32.mrf.mxu0
    %v5094 = vadd.f32 0.0, %v5093
    %v5095 = vpop.f32.mrf.mxu0
    %v5096 = vadd.f32 0.0, %v5095
    %5097 = vmatmul.bf16.gmra.mxu0 %v5056
    %v5098 = vpop.f32.mrf.mxu0
    %v5099 = vadd.f32 0.0, %v5098
    %v5100 = vpop.f32.mrf.mxu0
    %v5101 = vadd.f32 0.0, %v5100
    %5102 = vmatmul.bf16.gmra.mxu0 %v5059
    %v5103 = vpop.f32.mrf.mxu0
    %v5104 = vadd.f32 0.0, %v5103
    %v5105 = vpop.f32.mrf.mxu0
    %v5106 = vadd.f32 0.0, %v5105
    %5107 = vmatmul.bf16.gmra.mxu0 %v5062
    %v5108 = vpop.f32.mrf.mxu0
    %v5109 = vadd.f32 0.0, %v5108
    %v5110 = vpop.f32.mrf.mxu0
    %v5111 = vadd.f32 0.0, %v5110
    %5112 = vdwg.mxu0
    %v5129 = vunpack.c.l.b16 %v4908
    %v5130 = vunpack.c.l.b16 %v4909
    %v5131 = vunpack.c.l.b16 %v4910
    %v5132 = vunpack.c.l.b16 %v4911
    %v5133 = vunpack.c.l.b16 %v4912
    %v5134 = vunpack.c.l.b16 %v4913
    %v5135 = vunpack.c.l.b16 %v4914
    %v5136 = vunpack.c.l.b16 %v4915
    %v5137 = vunpack.c.l.b16 %v4916
    %v5138 = vunpack.c.l.b16 %v4917
    %v5139 = vunpack.c.l.b16 %v4918
    %v5140 = vunpack.c.l.b16 %v4919
    %v5141 = vunpack.c.l.b16 %v4920
    %v5142 = vunpack.c.l.b16 %v4921
    %v5143 = vunpack.c.l.b16 %v4922
    %v5144 = vunpack.c.l.b16 %v4923
    %v5145 = vpack.c.b16 %v5130, %v5129
    %v5146 = vpack.c.b16 %v5132, %v5131
    %v5147 = vpack.c.b16 %v5134, %v5133
    %v5148 = vpack.c.b16 %v5136, %v5135
    %v5149 = vpack.c.b16 %v5138, %v5137
    %v5150 = vpack.c.b16 %v5140, %v5139
    %v5151 = vpack.c.b16 %v5142, %v5141
    %v5152 = vpack.c.b16 %v5144, %v5143
    %v5157 = vunpack.c.l.b16 %v4664
    %v5158 = vunpack.c.l.b16 %v4665
    %v5159 = vunpack.c.l.b16 %v4666
    %v5160 = vunpack.c.l.b16 %v4667
    %v5161 = vpack.c.b16 %v5158, %v5157
    %v5162 = vpack.c.b16 %v5160, %v5159
    %v5166 = vsel %vm1926, %v5145, 0
    %v5169 = vsel %vm1926, %v5146, 0
    %v5172 = vsel %vm1926, %v5147, 0
    %v5175 = vsel %vm1926, %v5148, 0
    %v5178 = vsel %vm1926, %v5149, 0
    %v5181 = vsel %vm1926, %v5150, 0
    %v5184 = vsel %vm1926, %v5151, 0
    %v5187 = vsel %vm1926, %v5152, 0
    %5189 = vmatpush.bf16.msra.mxu0 0
    %5190 = vmatpush.bf16.msra.mxu0 0
    %5191 = vmatpush.bf16.msra.mxu0 0
    %5192 = vmatpush.bf16.msra.mxu0 0
    %5193 = vmatpush.bf16.msra.mxu0 0
    %5194 = vmatpush.bf16.msra.mxu0 0
    %5195 = vmatpush.bf16.msra.mxu0 %v5162
    %5196 = vmatpush.bf16.msra.mxu0 %v5161
    %5197 = vmatmul.bf16.gmra.mxu0 %v5166
    %v5198 = vpop.f32.mrf.mxu0
    %v5199 = vadd.f32 %v5074, %v5198
    %v5200 = vpop.f32.mrf.mxu0
    %v5201 = vadd.f32 %v5076, %v5200
    %5202 = vmatmul.bf16.gmra.mxu0 %v5169
    %v5203 = vpop.f32.mrf.mxu0
    %v5204 = vadd.f32 %v5079, %v5203
    %v5205 = vpop.f32.mrf.mxu0
    %v5206 = vadd.f32 %v5081, %v5205
    %5207 = vmatmul.bf16.gmra.mxu0 %v5172
    %v5208 = vpop.f32.mrf.mxu0
    %v5209 = vadd.f32 %v5084, %v5208
    %v5210 = vpop.f32.mrf.mxu0
    %v5211 = vadd.f32 %v5086, %v5210
    %5212 = vmatmul.bf16.gmra.mxu0 %v5175
    %v5213 = vpop.f32.mrf.mxu0
    %v5214 = vadd.f32 %v5089, %v5213
    %v5215 = vpop.f32.mrf.mxu0
    %v5216 = vadd.f32 %v5091, %v5215
    %5217 = vmatmul.bf16.gmra.mxu0 %v5178
    %v5218 = vpop.f32.mrf.mxu0
    %v5219 = vadd.f32 %v5094, %v5218
    %v5220 = vpop.f32.mrf.mxu0
    %v5221 = vadd.f32 %v5096, %v5220
    %5222 = vmatmul.bf16.gmra.mxu0 %v5181
    %v5223 = vpop.f32.mrf.mxu0
    %v5224 = vadd.f32 %v5099, %v5223
    %v5225 = vpop.f32.mrf.mxu0
    %v5226 = vadd.f32 %v5101, %v5225
    %5227 = vmatmul.bf16.gmra.mxu0 %v5184
    %v5228 = vpop.f32.mrf.mxu0
    %v5229 = vadd.f32 %v5104, %v5228
    %v5230 = vpop.f32.mrf.mxu0
    %v5231 = vadd.f32 %v5106, %v5230
    %5232 = vmatmul.bf16.gmra.mxu0 %v5187
    %v5233 = vpop.f32.mrf.mxu0
    %v5234 = vadd.f32 %v5109, %v5233
    %v5235 = vpop.f32.mrf.mxu0
    %v5236 = vadd.f32 %v5111, %v5235
    %5237 = vdwg.mxu0
    %v5254 = vunpack.c.l.b16 %v5004
    %v5255 = vunpack.c.l.b16 %v5005
    %v5256 = vunpack.c.l.b16 %v5006
    %v5257 = vunpack.c.l.b16 %v5007
    %v5258 = vunpack.c.l.b16 %v5008
    %v5259 = vunpack.c.l.b16 %v5009
    %v5260 = vunpack.c.l.b16 %v5010
    %v5261 = vunpack.c.l.b16 %v5011
    %v5262 = vunpack.c.l.b16 %v5012
    %v5263 = vunpack.c.l.b16 %v5013
    %v5264 = vunpack.c.l.b16 %v5014
    %v5265 = vunpack.c.l.b16 %v5015
    %v5266 = vunpack.c.l.b16 %v5016
    %v5267 = vunpack.c.l.b16 %v5017
    %v5268 = vunpack.c.l.b16 %v5018
    %v5269 = vunpack.c.l.b16 %v5019
    %v5270 = vpack.c.b16 %v5255, %v5254
    %v5271 = vpack.c.b16 %v5257, %v5256
    %v5272 = vpack.c.b16 %v5259, %v5258
    %v5273 = vpack.c.b16 %v5261, %v5260
    %v5274 = vpack.c.b16 %v5263, %v5262
    %v5275 = vpack.c.b16 %v5265, %v5264
    %v5276 = vpack.c.b16 %v5267, %v5266
    %v5277 = vpack.c.b16 %v5269, %v5268
    %v5282 = vunpack.c.l.b16 %v4672
    %v5283 = vunpack.c.l.b16 %v4673
    %v5284 = vunpack.c.l.b16 %v4674
    %v5285 = vunpack.c.l.b16 %v4675
    %v5286 = vpack.c.b16 %v5283, %v5282
    %v5287 = vpack.c.b16 %v5285, %v5284
    %v5291 = vsel %vm1926, %v5270, 0
    %v5294 = vsel %vm1926, %v5271, 0
    %v5297 = vsel %vm1926, %v5272, 0
    %v5300 = vsel %vm1926, %v5273, 0
    %v5303 = vsel %vm1926, %v5274, 0
    %v5306 = vsel %vm1926, %v5275, 0
    %v5309 = vsel %vm1926, %v5276, 0
    %v5312 = vsel %vm1926, %v5277, 0
    %5314 = vmatpush.bf16.msra.mxu0 0
    %5315 = vmatpush.bf16.msra.mxu0 0
    %5316 = vmatpush.bf16.msra.mxu0 0
    %5317 = vmatpush.bf16.msra.mxu0 0
    %5318 = vmatpush.bf16.msra.mxu0 0
    %5319 = vmatpush.bf16.msra.mxu0 0
    %5320 = vmatpush.bf16.msra.mxu0 %v5287
    %5321 = vmatpush.bf16.msra.mxu0 %v5286
    %5322 = vmatmul.bf16.gmra.mxu0 %v5291
    %v5323 = vpop.f32.mrf.mxu0
    %v5324 = vadd.f32 0.0, %v5323
    %v5325 = vpop.f32.mrf.mxu0
    %v5326 = vadd.f32 0.0, %v5325
    %5327 = vmatmul.bf16.gmra.mxu0 %v5294
    %v5328 = vpop.f32.mrf.mxu0
    %v5329 = vadd.f32 0.0, %v5328
    %v5330 = vpop.f32.mrf.mxu0
    %v5331 = vadd.f32 0.0, %v5330
    %5332 = vmatmul.bf16.gmra.mxu0 %v5297
    %v5333 = vpop.f32.mrf.mxu0
    %v5334 = vadd.f32 0.0, %v5333
    %v5335 = vpop.f32.mrf.mxu0
    %v5336 = vadd.f32 0.0, %v5335
    %5337 = vmatmul.bf16.gmra.mxu0 %v5300
    %v5338 = vpop.f32.mrf.mxu0
    %v5339 = vadd.f32 0.0, %v5338
    %v5340 = vpop.f32.mrf.mxu0
    %v5341 = vadd.f32 0.0, %v5340
    %5342 = vmatmul.bf16.gmra.mxu0 %v5303
    %v5343 = vpop.f32.mrf.mxu0
    %v5344 = vadd.f32 0.0, %v5343
    %v5345 = vpop.f32.mrf.mxu0
    %v5346 = vadd.f32 0.0, %v5345
    %5347 = vmatmul.bf16.gmra.mxu0 %v5306
    %v5348 = vpop.f32.mrf.mxu0
    %v5349 = vadd.f32 0.0, %v5348
    %v5350 = vpop.f32.mrf.mxu0
    %v5351 = vadd.f32 0.0, %v5350
    %5352 = vmatmul.bf16.gmra.mxu0 %v5309
    %v5353 = vpop.f32.mrf.mxu0
    %v5354 = vadd.f32 0.0, %v5353
    %v5355 = vpop.f32.mrf.mxu0
    %v5356 = vadd.f32 0.0, %v5355
    %5357 = vmatmul.bf16.gmra.mxu0 %v5312
    %v5358 = vpop.f32.mrf.mxu0
    %v5359 = vadd.f32 0.0, %v5358
    %v5360 = vpop.f32.mrf.mxu0
    %v5361 = vadd.f32 0.0, %v5360
    %5362 = vdwg.mxu0
    %v5363 = vadd.f32 %v5199, %v5324
    %v5364 = vadd.f32 %v5201, %v5326
    %v5365 = vadd.f32 %v5204, %v5329
    %v5366 = vadd.f32 %v5206, %v5331
    %v5367 = vadd.f32 %v5209, %v5334
    %v5368 = vadd.f32 %v5211, %v5336
    %v5369 = vadd.f32 %v5214, %v5339
    %v5370 = vadd.f32 %v5216, %v5341
    %v5371 = vadd.f32 %v5219, %v5344
    %v5372 = vadd.f32 %v5221, %v5346
    %v5373 = vadd.f32 %v5224, %v5349
    %v5374 = vadd.f32 %v5226, %v5351
    %v5375 = vadd.f32 %v5229, %v5354
    %v5376 = vadd.f32 %v5231, %v5356
    %v5377 = vadd.f32 %v5234, %v5359
    %v5378 = vadd.f32 %v5236, %v5361
    %v5379 = vpack.c.b16 %v5131, %v5130
    %v5380 = vpack.c.b16 %v5133, %v5132
    %v5381 = vpack.c.b16 %v5135, %v5134
    %v5382 = vpack.c.b16 %v5129, %v5136
    %v5383 = vpack.c.b16 %v5139, %v5138
    %v5384 = vpack.c.b16 %v5141, %v5140
    %v5385 = vpack.c.b16 %v5143, %v5142
    %v5386 = vpack.c.b16 %v5137, %v5144
    %v5391 = vunpack.c.l.b16 %v4676
    %v5392 = vunpack.c.l.b16 %v4677
    %v5393 = vunpack.c.l.b16 %v4678
    %v5394 = vunpack.c.l.b16 %v4679
    %v5395 = vpack.c.b16 %v5392, %v5391
    %v5396 = vpack.c.b16 %v5394, %v5393
    %v5400 = vsel %vm1926, %v5379, 0
    %v5403 = vsel %vm1926, %v5380, 0
    %v5406 = vsel %vm1926, %v5381, 0
    %v5409 = vsel %vm1926, %v5382, 0
    %v5412 = vsel %vm1926, %v5383, 0
    %v5415 = vsel %vm1926, %v5384, 0
    %v5418 = vsel %vm1926, %v5385, 0
    %v5421 = vsel %vm1926, %v5386, 0
    %5423 = vmatpush.bf16.msra.mxu0 0
    %5424 = vmatpush.bf16.msra.mxu0 0
    %5425 = vmatpush.bf16.msra.mxu0 0
    %5426 = vmatpush.bf16.msra.mxu0 0
    %5427 = vmatpush.bf16.msra.mxu0 0
    %5428 = vmatpush.bf16.msra.mxu0 0
    %5429 = vmatpush.bf16.msra.mxu0 %v5396
    %5430 = vmatpush.bf16.msra.mxu0 %v5395
    %5431 = vmatmul.bf16.gmra.mxu0 %v5400
    %v5432 = vpop.f32.mrf.mxu0
    %v5433 = vadd.f32 0.0, %v5432
    %v5434 = vpop.f32.mrf.mxu0
    %v5435 = vadd.f32 0.0, %v5434
    %5436 = vmatmul.bf16.gmra.mxu0 %v5403
    %v5437 = vpop.f32.mrf.mxu0
    %v5438 = vadd.f32 0.0, %v5437
    %v5439 = vpop.f32.mrf.mxu0
    %v5440 = vadd.f32 0.0, %v5439
    %5441 = vmatmul.bf16.gmra.mxu0 %v5406
    %v5442 = vpop.f32.mrf.mxu0
    %v5443 = vadd.f32 0.0, %v5442
    %v5444 = vpop.f32.mrf.mxu0
    %v5445 = vadd.f32 0.0, %v5444
    %5446 = vmatmul.bf16.gmra.mxu0 %v5409
    %v5447 = vpop.f32.mrf.mxu0
    %v5448 = vadd.f32 0.0, %v5447
    %v5449 = vpop.f32.mrf.mxu0
    %v5450 = vadd.f32 0.0, %v5449
    %5451 = vmatmul.bf16.gmra.mxu0 %v5412
    %v5452 = vpop.f32.mrf.mxu0
    %v5453 = vadd.f32 0.0, %v5452
    %v5454 = vpop.f32.mrf.mxu0
    %v5455 = vadd.f32 0.0, %v5454
    %5456 = vmatmul.bf16.gmra.mxu0 %v5415
    %v5457 = vpop.f32.mrf.mxu0
    %v5458 = vadd.f32 0.0, %v5457
    %v5459 = vpop.f32.mrf.mxu0
    %v5460 = vadd.f32 0.0, %v5459
    %5461 = vmatmul.bf16.gmra.mxu0 %v5418
    %v5462 = vpop.f32.mrf.mxu0
    %v5463 = vadd.f32 0.0, %v5462
    %v5464 = vpop.f32.mrf.mxu0
    %v5465 = vadd.f32 0.0, %v5464
    %5466 = vmatmul.bf16.gmra.mxu0 %v5421
    %v5467 = vpop.f32.mrf.mxu0
    %v5468 = vadd.f32 0.0, %v5467
    %v5469 = vpop.f32.mrf.mxu0
    %v5470 = vadd.f32 0.0, %v5469
    %5471 = vdwg.mxu0
    %v5472 = vadd.f32 %v5363, %v5433
    %v5473 = vadd.f32 %v5364, %v5435
    %v5474 = vadd.f32 %v5365, %v5438
    %v5475 = vadd.f32 %v5366, %v5440
    %v5476 = vadd.f32 %v5367, %v5443
    %v5477 = vadd.f32 %v5368, %v5445
    %v5478 = vadd.f32 %v5369, %v5448
    %v5479 = vadd.f32 %v5370, %v5450
    %v5480 = vadd.f32 %v5371, %v5453
    %v5481 = vadd.f32 %v5372, %v5455
    %v5482 = vadd.f32 %v5373, %v5458
    %v5483 = vadd.f32 %v5374, %v5460
    %v5484 = vadd.f32 %v5375, %v5463
    %v5485 = vadd.f32 %v5376, %v5465
    %v5486 = vadd.f32 %v5377, %v5468
    %v5487 = vadd.f32 %v5378, %v5470
    %v5488 = vpack.c.b16 %v4718, %v4717
    %v5489 = vpack.c.b16 %v4720, %v4719
    %v5490 = vpack.c.b16 %v4722, %v4721
    %v5491 = vpack.c.b16 %v4716, %v4723
    %v5492 = vpack.c.b16 %v4726, %v4725
    %v5493 = vpack.c.b16 %v4728, %v4727
    %v5494 = vpack.c.b16 %v4730, %v4729
    %v5495 = vpack.c.b16 %v4724, %v4731
    %v5500 = vunpack.c.l.b16 %v4680
    %v5501 = vunpack.c.l.b16 %v4681
    %v5502 = vunpack.c.l.b16 %v4682
    %v5503 = vunpack.c.l.b16 %v4683
    %v5504 = vpack.c.b16 %v5501, %v5500
    %v5505 = vpack.c.b16 %v5503, %v5502
    %v5509 = vsel %vm1926, %v5488, 0
    %v5512 = vsel %vm1926, %v5489, 0
    %v5515 = vsel %vm1926, %v5490, 0
    %v5518 = vsel %vm1926, %v5491, 0
    %v5521 = vsel %vm1926, %v5492, 0
    %v5524 = vsel %vm1926, %v5493, 0
    %v5527 = vsel %vm1926, %v5494, 0
    %v5530 = vsel %vm1926, %v5495, 0
    %5532 = vmatpush.bf16.msra.mxu0 0
    %5533 = vmatpush.bf16.msra.mxu0 0
    %5534 = vmatpush.bf16.msra.mxu0 0
    %5535 = vmatpush.bf16.msra.mxu0 0
    %5536 = vmatpush.bf16.msra.mxu0 0
    %5537 = vmatpush.bf16.msra.mxu0 0
    %5538 = vmatpush.bf16.msra.mxu0 %v5505
    %5539 = vmatpush.bf16.msra.mxu0 %v5504
    %5540 = vmatmul.bf16.gmra.mxu0 %v5509
    %v5541 = vpop.f32.mrf.mxu0
    %v5542 = vadd.f32 0.0, %v5541
    %v5543 = vpop.f32.mrf.mxu0
    %v5544 = vadd.f32 0.0, %v5543
    %5545 = vmatmul.bf16.gmra.mxu0 %v5512
    %v5546 = vpop.f32.mrf.mxu0
    %v5547 = vadd.f32 0.0, %v5546
    %v5548 = vpop.f32.mrf.mxu0
    %v5549 = vadd.f32 0.0, %v5548
    %5550 = vmatmul.bf16.gmra.mxu0 %v5515
    %v5551 = vpop.f32.mrf.mxu0
    %v5552 = vadd.f32 0.0, %v5551
    %v5553 = vpop.f32.mrf.mxu0
    %v5554 = vadd.f32 0.0, %v5553
    %5555 = vmatmul.bf16.gmra.mxu0 %v5518
    %v5556 = vpop.f32.mrf.mxu0
    %v5557 = vadd.f32 0.0, %v5556
    %v5558 = vpop.f32.mrf.mxu0
    %v5559 = vadd.f32 0.0, %v5558
    %5560 = vmatmul.bf16.gmra.mxu0 %v5521
    %v5561 = vpop.f32.mrf.mxu0
    %v5562 = vadd.f32 0.0, %v5561
    %v5563 = vpop.f32.mrf.mxu0
    %v5564 = vadd.f32 0.0, %v5563
    %5565 = vmatmul.bf16.gmra.mxu0 %v5524
    %v5566 = vpop.f32.mrf.mxu0
    %v5567 = vadd.f32 0.0, %v5566
    %v5568 = vpop.f32.mrf.mxu0
    %v5569 = vadd.f32 0.0, %v5568
    %5570 = vmatmul.bf16.gmra.mxu0 %v5527
    %v5571 = vpop.f32.mrf.mxu0
    %v5572 = vadd.f32 0.0, %v5571
    %v5573 = vpop.f32.mrf.mxu0
    %v5574 = vadd.f32 0.0, %v5573
    %5575 = vmatmul.bf16.gmra.mxu0 %v5530
    %v5576 = vpop.f32.mrf.mxu0
    %v5577 = vadd.f32 0.0, %v5576
    %v5578 = vpop.f32.mrf.mxu0
    %v5579 = vadd.f32 0.0, %v5578
    %5580 = vdwg.mxu0
    %v5581 = vadd.f32 %v5472, %v5542
    %v5582 = vadd.f32 %v5473, %v5544
    %v5583 = vadd.f32 %v5474, %v5547
    %v5584 = vadd.f32 %v5475, %v5549
    %v5585 = vadd.f32 %v5476, %v5552
    %v5586 = vadd.f32 %v5477, %v5554
    %v5587 = vadd.f32 %v5478, %v5557
    %v5588 = vadd.f32 %v5479, %v5559
    %v5589 = vadd.f32 %v5480, %v5562
    %v5590 = vadd.f32 %v5481, %v5564
    %v5591 = vadd.f32 %v5482, %v5567
    %v5592 = vadd.f32 %v5483, %v5569
    %v5593 = vadd.f32 %v5484, %v5572
    %v5594 = vadd.f32 %v5485, %v5574
    %v5595 = vadd.f32 %v5486, %v5577
    %v5596 = vadd.f32 %v5487, %v5579
    %v5597 = vpack.c.b16 %v5256, %v5255
    %v5598 = vpack.c.b16 %v5258, %v5257
    %v5599 = vpack.c.b16 %v5260, %v5259
    %v5600 = vpack.c.b16 %v5254, %v5261
    %v5601 = vpack.c.b16 %v5264, %v5263
    %v5602 = vpack.c.b16 %v5266, %v5265
    %v5603 = vpack.c.b16 %v5268, %v5267
    %v5604 = vpack.c.b16 %v5262, %v5269
    %v5609 = vunpack.c.l.b16 %v4684
    %v5610 = vunpack.c.l.b16 %v4685
    %v5611 = vunpack.c.l.b16 %v4686
    %v5612 = vunpack.c.l.b16 %v4687
    %v5613 = vpack.c.b16 %v5610, %v5609
    %v5614 = vpack.c.b16 %v5612, %v5611
    %v5618 = vsel %vm1926, %v5597, 0
    %v5621 = vsel %vm1926, %v5598, 0
    %v5624 = vsel %vm1926, %v5599, 0
    %v5627 = vsel %vm1926, %v5600, 0
    %v5630 = vsel %vm1926, %v5601, 0
    %v5633 = vsel %vm1926, %v5602, 0
    %v5636 = vsel %vm1926, %v5603, 0
    %v5639 = vsel %vm1926, %v5604, 0
    %5641 = vmatpush.bf16.msra.mxu0 0
    %5642 = vmatpush.bf16.msra.mxu0 0
    %5643 = vmatpush.bf16.msra.mxu0 0
    %5644 = vmatpush.bf16.msra.mxu0 0
    %5645 = vmatpush.bf16.msra.mxu0 0
    %5646 = vmatpush.bf16.msra.mxu0 0
    %5647 = vmatpush.bf16.msra.mxu0 %v5614
    %5648 = vmatpush.bf16.msra.mxu0 %v5613
    %5649 = vmatmul.bf16.gmra.mxu0 %v5618
    %v5650 = vpop.f32.mrf.mxu0
    %v5651 = vadd.f32 0.0, %v5650
    %v5652 = vpop.f32.mrf.mxu0
    %v5653 = vadd.f32 0.0, %v5652
    %5654 = vmatmul.bf16.gmra.mxu0 %v5621
    %v5655 = vpop.f32.mrf.mxu0
    %v5656 = vadd.f32 0.0, %v5655
    %v5657 = vpop.f32.mrf.mxu0
    %v5658 = vadd.f32 0.0, %v5657
    %5659 = vmatmul.bf16.gmra.mxu0 %v5624
    %v5660 = vpop.f32.mrf.mxu0
    %v5661 = vadd.f32 0.0, %v5660
    %v5662 = vpop.f32.mrf.mxu0
    %v5663 = vadd.f32 0.0, %v5662
    %5664 = vmatmul.bf16.gmra.mxu0 %v5627
    %v5665 = vpop.f32.mrf.mxu0
    %v5666 = vadd.f32 0.0, %v5665
    %v5667 = vpop.f32.mrf.mxu0
    %v5668 = vadd.f32 0.0, %v5667
    %5669 = vmatmul.bf16.gmra.mxu0 %v5630
    %v5670 = vpop.f32.mrf.mxu0
    %v5671 = vadd.f32 0.0, %v5670
    %v5672 = vpop.f32.mrf.mxu0
    %v5673 = vadd.f32 0.0, %v5672
    %5674 = vmatmul.bf16.gmra.mxu0 %v5633
    %v5675 = vpop.f32.mrf.mxu0
    %v5676 = vadd.f32 0.0, %v5675
    %v5677 = vpop.f32.mrf.mxu0
    %v5678 = vadd.f32 0.0, %v5677
    %5679 = vmatmul.bf16.gmra.mxu0 %v5636
    %v5680 = vpop.f32.mrf.mxu0
    %v5681 = vadd.f32 0.0, %v5680
    %v5682 = vpop.f32.mrf.mxu0
    %v5683 = vadd.f32 0.0, %v5682
    %5684 = vmatmul.bf16.gmra.mxu0 %v5639
    %v5685 = vpop.f32.mrf.mxu0
    %v5686 = vadd.f32 0.0, %v5685
    %v5687 = vpop.f32.mrf.mxu0
    %v5688 = vadd.f32 0.0, %v5687
    %5689 = vdwg.mxu0
    %v5690 = vadd.f32 %v5581, %v5651
    %v5691 = vadd.f32 %v5582, %v5653
    %v5692 = vadd.f32 %v5583, %v5656
    %v5693 = vadd.f32 %v5584, %v5658
    %v5694 = vadd.f32 %v5585, %v5661
    %v5695 = vadd.f32 %v5586, %v5663
    %v5696 = vadd.f32 %v5587, %v5666
    %v5697 = vadd.f32 %v5588, %v5668
    %v5698 = vadd.f32 %v5589, %v5671
    %v5699 = vadd.f32 %v5590, %v5673
    %v5700 = vadd.f32 %v5591, %v5676
    %v5701 = vadd.f32 %v5592, %v5678
    %v5702 = vadd.f32 %v5593, %v5681
    %v5703 = vadd.f32 %v5594, %v5683
    %v5704 = vadd.f32 %v5595, %v5686
    %v5705 = vadd.f32 %v5596, %v5688
    %v5710 = vunpack.c.l.b16 %v4688
    %v5711 = vunpack.c.l.b16 %v4689
    %v5712 = vunpack.c.l.b16 %v4690
    %v5713 = vunpack.c.l.b16 %v4691
    %v5714 = vpack.c.b16 %v5711, %v5710
    %v5715 = vpack.c.b16 %v5713, %v5712
    %5718 = vmatpush.bf16.msra.mxu0 0
    %5719 = vmatpush.bf16.msra.mxu0 0
    %5720 = vmatpush.bf16.msra.mxu0 0
    %5721 = vmatpush.bf16.msra.mxu0 0
    %5722 = vmatpush.bf16.msra.mxu0 0
    %5723 = vmatpush.bf16.msra.mxu0 0
    %5724 = vmatpush.bf16.msra.mxu0 %v5715
    %5725 = vmatpush.bf16.msra.mxu0 %v5714
    %5726 = vmatmul.bf16.gmra.mxu0 %v5169
    %v5727 = vpop.f32.mrf.mxu0
    %v5728 = vadd.f32 0.0, %v5727
    %v5729 = vpop.f32.mrf.mxu0
    %v5730 = vadd.f32 0.0, %v5729
    %5731 = vmatmul.bf16.gmra.mxu0 %v5172
    %v5732 = vpop.f32.mrf.mxu0
    %v5733 = vadd.f32 0.0, %v5732
    %v5734 = vpop.f32.mrf.mxu0
    %v5735 = vadd.f32 0.0, %v5734
    %5736 = vmatmul.bf16.gmra.mxu0 %v5175
    %v5737 = vpop.f32.mrf.mxu0
    %v5738 = vadd.f32 0.0, %v5737
    %v5739 = vpop.f32.mrf.mxu0
    %v5740 = vadd.f32 0.0, %v5739
    %5741 = vmatmul.bf16.gmra.mxu0 %v5166
    %v5742 = vpop.f32.mrf.mxu0
    %v5743 = vadd.f32 0.0, %v5742
    %v5744 = vpop.f32.mrf.mxu0
    %v5745 = vadd.f32 0.0, %v5744
    %5746 = vmatmul.bf16.gmra.mxu0 %v5181
    %v5747 = vpop.f32.mrf.mxu0
    %v5748 = vadd.f32 0.0, %v5747
    %v5749 = vpop.f32.mrf.mxu0
    %v5750 = vadd.f32 0.0, %v5749
    %5751 = vmatmul.bf16.gmra.mxu0 %v5184
    %v5752 = vpop.f32.mrf.mxu0
    %v5753 = vadd.f32 0.0, %v5752
    %v5754 = vpop.f32.mrf.mxu0
    %v5755 = vadd.f32 0.0, %v5754
    %5756 = vmatmul.bf16.gmra.mxu0 %v5187
    %v5757 = vpop.f32.mrf.mxu0
    %v5758 = vadd.f32 0.0, %v5757
    %v5759 = vpop.f32.mrf.mxu0
    %v5760 = vadd.f32 0.0, %v5759
    %5761 = vmatmul.bf16.gmra.mxu0 %v5178
    %v5762 = vpop.f32.mrf.mxu0
    %v5763 = vadd.f32 0.0, %v5762
    %v5764 = vpop.f32.mrf.mxu0
    %v5765 = vadd.f32 0.0, %v5764
    %5766 = vdwg.mxu0
    %v5767 = vadd.f32 %v5690, %v5728
    %v5768 = vadd.f32 %v5691, %v5730
    %v5769 = vadd.f32 %v5692, %v5733
    %v5770 = vadd.f32 %v5693, %v5735
    %v5771 = vadd.f32 %v5694, %v5738
    %v5772 = vadd.f32 %v5695, %v5740
    %v5773 = vadd.f32 %v5696, %v5743
    %v5774 = vadd.f32 %v5697, %v5745
    %v5775 = vadd.f32 %v5698, %v5748
    %v5776 = vadd.f32 %v5699, %v5750
    %v5777 = vadd.f32 %v5700, %v5753
    %v5778 = vadd.f32 %v5701, %v5755
    %v5779 = vadd.f32 %v5702, %v5758
    %v5780 = vadd.f32 %v5703, %v5760
    %v5781 = vadd.f32 %v5704, %v5763
    %v5782 = vadd.f32 %v5705, %v5765
    %v5787 = vunpack.c.l.b16 %v4692
    %v5788 = vunpack.c.l.b16 %v4693
    %v5789 = vunpack.c.l.b16 %v4694
    %v5790 = vunpack.c.l.b16 %v4695
    %v5791 = vpack.c.b16 %v5788, %v5787
    %v5792 = vpack.c.b16 %v5790, %v5789
    %5795 = vmatpush.bf16.msra.mxu0 0
    %5796 = vmatpush.bf16.msra.mxu0 0
    %5797 = vmatpush.bf16.msra.mxu0 0
    %5798 = vmatpush.bf16.msra.mxu0 0
    %5799 = vmatpush.bf16.msra.mxu0 0
    %5800 = vmatpush.bf16.msra.mxu0 0
    %5801 = vmatpush.bf16.msra.mxu0 %v5792
    %5802 = vmatpush.bf16.msra.mxu0 %v5791
    %5803 = vmatmul.bf16.gmra.mxu0 %v5044
    %v5804 = vpop.f32.mrf.mxu0
    %v5805 = vadd.f32 0.0, %v5804
    %v5806 = vpop.f32.mrf.mxu0
    %v5807 = vadd.f32 0.0, %v5806
    %5808 = vmatmul.bf16.gmra.mxu0 %v5047
    %v5809 = vpop.f32.mrf.mxu0
    %v5810 = vadd.f32 0.0, %v5809
    %v5811 = vpop.f32.mrf.mxu0
    %v5812 = vadd.f32 0.0, %v5811
    %5813 = vmatmul.bf16.gmra.mxu0 %v5050
    %v5814 = vpop.f32.mrf.mxu0
    %v5815 = vadd.f32 0.0, %v5814
    %v5816 = vpop.f32.mrf.mxu0
    %v5817 = vadd.f32 0.0, %v5816
    %5818 = vmatmul.bf16.gmra.mxu0 %v5041
    %v5819 = vpop.f32.mrf.mxu0
    %v5820 = vadd.f32 0.0, %v5819
    %v5821 = vpop.f32.mrf.mxu0
    %v5822 = vadd.f32 0.0, %v5821
    %5823 = vmatmul.bf16.gmra.mxu0 %v5056
    %v5824 = vpop.f32.mrf.mxu0
    %v5825 = vadd.f32 0.0, %v5824
    %v5826 = vpop.f32.mrf.mxu0
    %v5827 = vadd.f32 0.0, %v5826
    %5828 = vmatmul.bf16.gmra.mxu0 %v5059
    %v5829 = vpop.f32.mrf.mxu0
    %v5830 = vadd.f32 0.0, %v5829
    %v5831 = vpop.f32.mrf.mxu0
    %v5832 = vadd.f32 0.0, %v5831
    %5833 = vmatmul.bf16.gmra.mxu0 %v5062
    %v5834 = vpop.f32.mrf.mxu0
    %v5835 = vadd.f32 0.0, %v5834
    %v5836 = vpop.f32.mrf.mxu0
    %v5837 = vadd.f32 0.0, %v5836
    %5838 = vmatmul.bf16.gmra.mxu0 %v5053
    %v5839 = vpop.f32.mrf.mxu0
    %v5840 = vadd.f32 0.0, %v5839
    %v5841 = vpop.f32.mrf.mxu0
    %v5842 = vadd.f32 0.0, %v5841
    %5843 = vdwg.mxu0
    %v5844 = vadd.f32 %v5767, %v5805
    %v5845 = vadd.f32 %v5768, %v5807
    %v5846 = vadd.f32 %v5769, %v5810
    %v5847 = vadd.f32 %v5770, %v5812
    %v5848 = vadd.f32 %v5771, %v5815
    %v5849 = vadd.f32 %v5772, %v5817
    %v5850 = vadd.f32 %v5773, %v5820
    %v5851 = vadd.f32 %v5774, %v5822
    %v5852 = vadd.f32 %v5775, %v5825
    %v5853 = vadd.f32 %v5776, %v5827
    %v5854 = vadd.f32 %v5777, %v5830
    %v5855 = vadd.f32 %v5778, %v5832
    %v5856 = vadd.f32 %v5779, %v5835
    %v5857 = vadd.f32 %v5780, %v5837
    %v5858 = vadd.f32 %v5781, %v5840
    %v5859 = vadd.f32 %v5782, %v5842
    %v5864 = vunpack.c.l.b16 %v4696
    %v5865 = vunpack.c.l.b16 %v4697
    %v5866 = vunpack.c.l.b16 %v4698
    %v5867 = vunpack.c.l.b16 %v4699
    %v5868 = vpack.c.b16 %v5865, %v5864
    %v5869 = vpack.c.b16 %v5867, %v5866
    %5872 = vmatpush.bf16.msra.mxu0 0
    %5873 = vmatpush.bf16.msra.mxu0 0
    %5874 = vmatpush.bf16.msra.mxu0 0
    %5875 = vmatpush.bf16.msra.mxu0 0
    %5876 = vmatpush.bf16.msra.mxu0 0
    %5877 = vmatpush.bf16.msra.mxu0 0
    %5878 = vmatpush.bf16.msra.mxu0 %v5869
    %5879 = vmatpush.bf16.msra.mxu0 %v5868
    %5880 = vmatmul.bf16.gmra.mxu0 %v5294
    %v5881 = vpop.f32.mrf.mxu0
    %v5882 = vadd.f32 0.0, %v5881
    %v5883 = vpop.f32.mrf.mxu0
    %v5884 = vadd.f32 0.0, %v5883
    %5885 = vmatmul.bf16.gmra.mxu0 %v5297
    %v5886 = vpop.f32.mrf.mxu0
    %v5887 = vadd.f32 0.0, %v5886
    %v5888 = vpop.f32.mrf.mxu0
    %v5889 = vadd.f32 0.0, %v5888
    %5890 = vmatmul.bf16.gmra.mxu0 %v5300
    %v5891 = vpop.f32.mrf.mxu0
    %v5892 = vadd.f32 0.0, %v5891
    %v5893 = vpop.f32.mrf.mxu0
    %v5894 = vadd.f32 0.0, %v5893
    %5895 = vmatmul.bf16.gmra.mxu0 %v5291
    %v5896 = vpop.f32.mrf.mxu0
    %v5897 = vadd.f32 0.0, %v5896
    %v5898 = vpop.f32.mrf.mxu0
    %v5899 = vadd.f32 0.0, %v5898
    %5900 = vmatmul.bf16.gmra.mxu0 %v5306
    %v5901 = vpop.f32.mrf.mxu0
    %v5902 = vadd.f32 0.0, %v5901
    %v5903 = vpop.f32.mrf.mxu0
    %v5904 = vadd.f32 0.0, %v5903
    %5905 = vmatmul.bf16.gmra.mxu0 %v5309
    %v5906 = vpop.f32.mrf.mxu0
    %v5907 = vadd.f32 0.0, %v5906
    %v5908 = vpop.f32.mrf.mxu0
    %v5909 = vadd.f32 0.0, %v5908
    %5910 = vmatmul.bf16.gmra.mxu0 %v5312
    %v5911 = vpop.f32.mrf.mxu0
    %v5912 = vadd.f32 0.0, %v5911
    %v5913 = vpop.f32.mrf.mxu0
    %v5914 = vadd.f32 0.0, %v5913
    %5915 = vmatmul.bf16.gmra.mxu0 %v5303
    %v5916 = vpop.f32.mrf.mxu0
    %v5917 = vadd.f32 0.0, %v5916
    %v5918 = vpop.f32.mrf.mxu0
    %v5919 = vadd.f32 0.0, %v5918
    %5920 = vdwg.mxu0
    %v5921 = vadd.f32 %v5844, %v5882
    %v5922 = vadd.f32 %v5845, %v5884
    %v5923 = vadd.f32 %v5846, %v5887
    %v5924 = vadd.f32 %v5847, %v5889
    %v5925 = vadd.f32 %v5848, %v5892
    %v5926 = vadd.f32 %v5849, %v5894
    %v5927 = vadd.f32 %v5850, %v5897
    %v5928 = vadd.f32 %v5851, %v5899
    %v5929 = vadd.f32 %v5852, %v5902
    %v5930 = vadd.f32 %v5853, %v5904
    %v5931 = vadd.f32 %v5854, %v5907
    %v5932 = vadd.f32 %v5855, %v5909
    %v5933 = vadd.f32 %v5856, %v5912
    %v5934 = vadd.f32 %v5857, %v5914
    %v5935 = vadd.f32 %v5858, %v5917
    %v5936 = vadd.f32 %v5859, %v5919
    %v5937 = vperm.slane %v1527, 0
    %v5938 = vadd.f32 %v5921, %v5937
    %v5939 = vadd.f32 %v5922, %v5937
    %v5940 = vadd.f32 %v5923, %v5937
    %v5941 = vadd.f32 %v5924, %v5937
    %v5942 = vadd.f32 %v5925, %v5937
    %v5943 = vadd.f32 %v5926, %v5937
    %v5944 = vadd.f32 %v5927, %v5937
    %v5945 = vadd.f32 %v5928, %v5937
    %v5946 = vadd.f32 %v5929, %v5937
    %v5947 = vadd.f32 %v5930, %v5937
    %v5948 = vadd.f32 %v5931, %v5937
    %v5949 = vadd.f32 %v5932, %v5937
    %v5950 = vadd.f32 %v5933, %v5937
    %v5951 = vadd.f32 %v5934, %v5937
    %v5952 = vadd.f32 %v5935, %v5937
    %v5953 = vadd.f32 %v5936, %v5937
    %v5954 = vsel %vm1926, %v5938, 0.0
    %v5955 = vsel %vm1926, %v5939, 0.0
    %v5956 = vadd.f32 %v5954, %v5955
    %v5957 = vsel %vm1926, %v5940, 0.0
    %v5958 = vadd.f32 %v5956, %v5957
    %v5959 = vsel %vm1926, %v5941, 0.0
    %v5960 = vadd.f32 %v5958, %v5959
    %v5961 = vsel %vm1926, %v5942, 0.0
    %v5962 = vadd.f32 %v5960, %v5961
    %v5963 = vsel %vm1926, %v5943, 0.0
    %v5964 = vadd.f32 %v5962, %v5963
    %v5965 = vsel %vm1926, %v5944, 0.0
    %v5966 = vadd.f32 %v5964, %v5965
    %v5967 = vsel %vm1926, %v5945, 0.0
    %v5968 = vadd.f32 %v5966, %v5967
    %v5969 = vrot.slane %v5968, 4
    %v5970 = vadd.f32 %v5968, %v5969
    %v5971 = vrot.slane %v5970, 2
    %v5972 = vadd.f32 %v5970, %v5971
    %v5973 = vrot.slane %v5972, 1
    %v5974 = vadd.f32 %v5972, %v5973
    %v5975 = vsel %vm1926, %v5946, 0.0
    %v5976 = vsel %vm1926, %v5947, 0.0
    %v5977 = vadd.f32 %v5975, %v5976
    %v5978 = vsel %vm1926, %v5948, 0.0
    %v5979 = vadd.f32 %v5977, %v5978
    %v5980 = vsel %vm1926, %v5949, 0.0
    %v5981 = vadd.f32 %v5979, %v5980
    %v5982 = vsel %vm1926, %v5950, 0.0
    %v5983 = vadd.f32 %v5981, %v5982
    %v5984 = vsel %vm1926, %v5951, 0.0
    %v5985 = vadd.f32 %v5983, %v5984
    %v5986 = vsel %vm1926, %v5952, 0.0
    %v5987 = vadd.f32 %v5985, %v5986
    %v5988 = vsel %vm1926, %v5953, 0.0
    %v5989 = vadd.f32 %v5987, %v5988
    %v5990 = vrot.slane %v5989, 4
    %v5991 = vadd.f32 %v5989, %v5990
    %v5992 = vrot.slane %v5991, 2
    %v5993 = vadd.f32 %v5991, %v5992
    %v5994 = vrot.slane %v5993, 1
    %v5995 = vadd.f32 %v5993, %v5994
    %v5996 = vmul.f32 %v5974, %v2889
    %v5997 = vmul.f32 %v5995, %v2889
    %v5998 = vmul.f32 %v5938, %v5938
    %v5999 = vmul.f32 %v5939, %v5939
    %v6000 = vmul.f32 %v5940, %v5940
    %v6001 = vmul.f32 %v5941, %v5941
    %v6002 = vmul.f32 %v5942, %v5942
    %v6003 = vmul.f32 %v5943, %v5943
    %v6004 = vmul.f32 %v5944, %v5944
    %v6005 = vmul.f32 %v5945, %v5945
    %v6006 = vmul.f32 %v5946, %v5946
    %v6007 = vmul.f32 %v5947, %v5947
    %v6008 = vmul.f32 %v5948, %v5948
    %v6009 = vmul.f32 %v5949, %v5949
    %v6010 = vmul.f32 %v5950, %v5950
    %v6011 = vmul.f32 %v5951, %v5951
    %v6012 = vmul.f32 %v5952, %v5952
    %v6013 = vmul.f32 %v5953, %v5953
    %v6014 = vsel %vm1926, %v5998, 0.0
    %v6015 = vsel %vm1926, %v5999, 0.0
    %v6016 = vadd.f32 %v6014, %v6015
    %v6017 = vsel %vm1926, %v6000, 0.0
    %v6018 = vadd.f32 %v6016, %v6017
    %v6019 = vsel %vm1926, %v6001, 0.0
    %v6020 = vadd.f32 %v6018, %v6019
    %v6021 = vsel %vm1926, %v6002, 0.0
    %v6022 = vadd.f32 %v6020, %v6021
    %v6023 = vsel %vm1926, %v6003, 0.0
    %v6024 = vadd.f32 %v6022, %v6023
    %v6025 = vsel %vm1926, %v6004, 0.0
    %v6026 = vadd.f32 %v6024, %v6025
    %v6027 = vsel %vm1926, %v6005, 0.0
    %v6028 = vadd.f32 %v6026, %v6027
    %v6029 = vrot.slane %v6028, 4
    %v6030 = vadd.f32 %v6028, %v6029
    %v6031 = vrot.slane %v6030, 2
    %v6032 = vadd.f32 %v6030, %v6031
    %v6033 = vrot.slane %v6032, 1
    %v6034 = vadd.f32 %v6032, %v6033
    %v6035 = vsel %vm1926, %v6006, 0.0
    %v6036 = vsel %vm1926, %v6007, 0.0
    %v6037 = vadd.f32 %v6035, %v6036
    %v6038 = vsel %vm1926, %v6008, 0.0
    %v6039 = vadd.f32 %v6037, %v6038
    %v6040 = vsel %vm1926, %v6009, 0.0
    %v6041 = vadd.f32 %v6039, %v6040
    %v6042 = vsel %vm1926, %v6010, 0.0
    %v6043 = vadd.f32 %v6041, %v6042
    %v6044 = vsel %vm1926, %v6011, 0.0
    %v6045 = vadd.f32 %v6043, %v6044
    %v6046 = vsel %vm1926, %v6012, 0.0
    %v6047 = vadd.f32 %v6045, %v6046
    %v6048 = vsel %vm1926, %v6013, 0.0
    %v6049 = vadd.f32 %v6047, %v6048
    %v6050 = vrot.slane %v6049, 4
    %v6051 = vadd.f32 %v6049, %v6050
    %v6052 = vrot.slane %v6051, 2
    %v6053 = vadd.f32 %v6051, %v6052
    %v6054 = vrot.slane %v6053, 1
    %v6055 = vadd.f32 %v6053, %v6054
    %v6056 = vmul.f32 %v6034, %v2889
    %v6057 = vmul.f32 %v6055, %v2889
    %v6058 = vmul.f32 %v5996, %v5996
    %v6059 = vmul.f32 %v5997, %v5997
    %v6060 = vsub.f32 %v6056, %v6058
    %v6061 = vsub.f32 %v6057, %v6059
    %v6062 = vmax.f32 %v6060, 0.0
    %v6063 = vmax.f32 %v6061, 0.0
    %v6064 = vsub.f32 %v5938, %v5996
    %v6065 = vsub.f32 %v5939, %v5996
    %v6066 = vsub.f32 %v5940, %v5996
    %v6067 = vsub.f32 %v5941, %v5996
    %v6068 = vsub.f32 %v5942, %v5996
    %v6069 = vsub.f32 %v5943, %v5996
    %v6070 = vsub.f32 %v5944, %v5996
    %v6071 = vsub.f32 %v5945, %v5996
    %v6072 = vsub.f32 %v5946, %v5997
    %v6073 = vsub.f32 %v5947, %v5997
    %v6074 = vsub.f32 %v5948, %v5997
    %v6075 = vsub.f32 %v5949, %v5997
    %v6076 = vsub.f32 %v5950, %v5997
    %v6077 = vsub.f32 %v5951, %v5997
    %v6078 = vsub.f32 %v5952, %v5997
    %v6079 = vsub.f32 %v5953, %v5997
    %v6080 = vadd.f32 %v6062, 1e-05
    %v6081 = vadd.f32 %v6063, 1e-05
    %v6082 = vrsqrt.pop %v6080
    %v6083 = vmul.f32 %v6082, %v6080
    %v6084 = vmul.f32 %v6083, %v6082
    %v6085 = vmul.f32 0.5, %v6084
    %v6086 = vsub.f32 1.5, %v6085
    %v6087 = vmul.f32 %v6082, %v6086
    %vm6088 = vweird.f32 %v6080
    %vm6089 = vweird.f32 %v6082
    %vm6090 = vmor %vm6088, %vm6089
    %v6091 = vsel %vm6090, %v6082, %v6087
    %v6092 = vrsqrt.pop %v6081
    %v6093 = vmul.f32 %v6092, %v6081
    %v6094 = vmul.f32 %v6093, %v6092
    %v6095 = vmul.f32 0.5, %v6094
    %v6096 = vsub.f32 1.5, %v6095
    %v6097 = vmul.f32 %v6092, %v6096
    %vm6098 = vweird.f32 %v6081
    %vm6099 = vweird.f32 %v6092
    %vm6100 = vmor %vm6098, %vm6099
    %v6101 = vsel %vm6100, %v6092, %v6097
    %v6102 = vmul.f32 %v6064, %v6091
    %v6103 = vmul.f32 %v6065, %v6091
    %v6104 = vmul.f32 %v6066, %v6091
    %v6105 = vmul.f32 %v6067, %v6091
    %v6106 = vmul.f32 %v6068, %v6091
    %v6107 = vmul.f32 %v6069, %v6091
    %v6108 = vmul.f32 %v6070, %v6091
    %v6109 = vmul.f32 %v6071, %v6091
    %v6110 = vmul.f32 %v6072, %v6101
    %v6111 = vmul.f32 %v6073, %v6101
    %v6112 = vmul.f32 %v6074, %v6101
    %v6113 = vmul.f32 %v6075, %v6101
    %v6114 = vmul.f32 %v6076, %v6101
    %v6115 = vmul.f32 %v6077, %v6101
    %v6116 = vmul.f32 %v6078, %v6101
    %v6117 = vmul.f32 %v6079, %v6101
    %v6118 = vperm.slane %v1527, 1
    %v6119 = vmul.f32 %v6102, %v6118
    %v6120 = vmul.f32 %v6103, %v6118
    %v6121 = vmul.f32 %v6104, %v6118
    %v6122 = vmul.f32 %v6105, %v6118
    %v6123 = vmul.f32 %v6106, %v6118
    %v6124 = vmul.f32 %v6107, %v6118
    %v6125 = vmul.f32 %v6108, %v6118
    %v6126 = vmul.f32 %v6109, %v6118
    %v6127 = vmul.f32 %v6110, %v6118
    %v6128 = vmul.f32 %v6111, %v6118
    %v6129 = vmul.f32 %v6112, %v6118
    %v6130 = vmul.f32 %v6113, %v6118
    %v6131 = vmul.f32 %v6114, %v6118
    %v6132 = vmul.f32 %v6115, %v6118
    %v6133 = vmul.f32 %v6116, %v6118
    %v6134 = vmul.f32 %v6117, %v6118
    %v6135 = vperm.slane %v1527, 2
    %v6136 = vadd.f32 %v6119, %v6135
    %v6137 = vadd.f32 %v6120, %v6135
    %v6138 = vadd.f32 %v6121, %v6135
    %v6139 = vadd.f32 %v6122, %v6135
    %v6140 = vadd.f32 %v6123, %v6135
    %v6141 = vadd.f32 %v6124, %v6135
    %v6142 = vadd.f32 %v6125, %v6135
    %v6143 = vadd.f32 %v6126, %v6135
    %v6144 = vadd.f32 %v6127, %v6135
    %v6145 = vadd.f32 %v6128, %v6135
    %v6146 = vadd.f32 %v6129, %v6135
    %v6147 = vadd.f32 %v6130, %v6135
    %v6148 = vadd.f32 %v6131, %v6135
    %v6149 = vadd.f32 %v6132, %v6135
    %v6150 = vadd.f32 %v6133, %v6135
    %v6151 = vadd.f32 %v6134, %v6135
    %v6152 = vmax.f32 %v6136, 0.0
    %v6153 = vmax.f32 %v6137, 0.0
    %v6154 = vmax.f32 %v6138, 0.0
    %v6155 = vmax.f32 %v6139, 0.0
    %v6156 = vmax.f32 %v6140, 0.0
    %v6157 = vmax.f32 %v6141, 0.0
    %v6158 = vmax.f32 %v6142, 0.0
    %v6159 = vmax.f32 %v6143, 0.0
    %v6160 = vmax.f32 %v6144, 0.0
    %v6161 = vmax.f32 %v6145, 0.0
    %v6162 = vmax.f32 %v6146, 0.0
    %v6163 = vmax.f32 %v6147, 0.0
    %v6164 = vmax.f32 %v6148, 0.0
    %v6165 = vmax.f32 %v6149, 0.0
    %v6166 = vmax.f32 %v6150, 0.0
    %v6167 = vmax.f32 %v6151, 0.0
    %v6168 = vpack.c.bf16 %v6152, %v6152
    %v6169 = vpack.c.bf16 %v6153, %v6153
    %v6170 = vpack.c.bf16 %v6154, %v6154
    %v6171 = vpack.c.bf16 %v6155, %v6155
    %v6172 = vpack.c.bf16 %v6156, %v6156
    %v6173 = vpack.c.bf16 %v6157, %v6157
    %v6174 = vpack.c.bf16 %v6158, %v6158
    %v6175 = vpack.c.bf16 %v6159, %v6159
    %v6176 = vpack.c.bf16 %v6160, %v6160
    %v6177 = vpack.c.bf16 %v6161, %v6161
    %v6178 = vpack.c.bf16 %v6162, %v6162
    %v6179 = vpack.c.bf16 %v6163, %v6163
    %v6180 = vpack.c.bf16 %v6164, %v6164
    %v6181 = vpack.c.bf16 %v6165, %v6165
    %v6182 = vpack.c.bf16 %v6166, %v6166
    %v6183 = vpack.c.bf16 %v6167, %v6167
    %s6184 = scalar_lea.vmem %s4, 144
    %v6185 = vld [vmem:[%s6184] sm:$0xf]
    %v6186 = vld [vmem:[%s6184 + $0x4] sm:$0xf]
    %v6187 = vld [vmem:[%s6184 + $0x8] sm:$0xf]
    %v6188 = vld [vmem:[%s6184 + $0xc] sm:$0xf]
    %v6189 = vld [vmem:[%s6184 + $0x10] sm:$0xf]
    %v6190 = vld [vmem:[%s6184 + $0x14] sm:$0xf]
    %v6191 = vld [vmem:[%s6184 + $0x18] sm:$0xf]
    %v6192 = vld [vmem:[%s6184 + $0x1c] sm:$0xf]
    %v6193 = vld [vmem:[%s6184 + $0x20] sm:$0xf]
    %v6194 = vld [vmem:[%s6184 + $0x24] sm:$0xf]
    %v6195 = vld [vmem:[%s6184 + $0x28] sm:$0xf]
    %v6196 = vld [vmem:[%s6184 + $0x2c] sm:$0xf]
    %v6197 = vld [vmem:[%s6184 + $0x30] sm:$0xf]
    %v6198 = vld [vmem:[%s6184 + $0x34] sm:$0xf]
    %v6199 = vld [vmem:[%s6184 + $0x38] sm:$0xf]
    %v6200 = vld [vmem:[%s6184 + $0x3c] sm:$0xf]
    %v6201 = vld [vmem:[%s6184 + $0x40] sm:$0xf]
    %v6202 = vld [vmem:[%s6184 + $0x44] sm:$0xf]
    %v6203 = vld [vmem:[%s6184 + $0x48] sm:$0xf]
    %v6204 = vld [vmem:[%s6184 + $0x4c] sm:$0xf]
    %v6205 = vld [vmem:[%s6184 + $0x50] sm:$0xf]
    %v6206 = vld [vmem:[%s6184 + $0x54] sm:$0xf]
    %v6207 = vld [vmem:[%s6184 + $0x58] sm:$0xf]
    %v6208 = vld [vmem:[%s6184 + $0x5c] sm:$0xf]
    %v6209 = vld [vmem:[%s6184 + $0x60] sm:$0xf]
    %v6210 = vld [vmem:[%s6184 + $0x64] sm:$0xf]
    %v6211 = vld [vmem:[%s6184 + $0x68] sm:$0xf]
    %v6212 = vld [vmem:[%s6184 + $0x6c] sm:$0xf]
    %v6213 = vld [vmem:[%s6184 + $0x70] sm:$0xf]
    %v6214 = vld [vmem:[%s6184 + $0x74] sm:$0xf]
    %v6215 = vld [vmem:[%s6184 + $0x78] sm:$0xf]
    %v6216 = vld [vmem:[%s6184 + $0x7c] sm:$0xf]
    %v6217 = vld [vmem:[%s6184 + $0x80] sm:$0xf]
    %v6218 = vld [vmem:[%s6184 + $0x84] sm:$0xf]
    %v6219 = vld [vmem:[%s6184 + $0x88] sm:$0xf]
    %v6220 = vld [vmem:[%s6184 + $0x8c] sm:$0xf]
    %v6237 = vunpack.c.l.b16 %v6175
    %v6238 = vunpack.c.l.b16 %v6168
    %v6239 = vunpack.c.l.b16 %v6169
    %v6240 = vunpack.c.l.b16 %v6170
    %v6241 = vunpack.c.l.b16 %v6171
    %v6242 = vunpack.c.l.b16 %v6172
    %v6243 = vunpack.c.l.b16 %v6173
    %v6244 = vunpack.c.l.b16 %v6174
    %v6245 = vunpack.c.l.b16 %v6183
    %v6246 = vunpack.c.l.b16 %v6176
    %v6247 = vunpack.c.l.b16 %v6177
    %v6248 = vunpack.c.l.b16 %v6178
    %v6249 = vunpack.c.l.b16 %v6179
    %v6250 = vunpack.c.l.b16 %v6180
    %v6251 = vunpack.c.l.b16 %v6181
    %v6252 = vunpack.c.l.b16 %v6182
    %v6253 = vpack.c.b16 %v6237, %v6237
    %v6254 = vpack.c.b16 %v6238, %v6238
    %v6255 = vpack.c.b16 %v6239, %v6239
    %v6256 = vpack.c.b16 %v6240, %v6240
    %v6257 = vpack.c.b16 %v6241, %v6241
    %v6258 = vpack.c.b16 %v6242, %v6242
    %v6259 = vpack.c.b16 %v6243, %v6243
    %v6260 = vpack.c.b16 %v6244, %v6244
    %v6261 = vpack.c.b16 %v6245, %v6245
    %v6262 = vpack.c.b16 %v6246, %v6246
    %v6263 = vpack.c.b16 %v6247, %v6247
    %v6264 = vpack.c.b16 %v6248, %v6248
    %v6265 = vpack.c.b16 %v6249, %v6249
    %v6266 = vpack.c.b16 %v6250, %v6250
    %v6267 = vpack.c.b16 %v6251, %v6251
    %v6268 = vpack.c.b16 %v6252, %v6252
    %v6270 = vshrl.u32 %v6253, 16
    %v6272 = vrot.slane %v6270, 3
    %v6274 = vshrl.u32 %v6254, 16
    %v6276 = vrot.slane %v6274, 3
    %v6278 = vshrl.u32 %v6255, 16
    %v6280 = vrot.slane %v6278, 3
    %v6282 = vshrl.u32 %v6256, 16
    %v6284 = vrot.slane %v6282, 3
    %v6286 = vshrl.u32 %v6257, 16
    %v6288 = vrot.slane %v6286, 3
    %v6290 = vshrl.u32 %v6258, 16
    %v6292 = vrot.slane %v6290, 3
    %v6294 = vshrl.u32 %v6259, 16
    %v6296 = vrot.slane %v6294, 3
    %v6298 = vshrl.u32 %v6260, 16
    %v6300 = vrot.slane %v6298, 3
    %v6302 = vshrl.u32 %v6261, 16
    %v6304 = vrot.slane %v6302, 3
    %v6306 = vshrl.u32 %v6262, 16
    %v6308 = vrot.slane %v6306, 3
    %v6310 = vshrl.u32 %v6263, 16
    %v6312 = vrot.slane %v6310, 3
    %v6314 = vshrl.u32 %v6264, 16
    %v6316 = vrot.slane %v6314, 3
    %v6318 = vshrl.u32 %v6265, 16
    %v6320 = vrot.slane %v6318, 3
    %v6322 = vshrl.u32 %v6266, 16
    %v6324 = vrot.slane %v6322, 3
    %v6326 = vshrl.u32 %v6267, 16
    %v6328 = vrot.slane %v6326, 3
    %v6330 = vshrl.u32 %v6268, 16
    %v6332 = vrot.slane %v6330, 3
    %v6349 = vrot.slane %v6270, 7
    %v6350 = vshll.u32 %v6253, 16
    %v6352 = vor.u32 %v6349, %v6350
    %v6353 = vrot.slane %v6274, 7
    %v6354 = vshll.u32 %v6254, 16
    %v6356 = vor.u32 %v6353, %v6354
    %v6357 = vrot.slane %v6278, 7
    %v6358 = vshll.u32 %v6255, 16
    %v6360 = vor.u32 %v6357, %v6358
    %v6361 = vrot.slane %v6282, 7
    %v6362 = vshll.u32 %v6256, 16
    %v6364 = vor.u32 %v6361, %v6362
    %v6365 = vrot.slane %v6286, 7
    %v6366 = vshll.u32 %v6257, 16
    %v6368 = vor.u32 %v6365, %v6366
    %v6369 = vrot.slane %v6290, 7
    %v6370 = vshll.u32 %v6258, 16
    %v6372 = vor.u32 %v6369, %v6370
    %v6373 = vrot.slane %v6294, 7
    %v6374 = vshll.u32 %v6259, 16
    %v6376 = vor.u32 %v6373, %v6374
    %v6377 = vrot.slane %v6298, 7
    %v6378 = vshll.u32 %v6260, 16
    %v6380 = vor.u32 %v6377, %v6378
    %v6381 = vrot.slane %v6302, 7
    %v6382 = vshll.u32 %v6261, 16
    %v6384 = vor.u32 %v6381, %v6382
    %v6385 = vrot.slane %v6306, 7
    %v6386 = vshll.u32 %v6262, 16
    %v6388 = vor.u32 %v6385, %v6386
    %v6389 = vrot.slane %v6310, 7
    %v6390 = vshll.u32 %v6263, 16
    %v6392 = vor.u32 %v6389, %v6390
    %v6393 = vrot.slane %v6314, 7
    %v6394 = vshll.u32 %v6264, 16
    %v6396 = vor.u32 %v6393, %v6394
    %v6397 = vrot.slane %v6318, 7
    %v6398 = vshll.u32 %v6265, 16
    %v6400 = vor.u32 %v6397, %v6398
    %v6401 = vrot.slane %v6322, 7
    %v6402 = vshll.u32 %v6266, 16
    %v6404 = vor.u32 %v6401, %v6402
    %v6405 = vrot.slane %v6326, 7
    %v6406 = vshll.u32 %v6267, 16
    %v6408 = vor.u32 %v6405, %v6406
    %v6409 = vrot.slane %v6330, 7
    %v6410 = vshll.u32 %v6268, 16
    %v6412 = vor.u32 %v6409, %v6410
    %v6429 = vsel %vm1790, %v6272, %v6352
    %v6430 = vsel %vm1790, %v6276, %v6356
    %v6431 = vsel %vm1790, %v6280, %v6360
    %v6432 = vsel %vm1790, %v6284, %v6364
    %v6433 = vsel %vm1790, %v6288, %v6368
    %v6434 = vsel %vm1790, %v6292, %v6372
    %v6435 = vsel %vm1790, %v6296, %v6376
    %v6436 = vsel %vm1790, %v6300, %v6380
    %v6437 = vsel %vm1790, %v6304, %v6384
    %v6438 = vsel %vm1790, %v6308, %v6388
    %v6439 = vsel %vm1790, %v6312, %v6392
    %v6440 = vsel %vm1790, %v6316, %v6396
    %v6441 = vsel %vm1790, %v6320, %v6400
    %v6442 = vsel %vm1790, %v6324, %v6404
    %v6443 = vsel %vm1790, %v6328, %v6408
    %v6444 = vsel %vm1790, %v6332, %v6412
    %v6445 = vrot.slane %v6350, 1
    %v6446 = vor.u32 %v6270, %v6445
    %v6447 = vrot.slane %v6354, 1
    %v6448 = vor.u32 %v6274, %v6447
    %v6449 = vrot.slane %v6358, 1
    %v6450 = vor.u32 %v6278, %v6449
    %v6451 = vrot.slane %v6362, 1
    %v6452 = vor.u32 %v6282, %v6451
    %v6453 = vrot.slane %v6366, 1
    %v6454 = vor.u32 %v6286, %v6453
    %v6455 = vrot.slane %v6370, 1
    %v6456 = vor.u32 %v6290, %v6455
    %v6457 = vrot.slane %v6374, 1
    %v6458 = vor.u32 %v6294, %v6457
    %v6459 = vrot.slane %v6378, 1
    %v6460 = vor.u32 %v6298, %v6459
    %v6461 = vrot.slane %v6382, 1
    %v6462 = vor.u32 %v6302, %v6461
    %v6463 = vrot.slane %v6386, 1
    %v6464 = vor.u32 %v6306, %v6463
    %v6465 = vrot.slane %v6390, 1
    %v6466 = vor.u32 %v6310, %v6465
    %v6467 = vrot.slane %v6394, 1
    %v6468 = vor.u32 %v6314, %v6467
    %v6469 = vrot.slane %v6398, 1
    %v6470 = vor.u32 %v6318, %v6469
    %v6471 = vrot.slane %v6402, 1
    %v6472 = vor.u32 %v6322, %v6471
    %v6473 = vrot.slane %v6406, 1
    %v6474 = vor.u32 %v6326, %v6473
    %v6475 = vrot.slane %v6410, 1
    %v6476 = vor.u32 %v6330, %v6475
    %v6493 = vrot.slane %v6350, 5
    %v6494 = vrot.slane %v6354, 5
    %v6495 = vrot.slane %v6358, 5
    %v6496 = vrot.slane %v6362, 5
    %v6497 = vrot.slane %v6366, 5
    %v6498 = vrot.slane %v6370, 5
    %v6499 = vrot.slane %v6374, 5
    %v6500 = vrot.slane %v6378, 5
    %v6501 = vrot.slane %v6382, 5
    %v6502 = vrot.slane %v6386, 5
    %v6503 = vrot.slane %v6390, 5
    %v6504 = vrot.slane %v6394, 5
    %v6505 = vrot.slane %v6398, 5
    %v6506 = vrot.slane %v6402, 5
    %v6507 = vrot.slane %v6406, 5
    %v6508 = vrot.slane %v6410, 5
    %v6525 = vsel %vm1889, %v6446, %v6493
    %v6526 = vsel %vm1889, %v6448, %v6494
    %v6527 = vsel %vm1889, %v6450, %v6495
    %v6528 = vsel %vm1889, %v6452, %v6496
    %v6529 = vsel %vm1889, %v6454, %v6497
    %v6530 = vsel %vm1889, %v6456, %v6498
    %v6531 = vsel %vm1889, %v6458, %v6499
    %v6532 = vsel %vm1889, %v6460, %v6500
    %v6533 = vsel %vm1889, %v6462, %v6501
    %v6534 = vsel %vm1889, %v6464, %v6502
    %v6535 = vsel %vm1889, %v6466, %v6503
    %v6536 = vsel %vm1889, %v6468, %v6504
    %v6537 = vsel %vm1889, %v6470, %v6505
    %v6538 = vsel %vm1889, %v6472, %v6506
    %v6539 = vsel %vm1889, %v6474, %v6507
    %v6540 = vsel %vm1889, %v6476, %v6508
    %v6541 = vpack.c.b16 %v6238, %v6237
    %v6542 = vpack.c.b16 %v6240, %v6239
    %v6543 = vpack.c.b16 %v6242, %v6241
    %v6544 = vpack.c.b16 %v6244, %v6243
    %v6545 = vpack.c.b16 %v6246, %v6245
    %v6546 = vpack.c.b16 %v6248, %v6247
    %v6547 = vpack.c.b16 %v6250, %v6249
    %v6548 = vpack.c.b16 %v6252, %v6251
    %v6553 = vunpack.c.l.b16 %v6189
    %v6554 = vunpack.c.l.b16 %v6190
    %v6555 = vunpack.c.l.b16 %v6191
    %v6556 = vunpack.c.l.b16 %v6192
    %v6557 = vpack.c.b16 %v6554, %v6553
    %v6558 = vpack.c.b16 %v6556, %v6555
    %v6562 = vsel %vm1926, %v6541, 0
    %v6565 = vsel %vm1926, %v6542, 0
    %v6568 = vsel %vm1926, %v6543, 0
    %v6571 = vsel %vm1926, %v6544, 0
    %v6574 = vsel %vm1926, %v6545, 0
    %v6577 = vsel %vm1926, %v6546, 0
    %v6580 = vsel %vm1926, %v6547, 0
    %v6583 = vsel %vm1926, %v6548, 0
    %6585 = vmatpush.bf16.msra.mxu0 0
    %6586 = vmatpush.bf16.msra.mxu0 0
    %6587 = vmatpush.bf16.msra.mxu0 0
    %6588 = vmatpush.bf16.msra.mxu0 0
    %6589 = vmatpush.bf16.msra.mxu0 0
    %6590 = vmatpush.bf16.msra.mxu0 0
    %6591 = vmatpush.bf16.msra.mxu0 %v6558
    %6592 = vmatpush.bf16.msra.mxu0 %v6557
    %6593 = vmatmul.bf16.gmra.mxu0 %v6562
    %v6594 = vpop.f32.mrf.mxu0
    %v6595 = vadd.f32 0.0, %v6594
    %v6596 = vpop.f32.mrf.mxu0
    %v6597 = vadd.f32 0.0, %v6596
    %6598 = vmatmul.bf16.gmra.mxu0 %v6565
    %v6599 = vpop.f32.mrf.mxu0
    %v6600 = vadd.f32 0.0, %v6599
    %v6601 = vpop.f32.mrf.mxu0
    %v6602 = vadd.f32 0.0, %v6601
    %6603 = vmatmul.bf16.gmra.mxu0 %v6568
    %v6604 = vpop.f32.mrf.mxu0
    %v6605 = vadd.f32 0.0, %v6604
    %v6606 = vpop.f32.mrf.mxu0
    %v6607 = vadd.f32 0.0, %v6606
    %6608 = vmatmul.bf16.gmra.mxu0 %v6571
    %v6609 = vpop.f32.mrf.mxu0
    %v6610 = vadd.f32 0.0, %v6609
    %v6611 = vpop.f32.mrf.mxu0
    %v6612 = vadd.f32 0.0, %v6611
    %6613 = vmatmul.bf16.gmra.mxu0 %v6574
    %v6614 = vpop.f32.mrf.mxu0
    %v6615 = vadd.f32 0.0, %v6614
    %v6616 = vpop.f32.mrf.mxu0
    %v6617 = vadd.f32 0.0, %v6616
    %6618 = vmatmul.bf16.gmra.mxu0 %v6577
    %v6619 = vpop.f32.mrf.mxu0
    %v6620 = vadd.f32 0.0, %v6619
    %v6621 = vpop.f32.mrf.mxu0
    %v6622 = vadd.f32 0.0, %v6621
    %6623 = vmatmul.bf16.gmra.mxu0 %v6580
    %v6624 = vpop.f32.mrf.mxu0
    %v6625 = vadd.f32 0.0, %v6624
    %v6626 = vpop.f32.mrf.mxu0
    %v6627 = vadd.f32 0.0, %v6626
    %6628 = vmatmul.bf16.gmra.mxu0 %v6583
    %v6629 = vpop.f32.mrf.mxu0
    %v6630 = vadd.f32 0.0, %v6629
    %v6631 = vpop.f32.mrf.mxu0
    %v6632 = vadd.f32 0.0, %v6631
    %6633 = vdwg.mxu0
    %v6650 = vunpack.c.l.b16 %v6429
    %v6651 = vunpack.c.l.b16 %v6430
    %v6652 = vunpack.c.l.b16 %v6431
    %v6653 = vunpack.c.l.b16 %v6432
    %v6654 = vunpack.c.l.b16 %v6433
    %v6655 = vunpack.c.l.b16 %v6434
    %v6656 = vunpack.c.l.b16 %v6435
    %v6657 = vunpack.c.l.b16 %v6436
    %v6658 = vunpack.c.l.b16 %v6437
    %v6659 = vunpack.c.l.b16 %v6438
    %v6660 = vunpack.c.l.b16 %v6439
    %v6661 = vunpack.c.l.b16 %v6440
    %v6662 = vunpack.c.l.b16 %v6441
    %v6663 = vunpack.c.l.b16 %v6442
    %v6664 = vunpack.c.l.b16 %v6443
    %v6665 = vunpack.c.l.b16 %v6444
    %v6666 = vpack.c.b16 %v6651, %v6650
    %v6667 = vpack.c.b16 %v6653, %v6652
    %v6668 = vpack.c.b16 %v6655, %v6654
    %v6669 = vpack.c.b16 %v6657, %v6656
    %v6670 = vpack.c.b16 %v6659, %v6658
    %v6671 = vpack.c.b16 %v6661, %v6660
    %v6672 = vpack.c.b16 %v6663, %v6662
    %v6673 = vpack.c.b16 %v6665, %v6664
    %v6678 = vunpack.c.l.b16 %v6185
    %v6679 = vunpack.c.l.b16 %v6186
    %v6680 = vunpack.c.l.b16 %v6187
    %v6681 = vunpack.c.l.b16 %v6188
    %v6682 = vpack.c.b16 %v6679, %v6678
    %v6683 = vpack.c.b16 %v6681, %v6680
    %v6687 = vsel %vm1926, %v6666, 0
    %v6690 = vsel %vm1926, %v6667, 0
    %v6693 = vsel %vm1926, %v6668, 0
    %v6696 = vsel %vm1926, %v6669, 0
    %v6699 = vsel %vm1926, %v6670, 0
    %v6702 = vsel %vm1926, %v6671, 0
    %v6705 = vsel %vm1926, %v6672, 0
    %v6708 = vsel %vm1926, %v6673, 0
    %6710 = vmatpush.bf16.msra.mxu0 0
    %6711 = vmatpush.bf16.msra.mxu0 0
    %6712 = vmatpush.bf16.msra.mxu0 0
    %6713 = vmatpush.bf16.msra.mxu0 0
    %6714 = vmatpush.bf16.msra.mxu0 0
    %6715 = vmatpush.bf16.msra.mxu0 0
    %6716 = vmatpush.bf16.msra.mxu0 %v6683
    %6717 = vmatpush.bf16.msra.mxu0 %v6682
    %6718 = vmatmul.bf16.gmra.mxu0 %v6687
    %v6719 = vpop.f32.mrf.mxu0
    %v6720 = vadd.f32 %v6595, %v6719
    %v6721 = vpop.f32.mrf.mxu0
    %v6722 = vadd.f32 %v6597, %v6721
    %6723 = vmatmul.bf16.gmra.mxu0 %v6690
    %v6724 = vpop.f32.mrf.mxu0
    %v6725 = vadd.f32 %v6600, %v6724
    %v6726 = vpop.f32.mrf.mxu0
    %v6727 = vadd.f32 %v6602, %v6726
    %6728 = vmatmul.bf16.gmra.mxu0 %v6693
    %v6729 = vpop.f32.mrf.mxu0
    %v6730 = vadd.f32 %v6605, %v6729
    %v6731 = vpop.f32.mrf.mxu0
    %v6732 = vadd.f32 %v6607, %v6731
    %6733 = vmatmul.bf16.gmra.mxu0 %v6696
    %v6734 = vpop.f32.mrf.mxu0
    %v6735 = vadd.f32 %v6610, %v6734
    %v6736 = vpop.f32.mrf.mxu0
    %v6737 = vadd.f32 %v6612, %v6736
    %6738 = vmatmul.bf16.gmra.mxu0 %v6699
    %v6739 = vpop.f32.mrf.mxu0
    %v6740 = vadd.f32 %v6615, %v6739
    %v6741 = vpop.f32.mrf.mxu0
    %v6742 = vadd.f32 %v6617, %v6741
    %6743 = vmatmul.bf16.gmra.mxu0 %v6702
    %v6744 = vpop.f32.mrf.mxu0
    %v6745 = vadd.f32 %v6620, %v6744
    %v6746 = vpop.f32.mrf.mxu0
    %v6747 = vadd.f32 %v6622, %v6746
    %6748 = vmatmul.bf16.gmra.mxu0 %v6705
    %v6749 = vpop.f32.mrf.mxu0
    %v6750 = vadd.f32 %v6625, %v6749
    %v6751 = vpop.f32.mrf.mxu0
    %v6752 = vadd.f32 %v6627, %v6751
    %6753 = vmatmul.bf16.gmra.mxu0 %v6708
    %v6754 = vpop.f32.mrf.mxu0
    %v6755 = vadd.f32 %v6630, %v6754
    %v6756 = vpop.f32.mrf.mxu0
    %v6757 = vadd.f32 %v6632, %v6756
    %6758 = vdwg.mxu0
    %v6775 = vunpack.c.l.b16 %v6525
    %v6776 = vunpack.c.l.b16 %v6526
    %v6777 = vunpack.c.l.b16 %v6527
    %v6778 = vunpack.c.l.b16 %v6528
    %v6779 = vunpack.c.l.b16 %v6529
    %v6780 = vunpack.c.l.b16 %v6530
    %v6781 = vunpack.c.l.b16 %v6531
    %v6782 = vunpack.c.l.b16 %v6532
    %v6783 = vunpack.c.l.b16 %v6533
    %v6784 = vunpack.c.l.b16 %v6534
    %v6785 = vunpack.c.l.b16 %v6535
    %v6786 = vunpack.c.l.b16 %v6536
    %v6787 = vunpack.c.l.b16 %v6537
    %v6788 = vunpack.c.l.b16 %v6538
    %v6789 = vunpack.c.l.b16 %v6539
    %v6790 = vunpack.c.l.b16 %v6540
    %v6791 = vpack.c.b16 %v6776, %v6775
    %v6792 = vpack.c.b16 %v6778, %v6777
    %v6793 = vpack.c.b16 %v6780, %v6779
    %v6794 = vpack.c.b16 %v6782, %v6781
    %v6795 = vpack.c.b16 %v6784, %v6783
    %v6796 = vpack.c.b16 %v6786, %v6785
    %v6797 = vpack.c.b16 %v6788, %v6787
    %v6798 = vpack.c.b16 %v6790, %v6789
    %v6803 = vunpack.c.l.b16 %v6193
    %v6804 = vunpack.c.l.b16 %v6194
    %v6805 = vunpack.c.l.b16 %v6195
    %v6806 = vunpack.c.l.b16 %v6196
    %v6807 = vpack.c.b16 %v6804, %v6803
    %v6808 = vpack.c.b16 %v6806, %v6805
    %v6812 = vsel %vm1926, %v6791, 0
    %v6815 = vsel %vm1926, %v6792, 0
    %v6818 = vsel %vm1926, %v6793, 0
    %v6821 = vsel %vm1926, %v6794, 0
    %v6824 = vsel %vm1926, %v6795, 0
    %v6827 = vsel %vm1926, %v6796, 0
    %v6830 = vsel %vm1926, %v6797, 0
    %v6833 = vsel %vm1926, %v6798, 0
    %6835 = vmatpush.bf16.msra.mxu0 0
    %6836 = vmatpush.bf16.msra.mxu0 0
    %6837 = vmatpush.bf16.msra.mxu0 0
    %6838 = vmatpush.bf16.msra.mxu0 0
    %6839 = vmatpush.bf16.msra.mxu0 0
    %6840 = vmatpush.bf16.msra.mxu0 0
    %6841 = vmatpush.bf16.msra.mxu0 %v6808
    %6842 = vmatpush.bf16.msra.mxu0 %v6807
    %6843 = vmatmul.bf16.gmra.mxu0 %v6812
    %v6844 = vpop.f32.mrf.mxu0
    %v6845 = vadd.f32 0.0, %v6844
    %v6846 = vpop.f32.mrf.mxu0
    %v6847 = vadd.f32 0.0, %v6846
    %6848 = vmatmul.bf16.gmra.mxu0 %v6815
    %v6849 = vpop.f32.mrf.mxu0
    %v6850 = vadd.f32 0.0, %v6849
    %v6851 = vpop.f32.mrf.mxu0
    %v6852 = vadd.f32 0.0, %v6851
    %6853 = vmatmul.bf16.gmra.mxu0 %v6818
    %v6854 = vpop.f32.mrf.mxu0
    %v6855 = vadd.f32 0.0, %v6854
    %v6856 = vpop.f32.mrf.mxu0
    %v6857 = vadd.f32 0.0, %v6856
    %6858 = vmatmul.bf16.gmra.mxu0 %v6821
    %v6859 = vpop.f32.mrf.mxu0
    %v6860 = vadd.f32 0.0, %v6859
    %v6861 = vpop.f32.mrf.mxu0
    %v6862 = vadd.f32 0.0, %v6861
    %6863 = vmatmul.bf16.gmra.mxu0 %v6824
    %v6864 = vpop.f32.mrf.mxu0
    %v6865 = vadd.f32 0.0, %v6864
    %v6866 = vpop.f32.mrf.mxu0
    %v6867 = vadd.f32 0.0, %v6866
    %6868 = vmatmul.bf16.gmra.mxu0 %v6827
    %v6869 = vpop.f32.mrf.mxu0
    %v6870 = vadd.f32 0.0, %v6869
    %v6871 = vpop.f32.mrf.mxu0
    %v6872 = vadd.f32 0.0, %v6871
    %6873 = vmatmul.bf16.gmra.mxu0 %v6830
    %v6874 = vpop.f32.mrf.mxu0
    %v6875 = vadd.f32 0.0, %v6874
    %v6876 = vpop.f32.mrf.mxu0
    %v6877 = vadd.f32 0.0, %v6876
    %6878 = vmatmul.bf16.gmra.mxu0 %v6833
    %v6879 = vpop.f32.mrf.mxu0
    %v6880 = vadd.f32 0.0, %v6879
    %v6881 = vpop.f32.mrf.mxu0
    %v6882 = vadd.f32 0.0, %v6881
    %6883 = vdwg.mxu0
    %v6884 = vadd.f32 %v6720, %v6845
    %v6885 = vadd.f32 %v6722, %v6847
    %v6886 = vadd.f32 %v6725, %v6850
    %v6887 = vadd.f32 %v6727, %v6852
    %v6888 = vadd.f32 %v6730, %v6855
    %v6889 = vadd.f32 %v6732, %v6857
    %v6890 = vadd.f32 %v6735, %v6860
    %v6891 = vadd.f32 %v6737, %v6862
    %v6892 = vadd.f32 %v6740, %v6865
    %v6893 = vadd.f32 %v6742, %v6867
    %v6894 = vadd.f32 %v6745, %v6870
    %v6895 = vadd.f32 %v6747, %v6872
    %v6896 = vadd.f32 %v6750, %v6875
    %v6897 = vadd.f32 %v6752, %v6877
    %v6898 = vadd.f32 %v6755, %v6880
    %v6899 = vadd.f32 %v6757, %v6882
    %v6900 = vpack.c.b16 %v6652, %v6651
    %v6901 = vpack.c.b16 %v6654, %v6653
    %v6902 = vpack.c.b16 %v6656, %v6655
    %v6903 = vpack.c.b16 %v6650, %v6657
    %v6904 = vpack.c.b16 %v6660, %v6659
    %v6905 = vpack.c.b16 %v6662, %v6661
    %v6906 = vpack.c.b16 %v6664, %v6663
    %v6907 = vpack.c.b16 %v6658, %v6665
    %v6912 = vunpack.c.l.b16 %v6197
    %v6913 = vunpack.c.l.b16 %v6198
    %v6914 = vunpack.c.l.b16 %v6199
    %v6915 = vunpack.c.l.b16 %v6200
    %v6916 = vpack.c.b16 %v6913, %v6912
    %v6917 = vpack.c.b16 %v6915, %v6914
    %v6921 = vsel %vm1926, %v6900, 0
    %v6924 = vsel %vm1926, %v6901, 0
    %v6927 = vsel %vm1926, %v6902, 0
    %v6930 = vsel %vm1926, %v6903, 0
    %v6933 = vsel %vm1926, %v6904, 0
    %v6936 = vsel %vm1926, %v6905, 0
    %v6939 = vsel %vm1926, %v6906, 0
    %v6942 = vsel %vm1926, %v6907, 0
    %6944 = vmatpush.bf16.msra.mxu0 0
    %6945 = vmatpush.bf16.msra.mxu0 0
    %6946 = vmatpush.bf16.msra.mxu0 0
    %6947 = vmatpush.bf16.msra.mxu0 0
    %6948 = vmatpush.bf16.msra.mxu0 0
    %6949 = vmatpush.bf16.msra.mxu0 0
    %6950 = vmatpush.bf16.msra.mxu0 %v6917
    %6951 = vmatpush.bf16.msra.mxu0 %v6916
    %6952 = vmatmul.bf16.gmra.mxu0 %v6921
    %v6953 = vpop.f32.mrf.mxu0
    %v6954 = vadd.f32 0.0, %v6953
    %v6955 = vpop.f32.mrf.mxu0
    %v6956 = vadd.f32 0.0, %v6955
    %6957 = vmatmul.bf16.gmra.mxu0 %v6924
    %v6958 = vpop.f32.mrf.mxu0
    %v6959 = vadd.f32 0.0, %v6958
    %v6960 = vpop.f32.mrf.mxu0
    %v6961 = vadd.f32 0.0, %v6960
    %6962 = vmatmul.bf16.gmra.mxu0 %v6927
    %v6963 = vpop.f32.mrf.mxu0
    %v6964 = vadd.f32 0.0, %v6963
    %v6965 = vpop.f32.mrf.mxu0
    %v6966 = vadd.f32 0.0, %v6965
    %6967 = vmatmul.bf16.gmra.mxu0 %v6930
    %v6968 = vpop.f32.mrf.mxu0
    %v6969 = vadd.f32 0.0, %v6968
    %v6970 = vpop.f32.mrf.mxu0
    %v6971 = vadd.f32 0.0, %v6970
    %6972 = vmatmul.bf16.gmra.mxu0 %v6933
    %v6973 = vpop.f32.mrf.mxu0
    %v6974 = vadd.f32 0.0, %v6973
    %v6975 = vpop.f32.mrf.mxu0
    %v6976 = vadd.f32 0.0, %v6975
    %6977 = vmatmul.bf16.gmra.mxu0 %v6936
    %v6978 = vpop.f32.mrf.mxu0
    %v6979 = vadd.f32 0.0, %v6978
    %v6980 = vpop.f32.mrf.mxu0
    %v6981 = vadd.f32 0.0, %v6980
    %6982 = vmatmul.bf16.gmra.mxu0 %v6939
    %v6983 = vpop.f32.mrf.mxu0
    %v6984 = vadd.f32 0.0, %v6983
    %v6985 = vpop.f32.mrf.mxu0
    %v6986 = vadd.f32 0.0, %v6985
    %6987 = vmatmul.bf16.gmra.mxu0 %v6942
    %v6988 = vpop.f32.mrf.mxu0
    %v6989 = vadd.f32 0.0, %v6988
    %v6990 = vpop.f32.mrf.mxu0
    %v6991 = vadd.f32 0.0, %v6990
    %6992 = vdwg.mxu0
    %v6993 = vadd.f32 %v6884, %v6954
    %v6994 = vadd.f32 %v6885, %v6956
    %v6995 = vadd.f32 %v6886, %v6959
    %v6996 = vadd.f32 %v6887, %v6961
    %v6997 = vadd.f32 %v6888, %v6964
    %v6998 = vadd.f32 %v6889, %v6966
    %v6999 = vadd.f32 %v6890, %v6969
    %v7000 = vadd.f32 %v6891, %v6971
    %v7001 = vadd.f32 %v6892, %v6974
    %v7002 = vadd.f32 %v6893, %v6976
    %v7003 = vadd.f32 %v6894, %v6979
    %v7004 = vadd.f32 %v6895, %v6981
    %v7005 = vadd.f32 %v6896, %v6984
    %v7006 = vadd.f32 %v6897, %v6986
    %v7007 = vadd.f32 %v6898, %v6989
    %v7008 = vadd.f32 %v6899, %v6991
    %v7009 = vpack.c.b16 %v6239, %v6238
    %v7010 = vpack.c.b16 %v6241, %v6240
    %v7011 = vpack.c.b16 %v6243, %v6242
    %v7012 = vpack.c.b16 %v6237, %v6244
    %v7013 = vpack.c.b16 %v6247, %v6246
    %v7014 = vpack.c.b16 %v6249, %v6248
    %v7015 = vpack.c.b16 %v6251, %v6250
    %v7016 = vpack.c.b16 %v6245, %v6252
    %v7021 = vunpack.c.l.b16 %v6201
    %v7022 = vunpack.c.l.b16 %v6202
    %v7023 = vunpack.c.l.b16 %v6203
    %v7024 = vunpack.c.l.b16 %v6204
    %v7025 = vpack.c.b16 %v7022, %v7021
    %v7026 = vpack.c.b16 %v7024, %v7023
    %v7030 = vsel %vm1926, %v7009, 0
    %v7033 = vsel %vm1926, %v7010, 0
    %v7036 = vsel %vm1926, %v7011, 0
    %v7039 = vsel %vm1926, %v7012, 0
    %v7042 = vsel %vm1926, %v7013, 0
    %v7045 = vsel %vm1926, %v7014, 0
    %v7048 = vsel %vm1926, %v7015, 0
    %v7051 = vsel %vm1926, %v7016, 0
    %7053 = vmatpush.bf16.msra.mxu0 0
    %7054 = vmatpush.bf16.msra.mxu0 0
    %7055 = vmatpush.bf16.msra.mxu0 0
    %7056 = vmatpush.bf16.msra.mxu0 0
    %7057 = vmatpush.bf16.msra.mxu0 0
    %7058 = vmatpush.bf16.msra.mxu0 0
    %7059 = vmatpush.bf16.msra.mxu0 %v7026
    %7060 = vmatpush.bf16.msra.mxu0 %v7025
    %7061 = vmatmul.bf16.gmra.mxu0 %v7030
    %v7062 = vpop.f32.mrf.mxu0
    %v7063 = vadd.f32 0.0, %v7062
    %v7064 = vpop.f32.mrf.mxu0
    %v7065 = vadd.f32 0.0, %v7064
    %7066 = vmatmul.bf16.gmra.mxu0 %v7033
    %v7067 = vpop.f32.mrf.mxu0
    %v7068 = vadd.f32 0.0, %v7067
    %v7069 = vpop.f32.mrf.mxu0
    %v7070 = vadd.f32 0.0, %v7069
    %7071 = vmatmul.bf16.gmra.mxu0 %v7036
    %v7072 = vpop.f32.mrf.mxu0
    %v7073 = vadd.f32 0.0, %v7072
    %v7074 = vpop.f32.mrf.mxu0
    %v7075 = vadd.f32 0.0, %v7074
    %7076 = vmatmul.bf16.gmra.mxu0 %v7039
    %v7077 = vpop.f32.mrf.mxu0
    %v7078 = vadd.f32 0.0, %v7077
    %v7079 = vpop.f32.mrf.mxu0
    %v7080 = vadd.f32 0.0, %v7079
    %7081 = vmatmul.bf16.gmra.mxu0 %v7042
    %v7082 = vpop.f32.mrf.mxu0
    %v7083 = vadd.f32 0.0, %v7082
    %v7084 = vpop.f32.mrf.mxu0
    %v7085 = vadd.f32 0.0, %v7084
    %7086 = vmatmul.bf16.gmra.mxu0 %v7045
    %v7087 = vpop.f32.mrf.mxu0
    %v7088 = vadd.f32 0.0, %v7087
    %v7089 = vpop.f32.mrf.mxu0
    %v7090 = vadd.f32 0.0, %v7089
    %7091 = vmatmul.bf16.gmra.mxu0 %v7048
    %v7092 = vpop.f32.mrf.mxu0
    %v7093 = vadd.f32 0.0, %v7092
    %v7094 = vpop.f32.mrf.mxu0
    %v7095 = vadd.f32 0.0, %v7094
    %7096 = vmatmul.bf16.gmra.mxu0 %v7051
    %v7097 = vpop.f32.mrf.mxu0
    %v7098 = vadd.f32 0.0, %v7097
    %v7099 = vpop.f32.mrf.mxu0
    %v7100 = vadd.f32 0.0, %v7099
    %7101 = vdwg.mxu0
    %v7102 = vadd.f32 %v6993, %v7063
    %v7103 = vadd.f32 %v6994, %v7065
    %v7104 = vadd.f32 %v6995, %v7068
    %v7105 = vadd.f32 %v6996, %v7070
    %v7106 = vadd.f32 %v6997, %v7073
    %v7107 = vadd.f32 %v6998, %v7075
    %v7108 = vadd.f32 %v6999, %v7078
    %v7109 = vadd.f32 %v7000, %v7080
    %v7110 = vadd.f32 %v7001, %v7083
    %v7111 = vadd.f32 %v7002, %v7085
    %v7112 = vadd.f32 %v7003, %v7088
    %v7113 = vadd.f32 %v7004, %v7090
    %v7114 = vadd.f32 %v7005, %v7093
    %v7115 = vadd.f32 %v7006, %v7095
    %v7116 = vadd.f32 %v7007, %v7098
    %v7117 = vadd.f32 %v7008, %v7100
    %v7118 = vpack.c.b16 %v6777, %v6776
    %v7119 = vpack.c.b16 %v6779, %v6778
    %v7120 = vpack.c.b16 %v6781, %v6780
    %v7121 = vpack.c.b16 %v6775, %v6782
    %v7122 = vpack.c.b16 %v6785, %v6784
    %v7123 = vpack.c.b16 %v6787, %v6786
    %v7124 = vpack.c.b16 %v6789, %v6788
    %v7125 = vpack.c.b16 %v6783, %v6790
    %v7130 = vunpack.c.l.b16 %v6205
    %v7131 = vunpack.c.l.b16 %v6206
    %v7132 = vunpack.c.l.b16 %v6207
    %v7133 = vunpack.c.l.b16 %v6208
    %v7134 = vpack.c.b16 %v7131, %v7130
    %v7135 = vpack.c.b16 %v7133, %v7132
    %v7139 = vsel %vm1926, %v7118, 0
    %v7142 = vsel %vm1926, %v7119, 0
    %v7145 = vsel %vm1926, %v7120, 0
    %v7148 = vsel %vm1926, %v7121, 0
    %v7151 = vsel %vm1926, %v7122, 0
    %v7154 = vsel %vm1926, %v7123, 0
    %v7157 = vsel %vm1926, %v7124, 0
    %v7160 = vsel %vm1926, %v7125, 0
    %7162 = vmatpush.bf16.msra.mxu0 0
    %7163 = vmatpush.bf16.msra.mxu0 0
    %7164 = vmatpush.bf16.msra.mxu0 0
    %7165 = vmatpush.bf16.msra.mxu0 0
    %7166 = vmatpush.bf16.msra.mxu0 0
    %7167 = vmatpush.bf16.msra.mxu0 0
    %7168 = vmatpush.bf16.msra.mxu0 %v7135
    %7169 = vmatpush.bf16.msra.mxu0 %v7134
    %7170 = vmatmul.bf16.gmra.mxu0 %v7139
    %v7171 = vpop.f32.mrf.mxu0
    %v7172 = vadd.f32 0.0, %v7171
    %v7173 = vpop.f32.mrf.mxu0
    %v7174 = vadd.f32 0.0, %v7173
    %7175 = vmatmul.bf16.gmra.mxu0 %v7142
    %v7176 = vpop.f32.mrf.mxu0
    %v7177 = vadd.f32 0.0, %v7176
    %v7178 = vpop.f32.mrf.mxu0
    %v7179 = vadd.f32 0.0, %v7178
    %7180 = vmatmul.bf16.gmra.mxu0 %v7145
    %v7181 = vpop.f32.mrf.mxu0
    %v7182 = vadd.f32 0.0, %v7181
    %v7183 = vpop.f32.mrf.mxu0
    %v7184 = vadd.f32 0.0, %v7183
    %7185 = vmatmul.bf16.gmra.mxu0 %v7148
    %v7186 = vpop.f32.mrf.mxu0
    %v7187 = vadd.f32 0.0, %v7186
    %v7188 = vpop.f32.mrf.mxu0
    %v7189 = vadd.f32 0.0, %v7188
    %7190 = vmatmul.bf16.gmra.mxu0 %v7151
    %v7191 = vpop.f32.mrf.mxu0
    %v7192 = vadd.f32 0.0, %v7191
    %v7193 = vpop.f32.mrf.mxu0
    %v7194 = vadd.f32 0.0, %v7193
    %7195 = vmatmul.bf16.gmra.mxu0 %v7154
    %v7196 = vpop.f32.mrf.mxu0
    %v7197 = vadd.f32 0.0, %v7196
    %v7198 = vpop.f32.mrf.mxu0
    %v7199 = vadd.f32 0.0, %v7198
    %7200 = vmatmul.bf16.gmra.mxu0 %v7157
    %v7201 = vpop.f32.mrf.mxu0
    %v7202 = vadd.f32 0.0, %v7201
    %v7203 = vpop.f32.mrf.mxu0
    %v7204 = vadd.f32 0.0, %v7203
    %7205 = vmatmul.bf16.gmra.mxu0 %v7160
    %v7206 = vpop.f32.mrf.mxu0
    %v7207 = vadd.f32 0.0, %v7206
    %v7208 = vpop.f32.mrf.mxu0
    %v7209 = vadd.f32 0.0, %v7208
    %7210 = vdwg.mxu0
    %v7211 = vadd.f32 %v7102, %v7172
    %v7212 = vadd.f32 %v7103, %v7174
    %v7213 = vadd.f32 %v7104, %v7177
    %v7214 = vadd.f32 %v7105, %v7179
    %v7215 = vadd.f32 %v7106, %v7182
    %v7216 = vadd.f32 %v7107, %v7184
    %v7217 = vadd.f32 %v7108, %v7187
    %v7218 = vadd.f32 %v7109, %v7189
    %v7219 = vadd.f32 %v7110, %v7192
    %v7220 = vadd.f32 %v7111, %v7194
    %v7221 = vadd.f32 %v7112, %v7197
    %v7222 = vadd.f32 %v7113, %v7199
    %v7223 = vadd.f32 %v7114, %v7202
    %v7224 = vadd.f32 %v7115, %v7204
    %v7225 = vadd.f32 %v7116, %v7207
    %v7226 = vadd.f32 %v7117, %v7209
    %v7231 = vunpack.c.l.b16 %v6209
    %v7232 = vunpack.c.l.b16 %v6210
    %v7233 = vunpack.c.l.b16 %v6211
    %v7234 = vunpack.c.l.b16 %v6212
    %v7235 = vpack.c.b16 %v7232, %v7231
    %v7236 = vpack.c.b16 %v7234, %v7233
    %7239 = vmatpush.bf16.msra.mxu0 0
    %7240 = vmatpush.bf16.msra.mxu0 0
    %7241 = vmatpush.bf16.msra.mxu0 0
    %7242 = vmatpush.bf16.msra.mxu0 0
    %7243 = vmatpush.bf16.msra.mxu0 0
    %7244 = vmatpush.bf16.msra.mxu0 0
    %7245 = vmatpush.bf16.msra.mxu0 %v7236
    %7246 = vmatpush.bf16.msra.mxu0 %v7235
    %7247 = vmatmul.bf16.gmra.mxu0 %v6690
    %v7248 = vpop.f32.mrf.mxu0
    %v7249 = vadd.f32 0.0, %v7248
    %v7250 = vpop.f32.mrf.mxu0
    %v7251 = vadd.f32 0.0, %v7250
    %7252 = vmatmul.bf16.gmra.mxu0 %v6693
    %v7253 = vpop.f32.mrf.mxu0
    %v7254 = vadd.f32 0.0, %v7253
    %v7255 = vpop.f32.mrf.mxu0
    %v7256 = vadd.f32 0.0, %v7255
    %7257 = vmatmul.bf16.gmra.mxu0 %v6696
    %v7258 = vpop.f32.mrf.mxu0
    %v7259 = vadd.f32 0.0, %v7258
    %v7260 = vpop.f32.mrf.mxu0
    %v7261 = vadd.f32 0.0, %v7260
    %7262 = vmatmul.bf16.gmra.mxu0 %v6687
    %v7263 = vpop.f32.mrf.mxu0
    %v7264 = vadd.f32 0.0, %v7263
    %v7265 = vpop.f32.mrf.mxu0
    %v7266 = vadd.f32 0.0, %v7265
    %7267 = vmatmul.bf16.gmra.mxu0 %v6702
    %v7268 = vpop.f32.mrf.mxu0
    %v7269 = vadd.f32 0.0, %v7268
    %v7270 = vpop.f32.mrf.mxu0
    %v7271 = vadd.f32 0.0, %v7270
    %7272 = vmatmul.bf16.gmra.mxu0 %v6705
    %v7273 = vpop.f32.mrf.mxu0
    %v7274 = vadd.f32 0.0, %v7273
    %v7275 = vpop.f32.mrf.mxu0
    %v7276 = vadd.f32 0.0, %v7275
    %7277 = vmatmul.bf16.gmra.mxu0 %v6708
    %v7278 = vpop.f32.mrf.mxu0
    %v7279 = vadd.f32 0.0, %v7278
    %v7280 = vpop.f32.mrf.mxu0
    %v7281 = vadd.f32 0.0, %v7280
    %7282 = vmatmul.bf16.gmra.mxu0 %v6699
    %v7283 = vpop.f32.mrf.mxu0
    %v7284 = vadd.f32 0.0, %v7283
    %v7285 = vpop.f32.mrf.mxu0
    %v7286 = vadd.f32 0.0, %v7285
    %7287 = vdwg.mxu0
    %v7288 = vadd.f32 %v7211, %v7249
    %v7289 = vadd.f32 %v7212, %v7251
    %v7290 = vadd.f32 %v7213, %v7254
    %v7291 = vadd.f32 %v7214, %v7256
    %v7292 = vadd.f32 %v7215, %v7259
    %v7293 = vadd.f32 %v7216, %v7261
    %v7294 = vadd.f32 %v7217, %v7264
    %v7295 = vadd.f32 %v7218, %v7266
    %v7296 = vadd.f32 %v7219, %v7269
    %v7297 = vadd.f32 %v7220, %v7271
    %v7298 = vadd.f32 %v7221, %v7274
    %v7299 = vadd.f32 %v7222, %v7276
    %v7300 = vadd.f32 %v7223, %v7279
    %v7301 = vadd.f32 %v7224, %v7281
    %v7302 = vadd.f32 %v7225, %v7284
    %v7303 = vadd.f32 %v7226, %v7286
    %v7308 = vunpack.c.l.b16 %v6213
    %v7309 = vunpack.c.l.b16 %v6214
    %v7310 = vunpack.c.l.b16 %v6215
    %v7311 = vunpack.c.l.b16 %v6216
    %v7312 = vpack.c.b16 %v7309, %v7308
    %v7313 = vpack.c.b16 %v7311, %v7310
    %7316 = vmatpush.bf16.msra.mxu0 0
    %7317 = vmatpush.bf16.msra.mxu0 0
    %7318 = vmatpush.bf16.msra.mxu0 0
    %7319 = vmatpush.bf16.msra.mxu0 0
    %7320 = vmatpush.bf16.msra.mxu0 0
    %7321 = vmatpush.bf16.msra.mxu0 0
    %7322 = vmatpush.bf16.msra.mxu0 %v7313
    %7323 = vmatpush.bf16.msra.mxu0 %v7312
    %7324 = vmatmul.bf16.gmra.mxu0 %v6565
    %v7325 = vpop.f32.mrf.mxu0
    %v7326 = vadd.f32 0.0, %v7325
    %v7327 = vpop.f32.mrf.mxu0
    %v7328 = vadd.f32 0.0, %v7327
    %7329 = vmatmul.bf16.gmra.mxu0 %v6568
    %v7330 = vpop.f32.mrf.mxu0
    %v7331 = vadd.f32 0.0, %v7330
    %v7332 = vpop.f32.mrf.mxu0
    %v7333 = vadd.f32 0.0, %v7332
    %7334 = vmatmul.bf16.gmra.mxu0 %v6571
    %v7335 = vpop.f32.mrf.mxu0
    %v7336 = vadd.f32 0.0, %v7335
    %v7337 = vpop.f32.mrf.mxu0
    %v7338 = vadd.f32 0.0, %v7337
    %7339 = vmatmul.bf16.gmra.mxu0 %v6562
    %v7340 = vpop.f32.mrf.mxu0
    %v7341 = vadd.f32 0.0, %v7340
    %v7342 = vpop.f32.mrf.mxu0
    %v7343 = vadd.f32 0.0, %v7342
    %7344 = vmatmul.bf16.gmra.mxu0 %v6577
    %v7345 = vpop.f32.mrf.mxu0
    %v7346 = vadd.f32 0.0, %v7345
    %v7347 = vpop.f32.mrf.mxu0
    %v7348 = vadd.f32 0.0, %v7347
    %7349 = vmatmul.bf16.gmra.mxu0 %v6580
    %v7350 = vpop.f32.mrf.mxu0
    %v7351 = vadd.f32 0.0, %v7350
    %v7352 = vpop.f32.mrf.mxu0
    %v7353 = vadd.f32 0.0, %v7352
    %7354 = vmatmul.bf16.gmra.mxu0 %v6583
    %v7355 = vpop.f32.mrf.mxu0
    %v7356 = vadd.f32 0.0, %v7355
    %v7357 = vpop.f32.mrf.mxu0
    %v7358 = vadd.f32 0.0, %v7357
    %7359 = vmatmul.bf16.gmra.mxu0 %v6574
    %v7360 = vpop.f32.mrf.mxu0
    %v7361 = vadd.f32 0.0, %v7360
    %v7362 = vpop.f32.mrf.mxu0
    %v7363 = vadd.f32 0.0, %v7362
    %7364 = vdwg.mxu0
    %v7365 = vadd.f32 %v7288, %v7326
    %v7366 = vadd.f32 %v7289, %v7328
    %v7367 = vadd.f32 %v7290, %v7331
    %v7368 = vadd.f32 %v7291, %v7333
    %v7369 = vadd.f32 %v7292, %v7336
    %v7370 = vadd.f32 %v7293, %v7338
    %v7371 = vadd.f32 %v7294, %v7341
    %v7372 = vadd.f32 %v7295, %v7343
    %v7373 = vadd.f32 %v7296, %v7346
    %v7374 = vadd.f32 %v7297, %v7348
    %v7375 = vadd.f32 %v7298, %v7351
    %v7376 = vadd.f32 %v7299, %v7353
    %v7377 = vadd.f32 %v7300, %v7356
    %v7378 = vadd.f32 %v7301, %v7358
    %v7379 = vadd.f32 %v7302, %v7361
    %v7380 = vadd.f32 %v7303, %v7363
    %v7385 = vunpack.c.l.b16 %v6217
    %v7386 = vunpack.c.l.b16 %v6218
    %v7387 = vunpack.c.l.b16 %v6219
    %v7388 = vunpack.c.l.b16 %v6220
    %v7389 = vpack.c.b16 %v7386, %v7385
    %v7390 = vpack.c.b16 %v7388, %v7387
    %7393 = vmatpush.bf16.msra.mxu0 0
    %7394 = vmatpush.bf16.msra.mxu0 0
    %7395 = vmatpush.bf16.msra.mxu0 0
    %7396 = vmatpush.bf16.msra.mxu0 0
    %7397 = vmatpush.bf16.msra.mxu0 0
    %7398 = vmatpush.bf16.msra.mxu0 0
    %7399 = vmatpush.bf16.msra.mxu0 %v7390
    %7400 = vmatpush.bf16.msra.mxu0 %v7389
    %7401 = vmatmul.bf16.gmra.mxu0 %v6815
    %v7402 = vpop.f32.mrf.mxu0
    %v7403 = vadd.f32 0.0, %v7402
    %v7404 = vpop.f32.mrf.mxu0
    %v7405 = vadd.f32 0.0, %v7404
    %7406 = vmatmul.bf16.gmra.mxu0 %v6818
    %v7407 = vpop.f32.mrf.mxu0
    %v7408 = vadd.f32 0.0, %v7407
    %v7409 = vpop.f32.mrf.mxu0
    %v7410 = vadd.f32 0.0, %v7409
    %7411 = vmatmul.bf16.gmra.mxu0 %v6821
    %v7412 = vpop.f32.mrf.mxu0
    %v7413 = vadd.f32 0.0, %v7412
    %v7414 = vpop.f32.mrf.mxu0
    %v7415 = vadd.f32 0.0, %v7414
    %7416 = vmatmul.bf16.gmra.mxu0 %v6812
    %v7417 = vpop.f32.mrf.mxu0
    %v7418 = vadd.f32 0.0, %v7417
    %v7419 = vpop.f32.mrf.mxu0
    %v7420 = vadd.f32 0.0, %v7419
    %7421 = vmatmul.bf16.gmra.mxu0 %v6827
    %v7422 = vpop.f32.mrf.mxu0
    %v7423 = vadd.f32 0.0, %v7422
    %v7424 = vpop.f32.mrf.mxu0
    %v7425 = vadd.f32 0.0, %v7424
    %7426 = vmatmul.bf16.gmra.mxu0 %v6830
    %v7427 = vpop.f32.mrf.mxu0
    %v7428 = vadd.f32 0.0, %v7427
    %v7429 = vpop.f32.mrf.mxu0
    %v7430 = vadd.f32 0.0, %v7429
    %7431 = vmatmul.bf16.gmra.mxu0 %v6833
    %v7432 = vpop.f32.mrf.mxu0
    %v7433 = vadd.f32 0.0, %v7432
    %v7434 = vpop.f32.mrf.mxu0
    %v7435 = vadd.f32 0.0, %v7434
    %7436 = vmatmul.bf16.gmra.mxu0 %v6824
    %v7437 = vpop.f32.mrf.mxu0
    %v7438 = vadd.f32 0.0, %v7437
    %v7439 = vpop.f32.mrf.mxu0
    %v7440 = vadd.f32 0.0, %v7439
    %7441 = vdwg.mxu0
    %v7442 = vadd.f32 %v7365, %v7403
    %v7443 = vadd.f32 %v7366, %v7405
    %v7444 = vadd.f32 %v7367, %v7408
    %v7445 = vadd.f32 %v7368, %v7410
    %v7446 = vadd.f32 %v7369, %v7413
    %v7447 = vadd.f32 %v7370, %v7415
    %v7448 = vadd.f32 %v7371, %v7418
    %v7449 = vadd.f32 %v7372, %v7420
    %v7450 = vadd.f32 %v7373, %v7423
    %v7451 = vadd.f32 %v7374, %v7425
    %v7452 = vadd.f32 %v7375, %v7428
    %v7453 = vadd.f32 %v7376, %v7430
    %v7454 = vadd.f32 %v7377, %v7433
    %v7455 = vadd.f32 %v7378, %v7435
    %v7456 = vadd.f32 %v7379, %v7438
    %v7457 = vadd.f32 %v7380, %v7440
    %v7458 = vperm.slane %v1527, 3
    %v7459 = vadd.f32 %v7442, %v7458
    %v7460 = vadd.f32 %v7443, %v7458
    %v7461 = vadd.f32 %v7444, %v7458
    %v7462 = vadd.f32 %v7445, %v7458
    %v7463 = vadd.f32 %v7446, %v7458
    %v7464 = vadd.f32 %v7447, %v7458
    %v7465 = vadd.f32 %v7448, %v7458
    %v7466 = vadd.f32 %v7449, %v7458
    %v7467 = vadd.f32 %v7450, %v7458
    %v7468 = vadd.f32 %v7451, %v7458
    %v7469 = vadd.f32 %v7452, %v7458
    %v7470 = vadd.f32 %v7453, %v7458
    %v7471 = vadd.f32 %v7454, %v7458
    %v7472 = vadd.f32 %v7455, %v7458
    %v7473 = vadd.f32 %v7456, %v7458
    %v7474 = vadd.f32 %v7457, %v7458
    %v7475 = vsel %vm1926, %v7459, 0.0
    %v7476 = vsel %vm1926, %v7460, 0.0
    %v7477 = vadd.f32 %v7475, %v7476
    %v7478 = vsel %vm1926, %v7461, 0.0
    %v7479 = vadd.f32 %v7477, %v7478
    %v7480 = vsel %vm1926, %v7462, 0.0
    %v7481 = vadd.f32 %v7479, %v7480
    %v7482 = vsel %vm1926, %v7463, 0.0
    %v7483 = vadd.f32 %v7481, %v7482
    %v7484 = vsel %vm1926, %v7464, 0.0
    %v7485 = vadd.f32 %v7483, %v7484
    %v7486 = vsel %vm1926, %v7465, 0.0
    %v7487 = vadd.f32 %v7485, %v7486
    %v7488 = vsel %vm1926, %v7466, 0.0
    %v7489 = vadd.f32 %v7487, %v7488
    %v7490 = vrot.slane %v7489, 4
    %v7491 = vadd.f32 %v7489, %v7490
    %v7492 = vrot.slane %v7491, 2
    %v7493 = vadd.f32 %v7491, %v7492
    %v7494 = vrot.slane %v7493, 1
    %v7495 = vadd.f32 %v7493, %v7494
    %v7496 = vsel %vm1926, %v7467, 0.0
    %v7497 = vsel %vm1926, %v7468, 0.0
    %v7498 = vadd.f32 %v7496, %v7497
    %v7499 = vsel %vm1926, %v7469, 0.0
    %v7500 = vadd.f32 %v7498, %v7499
    %v7501 = vsel %vm1926, %v7470, 0.0
    %v7502 = vadd.f32 %v7500, %v7501
    %v7503 = vsel %vm1926, %v7471, 0.0
    %v7504 = vadd.f32 %v7502, %v7503
    %v7505 = vsel %vm1926, %v7472, 0.0
    %v7506 = vadd.f32 %v7504, %v7505
    %v7507 = vsel %vm1926, %v7473, 0.0
    %v7508 = vadd.f32 %v7506, %v7507
    %v7509 = vsel %vm1926, %v7474, 0.0
    %v7510 = vadd.f32 %v7508, %v7509
    %v7511 = vrot.slane %v7510, 4
    %v7512 = vadd.f32 %v7510, %v7511
    %v7513 = vrot.slane %v7512, 2
    %v7514 = vadd.f32 %v7512, %v7513
    %v7515 = vrot.slane %v7514, 1
    %v7516 = vadd.f32 %v7514, %v7515
    %v7517 = vmul.f32 %v7495, %v2889
    %v7518 = vmul.f32 %v7516, %v2889
    %v7519 = vmul.f32 %v7459, %v7459
    %v7520 = vmul.f32 %v7460, %v7460
    %v7521 = vmul.f32 %v7461, %v7461
    %v7522 = vmul.f32 %v7462, %v7462
    %v7523 = vmul.f32 %v7463, %v7463
    %v7524 = vmul.f32 %v7464, %v7464
    %v7525 = vmul.f32 %v7465, %v7465
    %v7526 = vmul.f32 %v7466, %v7466
    %v7527 = vmul.f32 %v7467, %v7467
    %v7528 = vmul.f32 %v7468, %v7468
    %v7529 = vmul.f32 %v7469, %v7469
    %v7530 = vmul.f32 %v7470, %v7470
    %v7531 = vmul.f32 %v7471, %v7471
    %v7532 = vmul.f32 %v7472, %v7472
    %v7533 = vmul.f32 %v7473, %v7473
    %v7534 = vmul.f32 %v7474, %v7474
    %v7535 = vsel %vm1926, %v7519, 0.0
    %v7536 = vsel %vm1926, %v7520, 0.0
    %v7537 = vadd.f32 %v7535, %v7536
    %v7538 = vsel %vm1926, %v7521, 0.0
    %v7539 = vadd.f32 %v7537, %v7538
    %v7540 = vsel %vm1926, %v7522, 0.0
    %v7541 = vadd.f32 %v7539, %v7540
    %v7542 = vsel %vm1926, %v7523, 0.0
    %v7543 = vadd.f32 %v7541, %v7542
    %v7544 = vsel %vm1926, %v7524, 0.0
    %v7545 = vadd.f32 %v7543, %v7544
    %v7546 = vsel %vm1926, %v7525, 0.0
    %v7547 = vadd.f32 %v7545, %v7546
    %v7548 = vsel %vm1926, %v7526, 0.0
    %v7549 = vadd.f32 %v7547, %v7548
    %v7550 = vrot.slane %v7549, 4
    %v7551 = vadd.f32 %v7549, %v7550
    %v7552 = vrot.slane %v7551, 2
    %v7553 = vadd.f32 %v7551, %v7552
    %v7554 = vrot.slane %v7553, 1
    %v7555 = vadd.f32 %v7553, %v7554
    %v7556 = vsel %vm1926, %v7527, 0.0
    %v7557 = vsel %vm1926, %v7528, 0.0
    %v7558 = vadd.f32 %v7556, %v7557
    %v7559 = vsel %vm1926, %v7529, 0.0
    %v7560 = vadd.f32 %v7558, %v7559
    %v7561 = vsel %vm1926, %v7530, 0.0
    %v7562 = vadd.f32 %v7560, %v7561
    %v7563 = vsel %vm1926, %v7531, 0.0
    %v7564 = vadd.f32 %v7562, %v7563
    %v7565 = vsel %vm1926, %v7532, 0.0
    %v7566 = vadd.f32 %v7564, %v7565
    %v7567 = vsel %vm1926, %v7533, 0.0
    %v7568 = vadd.f32 %v7566, %v7567
    %v7569 = vsel %vm1926, %v7534, 0.0
    %v7570 = vadd.f32 %v7568, %v7569
    %v7571 = vrot.slane %v7570, 4
    %v7572 = vadd.f32 %v7570, %v7571
    %v7573 = vrot.slane %v7572, 2
    %v7574 = vadd.f32 %v7572, %v7573
    %v7575 = vrot.slane %v7574, 1
    %v7576 = vadd.f32 %v7574, %v7575
    %v7577 = vmul.f32 %v7555, %v2889
    %v7578 = vmul.f32 %v7576, %v2889
    %v7579 = vmul.f32 %v7517, %v7517
    %v7580 = vmul.f32 %v7518, %v7518
    %v7581 = vsub.f32 %v7577, %v7579
    %v7582 = vsub.f32 %v7578, %v7580
    %v7583 = vmax.f32 %v7581, 0.0
    %v7584 = vmax.f32 %v7582, 0.0
    %v7585 = vsub.f32 %v7459, %v7517
    %v7586 = vsub.f32 %v7460, %v7517
    %v7587 = vsub.f32 %v7461, %v7517
    %v7588 = vsub.f32 %v7462, %v7517
    %v7589 = vsub.f32 %v7463, %v7517
    %v7590 = vsub.f32 %v7464, %v7517
    %v7591 = vsub.f32 %v7465, %v7517
    %v7592 = vsub.f32 %v7466, %v7517
    %v7593 = vsub.f32 %v7467, %v7518
    %v7594 = vsub.f32 %v7468, %v7518
    %v7595 = vsub.f32 %v7469, %v7518
    %v7596 = vsub.f32 %v7470, %v7518
    %v7597 = vsub.f32 %v7471, %v7518
    %v7598 = vsub.f32 %v7472, %v7518
    %v7599 = vsub.f32 %v7473, %v7518
    %v7600 = vsub.f32 %v7474, %v7518
    %v7601 = vadd.f32 %v7583, 1e-05
    %v7602 = vadd.f32 %v7584, 1e-05
    %v7603 = vrsqrt.pop %v7601
    %v7604 = vmul.f32 %v7603, %v7601
    %v7605 = vmul.f32 %v7604, %v7603
    %v7606 = vmul.f32 0.5, %v7605
    %v7607 = vsub.f32 1.5, %v7606
    %v7608 = vmul.f32 %v7603, %v7607
    %vm7609 = vweird.f32 %v7601
    %vm7610 = vweird.f32 %v7603
    %vm7611 = vmor %vm7609, %vm7610
    %v7612 = vsel %vm7611, %v7603, %v7608
    %v7613 = vrsqrt.pop %v7602
    %v7614 = vmul.f32 %v7613, %v7602
    %v7615 = vmul.f32 %v7614, %v7613
    %v7616 = vmul.f32 0.5, %v7615
    %v7617 = vsub.f32 1.5, %v7616
    %v7618 = vmul.f32 %v7613, %v7617
    %vm7619 = vweird.f32 %v7602
    %vm7620 = vweird.f32 %v7613
    %vm7621 = vmor %vm7619, %vm7620
    %v7622 = vsel %vm7621, %v7613, %v7618
    %v7623 = vmul.f32 %v7585, %v7612
    %v7624 = vmul.f32 %v7586, %v7612
    %v7625 = vmul.f32 %v7587, %v7612
    %v7626 = vmul.f32 %v7588, %v7612
    %v7627 = vmul.f32 %v7589, %v7612
    %v7628 = vmul.f32 %v7590, %v7612
    %v7629 = vmul.f32 %v7591, %v7612
    %v7630 = vmul.f32 %v7592, %v7612
    %v7631 = vmul.f32 %v7593, %v7622
    %v7632 = vmul.f32 %v7594, %v7622
    %v7633 = vmul.f32 %v7595, %v7622
    %v7634 = vmul.f32 %v7596, %v7622
    %v7635 = vmul.f32 %v7597, %v7622
    %v7636 = vmul.f32 %v7598, %v7622
    %v7637 = vmul.f32 %v7599, %v7622
    %v7638 = vmul.f32 %v7600, %v7622
    %v7639 = vperm.slane %v1527, 4
    %v7640 = vmul.f32 %v7623, %v7639
    %v7641 = vmul.f32 %v7624, %v7639
    %v7642 = vmul.f32 %v7625, %v7639
    %v7643 = vmul.f32 %v7626, %v7639
    %v7644 = vmul.f32 %v7627, %v7639
    %v7645 = vmul.f32 %v7628, %v7639
    %v7646 = vmul.f32 %v7629, %v7639
    %v7647 = vmul.f32 %v7630, %v7639
    %v7648 = vmul.f32 %v7631, %v7639
    %v7649 = vmul.f32 %v7632, %v7639
    %v7650 = vmul.f32 %v7633, %v7639
    %v7651 = vmul.f32 %v7634, %v7639
    %v7652 = vmul.f32 %v7635, %v7639
    %v7653 = vmul.f32 %v7636, %v7639
    %v7654 = vmul.f32 %v7637, %v7639
    %v7655 = vmul.f32 %v7638, %v7639
    %v7656 = vperm.slane %v1527, 5
    %v7657 = vadd.f32 %v7640, %v7656
    %v7658 = vadd.f32 %v7641, %v7656
    %v7659 = vadd.f32 %v7642, %v7656
    %v7660 = vadd.f32 %v7643, %v7656
    %v7661 = vadd.f32 %v7644, %v7656
    %v7662 = vadd.f32 %v7645, %v7656
    %v7663 = vadd.f32 %v7646, %v7656
    %v7664 = vadd.f32 %v7647, %v7656
    %v7665 = vadd.f32 %v7648, %v7656
    %v7666 = vadd.f32 %v7649, %v7656
    %v7667 = vadd.f32 %v7650, %v7656
    %v7668 = vadd.f32 %v7651, %v7656
    %v7669 = vadd.f32 %v7652, %v7656
    %v7670 = vadd.f32 %v7653, %v7656
    %v7671 = vadd.f32 %v7654, %v7656
    %v7672 = vadd.f32 %v7655, %v7656
    %v7673 = vunpack.c.l.bf16 %v4647
    %v7674 = vunpack.c.l.bf16 %v4648
    %v7675 = vunpack.c.l.bf16 %v4649
    %v7676 = vunpack.c.l.bf16 %v4650
    %v7677 = vunpack.c.l.bf16 %v4651
    %v7678 = vunpack.c.l.bf16 %v4652
    %v7679 = vunpack.c.l.bf16 %v4653
    %v7680 = vunpack.c.l.bf16 %v4654
    %v7681 = vunpack.c.l.bf16 %v4655
    %v7682 = vunpack.c.l.bf16 %v4656
    %v7683 = vunpack.c.l.bf16 %v4657
    %v7684 = vunpack.c.l.bf16 %v4658
    %v7685 = vunpack.c.l.bf16 %v4659
    %v7686 = vunpack.c.l.bf16 %v4660
    %v7687 = vunpack.c.l.bf16 %v4661
    %v7688 = vunpack.c.l.bf16 %v4662
    %v7689 = vadd.f32 %v7673, %v7657
    %v7690 = vadd.f32 %v7674, %v7658
    %v7691 = vadd.f32 %v7675, %v7659
    %v7692 = vadd.f32 %v7676, %v7660
    %v7693 = vadd.f32 %v7677, %v7661
    %v7694 = vadd.f32 %v7678, %v7662
    %v7695 = vadd.f32 %v7679, %v7663
    %v7696 = vadd.f32 %v7680, %v7664
    %v7697 = vadd.f32 %v7681, %v7665
    %v7698 = vadd.f32 %v7682, %v7666
    %v7699 = vadd.f32 %v7683, %v7667
    %v7700 = vadd.f32 %v7684, %v7668
    %v7701 = vadd.f32 %v7685, %v7669
    %v7702 = vadd.f32 %v7686, %v7670
    %v7703 = vadd.f32 %v7687, %v7671
    %v7704 = vadd.f32 %v7688, %v7672
    %v7705 = vmax.f32 %v7689, 0.0
    %v7706 = vmax.f32 %v7690, 0.0
    %v7707 = vmax.f32 %v7691, 0.0
    %v7708 = vmax.f32 %v7692, 0.0
    %v7709 = vmax.f32 %v7693, 0.0
    %v7710 = vmax.f32 %v7694, 0.0
    %v7711 = vmax.f32 %v7695, 0.0
    %v7712 = vmax.f32 %v7696, 0.0
    %v7713 = vmax.f32 %v7697, 0.0
    %v7714 = vmax.f32 %v7698, 0.0
    %v7715 = vmax.f32 %v7699, 0.0
    %v7716 = vmax.f32 %v7700, 0.0
    %v7717 = vmax.f32 %v7701, 0.0
    %v7718 = vmax.f32 %v7702, 0.0
    %v7719 = vmax.f32 %v7703, 0.0
    %v7720 = vmax.f32 %v7704, 0.0
    %v7721 = vpack.c.bf16 %v7705, %v7705
    %v7722 = vpack.c.bf16 %v7706, %v7706
    %v7723 = vpack.c.bf16 %v7707, %v7707
    %v7724 = vpack.c.bf16 %v7708, %v7708
    %v7725 = vpack.c.bf16 %v7709, %v7709
    %v7726 = vpack.c.bf16 %v7710, %v7710
    %v7727 = vpack.c.bf16 %v7711, %v7711
    %v7728 = vpack.c.bf16 %v7712, %v7712
    %v7729 = vpack.c.bf16 %v7713, %v7713
    %v7730 = vpack.c.bf16 %v7714, %v7714
    %v7731 = vpack.c.bf16 %v7715, %v7715
    %v7732 = vpack.c.bf16 %v7716, %v7716
    %v7733 = vpack.c.bf16 %v7717, %v7717
    %v7734 = vpack.c.bf16 %v7718, %v7718
    %v7735 = vpack.c.bf16 %v7719, %v7719
    %v7736 = vpack.c.bf16 %v7720, %v7720
    %7737 = vst.msk [vmem:[#allocation2] sm:$0xf] %vm4630, %v7721
    %7738 = vst.msk [vmem:[#allocation2 + $0x4] sm:$0xf] %vm4630, %v7722
    %7739 = vst.msk [vmem:[#allocation2 + $0x8] sm:$0xf] %vm4630, %v7723
    %7740 = vst.msk [vmem:[#allocation2 + $0xc] sm:$0xf] %vm4630, %v7724
    %7741 = vst.msk [vmem:[#allocation2 + $0x10] sm:$0xf] %vm4630, %v7725
    %7742 = vst.msk [vmem:[#allocation2 + $0x14] sm:$0xf] %vm4630, %v7726
    %7743 = vst.msk [vmem:[#allocation2 + $0x18] sm:$0xf] %vm4630, %v7727
    %7744 = vst.msk [vmem:[#allocation2 + $0x1c] sm:$0xf] %vm4630, %v7728
    %7745 = vst.msk [vmem:[#allocation2 + $0x20] sm:$0xf] %vm4630, %v7729
    %7746 = vst.msk [vmem:[#allocation2 + $0x24] sm:$0xf] %vm4630, %v7730
    %7747 = vst.msk [vmem:[#allocation2 + $0x28] sm:$0xf] %vm4630, %v7731
    %7748 = vst.msk [vmem:[#allocation2 + $0x2c] sm:$0xf] %vm4630, %v7732
    %7749 = vst.msk [vmem:[#allocation2 + $0x30] sm:$0xf] %vm4630, %v7733
    %7750 = vst.msk [vmem:[#allocation2 + $0x34] sm:$0xf] %vm4630, %v7734
    %7751 = vst.msk [vmem:[#allocation2 + $0x38] sm:$0xf] %vm4630, %v7735
    %7752 = vst.msk [vmem:[#allocation2 + $0x3c] sm:$0xf] %vm4630, %v7736
    // Predicated region
    $region30: #{board_representation_forward_batched.1} parent=1 // pred_check
      %p7753 = pneg %p25
    $region31: #{board_representation_forward_batched.1} parent=1 // pred_check_branch
      %7755 = sbr.rel (%p7753) target = $region33
    $region32: #{board_representation_forward_batched.1} parent=1 // pred_region
      %7756 = vst.msk [vmem:[#allocation3] sm:$0xff] %vm1926, %v7705
      %7757 = vst.msk [vmem:[#allocation3 + $0x8] sm:$0xff] %vm1926, %v7706
      %7758 = vst.msk [vmem:[#allocation3 + $0x10] sm:$0xff] %vm1926, %v7707
      %7759 = vst.msk [vmem:[#allocation3 + $0x18] sm:$0xff] %vm1926, %v7708
      %7760 = vst.msk [vmem:[#allocation3 + $0x20] sm:$0xff] %vm1926, %v7709
      %7761 = vst.msk [vmem:[#allocation3 + $0x28] sm:$0xff] %vm1926, %v7710
      %7762 = vst.msk [vmem:[#allocation3 + $0x30] sm:$0xff] %vm1926, %v7711
      %7763 = vst.msk [vmem:[#allocation3 + $0x38] sm:$0xff] %vm1926, %v7712
      %7764 = vst.msk [vmem:[#allocation3 + $0x40] sm:$0xff] %vm1926, %v7713
      %7765 = vst.msk [vmem:[#allocation3 + $0x48] sm:$0xff] %vm1926, %v7714
      %7766 = vst.msk [vmem:[#allocation3 + $0x50] sm:$0xff] %vm1926, %v7715
      %7767 = vst.msk [vmem:[#allocation3 + $0x58] sm:$0xff] %vm1926, %v7716
      %7768 = vst.msk [vmem:[#allocation3 + $0x60] sm:$0xff] %vm1926, %v7717
      %7769 = vst.msk [vmem:[#allocation3 + $0x68] sm:$0xff] %vm1926, %v7718
      %7770 = vst.msk [vmem:[#allocation3 + $0x70] sm:$0xff] %vm1926, %v7719
      %7771 = vst.msk [vmem:[#allocation3 + $0x78] sm:$0xff] %vm1926, %v7720
    $region33: #{board_representation_forward_batched.1} parent=1 // pred_fallthru
      _
    // Predicated region
    $region34: #{board_representation_forward_batched.1} parent=1 // pred_check
      _
    $region35: #{board_representation_forward_batched.1} parent=1 // pred_check_branch
      %7773 = sbr.rel (0) target = $region37
    $region36: #{board_representation_forward_batched.1} parent=1 // pred_region
      %7775 = vsyncadd [#allocation4], 0
      %s7776 = sshll.u32 [#allocation3], 4
      %s7777 = int_to_ptr.vmem [resolvable:$true] %s7776
      %s7778 = sshll.u32 %s6, 4
      %s7779 = int_to_ptr.hbm [resolvable:$true] %s7778
      %7784 = dma.vmem_to_hbm [thread:$0]  %s7777, 2048, %s7779, [#allocation4], 128, 128, 8
    $region37: #{board_representation_forward_batched.1} parent=1 // pred_fallthru
      _
    // Predicated region
    $region38: #{board_representation_forward_batched.1} parent=1 // pred_check
      _
    $region39: #{board_representation_forward_batched.1} parent=1 // pred_check_branch
      %7786 = sbr.rel (0) target = $region41
    $region40: #{board_representation_forward_batched.1} parent=1 // pred_region
      %7788 = dma.done [#allocation4], 2048
    $region41: #{board_representation_forward_batched.1} parent=1 // pred_fallthru
      _
    %7789 = vsyncpa [#allocation4], 1

</llo_original>
